<compile_context>
chip_gen: v5e
topology: v5e:2x2
jax: 0.10.0
libtpu: 0.0.40
codegen_flags: <defaults>
</compile_context>

<pallas_src>
import jax
import jax.numpy as jnp
from jax.experimental import pallas as pl
from jax.experimental.pallas import tpu as pltpu

NEG_SLOPE = 0.01
BN_EPS = 1e-5
LANE = 128
SUBLANE = 16                  # bf16 sublane packing
ROW_TILE_TARGET = 256         # rows per in-kernel sub-tile
SCRATCH_DTYPE = jnp.bfloat16


def _round_up(x, m):
    return (x + m - 1) // m * m


def _cdiv(a, b):
    return -(-a // b)


def _vmem_limit_bytes():
    """Scoped-VMEM limit from the actual part (v5e/v6e: 128 MiB, v7x: 64 MiB)."""
    try:
        cap = int(pltpu.get_tpu_info().vmem_capacity_bytes)
        return max(cap * 3 // 4, 32 * 1024 * 1024)
    except Exception:
        return None               # fall back to the compiler default


# ------------------------------ Pallas kernel ------------------------------ #
def _make_stacked_conv_kernel(num_blocks, tm, n_tiles, wp, w_img, hwp,
                              c_pad, cins, phase, m_buf):
    """`num_blocks` fused conv3x3 + folded-BN + LeakyReLU stages over one
    flattened, spatially padded image resident in VMEM."""
    taps = [ky * wp + kx for ky in range(3) for kx in range(3)]
    m_out = tm * n_tiles
    halo_lo = wp + 1 + phase          # first scratch row ever written (mult of 16)
    inv_wp = 1.0 / wp

    def _hint(x):                      # alignment hint only for traced offsets
        return x if isinstance(x, int) else pl.multiple_of(x, SUBLANE)

    def kernel(*refs):
        x_ref = refs[0]                                   # (1, m_in, cin0_pad) bf16
        ws = refs[1:1 + 2 * num_blocks]                   # w0, s0, w1, s1, ...
        o_ref = refs[1 + 2 * num_blocks]                  # (1, m_out, c_pad) bf16
        scratch = refs[2 + 2 * num_blocks:]
        bufs = scratch[:num_blocks - 1]                   # inter-block bf16 buffers
        lhs_refs = scratch[num_blocks - 1:]               # per-block LHS assembly

        # Zero ONLY the never-written halo rows of each inter-block buffer
        # (the interior is fully overwritten by the masked stores below).
        # Re-done per image so the kernel stays correct under megacore
        # ("parallel") splitting of the batch axis; it is only ~2*wp rows.
        for buf in bufs:
            buf[0:halo_lo, :] = jnp.zeros((halo_lo, c_pad), SCRATCH_DTYPE)
            buf[m_out + halo_lo:m_buf, :] = jnp.zeros(
                (m_buf - m_out - halo_lo, c_pad), SCRATCH_DTYPE)

        def valid_rows(q0):
            # Flat index q is a real output pixel iff (q % wp) < W and q < H*wp.
            # Exact f32 arithmetic (no vector integer div/rem): for q < 2^22,
            # floor((q + 0.5)/wp) == q // wp exactly.
            q = q0 + jax.lax.broadcasted_iota(jnp.int32, (tm, 1), 0)
            qf = q.astype(jnp.float32)
            row = jnp.floor((qf + 0.5) * inv_wp)
            col = qf - row * wp
            return (col < w_img) & (qf < hwp)

        def run_stage(load, w_ref, s_ref, lhs_ref, ci, store):
            def tile(t, carry):
                q0 = _hint(t * tm)
                # Assemble the (tm, 9*ci) LHS from 9 shifted row windows, then
                # one deep-K MXU matmul (accumulation stays inside the MXU).
                for k, off in enumerate(taps):
                    lhs_ref[:, k * ci:(k + 1) * ci] = load(q0 + off)
                acc = jnp.dot(lhs_ref[...], w_ref[...],
                              preferred_element_type=jnp.float32)
                y = acc + s_ref[...]                      # folded conv-bias + BN
                y = jnp.maximum(y, NEG_SLOPE * y)         # LeakyReLU(0.01)
                store(q0, y)
                return carry

            if n_tiles <= 8:                              # small: static unroll
                for t in range(n_tiles):
                    tile(t, None)
            else:                                         # large: tight fori loop
                jax.lax.fori_loop(0, n_tiles, tile, None)

        def load_x(s):                                    # stage-0 input (bf16)
            return x_ref[0, pl.ds(s, tm), :]

        def make_load_buf(buf):
            return lambda s: buf[pl.ds(s + phase, tm), :]

        def make_store_buf(buf):
            # Re-pad in place: output pixel q lands at padded flat position
            # q + wp + 1 (+phase keeps stores sublane-aligned).  W-padding
            # columns / rows past the image are zeroed so the next conv sees a
            # correct zero halo.
            def store(q0, y):
                y = jnp.where(valid_rows(q0), y, 0.0)
                buf[pl.ds(_hint(q0 + halo_lo), tm), :] = y.astype(SCRATCH_DTYPE)
            return store

        def store_out(q0, y):
            o_ref[0, pl.ds(q0, tm), :] = y.astype(o_ref.dtype)

        load = load_x
        for b in range(num_blocks):
            w_ref, s_ref = ws[2 * b], ws[2 * b + 1]
            lhs_ref, ci = lhs_refs[b], cins[b]
            if b == num_blocks - 1:
                run_stage(load, w_ref, s_ref, lhs_ref, ci, store_out)
            else:
                buf = bufs[b]
                run_stage(load, w_ref, s_ref, lhs_ref, ci, make_store_buf(buf))
                load = make_load_buf(buf)

    return kernel


# ------------------------------ JAX wrapper -------------------------------- #
def _fold_block_params(p, cin_pad, c_pad):
    """Fold conv bias + BatchNorm(eval, running stats) into the conv weights
    (per-channel scale) and a single shift vector; pad & flatten to (9*Cin, Cout)."""
    w = p["weight"]                                   # (Cout, Cin, 3, 3)
    cout, cin = w.shape[0], w.shape[1]
    inv_std = 1.0 / jnp.sqrt(p["running_var"] + BN_EPS)
    scale = p["gamma"] * inv_std                      # (Cout,)
    shift = (p["bias"] - p["running_mean"]) * scale + p["beta"]
    wmat = jnp.transpose(w, (2, 3, 1, 0)) * scale     # (3, 3, Cin, Cout), BN folded
    wmat = wmat.reshape(9, cin, cout)
    wmat = jnp.pad(wmat, ((0, 0), (0, cin_pad - cin), (0, c_pad - cout)))
    wmat = wmat.reshape(9 * cin_pad, c_pad)           # tap-major / channel-minor
    shift = jnp.pad(shift, (0, c_pad - cout)).reshape(1, c_pad)
    return wmat.astype(jnp.bfloat16), shift.astype(jnp.float32)


def stacked_conv_layers(x_nchw, blocks_params):
    """StackedConvLayers.forward (eval mode). NCHW in / NCHW out like PyTorch."""
    # TODO(synk): Dropout2d (p=0.5) and BatchNorm are modeled in eval mode only
    # (dropout = identity, BN uses running stats); train-mode behavior is not
    # reproduced.
    n, cin, h, w = x_nchw.shape
    num_blocks = len(blocks_params)
    cout = blocks_params[0]["weight"].shape[0]
    c_pad = _round_up(cout, LANE)                     # lane-dense output channels
    cin0_pad = _round_up(cin, 8)
    cins = [cin0_pad] + [c_pad] * (num_blocks - 1)    # per-block contraction width

    hp, wp = h + 2, w + 2
    hwp = h * wp                                      # flat output rows per image
    n_tiles = _cdiv(hwp, ROW_TILE_TARGET)
    tm = _round_up(_cdiv(hwp, n_tiles), SUBLANE)      # balanced sub-tiles
    m_out = tm * n_tiles
    halo = 2 * wp + 2                                 # largest tap offset
    phase = (-(wp + 1)) % SUBLANE                     # keeps scratch stores aligned
    m_in = _round_up(m_out + halo, SUBLANE)
    m_buf = _round_up(m_out + halo + phase, SUBLANE)

    # ---- plain-JAX prep: spatial zero-pad + flatten (no im2col in HBM) ----
    x_nhwc = jnp.transpose(x_nchw, (0, 2, 3, 1))
    x_pad = jnp.pad(x_nhwc, ((0, 0), (1, 1), (1, 1), (0, 0)))
    x_flat = x_pad.reshape(n, hp * wp, cin)
    x_flat = jnp.pad(x_flat, ((0, 0), (0, m_in - hp * wp), (0, cin0_pad - cin)))
    x_flat = x_flat.astype(jnp.bfloat16)

    folded = []
    for bi, p in enumerate(blocks_params):
        folded.extend(_fold_block_params(p, cins[bi], c_pad))

    kernel = _make_stacked_conv_kernel(num_blocks, tm, n_tiles, wp, w, hwp,
                                       c_pad, cins, phase, m_buf)

    in_specs = [pl.BlockSpec((1, m_in, cin0_pad), lambda b: (b, 0, 0))]
    for bi in range(num_blocks):
        # Grid-invariant weights / shifts: constant index map -> fetched once.
        in_specs.append(pl.BlockSpec((9 * cins[bi], c_pad), lambda b: (0, 0)))
        in_specs.append(pl.BlockSpec((1, c_pad), lambda b: (0, 0)))

    scratch_shapes = (
        [pltpu.VMEM((m_buf, c_pad), SCRATCH_DTYPE)        # inter-block activation
         for _ in range(num_blocks - 1)]
        + [pltpu.VMEM((tm, 9 * cins[bi]), SCRATCH_DTYPE)  # per-block LHS assembly
           for bi in range(num_blocks)]
    )

    grid_spec = pltpu.PrefetchScalarGridSpec(
        num_scalar_prefetch=0,
        grid=(n,),                                    # one grid step per image
        in_specs=in_specs,
        out_specs=pl.BlockSpec((1, m_out, c_pad), lambda b: (b, 0, 0)),
        scratch_shapes=scratch_shapes,
    )

    out = pl.pallas_call(
        kernel,
        out_shape=jax.ShapeDtypeStruct((n, m_out, c_pad), jnp.bfloat16),
        grid_spec=grid_spec,
        compiler_params=pltpu.CompilerParams(
            dimension_semantics=("parallel",),        # megacore: images across TCs
            vmem_limit_bytes=_vmem_limit_bytes(),
        ),
    )(x_flat, *folded)

    # Slice off padding while still bf16, then transpose / cast once.
    y = out[:, :hwp, :cout].reshape(n, h, wp, cout)[:, :, :w, :]
    return jnp.transpose(y, (0, 3, 1, 2)).astype(jnp.float32)   # NHWC -> NCHW


# --------------------------- Parameter init -------------------------------- #
def init_block_params(key, cin, cout):
    ks = jax.random.split(key, 6)
    return {
        "weight": jax.random.normal(ks[0], (cout, cin, 3, 3), jnp.float32) * 0.1,
        "bias": jax.random.normal(ks[1], (cout,), jnp.float32) * 0.1,
        "gamma": jax.random.uniform(ks[2], (cout,), jnp.float32, 0.8, 1.2),
        "beta": jax.random.normal(ks[3], (cout,), jnp.float32) * 0.1,
        "running_mean": jax.random.normal(ks[4], (cout,), jnp.float32) * 0.1,
        "running_var": jax.random.uniform(ks[5], (cout,), jnp.float32, 0.5, 1.5),
    }


# ---------------------------- Pure-JAX reference --------------------------- #
def _reference(x_nchw, blocks_params):
    x = x_nchw
    for p in blocks_params:
        y = jax.lax.conv_general_dilated(
            x, p["weight"], window_strides=(1, 1), padding=((1, 1), (1, 1)),
            dimension_numbers=("NCHW", "OIHW", "NCHW"),
            precision=jax.lax.Precision.HIGHEST)
        y = y + p["bias"][None, :, None, None]
        inv_std = 1.0 / jnp.sqrt(p["running_var"] + BN_EPS)
        y = (y - p["running_mean"][None, :, None, None]) * \
            (p["gamma"] * inv_std)[None, :, None, None] + p["beta"][None, :, None, None]
        x = jnp.where(y >= 0, y, NEG_SLOPE * y)
    return x


# --------------------------------- Main ------------------------------------ #
if __name__ == "__main__":
    key = jax.random.PRNGKey(0)
    k_x, k_b0, k_b1 = jax.random.split(key, 3)

    # StackedConvLayers(input_feature_channels=4, output_feature_channels=8,
    #                   num_convs=2, first_stride=None)
    N, CIN, COUT, H, W = 2, 4, 8, 16, 16
    x = jax.random.normal(k_x, (N, CIN, H, W), jnp.float32)

    blocks = [init_block_params(k_b0, CIN, COUT),
              init_block_params(k_b1, COUT, COUT)]

    fwd = jax.jit(stacked_conv_layers)
    out = jax.block_until_ready(fwd(x, blocks))

    ref = _reference(x, blocks)
    assert out.shape == (N, COUT, H, W), out.shape
    max_err = float(jnp.max(jnp.abs(out - ref)))
    # bf16 activation/weight/intermediate streams with f32 accumulation.
    assert jnp.allclose(out, ref, atol=5e-2, rtol=5e-2), max_err

    print("KERNEL_OK")
</pallas_src>

<mosaic_0001>
module attributes {stable_mosaic.version = 11 : i64} {
  func.func @kernel(%arg0: i32, %arg1: memref<1x336x8xbf16, #tpu.memory_space<vmem>>, %arg2: memref<72x128xbf16, #tpu.memory_space<vmem>>, %arg3: memref<1x128xf32, #tpu.memory_space<vmem>>, %arg4: memref<1152x128xbf16, #tpu.memory_space<vmem>>, %arg5: memref<1x128xf32, #tpu.memory_space<vmem>>, %arg6: memref<1x288x128xbf16, #tpu.memory_space<vmem>>, %arg7: memref<352x128xbf16, #tpu.memory_space<vmem>>, %arg8: memref<144x72xbf16, #tpu.memory_space<vmem>>, %arg9: memref<144x1152xbf16, #tpu.memory_space<vmem>>) attributes {dimension_semantics = [#tpu.dimension_semantics<parallel>], iteration_bounds = array<i64: 2>, scalar_prefetch = 0 : i64, scratch_operands = 3 : i64, tpu.core_type = #tpu.core_type<tc>, window_params = [{transform_indices = @transform_0, window_bounds = array<i64: 1, 336, 8>}, {pipeline_mode = #tpu.pipeline_mode<synchronous>, transform_indices = @transform_1, window_bounds = array<i64: 72, 128>}, {pipeline_mode = #tpu.pipeline_mode<synchronous>, transform_indices = @transform_2, window_bounds = array<i64: 1, 128>}, {pipeline_mode = #tpu.pipeline_mode<synchronous>, transform_indices = @transform_3, window_bounds = array<i64: 1152, 128>}, {pipeline_mode = #tpu.pipeline_mode<synchronous>, transform_indices = @transform_4, window_bounds = array<i64: 1, 128>}, {transform_indices = @transform_5, window_bounds = array<i64: 1, 288, 128>}]} {
    %cst = arith.constant 0.000000e+00 : bf16
    %0 = vector.broadcast %cst : bf16 to vector<32x128xbf16>
    %c0 = arith.constant 0 : index
    %c0_0 = arith.constant 0 : index
    %1 = vector.load %arg7[%c0, %c0_0] : memref<352x128xbf16, #tpu.memory_space<vmem>>, vector<32x128xbf16>
    tpu.vector_store %arg7[%c0, %c0_0], %0 {strides = array<i32>} : memref<352x128xbf16, #tpu.memory_space<vmem>>, vector<32x128xbf16>,
    %cst_1 = arith.constant 0.000000e+00 : bf16
    %2 = vector.broadcast %cst_1 : bf16 to vector<32x128xbf16>
    %c320 = arith.constant 320 : index
    %c0_2 = arith.constant 0 : index
    %3 = vector.load %arg7[%c320, %c0_2] : memref<352x128xbf16, #tpu.memory_space<vmem>>, vector<32x128xbf16>
    tpu.vector_store %arg7[%c320, %c0_2], %2 {strides = array<i32>} : memref<352x128xbf16, #tpu.memory_space<vmem>>, vector<32x128xbf16>,
    %c0_3 = arith.constant 0 : index
    %c0_4 = arith.constant 0 : index
    %c0_5 = arith.constant 0 : index
    %4 = vector.load %arg1[%c0_3, %c0_4, %c0_5] : memref<1x336x8xbf16, #tpu.memory_space<vmem>>, vector<1x144x8xbf16>
    %5 = vector.shape_cast %4 : vector<1x144x8xbf16> to vector<144x8xbf16>
    %c0_6 = arith.constant 0 : index
    %c0_7 = arith.constant 0 : index
    %6 = vector.load %arg8[%c0_6, %c0_7] : memref<144x72xbf16, #tpu.memory_space<vmem>>, vector<144x8xbf16>
    tpu.vector_store %arg8[%c0_6, %c0_7], %5 {strides = array<i32>} : memref<144x72xbf16, #tpu.memory_space<vmem>>, vector<144x8xbf16>,
    %c0_8 = arith.constant 0 : index
    %c1 = arith.constant 1 : index
    %c0_9 = arith.constant 0 : index
    %7 = vector.load %arg1[%c0_8, %c1, %c0_9] : memref<1x336x8xbf16, #tpu.memory_space<vmem>>, vector<1x144x8xbf16>
    %8 = vector.shape_cast %7 : vector<1x144x8xbf16> to vector<144x8xbf16>
    %c0_10 = arith.constant 0 : index
    %c8 = arith.constant 8 : index
    %9 = vector.load %arg8[%c0_10, %c8] : memref<144x72xbf16, #tpu.memory_space<vmem>>, vector<144x8xbf16>
    tpu.vector_store %arg8[%c0_10, %c8], %8 {strides = array<i32>} : memref<144x72xbf16, #tpu.memory_space<vmem>>, vector<144x8xbf16>,
    %c0_11 = arith.constant 0 : index
    %c2 = arith.constant 2 : index
    %c0_12 = arith.constant 0 : index
    %10 = vector.load %arg1[%c0_11, %c2, %c0_12] : memref<1x336x8xbf16, #tpu.memory_space<vmem>>, vector<1x144x8xbf16>
    %11 = vector.shape_cast %10 : vector<1x144x8xbf16> to vector<144x8xbf16>
    %c0_13 = arith.constant 0 : index
    %c16 = arith.constant 16 : index
    %12 = vector.load %arg8[%c0_13, %c16] : memref<144x72xbf16, #tpu.memory_space<vmem>>, vector<144x8xbf16>
    tpu.vector_store %arg8[%c0_13, %c16], %11 {strides = array<i32>} : memref<144x72xbf16, #tpu.memory_space<vmem>>, vector<144x8xbf16>,
    %c0_14 = arith.constant 0 : index
    %c18 = arith.constant 18 : index
    %c0_15 = arith.constant 0 : index
    %13 = vector.load %arg1[%c0_14, %c18, %c0_15] : memref<1x336x8xbf16, #tpu.memory_space<vmem>>, vector<1x144x8xbf16>
    %14 = vector.shape_cast %13 : vector<1x144x8xbf16> to vector<144x8xbf16>
    %c0_16 = arith.constant 0 : index
    %c24 = arith.constant 24 : index
    %15 = vector.load %arg8[%c0_16, %c24] : memref<144x72xbf16, #tpu.memory_space<vmem>>, vector<144x8xbf16>
    tpu.vector_store %arg8[%c0_16, %c24], %14 {strides = array<i32>} : memref<144x72xbf16, #tpu.memory_space<vmem>>, vector<144x8xbf16>,
    %c0_17 = arith.constant 0 : index
    %c19 = arith.constant 19 : index
    %c0_18 = arith.constant 0 : index
    %16 = vector.load %arg1[%c0_17, %c19, %c0_18] : memref<1x336x8xbf16, #tpu.memory_space<vmem>>, vector<1x144x8xbf16>
    %17 = vector.shape_cast %16 : vector<1x144x8xbf16> to vector<144x8xbf16>
    %c0_19 = arith.constant 0 : index
    %c32 = arith.constant 32 : index
    %18 = vector.load %arg8[%c0_19, %c32] : memref<144x72xbf16, #tpu.memory_space<vmem>>, vector<144x8xbf16>
    tpu.vector_store %arg8[%c0_19, %c32], %17 {strides = array<i32>} : memref<144x72xbf16, #tpu.memory_space<vmem>>, vector<144x8xbf16>,
    %c0_20 = arith.constant 0 : index
    %c20 = arith.constant 20 : index
    %c0_21 = arith.constant 0 : index
    %19 = vector.load %arg1[%c0_20, %c20, %c0_21] : memref<1x336x8xbf16, #tpu.memory_space<vmem>>, vector<1x144x8xbf16>
    %20 = vector.shape_cast %19 : vector<1x144x8xbf16> to vector<144x8xbf16>
    %c0_22 = arith.constant 0 : index
    %c40 = arith.constant 40 : index
    %21 = vector.load %arg8[%c0_22, %c40] : memref<144x72xbf16, #tpu.memory_space<vmem>>, vector<144x8xbf16>
    tpu.vector_store %arg8[%c0_22, %c40], %20 {strides = array<i32>} : memref<144x72xbf16, #tpu.memory_space<vmem>>, vector<144x8xbf16>,
    %c0_23 = arith.constant 0 : index
    %c36 = arith.constant 36 : index
    %c0_24 = arith.constant 0 : index
    %22 = vector.load %arg1[%c0_23, %c36, %c0_24] : memref<1x336x8xbf16, #tpu.memory_space<vmem>>, vector<1x144x8xbf16>
    %23 = vector.shape_cast %22 : vector<1x144x8xbf16> to vector<144x8xbf16>
    %c0_25 = arith.constant 0 : index
    %c48 = arith.constant 48 : index
    %24 = vector.load %arg8[%c0_25, %c48] : memref<144x72xbf16, #tpu.memory_space<vmem>>, vector<144x8xbf16>
    tpu.vector_store %arg8[%c0_25, %c48], %23 {strides = array<i32>} : memref<144x72xbf16, #tpu.memory_space<vmem>>, vector<144x8xbf16>,
    %c0_26 = arith.constant 0 : index
    %c37 = arith.constant 37 : index
    %c0_27 = arith.constant 0 : index
    %25 = vector.load %arg1[%c0_26, %c37, %c0_27] : memref<1x336x8xbf16, #tpu.memory_space<vmem>>, vector<1x144x8xbf16>
    %26 = vector.shape_cast %25 : vector<1x144x8xbf16> to vector<144x8xbf16>
    %c0_28 = arith.constant 0 : index
    %c56 = arith.constant 56 : index
    %27 = vector.load %arg8[%c0_28, %c56] : memref<144x72xbf16, #tpu.memory_space<vmem>>, vector<144x8xbf16>
    tpu.vector_store %arg8[%c0_28, %c56], %26 {strides = array<i32>} : memref<144x72xbf16, #tpu.memory_space<vmem>>, vector<144x8xbf16>,
    %c0_29 = arith.constant 0 : index
    %c38 = arith.constant 38 : index
    %c0_30 = arith.constant 0 : index
    %28 = vector.load %arg1[%c0_29, %c38, %c0_30] : memref<1x336x8xbf16, #tpu.memory_space<vmem>>, vector<1x144x8xbf16>
    %29 = vector.shape_cast %28 : vector<1x144x8xbf16> to vector<144x8xbf16>
    %c0_31 = arith.constant 0 : index
    %c64 = arith.constant 64 : index
    %30 = vector.load %arg8[%c0_31, %c64] : memref<144x72xbf16, #tpu.memory_space<vmem>>, vector<144x8xbf16>
    tpu.vector_store %arg8[%c0_31, %c64], %29 {strides = array<i32>} : memref<144x72xbf16, #tpu.memory_space<vmem>>, vector<144x8xbf16>,
    %c0_32 = arith.constant 0 : index
    %c0_33 = arith.constant 0 : index
    %31 = vector.load %arg8[%c0_32, %c0_33] : memref<144x72xbf16, #tpu.memory_space<vmem>>, vector<144x72xbf16>
    %c0_34 = arith.constant 0 : index
    %c0_35 = arith.constant 0 : index
    %32 = vector.load %arg2[%c0_34, %c0_35] : memref<72x128xbf16, #tpu.memory_space<vmem>>, vector<72x128xbf16>
    %cst_36 = arith.constant dense<0.000000e+00> : vector<144x128xf32>
    %33 = tpu.matmul %31, %32, %cst_36 {dimension_numbers = #tpu.dot_dimension_numbers<[1], [0], [0], [1], [0, 0, 1, 1], [], []>} : vector<144x72xbf16>, vector<72x128xbf16>, vector<144x128xf32> -> vector<144x128xf32>
    %c0_37 = arith.constant 0 : index
    %c0_38 = arith.constant 0 : index
    %34 = vector.load %arg3[%c0_37, %c0_38] : memref<1x128xf32, #tpu.memory_space<vmem>>, vector<1x128xf32>
    %35 = vector.broadcast %34 : vector<1x128xf32> to vector<144x128xf32>
    %36 = arith.addf %33, %35 : vector<144x128xf32>
    %cst_39 = arith.constant 0.00999999977 : f32
    %37 = vector.broadcast %cst_39 : f32 to vector<144x128xf32>
    %38 = arith.mulf %37, %36 : vector<144x128xf32>
    %39 = arith.maximumf %36, %38 : vector<144x128xf32>
    %40 = tpu.iota {dimensions = array<i32: 0>} : vector<144x1xi32>
    %c0_i32 = arith.constant 0 : i32
    %41 = vector.broadcast %c0_i32 : i32 to vector<144x1xi32>
    %42 = arith.addi %41, %40 : vector<144x1xi32>
    %43 = arith.sitofp %42 : vector<144x1xi32> to vector<144x1xf32>
    %cst_40 = arith.constant 5.000000e-01 : f32
    %44 = vector.broadcast %cst_40 : f32 to vector<144x1xf32>
    %45 = arith.addf %43, %44 : vector<144x1xf32>
    %cst_41 = arith.constant 0.055555556 : f32
    %46 = vector.broadcast %cst_41 : f32 to vector<144x1xf32>
    %47 = arith.mulf %45, %46 : vector<144x1xf32>
    %48 = math.floor %47 : vector<144x1xf32>
    %cst_42 = arith.constant 1.800000e+01 : f32
    %49 = vector.broadcast %cst_42 : f32 to vector<144x1xf32>
    %50 = arith.mulf %48, %49 : vector<144x1xf32>
    %51 = arith.subf %43, %50 : vector<144x1xf32>
    %cst_43 = arith.constant 1.600000e+01 : f32
    %52 = vector.broadcast %cst_43 : f32 to vector<144x1xf32>
    %53 = arith.cmpf olt, %51, %52 : vector<144x1xf32>
    %cst_44 = arith.constant 2.880000e+02 : f32
    %54 = vector.broadcast %cst_44 : f32 to vector<144x1xf32>
    %55 = arith.cmpf olt, %43, %54 : vector<144x1xf32>
    %56 = arith.andi %53, %55 : vector<144x1xi1>
    %cst_45 = arith.constant 0.000000e+00 : f32
    %57 = vector.shape_cast %56 : vector<144x1xi1> to vector<144x1xi1>
    %58 = vector.broadcast %57 : vector<144x1xi1> to vector<144x128xi1>
    %59 = vector.broadcast %cst_45 : f32 to vector<144x128xf32>
    %60 = arith.select %58, %39, %59 : vector<144x128xi1>, vector<144x128xf32>
    %61 = arith.truncf %60 : vector<144x128xf32> to vector<144x128xbf16>
    %c32_46 = arith.constant 32 : index
    %c0_47 = arith.constant 0 : index
    %62 = vector.load %arg7[%c32_46, %c0_47] : memref<352x128xbf16, #tpu.memory_space<vmem>>, vector<144x128xbf16>
    tpu.vector_store %arg7[%c32_46, %c0_47], %61 {strides = array<i32>} : memref<352x128xbf16, #tpu.memory_space<vmem>>, vector<144x128xbf16>,
    %c0_48 = arith.constant 0 : index
    %c144 = arith.constant 144 : index
    %c0_49 = arith.constant 0 : index
    %63 = vector.load %arg1[%c0_48, %c144, %c0_49] : memref<1x336x8xbf16, #tpu.memory_space<vmem>>, vector<1x144x8xbf16>
    %64 = vector.shape_cast %63 : vector<1x144x8xbf16> to vector<144x8xbf16>
    %c0_50 = arith.constant 0 : index
    %c0_51 = arith.constant 0 : index
    %65 = vector.load %arg8[%c0_50, %c0_51] : memref<144x72xbf16, #tpu.memory_space<vmem>>, vector<144x8xbf16>
    tpu.vector_store %arg8[%c0_50, %c0_51], %64 {strides = array<i32>} : memref<144x72xbf16, #tpu.memory_space<vmem>>, vector<144x8xbf16>,
    %c0_52 = arith.constant 0 : index
    %c145 = arith.constant 145 : index
    %c0_53 = arith.constant 0 : index
    %66 = vector.load %arg1[%c0_52, %c145, %c0_53] : memref<1x336x8xbf16, #tpu.memory_space<vmem>>, vector<1x144x8xbf16>
    %67 = vector.shape_cast %66 : vector<1x144x8xbf16> to vector<144x8xbf16>
    %c0_54 = arith.constant 0 : index
    %c8_55 = arith.constant 8 : index
    %68 = vector.load %arg8[%c0_54, %c8_55] : memref<144x72xbf16, #tpu.memory_space<vmem>>, vector<144x8xbf16>
    tpu.vector_store %arg8[%c0_54, %c8_55], %67 {strides = array<i32>} : memref<144x72xbf16, #tpu.memory_space<vmem>>, vector<144x8xbf16>,
    %c0_56 = arith.constant 0 : index
    %c146 = arith.constant 146 : index
    %c0_57 = arith.constant 0 : index
    %69 = vector.load %arg1[%c0_56, %c146, %c0_57] : memref<1x336x8xbf16, #tpu.memory_space<vmem>>, vector<1x144x8xbf16>
    %70 = vector.shape_cast %69 : vector<1x144x8xbf16> to vector<144x8xbf16>
    %c0_58 = arith.constant 0 : index
    %c16_59 = arith.constant 16 : index
    %71 = vector.load %arg8[%c0_58, %c16_59] : memref<144x72xbf16, #tpu.memory_space<vmem>>, vector<144x8xbf16>
    tpu.vector_store %arg8[%c0_58, %c16_59], %70 {strides = array<i32>} : memref<144x72xbf16, #tpu.memory_space<vmem>>, vector<144x8xbf16>,
    %c0_60 = arith.constant 0 : index
    %c162 = arith.constant 162 : index
    %c0_61 = arith.constant 0 : index
    %72 = vector.load %arg1[%c0_60, %c162, %c0_61] : memref<1x336x8xbf16, #tpu.memory_space<vmem>>, vector<1x144x8xbf16>
    %73 = vector.shape_cast %72 : vector<1x144x8xbf16> to vector<144x8xbf16>
    %c0_62 = arith.constant 0 : index
    %c24_63 = arith.constant 24 : index
    %74 = vector.load %arg8[%c0_62, %c24_63] : memref<144x72xbf16, #tpu.memory_space<vmem>>, vector<144x8xbf16>
    tpu.vector_store %arg8[%c0_62, %c24_63], %73 {strides = array<i32>} : memref<144x72xbf16, #tpu.memory_space<vmem>>, vector<144x8xbf16>,
    %c0_64 = arith.constant 0 : index
    %c163 = arith.constant 163 : index
    %c0_65 = arith.constant 0 : index
    %75 = vector.load %arg1[%c0_64, %c163, %c0_65] : memref<1x336x8xbf16, #tpu.memory_space<vmem>>, vector<1x144x8xbf16>
    %76 = vector.shape_cast %75 : vector<1x144x8xbf16> to vector<144x8xbf16>
    %c0_66 = arith.constant 0 : index
    %c32_67 = arith.constant 32 : index
    %77 = vector.load %arg8[%c0_66, %c32_67] : memref<144x72xbf16, #tpu.memory_space<vmem>>, vector<144x8xbf16>
    tpu.vector_store %arg8[%c0_66, %c32_67], %76 {strides = array<i32>} : memref<144x72xbf16, #tpu.memory_space<vmem>>, vector<144x8xbf16>,
    %c0_68 = arith.constant 0 : index
    %c164 = arith.constant 164 : index
    %c0_69 = arith.constant 0 : index
    %78 = vector.load %arg1[%c0_68, %c164, %c0_69] : memref<1x336x8xbf16, #tpu.memory_space<vmem>>, vector<1x144x8xbf16>
    %79 = vector.shape_cast %78 : vector<1x144x8xbf16> to vector<144x8xbf16>
    %c0_70 = arith.constant 0 : index
    %c40_71 = arith.constant 40 : index
    %80 = vector.load %arg8[%c0_70, %c40_71] : memref<144x72xbf16, #tpu.memory_space<vmem>>, vector<144x8xbf16>
    tpu.vector_store %arg8[%c0_70, %c40_71], %79 {strides = array<i32>} : memref<144x72xbf16, #tpu.memory_space<vmem>>, vector<144x8xbf16>,
    %c0_72 = arith.constant 0 : index
    %c180 = arith.constant 180 : index
    %c0_73 = arith.constant 0 : index
    %81 = vector.load %arg1[%c0_72, %c180, %c0_73] : memref<1x336x8xbf16, #tpu.memory_space<vmem>>, vector<1x144x8xbf16>
    %82 = vector.shape_cast %81 : vector<1x144x8xbf16> to vector<144x8xbf16>
    %c0_74 = arith.constant 0 : index
    %c48_75 = arith.constant 48 : index
    %83 = vector.load %arg8[%c0_74, %c48_75] : memref<144x72xbf16, #tpu.memory_space<vmem>>, vector<144x8xbf16>
    tpu.vector_store %arg8[%c0_74, %c48_75], %82 {strides = array<i32>} : memref<144x72xbf16, #tpu.memory_space<vmem>>, vector<144x8xbf16>,
    %c0_76 = arith.constant 0 : index
    %c181 = arith.constant 181 : index
    %c0_77 = arith.constant 0 : index
    %84 = vector.load %arg1[%c0_76, %c181, %c0_77] : memref<1x336x8xbf16, #tpu.memory_space<vmem>>, vector<1x144x8xbf16>
    %85 = vector.shape_cast %84 : vector<1x144x8xbf16> to vector<144x8xbf16>
    %c0_78 = arith.constant 0 : index
    %c56_79 = arith.constant 56 : index
    %86 = vector.load %arg8[%c0_78, %c56_79] : memref<144x72xbf16, #tpu.memory_space<vmem>>, vector<144x8xbf16>
    tpu.vector_store %arg8[%c0_78, %c56_79], %85 {strides = array<i32>} : memref<144x72xbf16, #tpu.memory_space<vmem>>, vector<144x8xbf16>,
    %c0_80 = arith.constant 0 : index
    %c182 = arith.constant 182 : index
    %c0_81 = arith.constant 0 : index
    %87 = vector.load %arg1[%c0_80, %c182, %c0_81] : memref<1x336x8xbf16, #tpu.memory_space<vmem>>, vector<1x144x8xbf16>
    %88 = vector.shape_cast %87 : vector<1x144x8xbf16> to vector<144x8xbf16>
    %c0_82 = arith.constant 0 : index
    %c64_83 = arith.constant 64 : index
    %89 = vector.load %arg8[%c0_82, %c64_83] : memref<144x72xbf16, #tpu.memory_space<vmem>>, vector<144x8xbf16>
    tpu.vector_store %arg8[%c0_82, %c64_83], %88 {strides = array<i32>} : memref<144x72xbf16, #tpu.memory_space<vmem>>, vector<144x8xbf16>,
    %c0_84 = arith.constant 0 : index
    %c0_85 = arith.constant 0 : index
    %90 = vector.load %arg8[%c0_84, %c0_85] : memref<144x72xbf16, #tpu.memory_space<vmem>>, vector<144x72xbf16>
    %c0_86 = arith.constant 0 : index
    %c0_87 = arith.constant 0 : index
    %91 = vector.load %arg2[%c0_86, %c0_87] : memref<72x128xbf16, #tpu.memory_space<vmem>>, vector<72x128xbf16>
    %cst_88 = arith.constant dense<0.000000e+00> : vector<144x128xf32>
    %92 = tpu.matmul %90, %91, %cst_88 {dimension_numbers = #tpu.dot_dimension_numbers<[1], [0], [0], [1], [0, 0, 1, 1], [], []>} : vector<144x72xbf16>, vector<72x128xbf16>, vector<144x128xf32> -> vector<144x128xf32>
    %c0_89 = arith.constant 0 : index
    %c0_90 = arith.constant 0 : index
    %93 = vector.load %arg3[%c0_89, %c0_90] : memref<1x128xf32, #tpu.memory_space<vmem>>, vector<1x128xf32>
    %94 = vector.broadcast %93 : vector<1x128xf32> to vector<144x128xf32>
    %95 = arith.addf %92, %94 : vector<144x128xf32>
    %cst_91 = arith.constant 0.00999999977 : f32
    %96 = vector.broadcast %cst_91 : f32 to vector<144x128xf32>
    %97 = arith.mulf %96, %95 : vector<144x128xf32>
    %98 = arith.maximumf %95, %97 : vector<144x128xf32>
    %99 = tpu.iota {dimensions = array<i32: 0>} : vector<144x1xi32>
    %c144_i32 = arith.constant 144 : i32
    %100 = vector.broadcast %c144_i32 : i32 to vector<144x1xi32>
    %101 = arith.addi %100, %99 : vector<144x1xi32>
    %102 = arith.sitofp %101 : vector<144x1xi32> to vector<144x1xf32>
    %cst_92 = arith.constant 5.000000e-01 : f32
    %103 = vector.broadcast %cst_92 : f32 to vector<144x1xf32>
    %104 = arith.addf %102, %103 : vector<144x1xf32>
    %cst_93 = arith.constant 0.055555556 : f32
    %105 = vector.broadcast %cst_93 : f32 to vector<144x1xf32>
    %106 = arith.mulf %104, %105 : vector<144x1xf32>
    %107 = math.floor %106 : vector<144x1xf32>
    %cst_94 = arith.constant 1.800000e+01 : f32
    %108 = vector.broadcast %cst_94 : f32 to vector<144x1xf32>
    %109 = arith.mulf %107, %108 : vector<144x1xf32>
    %110 = arith.subf %102, %109 : vector<144x1xf32>
    %cst_95 = arith.constant 1.600000e+01 : f32
    %111 = vector.broadcast %cst_95 : f32 to vector<144x1xf32>
    %112 = arith.cmpf olt, %110, %111 : vector<144x1xf32>
    %cst_96 = arith.constant 2.880000e+02 : f32
    %113 = vector.broadcast %cst_96 : f32 to vector<144x1xf32>
    %114 = arith.cmpf olt, %102, %113 : vector<144x1xf32>
    %115 = arith.andi %112, %114 : vector<144x1xi1>
    %cst_97 = arith.constant 0.000000e+00 : f32
    %116 = vector.shape_cast %115 : vector<144x1xi1> to vector<144x1xi1>
    %117 = vector.broadcast %116 : vector<144x1xi1> to vector<144x128xi1>
    %118 = vector.broadcast %cst_97 : f32 to vector<144x128xf32>
    %119 = arith.select %117, %98, %118 : vector<144x128xi1>, vector<144x128xf32>
    %120 = arith.truncf %119 : vector<144x128xf32> to vector<144x128xbf16>
    %c176 = arith.constant 176 : index
    %c0_98 = arith.constant 0 : index
    %121 = vector.load %arg7[%c176, %c0_98] : memref<352x128xbf16, #tpu.memory_space<vmem>>, vector<144x128xbf16>
    tpu.vector_store %arg7[%c176, %c0_98], %120 {strides = array<i32>} : memref<352x128xbf16, #tpu.memory_space<vmem>>, vector<144x128xbf16>,
    %c13 = arith.constant 13 : index
    %c0_99 = arith.constant 0 : index
    %122 = vector.load %arg7[%c13, %c0_99] : memref<352x128xbf16, #tpu.memory_space<vmem>>, vector<144x128xbf16>
    %c0_100 = arith.constant 0 : index
    %c0_101 = arith.constant 0 : index
    %123 = vector.load %arg9[%c0_100, %c0_101] : memref<144x1152xbf16, #tpu.memory_space<vmem>>, vector<144x128xbf16>
    tpu.vector_store %arg9[%c0_100, %c0_101], %122 {strides = array<i32>} : memref<144x1152xbf16, #tpu.memory_space<vmem>>, vector<144x128xbf16>,
    %c14 = arith.constant 14 : index
    %c0_102 = arith.constant 0 : index
    %124 = vector.load %arg7[%c14, %c0_102] : memref<352x128xbf16, #tpu.memory_space<vmem>>, vector<144x128xbf16>
    %c0_103 = arith.constant 0 : index
    %c128 = arith.constant 128 : index
    %125 = vector.load %arg9[%c0_103, %c128] : memref<144x1152xbf16, #tpu.memory_space<vmem>>, vector<144x128xbf16>
    tpu.vector_store %arg9[%c0_103, %c128], %124 {strides = array<i32>} : memref<144x1152xbf16, #tpu.memory_space<vmem>>, vector<144x128xbf16>,
    %c15 = arith.constant 15 : index
    %c0_104 = arith.constant 0 : index
    %126 = vector.load %arg7[%c15, %c0_104] : memref<352x128xbf16, #tpu.memory_space<vmem>>, vector<144x128xbf16>
    %c0_105 = arith.constant 0 : index
    %c256 = arith.constant 256 : index
    %127 = vector.load %arg9[%c0_105, %c256] : memref<144x1152xbf16, #tpu.memory_space<vmem>>, vector<144x128xbf16>
    tpu.vector_store %arg9[%c0_105, %c256], %126 {strides = array<i32>} : memref<144x1152xbf16, #tpu.memory_space<vmem>>, vector<144x128xbf16>,
    %c31 = arith.constant 31 : index
    %c0_106 = arith.constant 0 : index
    %128 = vector.load %arg7[%c31, %c0_106] : memref<352x128xbf16, #tpu.memory_space<vmem>>, vector<144x128xbf16>
    %c0_107 = arith.constant 0 : index
    %c384 = arith.constant 384 : index
    %129 = vector.load %arg9[%c0_107, %c384] : memref<144x1152xbf16, #tpu.memory_space<vmem>>, vector<144x128xbf16>
    tpu.vector_store %arg9[%c0_107, %c384], %128 {strides = array<i32>} : memref<144x1152xbf16, #tpu.memory_space<vmem>>, vector<144x128xbf16>,
    %c32_108 = arith.constant 32 : index
    %c0_109 = arith.constant 0 : index
    %130 = vector.load %arg7[%c32_108, %c0_109] : memref<352x128xbf16, #tpu.memory_space<vmem>>, vector<144x128xbf16>
    %c0_110 = arith.constant 0 : index
    %c512 = arith.constant 512 : index
    %131 = vector.load %arg9[%c0_110, %c512] : memref<144x1152xbf16, #tpu.memory_space<vmem>>, vector<144x128xbf16>
    tpu.vector_store %arg9[%c0_110, %c512], %130 {strides = array<i32>} : memref<144x1152xbf16, #tpu.memory_space<vmem>>, vector<144x128xbf16>,
    %c33 = arith.constant 33 : index
    %c0_111 = arith.constant 0 : index
    %132 = vector.load %arg7[%c33, %c0_111] : memref<352x128xbf16, #tpu.memory_space<vmem>>, vector<144x128xbf16>
    %c0_112 = arith.constant 0 : index
    %c640 = arith.constant 640 : index
    %133 = vector.load %arg9[%c0_112, %c640] : memref<144x1152xbf16, #tpu.memory_space<vmem>>, vector<144x128xbf16>
    tpu.vector_store %arg9[%c0_112, %c640], %132 {strides = array<i32>} : memref<144x1152xbf16, #tpu.memory_space<vmem>>, vector<144x128xbf16>,
    %c49 = arith.constant 49 : index
    %c0_113 = arith.constant 0 : index
    %134 = vector.load %arg7[%c49, %c0_113] : memref<352x128xbf16, #tpu.memory_space<vmem>>, vector<144x128xbf16>
    %c0_114 = arith.constant 0 : index
    %c768 = arith.constant 768 : index
    %135 = vector.load %arg9[%c0_114, %c768] : memref<144x1152xbf16, #tpu.memory_space<vmem>>, vector<144x128xbf16>
    tpu.vector_store %arg9[%c0_114, %c768], %134 {strides = array<i32>} : memref<144x1152xbf16, #tpu.memory_space<vmem>>, vector<144x128xbf16>,
    %c50 = arith.constant 50 : index
    %c0_115 = arith.constant 0 : index
    %136 = vector.load %arg7[%c50, %c0_115] : memref<352x128xbf16, #tpu.memory_space<vmem>>, vector<144x128xbf16>
    %c0_116 = arith.constant 0 : index
    %c896 = arith.constant 896 : index
    %137 = vector.load %arg9[%c0_116, %c896] : memref<144x1152xbf16, #tpu.memory_space<vmem>>, vector<144x128xbf16>
    tpu.vector_store %arg9[%c0_116, %c896], %136 {strides = array<i32>} : memref<144x1152xbf16, #tpu.memory_space<vmem>>, vector<144x128xbf16>,
    %c51 = arith.constant 51 : index
    %c0_117 = arith.constant 0 : index
    %138 = vector.load %arg7[%c51, %c0_117] : memref<352x128xbf16, #tpu.memory_space<vmem>>, vector<144x128xbf16>
    %c0_118 = arith.constant 0 : index
    %c1024 = arith.constant 1024 : index
    %139 = vector.load %arg9[%c0_118, %c1024] : memref<144x1152xbf16, #tpu.memory_space<vmem>>, vector<144x128xbf16>
    tpu.vector_store %arg9[%c0_118, %c1024], %138 {strides = array<i32>} : memref<144x1152xbf16, #tpu.memory_space<vmem>>, vector<144x128xbf16>,
    %c0_119 = arith.constant 0 : index
    %c0_120 = arith.constant 0 : index
    %140 = vector.load %arg9[%c0_119, %c0_120] : memref<144x1152xbf16, #tpu.memory_space<vmem>>, vector<144x1152xbf16>
    %c0_121 = arith.constant 0 : index
    %c0_122 = arith.constant 0 : index
    %141 = vector.load %arg4[%c0_121, %c0_122] : memref<1152x128xbf16, #tpu.memory_space<vmem>>, vector<1152x128xbf16>
    %cst_123 = arith.constant dense<0.000000e+00> : vector<144x128xf32>
    %142 = tpu.matmul %140, %141, %cst_123 {dimension_numbers = #tpu.dot_dimension_numbers<[1], [0], [0], [1], [0, 0, 1, 1], [], []>} : vector<144x1152xbf16>, vector<1152x128xbf16>, vector<144x128xf32> -> vector<144x128xf32>
    %c0_124 = arith.constant 0 : index
    %c0_125 = arith.constant 0 : index
    %143 = vector.load %arg5[%c0_124, %c0_125] : memref<1x128xf32, #tpu.memory_space<vmem>>, vector<1x128xf32>
    %144 = vector.broadcast %143 : vector<1x128xf32> to vector<144x128xf32>
    %145 = arith.addf %142, %144 : vector<144x128xf32>
    %cst_126 = arith.constant 0.00999999977 : f32
    %146 = vector.broadcast %cst_126 : f32 to vector<144x128xf32>
    %147 = arith.mulf %146, %145 : vector<144x128xf32>
    %148 = arith.maximumf %145, %147 : vector<144x128xf32>
    %149 = arith.truncf %148 : vector<144x128xf32> to vector<144x128xbf16>
    %c0_127 = arith.constant 0 : index
    %c0_128 = arith.constant 0 : index
    %c0_129 = arith.constant 0 : index
    %150 = vector.load %arg6[%c0_127, %c0_128, %c0_129] : memref<1x288x128xbf16, #tpu.memory_space<vmem>>, vector<1x144x128xbf16>
    %151 = vector.shape_cast %150 : vector<1x144x128xbf16> to vector<144x128xbf16>
    %152 = vector.shape_cast %149 : vector<144x128xbf16> to vector<1x144x128xbf16>
    tpu.vector_store %arg6[%c0_127, %c0_128, %c0_129], %152 {strides = array<i32>} : memref<1x288x128xbf16, #tpu.memory_space<vmem>>, vector<1x144x128xbf16>,
    %c157 = arith.constant 157 : index
    %c0_130 = arith.constant 0 : index
    %153 = vector.load %arg7[%c157, %c0_130] : memref<352x128xbf16, #tpu.memory_space<vmem>>, vector<144x128xbf16>
    %c0_131 = arith.constant 0 : index
    %c0_132 = arith.constant 0 : index
    %154 = vector.load %arg9[%c0_131, %c0_132] : memref<144x1152xbf16, #tpu.memory_space<vmem>>, vector<144x128xbf16>
    tpu.vector_store %arg9[%c0_131, %c0_132], %153 {strides = array<i32>} : memref<144x1152xbf16, #tpu.memory_space<vmem>>, vector<144x128xbf16>,
    %c158 = arith.constant 158 : index
    %c0_133 = arith.constant 0 : index
    %155 = vector.load %arg7[%c158, %c0_133] : memref<352x128xbf16, #tpu.memory_space<vmem>>, vector<144x128xbf16>
    %c0_134 = arith.constant 0 : index
    %c128_135 = arith.constant 128 : index
    %156 = vector.load %arg9[%c0_134, %c128_135] : memref<144x1152xbf16, #tpu.memory_space<vmem>>, vector<144x128xbf16>
    tpu.vector_store %arg9[%c0_134, %c128_135], %155 {strides = array<i32>} : memref<144x1152xbf16, #tpu.memory_space<vmem>>, vector<144x128xbf16>,
    %c159 = arith.constant 159 : index
    %c0_136 = arith.constant 0 : index
    %157 = vector.load %arg7[%c159, %c0_136] : memref<352x128xbf16, #tpu.memory_space<vmem>>, vector<144x128xbf16>
    %c0_137 = arith.constant 0 : index
    %c256_138 = arith.constant 256 : index
    %158 = vector.load %arg9[%c0_137, %c256_138] : memref<144x1152xbf16, #tpu.memory_space<vmem>>, vector<144x128xbf16>
    tpu.vector_store %arg9[%c0_137, %c256_138], %157 {strides = array<i32>} : memref<144x1152xbf16, #tpu.memory_space<vmem>>, vector<144x128xbf16>,
    %c175 = arith.constant 175 : index
    %c0_139 = arith.constant 0 : index
    %159 = vector.load %arg7[%c175, %c0_139] : memref<352x128xbf16, #tpu.memory_space<vmem>>, vector<144x128xbf16>
    %c0_140 = arith.constant 0 : index
    %c384_141 = arith.constant 384 : index
    %160 = vector.load %arg9[%c0_140, %c384_141] : memref<144x1152xbf16, #tpu.memory_space<vmem>>, vector<144x128xbf16>
    tpu.vector_store %arg9[%c0_140, %c384_141], %159 {strides = array<i32>} : memref<144x1152xbf16, #tpu.memory_space<vmem>>, vector<144x128xbf16>,
    %c176_142 = arith.constant 176 : index
    %c0_143 = arith.constant 0 : index
    %161 = vector.load %arg7[%c176_142, %c0_143] : memref<352x128xbf16, #tpu.memory_space<vmem>>, vector<144x128xbf16>
    %c0_144 = arith.constant 0 : index
    %c512_145 = arith.constant 512 : index
    %162 = vector.load %arg9[%c0_144, %c512_145] : memref<144x1152xbf16, #tpu.memory_space<vmem>>, vector<144x128xbf16>
    tpu.vector_store %arg9[%c0_144, %c512_145], %161 {strides = array<i32>} : memref<144x1152xbf16, #tpu.memory_space<vmem>>, vector<144x128xbf16>,
    %c177 = arith.constant 177 : index
    %c0_146 = arith.constant 0 : index
    %163 = vector.load %arg7[%c177, %c0_146] : memref<352x128xbf16, #tpu.memory_space<vmem>>, vector<144x128xbf16>
    %c0_147 = arith.constant 0 : index
    %c640_148 = arith.constant 640 : index
    %164 = vector.load %arg9[%c0_147, %c640_148] : memref<144x1152xbf16, #tpu.memory_space<vmem>>, vector<144x128xbf16>
    tpu.vector_store %arg9[%c0_147, %c640_148], %163 {strides = array<i32>} : memref<144x1152xbf16, #tpu.memory_space<vmem>>, vector<144x128xbf16>,
    %c193 = arith.constant 193 : index
    %c0_149 = arith.constant 0 : index
    %165 = vector.load %arg7[%c193, %c0_149] : memref<352x128xbf16, #tpu.memory_space<vmem>>, vector<144x128xbf16>
    %c0_150 = arith.constant 0 : index
    %c768_151 = arith.constant 768 : index
    %166 = vector.load %arg9[%c0_150, %c768_151] : memref<144x1152xbf16, #tpu.memory_space<vmem>>, vector<144x128xbf16>
    tpu.vector_store %arg9[%c0_150, %c768_151], %165 {strides = array<i32>} : memref<144x1152xbf16, #tpu.memory_space<vmem>>, vector<144x128xbf16>,
    %c194 = arith.constant 194 : index
    %c0_152 = arith.constant 0 : index
    %167 = vector.load %arg7[%c194, %c0_152] : memref<352x128xbf16, #tpu.memory_space<vmem>>, vector<144x128xbf16>
    %c0_153 = arith.constant 0 : index
    %c896_154 = arith.constant 896 : index
    %168 = vector.load %arg9[%c0_153, %c896_154] : memref<144x1152xbf16, #tpu.memory_space<vmem>>, vector<144x128xbf16>
    tpu.vector_store %arg9[%c0_153, %c896_154], %167 {strides = array<i32>} : memref<144x1152xbf16, #tpu.memory_space<vmem>>, vector<144x128xbf16>,
    %c195 = arith.constant 195 : index
    %c0_155 = arith.constant 0 : index
    %169 = vector.load %arg7[%c195, %c0_155] : memref<352x128xbf16, #tpu.memory_space<vmem>>, vector<144x128xbf16>
    %c0_156 = arith.constant 0 : index
    %c1024_157 = arith.constant 1024 : index
    %170 = vector.load %arg9[%c0_156, %c1024_157] : memref<144x1152xbf16, #tpu.memory_space<vmem>>, vector<144x128xbf16>
    tpu.vector_store %arg9[%c0_156, %c1024_157], %169 {strides = array<i32>} : memref<144x1152xbf16, #tpu.memory_space<vmem>>, vector<144x128xbf16>,
    %c0_158 = arith.constant 0 : index
    %c0_159 = arith.constant 0 : index
    %171 = vector.load %arg9[%c0_158, %c0_159] : memref<144x1152xbf16, #tpu.memory_space<vmem>>, vector<144x1152xbf16>
    %c0_160 = arith.constant 0 : index
    %c0_161 = arith.constant 0 : index
    %172 = vector.load %arg4[%c0_160, %c0_161] : memref<1152x128xbf16, #tpu.memory_space<vmem>>, vector<1152x128xbf16>
    %cst_162 = arith.constant dense<0.000000e+00> : vector<144x128xf32>
    %173 = tpu.matmul %171, %172, %cst_162 {dimension_numbers = #tpu.dot_dimension_numbers<[1], [0], [0], [1], [0, 0, 1, 1], [], []>} : vector<144x1152xbf16>, vector<1152x128xbf16>, vector<144x128xf32> -> vector<144x128xf32>
    %c0_163 = arith.constant 0 : index
    %c0_164 = arith.constant 0 : index
    %174 = vector.load %arg5[%c0_163, %c0_164] : memref<1x128xf32, #tpu.memory_space<vmem>>, vector<1x128xf32>
    %175 = vector.broadcast %174 : vector<1x128xf32> to vector<144x128xf32>
    %176 = arith.addf %173, %175 : vector<144x128xf32>
    %cst_165 = arith.constant 0.00999999977 : f32
    %177 = vector.broadcast %cst_165 : f32 to vector<144x128xf32>
    %178 = arith.mulf %177, %176 : vector<144x128xf32>
    %179 = arith.maximumf %176, %178 : vector<144x128xf32>
    %180 = arith.truncf %179 : vector<144x128xf32> to vector<144x128xbf16>
    %c0_166 = arith.constant 0 : index
    %c144_167 = arith.constant 144 : index
    %c0_168 = arith.constant 0 : index
    %181 = vector.load %arg6[%c0_166, %c144_167, %c0_168] : memref<1x288x128xbf16, #tpu.memory_space<vmem>>, vector<1x144x128xbf16>
    %182 = vector.shape_cast %181 : vector<1x144x128xbf16> to vector<144x128xbf16>
    %183 = vector.shape_cast %180 : vector<144x128xbf16> to vector<1x144x128xbf16>
    tpu.vector_store %arg6[%c0_166, %c144_167, %c0_168], %183 {strides = array<i32>} : memref<1x288x128xbf16, #tpu.memory_space<vmem>>, vector<1x144x128xbf16>,
    return
  }
  func.func @transform_0(%arg0: i32) -> (i32, i32, i32) {
    %c0_i32 = arith.constant 0 : i32
    %c0_i32_0 = arith.constant 0 : i32
    %c0_i32_1 = arith.constant 0 : i32
    return %arg0, %c0_i32, %c0_i32_0 : i32, i32, i32
  }
  func.func @transform_1(%arg0: i32) -> (i32, i32) {
    %c0_i32 = arith.constant 0 : i32
    %c0_i32_0 = arith.constant 0 : i32
    %c0_i32_1 = arith.constant 0 : i32
    return %c0_i32, %c0_i32_0 : i32, i32
  }
  func.func @transform_2(%arg0: i32) -> (i32, i32) {
    %c0_i32 = arith.constant 0 : i32
    %c0_i32_0 = arith.constant 0 : i32
    %c0_i32_1 = arith.constant 0 : i32
    return %c0_i32, %c0_i32_0 : i32, i32
  }
  func.func @transform_3(%arg0: i32) -> (i32, i32) {
    %c0_i32 = arith.constant 0 : i32
    %c0_i32_0 = arith.constant 0 : i32
    %c0_i32_1 = arith.constant 0 : i32
    return %c0_i32, %c0_i32_0 : i32, i32
  }
  func.func @transform_4(%arg0: i32) -> (i32, i32) {
    %c0_i32 = arith.constant 0 : i32
    %c0_i32_0 = arith.constant 0 : i32
    %c0_i32_1 = arith.constant 0 : i32
    return %c0_i32, %c0_i32_0 : i32, i32
  }
  func.func @transform_5(%arg0: i32) -> (i32, i32, i32) {
    %c0_i32 = arith.constant 0 : i32
    %c0_i32_0 = arith.constant 0 : i32
    %c0_i32_1 = arith.constant 0 : i32
    return %arg0, %c0_i32, %c0_i32_0 : i32, i32, i32
  }
}

</mosaic_0001>

<llo_original>
// kernel: stacked_conv_layers.1
$region0: #{stacked_conv_layers.1}
  #allocation0 [shape = 'u32[]', space=smem, size = 0x4, offset = 0x4, fixed_abs, tag = 'smem constant byte address 0x4 - core index']
  #allocation1 [shape = 'u32[72,128]{1,0:T(1,128)}', space=vmem, size = 0x9000, scoped, tag = 'internal scratch']
  #allocation2 [shape = 'bf16[352,128]{1,0:T(8,128)(2,1)}', space=vmem, size = 0x16000, scoped, tag = 'scratch operand']
  #allocation3 [shape = 'bf16[144,72]{1,0:T(8,128)(2,1)}', space=vmem, size = 0x9000, scoped, tag = 'scratch operand']
  #allocation4 [shape = 'bf16[144,1152]{1,0:T(8,128)(2,1)}', space=vmem, size = 0x51000, scoped, tag = 'scratch operand']
  %s0 = inlined_call_operand.vmem [shape: bf16[2,336,8], index: 0, kind: input, shape index: {}]
  %s1 = inlined_call_operand.vmem [shape: bf16[72,128], index: 1, kind: input, shape index: {}]
  %s2 = inlined_call_operand.vmem [shape: f32[1,128], index: 2, kind: input, shape index: {}]
  %s3 = inlined_call_operand.vmem [shape: bf16[1152,128], index: 3, kind: input, shape index: {}]
  %s4 = inlined_call_operand.vmem [shape: f32[1,128], index: 4, kind: input, shape index: {}]
  %s5 = inlined_call_operand.vmem [shape: bf16[2,288,128], index: 5, kind: output, shape index: {}]
  %s6 = sld [smem:[#allocation0]]
  $region53: #{stacked_conv_layers.1} parent=0
    _
  %s8 = ssub.s32 1, %s6
  %s9 = scalar_select 0, %s8, %s6
  loop: start=0, step=1, limit=4
  $region2: #{stacked_conv_layers.1} parent=0 // loop_pre_header
    _
  $region3: #{stacked_conv_layers.1} parent=0 // loop_header
    %s11 = sphi 0, %s15
    %p12 = scmp.ge.s32.totalorder %s11, 4
    %s21 = sphi 0, %s23
    %s24 = sphi 0, %s21
    %s25 = sphi 0, %s24
    %s41 = sphi 0, %s25
    %s45 = sphi 0, %s45
    %s47 = sphi 0, %s45
    %s48 = sphi 0, %s47
    %s62 = sphi 0, %s48
    %s66 = sphi 0, %s66
    %s68 = sphi 0, %s66
    %s69 = sphi 0, %s68
    %s83 = sphi 0, %s69
    %s87 = sphi 0, %s87
    %s89 = sphi 0, %s87
    %s90 = sphi 0, %s89
    %s104 = sphi 0, %s90
    %s108 = sphi 0, %s108
    %s110 = sphi 0, %s108
    %s111 = sphi 0, %s110
    %s125 = sphi 0, %s111
    %s131 = sphi 0, %s133
    %s134 = sphi 0, %s131
    %s135 = sphi 0, %s134
    %s151 = sphi 0, %s135
  $region4: #{stacked_conv_layers.1} parent=0 // loop_header_branch
    %14 = sbr.rel (%p12) target = $region8
  $region5: #{stacked_conv_layers.1} parent=0 // loop_body
    %s16 = ssub.s32 %s11, 1
    %s17 = ssub.s32 %s11, 2
    %s18 = sadd.s32 %s11, 1
    %s19 = ssub.s32 %s11, %s18
    %p20 = scmp.eq.s32.totalorder %s19, 0
    %s22 = sadd.s32 %s21, 1
    %s23 = scalar_select %p20, %s21, %s22
    %p26 = pneg %p20
    %p27 = scmp.eq.s32.totalorder %s11, 1
    %p28 = por %p26, %p27
    %p29 = scmp.ne.s32.totalorder %s21, %s24
    %p30 = scmp.eq.s32.totalorder %s11, 0
    %p31 = por %p29, %p30
    %p32 = scmp.ne.s32.totalorder %s21, %s24
    %p33 = scmp.eq.s32.totalorder %s16, 1
    %p34 = por %p32, %p33
    %p35 = scmp.ne.s32.totalorder %s24, %s25
    %p36 = scmp.eq.s32.totalorder %s16, 0
    %p37 = por %p35, %p36
    %p38 = scmp.ne.s32.totalorder %s24, %s25
    %p39 = scmp.eq.s32.totalorder %s17, 1
    %p40 = por %p38, %p39
    %p42 = scmp.ne.s32.totalorder %s25, %s41
    %p43 = scmp.eq.s32.totalorder %s17, 0
    %p44 = por %p42, %p43
    %s46 = sadd.s32 %s45, 1
    %p49 = scmp.eq.s32.totalorder %s11, 1
    %p50 = scmp.ne.s32.totalorder %s45, %s47
    %p51 = scmp.eq.s32.totalorder %s11, 0
    %p52 = por %p50, %p51
    %p53 = scmp.ne.s32.totalorder %s45, %s47
    %p54 = scmp.eq.s32.totalorder %s16, 1
    %p55 = por %p53, %p54
    %p56 = scmp.ne.s32.totalorder %s47, %s48
    %p57 = scmp.eq.s32.totalorder %s16, 0
    %p58 = por %p56, %p57
    %p59 = scmp.ne.s32.totalorder %s47, %s48
    %p60 = scmp.eq.s32.totalorder %s17, 1
    %p61 = por %p59, %p60
    %p63 = scmp.ne.s32.totalorder %s48, %s62
    %p64 = scmp.eq.s32.totalorder %s17, 0
    %p65 = por %p63, %p64
    %s67 = sadd.s32 %s66, 1
    %p70 = scmp.eq.s32.totalorder %s11, 1
    %p71 = scmp.ne.s32.totalorder %s66, %s68
    %p72 = scmp.eq.s32.totalorder %s11, 0
    %p73 = por %p71, %p72
    %p74 = scmp.ne.s32.totalorder %s66, %s68
    %p75 = scmp.eq.s32.totalorder %s16, 1
    %p76 = por %p74, %p75
    %p77 = scmp.ne.s32.totalorder %s68, %s69
    %p78 = scmp.eq.s32.totalorder %s16, 0
    %p79 = por %p77, %p78
    %p80 = scmp.ne.s32.totalorder %s68, %s69
    %p81 = scmp.eq.s32.totalorder %s17, 1
    %p82 = por %p80, %p81
    %p84 = scmp.ne.s32.totalorder %s69, %s83
    %p85 = scmp.eq.s32.totalorder %s17, 0
    %p86 = por %p84, %p85
    %s88 = sadd.s32 %s87, 1
    %p91 = scmp.eq.s32.totalorder %s11, 1
    %p92 = scmp.ne.s32.totalorder %s87, %s89
    %p93 = scmp.eq.s32.totalorder %s11, 0
    %p94 = por %p92, %p93
    %p95 = scmp.ne.s32.totalorder %s87, %s89
    %p96 = scmp.eq.s32.totalorder %s16, 1
    %p97 = por %p95, %p96
    %p98 = scmp.ne.s32.totalorder %s89, %s90
    %p99 = scmp.eq.s32.totalorder %s16, 0
    %p100 = por %p98, %p99
    %p101 = scmp.ne.s32.totalorder %s89, %s90
    %p102 = scmp.eq.s32.totalorder %s17, 1
    %p103 = por %p101, %p102
    %p105 = scmp.ne.s32.totalorder %s90, %s104
    %p106 = scmp.eq.s32.totalorder %s17, 0
    %p107 = por %p105, %p106
    %s109 = sadd.s32 %s108, 1
    %p112 = scmp.eq.s32.totalorder %s11, 1
    %p113 = scmp.ne.s32.totalorder %s108, %s110
    %p114 = scmp.eq.s32.totalorder %s11, 0
    %p115 = por %p113, %p114
    %p116 = scmp.ne.s32.totalorder %s108, %s110
    %p117 = scmp.eq.s32.totalorder %s16, 1
    %p118 = por %p116, %p117
    %p119 = scmp.ne.s32.totalorder %s110, %s111
    %p120 = scmp.eq.s32.totalorder %s16, 0
    %p121 = por %p119, %p120
    %p122 = scmp.ne.s32.totalorder %s110, %s111
    %p123 = scmp.eq.s32.totalorder %s17, 1
    %p124 = por %p122, %p123
    %p126 = scmp.ne.s32.totalorder %s111, %s125
    %p127 = scmp.eq.s32.totalorder %s17, 0
    %p128 = por %p126, %p127
    %s129 = ssub.s32 %s11, %s18
    %p130 = scmp.eq.s32.totalorder %s129, 0
    %s132 = sadd.s32 %s131, 1
    %s133 = scalar_select %p130, %s131, %s132
    %p136 = pneg %p130
    %p137 = scmp.eq.s32.totalorder %s11, 1
    %p138 = por %p136, %p137
    %p139 = scmp.ne.s32.totalorder %s131, %s134
    %p140 = scmp.eq.s32.totalorder %s11, 0
    %p141 = por %p139, %p140
    %p142 = scmp.ne.s32.totalorder %s131, %s134
    %p143 = scmp.eq.s32.totalorder %s16, 1
    %p144 = por %p142, %p143
    %p145 = scmp.ne.s32.totalorder %s134, %s135
    %p146 = scmp.eq.s32.totalorder %s16, 0
    %p147 = por %p145, %p146
    %p148 = scmp.ne.s32.totalorder %s134, %s135
    %p149 = scmp.eq.s32.totalorder %s17, 1
    %p150 = por %p148, %p149
    %p152 = scmp.ne.s32.totalorder %s135, %s151
    %p153 = scmp.eq.s32.totalorder %s17, 0
    %p154 = por %p152, %p153
    %p155 = scmp.le.s32.totalorder 1, %s11
    %p156 = scmp.lt.s32.totalorder %s11, 3
    %p157 = pnand %p155, %p156
    %p158 = pneg %p157
    // Predicated region
    $region9: #{stacked_conv_layers.1} parent=5 // pred_check
      _
    $region10: #{stacked_conv_layers.1} parent=5 // pred_check_branch
      %160 = sbr.rel (%p157) target = $region12
    $region11: #{stacked_conv_layers.1} parent=5 // pred_region
      %s161 = ssub.s32 %s11, 1
      // Predicated region
      $region13: #{stacked_conv_layers.1} parent=11 // pred_check
        %p162 = pneg %p58
      $region14: #{stacked_conv_layers.1} parent=11 // pred_check_branch
        %164 = sbr.rel (%p162) target = $region16
      $region15: #{stacked_conv_layers.1} parent=11 // pred_region
        _
      $region16: #{stacked_conv_layers.1} parent=11 // pred_fallthru
        _
      // Predicated region
      $region17: #{stacked_conv_layers.1} parent=11 // pred_check
        %p165 = pneg %p79
      $region18: #{stacked_conv_layers.1} parent=11 // pred_check_branch
        %167 = sbr.rel (%p165) target = $region20
      $region19: #{stacked_conv_layers.1} parent=11 // pred_region
        _
      $region20: #{stacked_conv_layers.1} parent=11 // pred_fallthru
        _
      // Predicated region
      $region21: #{stacked_conv_layers.1} parent=11 // pred_check
        %p168 = pneg %p100
      $region22: #{stacked_conv_layers.1} parent=11 // pred_check_branch
        %170 = sbr.rel (%p168) target = $region24
      $region23: #{stacked_conv_layers.1} parent=11 // pred_region
        _
      $region24: #{stacked_conv_layers.1} parent=11 // pred_fallthru
        _
      // Predicated region
      $region25: #{stacked_conv_layers.1} parent=11 // pred_check
        %p171 = pneg %p121
      $region26: #{stacked_conv_layers.1} parent=11 // pred_check_branch
        %173 = sbr.rel (%p171) target = $region28
      $region27: #{stacked_conv_layers.1} parent=11 // pred_region
        _
      $region28: #{stacked_conv_layers.1} parent=11 // pred_fallthru
        _
    $region12: #{stacked_conv_layers.1} parent=5 // pred_fallthru
      _
    %p174 = scmp.lt.s32.totalorder %s11, 2
    // Predicated region
    $region29: #{stacked_conv_layers.1} parent=5 // pred_check
      %p175 = pneg %p174
    $region30: #{stacked_conv_layers.1} parent=5 // pred_check_branch
      %177 = sbr.rel (%p175) target = $region32
    $region31: #{stacked_conv_layers.1} parent=5 // pred_region
      // Predicated region
      $region33: #{stacked_conv_layers.1} parent=31 // pred_check
        %p178 = pneg %p31
      $region34: #{stacked_conv_layers.1} parent=31 // pred_check_branch
        %180 = sbr.rel (%p178) target = $region36
      $region35: #{stacked_conv_layers.1} parent=31 // pred_region
        %p181 = scmp.lt.s32.totalorder %s11, 1
        %s182 = scalar_select %p181, %s11, 1
        %s183 = smul.addr %s182, 42
        %s184 = smul.addr %s183, 4
        %s185 = scalar_lea.vmem %s0, %s184
      $region36: #{stacked_conv_layers.1} parent=31 // pred_fallthru
        _
    $region32: #{stacked_conv_layers.1} parent=5 // pred_fallthru
      _
    %p186 = scmp.le.s32.totalorder 1, %s11
    %p187 = scmp.lt.s32.totalorder %s11, 3
    %p188 = pnand %p186, %p187
    %p189 = pneg %p188
    // Predicated region
    $region37: #{stacked_conv_layers.1} parent=5 // pred_check
      _
    $region38: #{stacked_conv_layers.1} parent=5 // pred_check_branch
      %191 = sbr.rel (%p188) target = $region40
    $region39: #{stacked_conv_layers.1} parent=5 // pred_region
      %s192 = ssub.s32 %s11, 1
      %p193 = scmp.lt.s32.totalorder %s16, 1
      %s194 = scalar_select %p193, %s16, 1
      %s195 = smul.addr %s194, 42
      %s196 = smul.addr %s195, 4
      %s197 = scalar_lea.vmem %s0, %s196
      %p198 = pneg %p37
      %p199 = pneg %p34
      %p200 = pneg %p58
      %p201 = pneg %p55
      %p202 = pneg %p79
      %p203 = pneg %p76
      %p204 = pneg %p100
      %p205 = pneg %p97
      %p206 = pneg %p121
      %p207 = pneg %p118
      %p208 = pneg %p147
      %p209 = pneg %p144
      %p210 = scmp.lt.s32.totalorder %s16, 1
      %s211 = scalar_select %p210, %s16, 1
      %s212 = smul.addr %s211, 36
      %s213 = smul.addr %s212, 4
      %s214 = scalar_lea.vmem %s5, %s213
      %p215 = scmp.lt.s32.totalorder %s16, 1
      %s216 = scalar_select %p215, %s16, 1
      %s217 = smul.addr %s216, 42
      %s218 = smul.addr %s217, 4
      %s219 = scalar_lea.vmem %s0, %s218
      %p220 = scmp.lt.s32.totalorder %s16, 1
      %s221 = scalar_select %p220, %s16, 1
      %s222 = smul.addr %s221, 36
      %s223 = smul.addr %s222, 4
      %s224 = scalar_lea.vmem %s5, %s223
      %226 = vst [vmem:[#allocation2] sm:$0xf] 0
      %227 = vst [vmem:[#allocation2 + $0x4] sm:$0xf] 0
      %228 = vst [vmem:[#allocation2 + $0x8] sm:$0xf] 0
      %229 = vst [vmem:[#allocation2 + $0xc] sm:$0xf] 0
      %230 = vst [vmem:[#allocation2 + $0xa0] sm:$0xf] 0
      %231 = vst [vmem:[#allocation2 + $0xa4] sm:$0xf] 0
      %232 = vst [vmem:[#allocation2 + $0xa8] sm:$0xf] 0
      %233 = vst [vmem:[#allocation2 + $0xac] sm:$0xf] 0
      %v234 = vld [vmem:[%s219] sm:$0xf]
      %v235 = vld [vmem:[%s219 + $0x4] sm:$0xf]
      %v236 = vld [vmem:[%s219 + $0x8] sm:$0xf]
      %v237 = vld [vmem:[%s219 + $0xc] sm:$0xf]
      %v238 = vld [vmem:[%s219 + $0x10] sm:$0xf]
      %v239 = vld [vmem:[%s219 + $0x14] sm:$0xf]
      %v240 = vld [vmem:[%s219 + $0x18] sm:$0xf]
      %v241 = vld [vmem:[%s219 + $0x1c] sm:$0xf]
      %v242 = vld [vmem:[%s219 + $0x20] sm:$0xf]
      %v243 = vld [vmem:[%s219 + $0x24] sm:$0xf]
      %v244 = vld [vmem:[%s219 + $0x28] sm:$0xf]
      %v245 = vld [vmem:[%s219 + $0x2c] sm:$0xf]
      %v246 = vld [vmem:[%s219 + $0x30] sm:$0xf]
      %v247 = vld [vmem:[%s219 + $0x34] sm:$0xf]
      %v248 = vld [vmem:[%s219 + $0x38] sm:$0xf]
      %v249 = vld [vmem:[%s219 + $0x3c] sm:$0xf]
      %v250 = vld [vmem:[%s219 + $0x40] sm:$0xf]
      %v251 = vld [vmem:[%s219 + $0x44] sm:$0xf]
      %vm252 = vcmask 60416
      %253 = vst.msk [vmem:[#allocation3] sm:$0xf] %vm252, %v234
      %254 = vst.msk [vmem:[#allocation3 + $0x4] sm:$0xf] %vm252, %v235
      %255 = vst.msk [vmem:[#allocation3 + $0x8] sm:$0xf] %vm252, %v236
      %256 = vst.msk [vmem:[#allocation3 + $0xc] sm:$0xf] %vm252, %v237
      %257 = vst.msk [vmem:[#allocation3 + $0x10] sm:$0xf] %vm252, %v238
      %258 = vst.msk [vmem:[#allocation3 + $0x14] sm:$0xf] %vm252, %v239
      %259 = vst.msk [vmem:[#allocation3 + $0x18] sm:$0xf] %vm252, %v240
      %260 = vst.msk [vmem:[#allocation3 + $0x1c] sm:$0xf] %vm252, %v241
      %261 = vst.msk [vmem:[#allocation3 + $0x20] sm:$0xf] %vm252, %v242
      %262 = vst.msk [vmem:[#allocation3 + $0x24] sm:$0xf] %vm252, %v243
      %263 = vst.msk [vmem:[#allocation3 + $0x28] sm:$0xf] %vm252, %v244
      %264 = vst.msk [vmem:[#allocation3 + $0x2c] sm:$0xf] %vm252, %v245
      %265 = vst.msk [vmem:[#allocation3 + $0x30] sm:$0xf] %vm252, %v246
      %266 = vst.msk [vmem:[#allocation3 + $0x34] sm:$0xf] %vm252, %v247
      %267 = vst.msk [vmem:[#allocation3 + $0x38] sm:$0xf] %vm252, %v248
      %268 = vst.msk [vmem:[#allocation3 + $0x3c] sm:$0xf] %vm252, %v249
      %269 = vst.msk [vmem:[#allocation3 + $0x40] sm:$0xf] %vm252, %v250
      %270 = vst.msk [vmem:[#allocation3 + $0x44] sm:$0xf] %vm252, %v251
      %v271 = vld [vmem:[%s219] sm:$0xf]
      %v272 = vld [vmem:[%s219 + $0x4] sm:$0xf]
      %v273 = vld [vmem:[%s219 + $0x8] sm:$0xf]
      %v274 = vld [vmem:[%s219 + $0xc] sm:$0xf]
      %v275 = vld [vmem:[%s219 + $0x10] sm:$0xf]
      %v276 = vld [vmem:[%s219 + $0x14] sm:$0xf]
      %v277 = vld [vmem:[%s219 + $0x18] sm:$0xf]
      %v278 = vld [vmem:[%s219 + $0x1c] sm:$0xf]
      %v279 = vld [vmem:[%s219 + $0x20] sm:$0xf]
      %v280 = vld [vmem:[%s219 + $0x24] sm:$0xf]
      %v281 = vld [vmem:[%s219 + $0x28] sm:$0xf]
      %v282 = vld [vmem:[%s219 + $0x2c] sm:$0xf]
      %v283 = vld [vmem:[%s219 + $0x30] sm:$0xf]
      %v284 = vld [vmem:[%s219 + $0x34] sm:$0xf]
      %v285 = vld [vmem:[%s219 + $0x38] sm:$0xf]
      %v286 = vld [vmem:[%s219 + $0x3c] sm:$0xf]
      %v287 = vld [vmem:[%s219 + $0x40] sm:$0xf]
      %v288 = vld [vmem:[%s219 + $0x44] sm:$0xf]
      %v289 = vld [vmem:[%s219 + $0x48] sm:$0x1]
      %vm290 = vsmask.f32 3328
      %vm291 = vsmask.f32 7440
      %vm292 = vmor %vm290, %vm291
      %v294 = vshrl.u32 %v271, 16
      %v296 = vrot.slane %v294, 4
      %v297 = vshll.u32 %v271, 16
      %v299 = vrot.slane %v297, 5
      %v300 = vor.u32 %v296, %v299
      %v301 = vrot.slane %v300, 4
      %v303 = vshll.u32 %v272, 16
      %v305 = vrot.slane %v303, 5
      %v306 = vsel %vm292, %v301, %v305
      %v307 = vshrl.u32 %v272, 16
      %v309 = vrot.slane %v307, 4
      %v310 = vor.u32 %v309, %v305
      %v311 = vrot.slane %v310, 4
      %v313 = vshll.u32 %v273, 16
      %v315 = vrot.slane %v313, 5
      %v316 = vsel %vm292, %v311, %v315
      %v317 = vshrl.u32 %v273, 16
      %v319 = vrot.slane %v317, 4
      %v320 = vor.u32 %v319, %v315
      %v321 = vrot.slane %v320, 4
      %v323 = vshll.u32 %v274, 16
      %v325 = vrot.slane %v323, 5
      %v326 = vsel %vm292, %v321, %v325
      %v327 = vshrl.u32 %v274, 16
      %v329 = vrot.slane %v327, 4
      %v330 = vor.u32 %v329, %v325
      %v331 = vrot.slane %v330, 4
      %v333 = vshll.u32 %v275, 16
      %v335 = vrot.slane %v333, 5
      %v336 = vsel %vm292, %v331, %v335
      %v337 = vshrl.u32 %v275, 16
      %v339 = vrot.slane %v337, 4
      %v340 = vor.u32 %v339, %v335
      %v341 = vrot.slane %v340, 4
      %v343 = vshll.u32 %v276, 16
      %v345 = vrot.slane %v343, 5
      %v346 = vsel %vm292, %v341, %v345
      %v347 = vshrl.u32 %v276, 16
      %v349 = vrot.slane %v347, 4
      %v350 = vor.u32 %v349, %v345
      %v351 = vrot.slane %v350, 4
      %v353 = vshll.u32 %v277, 16
      %v355 = vrot.slane %v353, 5
      %v356 = vsel %vm292, %v351, %v355
      %v357 = vshrl.u32 %v277, 16
      %v359 = vrot.slane %v357, 4
      %v360 = vor.u32 %v359, %v355
      %v361 = vrot.slane %v360, 4
      %v363 = vshll.u32 %v278, 16
      %v365 = vrot.slane %v363, 5
      %v366 = vsel %vm292, %v361, %v365
      %v367 = vshrl.u32 %v278, 16
      %v369 = vrot.slane %v367, 4
      %v370 = vor.u32 %v369, %v365
      %v371 = vrot.slane %v370, 4
      %v373 = vshll.u32 %v279, 16
      %v375 = vrot.slane %v373, 5
      %v376 = vsel %vm292, %v371, %v375
      %v377 = vshrl.u32 %v279, 16
      %v379 = vrot.slane %v377, 4
      %v380 = vor.u32 %v379, %v375
      %v381 = vrot.slane %v380, 4
      %v383 = vshll.u32 %v280, 16
      %v385 = vrot.slane %v383, 5
      %v386 = vsel %vm292, %v381, %v385
      %v387 = vshrl.u32 %v280, 16
      %v389 = vrot.slane %v387, 4
      %v390 = vor.u32 %v389, %v385
      %v391 = vrot.slane %v390, 4
      %v393 = vshll.u32 %v281, 16
      %v395 = vrot.slane %v393, 5
      %v396 = vsel %vm292, %v391, %v395
      %v397 = vshrl.u32 %v281, 16
      %v399 = vrot.slane %v397, 4
      %v400 = vor.u32 %v399, %v395
      %v401 = vrot.slane %v400, 4
      %v403 = vshll.u32 %v282, 16
      %v405 = vrot.slane %v403, 5
      %v406 = vsel %vm292, %v401, %v405
      %v407 = vshrl.u32 %v282, 16
      %v409 = vrot.slane %v407, 4
      %v410 = vor.u32 %v409, %v405
      %v411 = vrot.slane %v410, 4
      %v413 = vshll.u32 %v283, 16
      %v415 = vrot.slane %v413, 5
      %v416 = vsel %vm292, %v411, %v415
      %v417 = vshrl.u32 %v283, 16
      %v419 = vrot.slane %v417, 4
      %v420 = vor.u32 %v419, %v415
      %v421 = vrot.slane %v420, 4
      %v423 = vshll.u32 %v284, 16
      %v425 = vrot.slane %v423, 5
      %v426 = vsel %vm292, %v421, %v425
      %v427 = vshrl.u32 %v284, 16
      %v429 = vrot.slane %v427, 4
      %v430 = vor.u32 %v429, %v425
      %v431 = vrot.slane %v430, 4
      %v433 = vshll.u32 %v285, 16
      %v435 = vrot.slane %v433, 5
      %v436 = vsel %vm292, %v431, %v435
      %v437 = vshrl.u32 %v285, 16
      %v439 = vrot.slane %v437, 4
      %v440 = vor.u32 %v439, %v435
      %v441 = vrot.slane %v440, 4
      %v443 = vshll.u32 %v286, 16
      %v445 = vrot.slane %v443, 5
      %v446 = vsel %vm292, %v441, %v445
      %v447 = vshrl.u32 %v286, 16
      %v449 = vrot.slane %v447, 4
      %v450 = vor.u32 %v449, %v445
      %v451 = vrot.slane %v450, 4
      %v453 = vshll.u32 %v287, 16
      %v455 = vrot.slane %v453, 5
      %v456 = vsel %vm292, %v451, %v455
      %v457 = vshrl.u32 %v287, 16
      %v459 = vrot.slane %v457, 4
      %v460 = vor.u32 %v459, %v455
      %v461 = vrot.slane %v460, 4
      %v463 = vshll.u32 %v288, 16
      %v465 = vrot.slane %v463, 5
      %v466 = vsel %vm292, %v461, %v465
      %v467 = vshrl.u32 %v288, 16
      %v469 = vrot.slane %v467, 4
      %v470 = vor.u32 %v469, %v465
      %v471 = vrot.slane %v470, 4
      %v473 = vshll.u32 %v289, 16
      %v475 = vrot.slane %v473, 5
      %v476 = vsel %vm292, %v471, %v475
      %477 = vrot.lane.b32.xlu0 %v306, 8
      %v478 = vpop.permute.xlu0 %477
      %479 = vrot.lane.b32.xlu0 %v316, 8
      %v480 = vpop.permute.xlu0 %479
      %481 = vrot.lane.b32.xlu0 %v326, 8
      %v482 = vpop.permute.xlu0 %481
      %483 = vrot.lane.b32.xlu0 %v336, 8
      %v484 = vpop.permute.xlu0 %483
      %485 = vrot.lane.b32.xlu0 %v346, 8
      %v486 = vpop.permute.xlu0 %485
      %487 = vrot.lane.b32.xlu0 %v356, 8
      %v488 = vpop.permute.xlu0 %487
      %489 = vrot.lane.b32.xlu0 %v366, 8
      %v490 = vpop.permute.xlu0 %489
      %491 = vrot.lane.b32.xlu0 %v376, 8
      %v492 = vpop.permute.xlu0 %491
      %493 = vrot.lane.b32.xlu0 %v386, 8
      %v494 = vpop.permute.xlu0 %493
      %495 = vrot.lane.b32.xlu0 %v396, 8
      %v496 = vpop.permute.xlu0 %495
      %497 = vrot.lane.b32.xlu0 %v406, 8
      %v498 = vpop.permute.xlu0 %497
      %499 = vrot.lane.b32.xlu0 %v416, 8
      %v500 = vpop.permute.xlu0 %499
      %501 = vrot.lane.b32.xlu0 %v426, 8
      %v502 = vpop.permute.xlu0 %501
      %503 = vrot.lane.b32.xlu0 %v436, 8
      %v504 = vpop.permute.xlu0 %503
      %505 = vrot.lane.b32.xlu0 %v446, 8
      %v506 = vpop.permute.xlu0 %505
      %507 = vrot.lane.b32.xlu0 %v456, 8
      %v508 = vpop.permute.xlu0 %507
      %509 = vrot.lane.b32.xlu0 %v466, 8
      %v510 = vpop.permute.xlu0 %509
      %511 = vrot.lane.b32.xlu0 %v476, 8
      %v512 = vpop.permute.xlu0 %511
      %vm531 = vcmask 126016
      %532 = vst.msk [vmem:[#allocation3] sm:$0xf] %vm531, %v478
      %533 = vst.msk [vmem:[#allocation3 + $0x4] sm:$0xf] %vm531, %v480
      %534 = vst.msk [vmem:[#allocation3 + $0x8] sm:$0xf] %vm531, %v482
      %535 = vst.msk [vmem:[#allocation3 + $0xc] sm:$0xf] %vm531, %v484
      %536 = vst.msk [vmem:[#allocation3 + $0x10] sm:$0xf] %vm531, %v486
      %537 = vst.msk [vmem:[#allocation3 + $0x14] sm:$0xf] %vm531, %v488
      %538 = vst.msk [vmem:[#allocation3 + $0x18] sm:$0xf] %vm531, %v490
      %539 = vst.msk [vmem:[#allocation3 + $0x1c] sm:$0xf] %vm531, %v492
      %540 = vst.msk [vmem:[#allocation3 + $0x20] sm:$0xf] %vm531, %v494
      %541 = vst.msk [vmem:[#allocation3 + $0x24] sm:$0xf] %vm531, %v496
      %542 = vst.msk [vmem:[#allocation3 + $0x28] sm:$0xf] %vm531, %v498
      %543 = vst.msk [vmem:[#allocation3 + $0x2c] sm:$0xf] %vm531, %v500
      %544 = vst.msk [vmem:[#allocation3 + $0x30] sm:$0xf] %vm531, %v502
      %545 = vst.msk [vmem:[#allocation3 + $0x34] sm:$0xf] %vm531, %v504
      %546 = vst.msk [vmem:[#allocation3 + $0x38] sm:$0xf] %vm531, %v506
      %547 = vst.msk [vmem:[#allocation3 + $0x3c] sm:$0xf] %vm531, %v508
      %548 = vst.msk [vmem:[#allocation3 + $0x40] sm:$0xf] %vm531, %v510
      %549 = vst.msk [vmem:[#allocation3 + $0x44] sm:$0xf] %vm531, %v512
      %v550 = vld [vmem:[%s219] sm:$0xe]
      %v551 = vld [vmem:[%s219 + $0x4] sm:$0xf]
      %v552 = vld [vmem:[%s219 + $0x8] sm:$0xf]
      %v553 = vld [vmem:[%s219 + $0xc] sm:$0xf]
      %v554 = vld [vmem:[%s219 + $0x10] sm:$0xf]
      %v555 = vld [vmem:[%s219 + $0x14] sm:$0xf]
      %v556 = vld [vmem:[%s219 + $0x18] sm:$0xf]
      %v557 = vld [vmem:[%s219 + $0x1c] sm:$0xf]
      %v558 = vld [vmem:[%s219 + $0x20] sm:$0xf]
      %v559 = vld [vmem:[%s219 + $0x24] sm:$0xf]
      %v560 = vld [vmem:[%s219 + $0x28] sm:$0xf]
      %v561 = vld [vmem:[%s219 + $0x2c] sm:$0xf]
      %v562 = vld [vmem:[%s219 + $0x30] sm:$0xf]
      %v563 = vld [vmem:[%s219 + $0x34] sm:$0xf]
      %v564 = vld [vmem:[%s219 + $0x38] sm:$0xf]
      %v565 = vld [vmem:[%s219 + $0x3c] sm:$0xf]
      %v566 = vld [vmem:[%s219 + $0x40] sm:$0xf]
      %v567 = vld [vmem:[%s219 + $0x44] sm:$0xf]
      %v568 = vld [vmem:[%s219 + $0x48] sm:$0x1]
      %vm588 = vcmask 1042432
      %vm589 = vcmask 1046532
      %vm590 = vmor %vm588, %vm589
      %v591 = vrot.slane %v550, 5
      %v592 = vrot.slane %v591, 4
      %v593 = vrot.slane %v551, 5
      %v594 = vsel %vm590, %v592, %v593
      %v595 = vrot.slane %v593, 4
      %v596 = vrot.slane %v552, 5
      %v597 = vsel %vm590, %v595, %v596
      %v598 = vrot.slane %v596, 4
      %v599 = vrot.slane %v553, 5
      %v600 = vsel %vm590, %v598, %v599
      %v601 = vrot.slane %v599, 4
      %v602 = vrot.slane %v554, 5
      %v603 = vsel %vm590, %v601, %v602
      %v604 = vrot.slane %v602, 4
      %v605 = vrot.slane %v555, 5
      %v606 = vsel %vm590, %v604, %v605
      %v607 = vrot.slane %v605, 4
      %v608 = vrot.slane %v556, 5
      %v609 = vsel %vm590, %v607, %v608
      %v610 = vrot.slane %v608, 4
      %v611 = vrot.slane %v557, 5
      %v612 = vsel %vm590, %v610, %v611
      %v613 = vrot.slane %v611, 4
      %v614 = vrot.slane %v558, 5
      %v615 = vsel %vm590, %v613, %v614
      %v616 = vrot.slane %v614, 4
      %v617 = vrot.slane %v559, 5
      %v618 = vsel %vm590, %v616, %v617
      %v619 = vrot.slane %v617, 4
      %v620 = vrot.slane %v560, 5
      %v621 = vsel %vm590, %v619, %v620
      %v622 = vrot.slane %v620, 4
      %v623 = vrot.slane %v561, 5
      %v624 = vsel %vm590, %v622, %v623
      %v625 = vrot.slane %v623, 4
      %v626 = vrot.slane %v562, 5
      %v627 = vsel %vm590, %v625, %v626
      %v628 = vrot.slane %v626, 4
      %v629 = vrot.slane %v563, 5
      %v630 = vsel %vm590, %v628, %v629
      %v631 = vrot.slane %v629, 4
      %v632 = vrot.slane %v564, 5
      %v633 = vsel %vm590, %v631, %v632
      %v634 = vrot.slane %v632, 4
      %v635 = vrot.slane %v565, 5
      %v636 = vsel %vm590, %v634, %v635
      %v637 = vrot.slane %v635, 4
      %v638 = vrot.slane %v566, 5
      %v639 = vsel %vm590, %v637, %v638
      %v640 = vrot.slane %v638, 4
      %v641 = vrot.slane %v567, 5
      %v642 = vsel %vm590, %v640, %v641
      %v643 = vrot.slane %v641, 4
      %v644 = vrot.slane %v568, 5
      %v645 = vsel %vm590, %v643, %v644
      %646 = vrot.lane.b32.xlu0 %v594, 16
      %v647 = vpop.permute.xlu0 %646
      %648 = vrot.lane.b32.xlu0 %v597, 16
      %v649 = vpop.permute.xlu0 %648
      %650 = vrot.lane.b32.xlu0 %v600, 16
      %v651 = vpop.permute.xlu0 %650
      %652 = vrot.lane.b32.xlu0 %v603, 16
      %v653 = vpop.permute.xlu0 %652
      %654 = vrot.lane.b32.xlu0 %v606, 16
      %v655 = vpop.permute.xlu0 %654
      %656 = vrot.lane.b32.xlu0 %v609, 16
      %v657 = vpop.permute.xlu0 %656
      %658 = vrot.lane.b32.xlu0 %v612, 16
      %v659 = vpop.permute.xlu0 %658
      %660 = vrot.lane.b32.xlu0 %v615, 16
      %v661 = vpop.permute.xlu0 %660
      %662 = vrot.lane.b32.xlu0 %v618, 16
      %v663 = vpop.permute.xlu0 %662
      %664 = vrot.lane.b32.xlu0 %v621, 16
      %v665 = vpop.permute.xlu0 %664
      %666 = vrot.lane.b32.xlu0 %v624, 16
      %v667 = vpop.permute.xlu0 %666
      %668 = vrot.lane.b32.xlu0 %v627, 16
      %v669 = vpop.permute.xlu0 %668
      %670 = vrot.lane.b32.xlu0 %v630, 16
      %v671 = vpop.permute.xlu0 %670
      %672 = vrot.lane.b32.xlu0 %v633, 16
      %v673 = vpop.permute.xlu0 %672
      %674 = vrot.lane.b32.xlu0 %v636, 16
      %v675 = vpop.permute.xlu0 %674
      %676 = vrot.lane.b32.xlu0 %v639, 16
      %v677 = vpop.permute.xlu0 %676
      %678 = vrot.lane.b32.xlu0 %v642, 16
      %v679 = vpop.permute.xlu0 %678
      %680 = vrot.lane.b32.xlu0 %v645, 16
      %v681 = vpop.permute.xlu0 %680
      %vm700 = vcmask 191616
      %701 = vst.msk [vmem:[#allocation3] sm:$0xf] %vm700, %v647
      %702 = vst.msk [vmem:[#allocation3 + $0x4] sm:$0xf] %vm700, %v649
      %703 = vst.msk [vmem:[#allocation3 + $0x8] sm:$0xf] %vm700, %v651
      %704 = vst.msk [vmem:[#allocation3 + $0xc] sm:$0xf] %vm700, %v653
      %705 = vst.msk [vmem:[#allocation3 + $0x10] sm:$0xf] %vm700, %v655
      %706 = vst.msk [vmem:[#allocation3 + $0x14] sm:$0xf] %vm700, %v657
      %707 = vst.msk [vmem:[#allocation3 + $0x18] sm:$0xf] %vm700, %v659
      %708 = vst.msk [vmem:[#allocation3 + $0x1c] sm:$0xf] %vm700, %v661
      %709 = vst.msk [vmem:[#allocation3 + $0x20] sm:$0xf] %vm700, %v663
      %710 = vst.msk [vmem:[#allocation3 + $0x24] sm:$0xf] %vm700, %v665
      %711 = vst.msk [vmem:[#allocation3 + $0x28] sm:$0xf] %vm700, %v667
      %712 = vst.msk [vmem:[#allocation3 + $0x2c] sm:$0xf] %vm700, %v669
      %713 = vst.msk [vmem:[#allocation3 + $0x30] sm:$0xf] %vm700, %v671
      %714 = vst.msk [vmem:[#allocation3 + $0x34] sm:$0xf] %vm700, %v673
      %715 = vst.msk [vmem:[#allocation3 + $0x38] sm:$0xf] %vm700, %v675
      %716 = vst.msk [vmem:[#allocation3 + $0x3c] sm:$0xf] %vm700, %v677
      %717 = vst.msk [vmem:[#allocation3 + $0x40] sm:$0xf] %vm700, %v679
      %718 = vst.msk [vmem:[#allocation3 + $0x44] sm:$0xf] %vm700, %v681
      %v719 = vld [vmem:[%s219 + $0x8] sm:$0xe]
      %v720 = vld [vmem:[%s219 + $0xc] sm:$0xf]
      %v721 = vld [vmem:[%s219 + $0x10] sm:$0xf]
      %v722 = vld [vmem:[%s219 + $0x14] sm:$0xf]
      %v723 = vld [vmem:[%s219 + $0x18] sm:$0xf]
      %v724 = vld [vmem:[%s219 + $0x1c] sm:$0xf]
      %v725 = vld [vmem:[%s219 + $0x20] sm:$0xf]
      %v726 = vld [vmem:[%s219 + $0x24] sm:$0xf]
      %v727 = vld [vmem:[%s219 + $0x28] sm:$0xf]
      %v728 = vld [vmem:[%s219 + $0x2c] sm:$0xf]
      %v729 = vld [vmem:[%s219 + $0x30] sm:$0xf]
      %v730 = vld [vmem:[%s219 + $0x34] sm:$0xf]
      %v731 = vld [vmem:[%s219 + $0x38] sm:$0xf]
      %v732 = vld [vmem:[%s219 + $0x3c] sm:$0xf]
      %v733 = vld [vmem:[%s219 + $0x40] sm:$0xf]
      %v734 = vld [vmem:[%s219 + $0x44] sm:$0xf]
      %v735 = vld [vmem:[%s219 + $0x48] sm:$0xf]
      %v736 = vld [vmem:[%s219 + $0x4c] sm:$0xf]
      %v737 = vld [vmem:[%s219 + $0x50] sm:$0x1]
      %v757 = vrot.slane %v719, 5
      %v758 = vrot.slane %v757, 4
      %v759 = vrot.slane %v720, 5
      %v760 = vsel %vm590, %v758, %v759
      %v761 = vrot.slane %v759, 4
      %v762 = vrot.slane %v721, 5
      %v763 = vsel %vm590, %v761, %v762
      %v764 = vrot.slane %v762, 4
      %v765 = vrot.slane %v722, 5
      %v766 = vsel %vm590, %v764, %v765
      %v767 = vrot.slane %v765, 4
      %v768 = vrot.slane %v723, 5
      %v769 = vsel %vm590, %v767, %v768
      %v770 = vrot.slane %v768, 4
      %v771 = vrot.slane %v724, 5
      %v772 = vsel %vm590, %v770, %v771
      %v773 = vrot.slane %v771, 4
      %v774 = vrot.slane %v725, 5
      %v775 = vsel %vm590, %v773, %v774
      %v776 = vrot.slane %v774, 4
      %v777 = vrot.slane %v726, 5
      %v778 = vsel %vm590, %v776, %v777
      %v779 = vrot.slane %v777, 4
      %v780 = vrot.slane %v727, 5
      %v781 = vsel %vm590, %v779, %v780
      %v782 = vrot.slane %v780, 4
      %v783 = vrot.slane %v728, 5
      %v784 = vsel %vm590, %v782, %v783
      %v785 = vrot.slane %v783, 4
      %v786 = vrot.slane %v729, 5
      %v787 = vsel %vm590, %v785, %v786
      %v788 = vrot.slane %v786, 4
      %v789 = vrot.slane %v730, 5
      %v790 = vsel %vm590, %v788, %v789
      %v791 = vrot.slane %v789, 4
      %v792 = vrot.slane %v731, 5
      %v793 = vsel %vm590, %v791, %v792
      %v794 = vrot.slane %v792, 4
      %v795 = vrot.slane %v732, 5
      %v796 = vsel %vm590, %v794, %v795
      %v797 = vrot.slane %v795, 4
      %v798 = vrot.slane %v733, 5
      %v799 = vsel %vm590, %v797, %v798
      %v800 = vrot.slane %v798, 4
      %v801 = vrot.slane %v734, 5
      %v802 = vsel %vm590, %v800, %v801
      %v803 = vrot.slane %v801, 4
      %v804 = vrot.slane %v735, 5
      %v805 = vsel %vm590, %v803, %v804
      %v806 = vrot.slane %v804, 4
      %v807 = vrot.slane %v736, 5
      %v808 = vsel %vm590, %v806, %v807
      %v809 = vrot.slane %v807, 4
      %v810 = vrot.slane %v737, 5
      %v811 = vsel %vm590, %v809, %v810
      %812 = vrot.lane.b32.xlu0 %v760, 24
      %v813 = vpop.permute.xlu0 %812
      %814 = vrot.lane.b32.xlu0 %v763, 24
      %v815 = vpop.permute.xlu0 %814
      %816 = vrot.lane.b32.xlu0 %v766, 24
      %v817 = vpop.permute.xlu0 %816
      %818 = vrot.lane.b32.xlu0 %v769, 24
      %v819 = vpop.permute.xlu0 %818
      %820 = vrot.lane.b32.xlu0 %v772, 24
      %v821 = vpop.permute.xlu0 %820
      %822 = vrot.lane.b32.xlu0 %v775, 24
      %v823 = vpop.permute.xlu0 %822
      %824 = vrot.lane.b32.xlu0 %v778, 24
      %v825 = vpop.permute.xlu0 %824
      %826 = vrot.lane.b32.xlu0 %v781, 24
      %v827 = vpop.permute.xlu0 %826
      %828 = vrot.lane.b32.xlu0 %v784, 24
      %v829 = vpop.permute.xlu0 %828
      %830 = vrot.lane.b32.xlu0 %v787, 24
      %v831 = vpop.permute.xlu0 %830
      %832 = vrot.lane.b32.xlu0 %v790, 24
      %v833 = vpop.permute.xlu0 %832
      %834 = vrot.lane.b32.xlu0 %v793, 24
      %v835 = vpop.permute.xlu0 %834
      %836 = vrot.lane.b32.xlu0 %v796, 24
      %v837 = vpop.permute.xlu0 %836
      %838 = vrot.lane.b32.xlu0 %v799, 24
      %v839 = vpop.permute.xlu0 %838
      %840 = vrot.lane.b32.xlu0 %v802, 24
      %v841 = vpop.permute.xlu0 %840
      %842 = vrot.lane.b32.xlu0 %v805, 24
      %v843 = vpop.permute.xlu0 %842
      %844 = vrot.lane.b32.xlu0 %v808, 24
      %v845 = vpop.permute.xlu0 %844
      %846 = vrot.lane.b32.xlu0 %v811, 24
      %v847 = vpop.permute.xlu0 %846
      %vm866 = vcmask 257216
      %867 = vst.msk [vmem:[#allocation3] sm:$0xf] %vm866, %v813
      %868 = vst.msk [vmem:[#allocation3 + $0x4] sm:$0xf] %vm866, %v815
      %869 = vst.msk [vmem:[#allocation3 + $0x8] sm:$0xf] %vm866, %v817
      %870 = vst.msk [vmem:[#allocation3 + $0xc] sm:$0xf] %vm866, %v819
      %871 = vst.msk [vmem:[#allocation3 + $0x10] sm:$0xf] %vm866, %v821
      %872 = vst.msk [vmem:[#allocation3 + $0x14] sm:$0xf] %vm866, %v823
      %873 = vst.msk [vmem:[#allocation3 + $0x18] sm:$0xf] %vm866, %v825
      %874 = vst.msk [vmem:[#allocation3 + $0x1c] sm:$0xf] %vm866, %v827
      %875 = vst.msk [vmem:[#allocation3 + $0x20] sm:$0xf] %vm866, %v829
      %876 = vst.msk [vmem:[#allocation3 + $0x24] sm:$0xf] %vm866, %v831
      %877 = vst.msk [vmem:[#allocation3 + $0x28] sm:$0xf] %vm866, %v833
      %878 = vst.msk [vmem:[#allocation3 + $0x2c] sm:$0xf] %vm866, %v835
      %879 = vst.msk [vmem:[#allocation3 + $0x30] sm:$0xf] %vm866, %v837
      %880 = vst.msk [vmem:[#allocation3 + $0x34] sm:$0xf] %vm866, %v839
      %881 = vst.msk [vmem:[#allocation3 + $0x38] sm:$0xf] %vm866, %v841
      %882 = vst.msk [vmem:[#allocation3 + $0x3c] sm:$0xf] %vm866, %v843
      %883 = vst.msk [vmem:[#allocation3 + $0x40] sm:$0xf] %vm866, %v845
      %884 = vst.msk [vmem:[#allocation3 + $0x44] sm:$0xf] %vm866, %v847
      %v885 = vld [vmem:[%s219 + $0x8] sm:$0xe]
      %v886 = vld [vmem:[%s219 + $0xc] sm:$0xf]
      %v887 = vld [vmem:[%s219 + $0x10] sm:$0xf]
      %v888 = vld [vmem:[%s219 + $0x14] sm:$0xf]
      %v889 = vld [vmem:[%s219 + $0x18] sm:$0xf]
      %v890 = vld [vmem:[%s219 + $0x1c] sm:$0xf]
      %v891 = vld [vmem:[%s219 + $0x20] sm:$0xf]
      %v892 = vld [vmem:[%s219 + $0x24] sm:$0xf]
      %v893 = vld [vmem:[%s219 + $0x28] sm:$0xf]
      %v894 = vld [vmem:[%s219 + $0x2c] sm:$0xf]
      %v895 = vld [vmem:[%s219 + $0x30] sm:$0xf]
      %v896 = vld [vmem:[%s219 + $0x34] sm:$0xf]
      %v897 = vld [vmem:[%s219 + $0x38] sm:$0xf]
      %v898 = vld [vmem:[%s219 + $0x3c] sm:$0xf]
      %v899 = vld [vmem:[%s219 + $0x40] sm:$0xf]
      %v900 = vld [vmem:[%s219 + $0x44] sm:$0xf]
      %v901 = vld [vmem:[%s219 + $0x48] sm:$0xf]
      %v902 = vld [vmem:[%s219 + $0x4c] sm:$0xf]
      %v903 = vld [vmem:[%s219 + $0x50] sm:$0x3]
      %vm904 = vsmask.f32 2304
      %vm905 = vsmask.f32 6416
      %vm906 = vmor %vm904, %vm905
      %v908 = vshrl.u32 %v885, 16
      %v910 = vrot.slane %v908, 5
      %v911 = vshll.u32 %v885, 16
      %v913 = vrot.slane %v911, 6
      %v914 = vor.u32 %v910, %v913
      %v915 = vrot.slane %v914, 4
      %v917 = vshrl.u32 %v886, 16
      %v919 = vrot.slane %v917, 5
      %v920 = vshll.u32 %v886, 16
      %v922 = vrot.slane %v920, 6
      %v923 = vor.u32 %v919, %v922
      %v924 = vsel %vm906, %v915, %v923
      %v925 = vrot.slane %v923, 4
      %v927 = vshrl.u32 %v887, 16
      %v929 = vrot.slane %v927, 5
      %v930 = vshll.u32 %v887, 16
      %v932 = vrot.slane %v930, 6
      %v933 = vor.u32 %v929, %v932
      %v934 = vsel %vm906, %v925, %v933
      %v935 = vrot.slane %v933, 4
      %v937 = vshrl.u32 %v888, 16
      %v939 = vrot.slane %v937, 5
      %v940 = vshll.u32 %v888, 16
      %v942 = vrot.slane %v940, 6
      %v943 = vor.u32 %v939, %v942
      %v944 = vsel %vm906, %v935, %v943
      %v945 = vrot.slane %v943, 4
      %v947 = vshrl.u32 %v889, 16
      %v949 = vrot.slane %v947, 5
      %v950 = vshll.u32 %v889, 16
      %v952 = vrot.slane %v950, 6
      %v953 = vor.u32 %v949, %v952
      %v954 = vsel %vm906, %v945, %v953
      %v955 = vrot.slane %v953, 4
      %v957 = vshrl.u32 %v890, 16
      %v959 = vrot.slane %v957, 5
      %v960 = vshll.u32 %v890, 16
      %v962 = vrot.slane %v960, 6
      %v963 = vor.u32 %v959, %v962
      %v964 = vsel %vm906, %v955, %v963
      %v965 = vrot.slane %v963, 4
      %v967 = vshrl.u32 %v891, 16
      %v969 = vrot.slane %v967, 5
      %v970 = vshll.u32 %v891, 16
      %v972 = vrot.slane %v970, 6
      %v973 = vor.u32 %v969, %v972
      %v974 = vsel %vm906, %v965, %v973
      %v975 = vrot.slane %v973, 4
      %v977 = vshrl.u32 %v892, 16
      %v979 = vrot.slane %v977, 5
      %v980 = vshll.u32 %v892, 16
      %v982 = vrot.slane %v980, 6
      %v983 = vor.u32 %v979, %v982
      %v984 = vsel %vm906, %v975, %v983
      %v985 = vrot.slane %v983, 4
      %v987 = vshrl.u32 %v893, 16
      %v989 = vrot.slane %v987, 5
      %v990 = vshll.u32 %v893, 16
      %v992 = vrot.slane %v990, 6
      %v993 = vor.u32 %v989, %v992
      %v994 = vsel %vm906, %v985, %v993
      %v995 = vrot.slane %v993, 4
      %v997 = vshrl.u32 %v894, 16
      %v999 = vrot.slane %v997, 5
      %v1000 = vshll.u32 %v894, 16
      %v1002 = vrot.slane %v1000, 6
      %v1003 = vor.u32 %v999, %v1002
      %v1004 = vsel %vm906, %v995, %v1003
      %v1005 = vrot.slane %v1003, 4
      %v1007 = vshrl.u32 %v895, 16
      %v1009 = vrot.slane %v1007, 5
      %v1010 = vshll.u32 %v895, 16
      %v1012 = vrot.slane %v1010, 6
      %v1013 = vor.u32 %v1009, %v1012
      %v1014 = vsel %vm906, %v1005, %v1013
      %v1015 = vrot.slane %v1013, 4
      %v1017 = vshrl.u32 %v896, 16
      %v1019 = vrot.slane %v1017, 5
      %v1020 = vshll.u32 %v896, 16
      %v1022 = vrot.slane %v1020, 6
      %v1023 = vor.u32 %v1019, %v1022
      %v1024 = vsel %vm906, %v1015, %v1023
      %v1025 = vrot.slane %v1023, 4
      %v1027 = vshrl.u32 %v897, 16
      %v1029 = vrot.slane %v1027, 5
      %v1030 = vshll.u32 %v897, 16
      %v1032 = vrot.slane %v1030, 6
      %v1033 = vor.u32 %v1029, %v1032
      %v1034 = vsel %vm906, %v1025, %v1033
      %v1035 = vrot.slane %v1033, 4
      %v1037 = vshrl.u32 %v898, 16
      %v1039 = vrot.slane %v1037, 5
      %v1040 = vshll.u32 %v898, 16
      %v1042 = vrot.slane %v1040, 6
      %v1043 = vor.u32 %v1039, %v1042
      %v1044 = vsel %vm906, %v1035, %v1043
      %v1045 = vrot.slane %v1043, 4
      %v1047 = vshrl.u32 %v899, 16
      %v1049 = vrot.slane %v1047, 5
      %v1050 = vshll.u32 %v899, 16
      %v1052 = vrot.slane %v1050, 6
      %v1053 = vor.u32 %v1049, %v1052
      %v1054 = vsel %vm906, %v1045, %v1053
      %v1055 = vrot.slane %v1053, 4
      %v1057 = vshrl.u32 %v900, 16
      %v1059 = vrot.slane %v1057, 5
      %v1060 = vshll.u32 %v900, 16
      %v1062 = vrot.slane %v1060, 6
      %v1063 = vor.u32 %v1059, %v1062
      %v1064 = vsel %vm906, %v1055, %v1063
      %v1065 = vrot.slane %v1063, 4
      %v1067 = vshrl.u32 %v901, 16
      %v1069 = vrot.slane %v1067, 5
      %v1070 = vshll.u32 %v901, 16
      %v1072 = vrot.slane %v1070, 6
      %v1073 = vor.u32 %v1069, %v1072
      %v1074 = vsel %vm906, %v1065, %v1073
      %v1075 = vrot.slane %v1073, 4
      %v1077 = vshrl.u32 %v902, 16
      %v1079 = vrot.slane %v1077, 5
      %v1080 = vshll.u32 %v902, 16
      %v1082 = vrot.slane %v1080, 6
      %v1083 = vor.u32 %v1079, %v1082
      %v1084 = vsel %vm906, %v1075, %v1083
      %v1085 = vrot.slane %v1083, 4
      %v1087 = vshrl.u32 %v903, 16
      %v1089 = vrot.slane %v1087, 5
      %v1090 = vshll.u32 %v903, 16
      %v1092 = vrot.slane %v1090, 6
      %v1093 = vor.u32 %v1089, %v1092
      %v1094 = vsel %vm906, %v1085, %v1093
      %1095 = vrot.lane.b32.xlu0 %v924, 32
      %v1096 = vpop.permute.xlu0 %1095
      %1097 = vrot.lane.b32.xlu0 %v934, 32
      %v1098 = vpop.permute.xlu0 %1097
      %1099 = vrot.lane.b32.xlu0 %v944, 32
      %v1100 = vpop.permute.xlu0 %1099
      %1101 = vrot.lane.b32.xlu0 %v954, 32
      %v1102 = vpop.permute.xlu0 %1101
      %1103 = vrot.lane.b32.xlu0 %v964, 32
      %v1104 = vpop.permute.xlu0 %1103
      %1105 = vrot.lane.b32.xlu0 %v974, 32
      %v1106 = vpop.permute.xlu0 %1105
      %1107 = vrot.lane.b32.xlu0 %v984, 32
      %v1108 = vpop.permute.xlu0 %1107
      %1109 = vrot.lane.b32.xlu0 %v994, 32
      %v1110 = vpop.permute.xlu0 %1109
      %1111 = vrot.lane.b32.xlu0 %v1004, 32
      %v1112 = vpop.permute.xlu0 %1111
      %1113 = vrot.lane.b32.xlu0 %v1014, 32
      %v1114 = vpop.permute.xlu0 %1113
      %1115 = vrot.lane.b32.xlu0 %v1024, 32
      %v1116 = vpop.permute.xlu0 %1115
      %1117 = vrot.lane.b32.xlu0 %v1034, 32
      %v1118 = vpop.permute.xlu0 %1117
      %1119 = vrot.lane.b32.xlu0 %v1044, 32
      %v1120 = vpop.permute.xlu0 %1119
      %1121 = vrot.lane.b32.xlu0 %v1054, 32
      %v1122 = vpop.permute.xlu0 %1121
      %1123 = vrot.lane.b32.xlu0 %v1064, 32
      %v1124 = vpop.permute.xlu0 %1123
      %1125 = vrot.lane.b32.xlu0 %v1074, 32
      %v1126 = vpop.permute.xlu0 %1125
      %1127 = vrot.lane.b32.xlu0 %v1084, 32
      %v1128 = vpop.permute.xlu0 %1127
      %1129 = vrot.lane.b32.xlu0 %v1094, 32
      %v1130 = vpop.permute.xlu0 %1129
      %vm1149 = vcmask 322816
      %1150 = vst.msk [vmem:[#allocation3] sm:$0xf] %vm1149, %v1096
      %1151 = vst.msk [vmem:[#allocation3 + $0x4] sm:$0xf] %vm1149, %v1098
      %1152 = vst.msk [vmem:[#allocation3 + $0x8] sm:$0xf] %vm1149, %v1100
      %1153 = vst.msk [vmem:[#allocation3 + $0xc] sm:$0xf] %vm1149, %v1102
      %1154 = vst.msk [vmem:[#allocation3 + $0x10] sm:$0xf] %vm1149, %v1104
      %1155 = vst.msk [vmem:[#allocation3 + $0x14] sm:$0xf] %vm1149, %v1106
      %1156 = vst.msk [vmem:[#allocation3 + $0x18] sm:$0xf] %vm1149, %v1108
      %1157 = vst.msk [vmem:[#allocation3 + $0x1c] sm:$0xf] %vm1149, %v1110
      %1158 = vst.msk [vmem:[#allocation3 + $0x20] sm:$0xf] %vm1149, %v1112
      %1159 = vst.msk [vmem:[#allocation3 + $0x24] sm:$0xf] %vm1149, %v1114
      %1160 = vst.msk [vmem:[#allocation3 + $0x28] sm:$0xf] %vm1149, %v1116
      %1161 = vst.msk [vmem:[#allocation3 + $0x2c] sm:$0xf] %vm1149, %v1118
      %1162 = vst.msk [vmem:[#allocation3 + $0x30] sm:$0xf] %vm1149, %v1120
      %1163 = vst.msk [vmem:[#allocation3 + $0x34] sm:$0xf] %vm1149, %v1122
      %1164 = vst.msk [vmem:[#allocation3 + $0x38] sm:$0xf] %vm1149, %v1124
      %1165 = vst.msk [vmem:[#allocation3 + $0x3c] sm:$0xf] %vm1149, %v1126
      %1166 = vst.msk [vmem:[#allocation3 + $0x40] sm:$0xf] %vm1149, %v1128
      %1167 = vst.msk [vmem:[#allocation3 + $0x44] sm:$0xf] %vm1149, %v1130
      %v1168 = vld [vmem:[%s219 + $0x8] sm:$0xc]
      %v1169 = vld [vmem:[%s219 + $0xc] sm:$0xf]
      %v1170 = vld [vmem:[%s219 + $0x10] sm:$0xf]
      %v1171 = vld [vmem:[%s219 + $0x14] sm:$0xf]
      %v1172 = vld [vmem:[%s219 + $0x18] sm:$0xf]
      %v1173 = vld [vmem:[%s219 + $0x1c] sm:$0xf]
      %v1174 = vld [vmem:[%s219 + $0x20] sm:$0xf]
      %v1175 = vld [vmem:[%s219 + $0x24] sm:$0xf]
      %v1176 = vld [vmem:[%s219 + $0x28] sm:$0xf]
      %v1177 = vld [vmem:[%s219 + $0x2c] sm:$0xf]
      %v1178 = vld [vmem:[%s219 + $0x30] sm:$0xf]
      %v1179 = vld [vmem:[%s219 + $0x34] sm:$0xf]
      %v1180 = vld [vmem:[%s219 + $0x38] sm:$0xf]
      %v1181 = vld [vmem:[%s219 + $0x3c] sm:$0xf]
      %v1182 = vld [vmem:[%s219 + $0x40] sm:$0xf]
      %v1183 = vld [vmem:[%s219 + $0x44] sm:$0xf]
      %v1184 = vld [vmem:[%s219 + $0x48] sm:$0xf]
      %v1185 = vld [vmem:[%s219 + $0x4c] sm:$0xf]
      %v1186 = vld [vmem:[%s219 + $0x50] sm:$0x3]
      %vm1206 = vcmask 1041408
      %vm1207 = vcmask 1045508
      %vm1208 = vmor %vm1206, %vm1207
      %v1209 = vrot.slane %v1168, 6
      %v1210 = vrot.slane %v1209, 4
      %v1211 = vrot.slane %v1169, 6
      %v1212 = vsel %vm1208, %v1210, %v1211
      %v1213 = vrot.slane %v1211, 4
      %v1214 = vrot.slane %v1170, 6
      %v1215 = vsel %vm1208, %v1213, %v1214
      %v1216 = vrot.slane %v1214, 4
      %v1217 = vrot.slane %v1171, 6
      %v1218 = vsel %vm1208, %v1216, %v1217
      %v1219 = vrot.slane %v1217, 4
      %v1220 = vrot.slane %v1172, 6
      %v1221 = vsel %vm1208, %v1219, %v1220
      %v1222 = vrot.slane %v1220, 4
      %v1223 = vrot.slane %v1173, 6
      %v1224 = vsel %vm1208, %v1222, %v1223
      %v1225 = vrot.slane %v1223, 4
      %v1226 = vrot.slane %v1174, 6
      %v1227 = vsel %vm1208, %v1225, %v1226
      %v1228 = vrot.slane %v1226, 4
      %v1229 = vrot.slane %v1175, 6
      %v1230 = vsel %vm1208, %v1228, %v1229
      %v1231 = vrot.slane %v1229, 4
      %v1232 = vrot.slane %v1176, 6
      %v1233 = vsel %vm1208, %v1231, %v1232
      %v1234 = vrot.slane %v1232, 4
      %v1235 = vrot.slane %v1177, 6
      %v1236 = vsel %vm1208, %v1234, %v1235
      %v1237 = vrot.slane %v1235, 4
      %v1238 = vrot.slane %v1178, 6
      %v1239 = vsel %vm1208, %v1237, %v1238
      %v1240 = vrot.slane %v1238, 4
      %v1241 = vrot.slane %v1179, 6
      %v1242 = vsel %vm1208, %v1240, %v1241
      %v1243 = vrot.slane %v1241, 4
      %v1244 = vrot.slane %v1180, 6
      %v1245 = vsel %vm1208, %v1243, %v1244
      %v1246 = vrot.slane %v1244, 4
      %v1247 = vrot.slane %v1181, 6
      %v1248 = vsel %vm1208, %v1246, %v1247
      %v1249 = vrot.slane %v1247, 4
      %v1250 = vrot.slane %v1182, 6
      %v1251 = vsel %vm1208, %v1249, %v1250
      %v1252 = vrot.slane %v1250, 4
      %v1253 = vrot.slane %v1183, 6
      %v1254 = vsel %vm1208, %v1252, %v1253
      %v1255 = vrot.slane %v1253, 4
      %v1256 = vrot.slane %v1184, 6
      %v1257 = vsel %vm1208, %v1255, %v1256
      %v1258 = vrot.slane %v1256, 4
      %v1259 = vrot.slane %v1185, 6
      %v1260 = vsel %vm1208, %v1258, %v1259
      %v1261 = vrot.slane %v1259, 4
      %v1262 = vrot.slane %v1186, 6
      %v1263 = vsel %vm1208, %v1261, %v1262
      %1264 = vrot.lane.b32.xlu0 %v1212, 40
      %v1265 = vpop.permute.xlu0 %1264
      %1266 = vrot.lane.b32.xlu0 %v1215, 40
      %v1267 = vpop.permute.xlu0 %1266
      %1268 = vrot.lane.b32.xlu0 %v1218, 40
      %v1269 = vpop.permute.xlu0 %1268
      %1270 = vrot.lane.b32.xlu0 %v1221, 40
      %v1271 = vpop.permute.xlu0 %1270
      %1272 = vrot.lane.b32.xlu0 %v1224, 40
      %v1273 = vpop.permute.xlu0 %1272
      %1274 = vrot.lane.b32.xlu0 %v1227, 40
      %v1275 = vpop.permute.xlu0 %1274
      %1276 = vrot.lane.b32.xlu0 %v1230, 40
      %v1277 = vpop.permute.xlu0 %1276
      %1278 = vrot.lane.b32.xlu0 %v1233, 40
      %v1279 = vpop.permute.xlu0 %1278
      %1280 = vrot.lane.b32.xlu0 %v1236, 40
      %v1281 = vpop.permute.xlu0 %1280
      %1282 = vrot.lane.b32.xlu0 %v1239, 40
      %v1283 = vpop.permute.xlu0 %1282
      %1284 = vrot.lane.b32.xlu0 %v1242, 40
      %v1285 = vpop.permute.xlu0 %1284
      %1286 = vrot.lane.b32.xlu0 %v1245, 40
      %v1287 = vpop.permute.xlu0 %1286
      %1288 = vrot.lane.b32.xlu0 %v1248, 40
      %v1289 = vpop.permute.xlu0 %1288
      %1290 = vrot.lane.b32.xlu0 %v1251, 40
      %v1291 = vpop.permute.xlu0 %1290
      %1292 = vrot.lane.b32.xlu0 %v1254, 40
      %v1293 = vpop.permute.xlu0 %1292
      %1294 = vrot.lane.b32.xlu0 %v1257, 40
      %v1295 = vpop.permute.xlu0 %1294
      %1296 = vrot.lane.b32.xlu0 %v1260, 40
      %v1297 = vpop.permute.xlu0 %1296
      %1298 = vrot.lane.b32.xlu0 %v1263, 40
      %v1299 = vpop.permute.xlu0 %1298
      %vm1318 = vcmask 388416
      %1319 = vst.msk [vmem:[#allocation3] sm:$0xf] %vm1318, %v1265
      %1320 = vst.msk [vmem:[#allocation3 + $0x4] sm:$0xf] %vm1318, %v1267
      %1321 = vst.msk [vmem:[#allocation3 + $0x8] sm:$0xf] %vm1318, %v1269
      %1322 = vst.msk [vmem:[#allocation3 + $0xc] sm:$0xf] %vm1318, %v1271
      %1323 = vst.msk [vmem:[#allocation3 + $0x10] sm:$0xf] %vm1318, %v1273
      %1324 = vst.msk [vmem:[#allocation3 + $0x14] sm:$0xf] %vm1318, %v1275
      %1325 = vst.msk [vmem:[#allocation3 + $0x18] sm:$0xf] %vm1318, %v1277
      %1326 = vst.msk [vmem:[#allocation3 + $0x1c] sm:$0xf] %vm1318, %v1279
      %1327 = vst.msk [vmem:[#allocation3 + $0x20] sm:$0xf] %vm1318, %v1281
      %1328 = vst.msk [vmem:[#allocation3 + $0x24] sm:$0xf] %vm1318, %v1283
      %1329 = vst.msk [vmem:[#allocation3 + $0x28] sm:$0xf] %vm1318, %v1285
      %1330 = vst.msk [vmem:[#allocation3 + $0x2c] sm:$0xf] %vm1318, %v1287
      %1331 = vst.msk [vmem:[#allocation3 + $0x30] sm:$0xf] %vm1318, %v1289
      %1332 = vst.msk [vmem:[#allocation3 + $0x34] sm:$0xf] %vm1318, %v1291
      %1333 = vst.msk [vmem:[#allocation3 + $0x38] sm:$0xf] %vm1318, %v1293
      %1334 = vst.msk [vmem:[#allocation3 + $0x3c] sm:$0xf] %vm1318, %v1295
      %1335 = vst.msk [vmem:[#allocation3 + $0x40] sm:$0xf] %vm1318, %v1297
      %1336 = vst.msk [vmem:[#allocation3 + $0x44] sm:$0xf] %vm1318, %v1299
      %v1337 = vld [vmem:[%s219 + $0x10] sm:$0xc]
      %v1338 = vld [vmem:[%s219 + $0x14] sm:$0xf]
      %v1339 = vld [vmem:[%s219 + $0x18] sm:$0xf]
      %v1340 = vld [vmem:[%s219 + $0x1c] sm:$0xf]
      %v1341 = vld [vmem:[%s219 + $0x20] sm:$0xf]
      %v1342 = vld [vmem:[%s219 + $0x24] sm:$0xf]
      %v1343 = vld [vmem:[%s219 + $0x28] sm:$0xf]
      %v1344 = vld [vmem:[%s219 + $0x2c] sm:$0xf]
      %v1345 = vld [vmem:[%s219 + $0x30] sm:$0xf]
      %v1346 = vld [vmem:[%s219 + $0x34] sm:$0xf]
      %v1347 = vld [vmem:[%s219 + $0x38] sm:$0xf]
      %v1348 = vld [vmem:[%s219 + $0x3c] sm:$0xf]
      %v1349 = vld [vmem:[%s219 + $0x40] sm:$0xf]
      %v1350 = vld [vmem:[%s219 + $0x44] sm:$0xf]
      %v1351 = vld [vmem:[%s219 + $0x48] sm:$0xf]
      %v1352 = vld [vmem:[%s219 + $0x4c] sm:$0xf]
      %v1353 = vld [vmem:[%s219 + $0x50] sm:$0xf]
      %v1354 = vld [vmem:[%s219 + $0x54] sm:$0xf]
      %v1355 = vld [vmem:[%s219 + $0x58] sm:$0x3]
      %v1375 = vrot.slane %v1337, 6
      %v1376 = vrot.slane %v1375, 4
      %v1377 = vrot.slane %v1338, 6
      %v1378 = vsel %vm1208, %v1376, %v1377
      %v1379 = vrot.slane %v1377, 4
      %v1380 = vrot.slane %v1339, 6
      %v1381 = vsel %vm1208, %v1379, %v1380
      %v1382 = vrot.slane %v1380, 4
      %v1383 = vrot.slane %v1340, 6
      %v1384 = vsel %vm1208, %v1382, %v1383
      %v1385 = vrot.slane %v1383, 4
      %v1386 = vrot.slane %v1341, 6
      %v1387 = vsel %vm1208, %v1385, %v1386
      %v1388 = vrot.slane %v1386, 4
      %v1389 = vrot.slane %v1342, 6
      %v1390 = vsel %vm1208, %v1388, %v1389
      %v1391 = vrot.slane %v1389, 4
      %v1392 = vrot.slane %v1343, 6
      %v1393 = vsel %vm1208, %v1391, %v1392
      %v1394 = vrot.slane %v1392, 4
      %v1395 = vrot.slane %v1344, 6
      %v1396 = vsel %vm1208, %v1394, %v1395
      %v1397 = vrot.slane %v1395, 4
      %v1398 = vrot.slane %v1345, 6
      %v1399 = vsel %vm1208, %v1397, %v1398
      %v1400 = vrot.slane %v1398, 4
      %v1401 = vrot.slane %v1346, 6
      %v1402 = vsel %vm1208, %v1400, %v1401
      %v1403 = vrot.slane %v1401, 4
      %v1404 = vrot.slane %v1347, 6
      %v1405 = vsel %vm1208, %v1403, %v1404
      %v1406 = vrot.slane %v1404, 4
      %v1407 = vrot.slane %v1348, 6
      %v1408 = vsel %vm1208, %v1406, %v1407
      %v1409 = vrot.slane %v1407, 4
      %v1410 = vrot.slane %v1349, 6
      %v1411 = vsel %vm1208, %v1409, %v1410
      %v1412 = vrot.slane %v1410, 4
      %v1413 = vrot.slane %v1350, 6
      %v1414 = vsel %vm1208, %v1412, %v1413
      %v1415 = vrot.slane %v1413, 4
      %v1416 = vrot.slane %v1351, 6
      %v1417 = vsel %vm1208, %v1415, %v1416
      %v1418 = vrot.slane %v1416, 4
      %v1419 = vrot.slane %v1352, 6
      %v1420 = vsel %vm1208, %v1418, %v1419
      %v1421 = vrot.slane %v1419, 4
      %v1422 = vrot.slane %v1353, 6
      %v1423 = vsel %vm1208, %v1421, %v1422
      %v1424 = vrot.slane %v1422, 4
      %v1425 = vrot.slane %v1354, 6
      %v1426 = vsel %vm1208, %v1424, %v1425
      %v1427 = vrot.slane %v1425, 4
      %v1428 = vrot.slane %v1355, 6
      %v1429 = vsel %vm1208, %v1427, %v1428
      %1430 = vrot.lane.b32.xlu0 %v1378, 48
      %v1431 = vpop.permute.xlu0 %1430
      %1432 = vrot.lane.b32.xlu0 %v1381, 48
      %v1433 = vpop.permute.xlu0 %1432
      %1434 = vrot.lane.b32.xlu0 %v1384, 48
      %v1435 = vpop.permute.xlu0 %1434
      %1436 = vrot.lane.b32.xlu0 %v1387, 48
      %v1437 = vpop.permute.xlu0 %1436
      %1438 = vrot.lane.b32.xlu0 %v1390, 48
      %v1439 = vpop.permute.xlu0 %1438
      %1440 = vrot.lane.b32.xlu0 %v1393, 48
      %v1441 = vpop.permute.xlu0 %1440
      %1442 = vrot.lane.b32.xlu0 %v1396, 48
      %v1443 = vpop.permute.xlu0 %1442
      %1444 = vrot.lane.b32.xlu0 %v1399, 48
      %v1445 = vpop.permute.xlu0 %1444
      %1446 = vrot.lane.b32.xlu0 %v1402, 48
      %v1447 = vpop.permute.xlu0 %1446
      %1448 = vrot.lane.b32.xlu0 %v1405, 48
      %v1449 = vpop.permute.xlu0 %1448
      %1450 = vrot.lane.b32.xlu0 %v1408, 48
      %v1451 = vpop.permute.xlu0 %1450
      %1452 = vrot.lane.b32.xlu0 %v1411, 48
      %v1453 = vpop.permute.xlu0 %1452
      %1454 = vrot.lane.b32.xlu0 %v1414, 48
      %v1455 = vpop.permute.xlu0 %1454
      %1456 = vrot.lane.b32.xlu0 %v1417, 48
      %v1457 = vpop.permute.xlu0 %1456
      %1458 = vrot.lane.b32.xlu0 %v1420, 48
      %v1459 = vpop.permute.xlu0 %1458
      %1460 = vrot.lane.b32.xlu0 %v1423, 48
      %v1461 = vpop.permute.xlu0 %1460
      %1462 = vrot.lane.b32.xlu0 %v1426, 48
      %v1463 = vpop.permute.xlu0 %1462
      %1464 = vrot.lane.b32.xlu0 %v1429, 48
      %v1465 = vpop.permute.xlu0 %1464
      %vm1484 = vcmask 454016
      %1485 = vst.msk [vmem:[#allocation3] sm:$0xf] %vm1484, %v1431
      %1486 = vst.msk [vmem:[#allocation3 + $0x4] sm:$0xf] %vm1484, %v1433
      %1487 = vst.msk [vmem:[#allocation3 + $0x8] sm:$0xf] %vm1484, %v1435
      %1488 = vst.msk [vmem:[#allocation3 + $0xc] sm:$0xf] %vm1484, %v1437
      %1489 = vst.msk [vmem:[#allocation3 + $0x10] sm:$0xf] %vm1484, %v1439
      %1490 = vst.msk [vmem:[#allocation3 + $0x14] sm:$0xf] %vm1484, %v1441
      %1491 = vst.msk [vmem:[#allocation3 + $0x18] sm:$0xf] %vm1484, %v1443
      %1492 = vst.msk [vmem:[#allocation3 + $0x1c] sm:$0xf] %vm1484, %v1445
      %1493 = vst.msk [vmem:[#allocation3 + $0x20] sm:$0xf] %vm1484, %v1447
      %1494 = vst.msk [vmem:[#allocation3 + $0x24] sm:$0xf] %vm1484, %v1449
      %1495 = vst.msk [vmem:[#allocation3 + $0x28] sm:$0xf] %vm1484, %v1451
      %1496 = vst.msk [vmem:[#allocation3 + $0x2c] sm:$0xf] %vm1484, %v1453
      %1497 = vst.msk [vmem:[#allocation3 + $0x30] sm:$0xf] %vm1484, %v1455
      %1498 = vst.msk [vmem:[#allocation3 + $0x34] sm:$0xf] %vm1484, %v1457
      %1499 = vst.msk [vmem:[#allocation3 + $0x38] sm:$0xf] %vm1484, %v1459
      %1500 = vst.msk [vmem:[#allocation3 + $0x3c] sm:$0xf] %vm1484, %v1461
      %1501 = vst.msk [vmem:[#allocation3 + $0x40] sm:$0xf] %vm1484, %v1463
      %1502 = vst.msk [vmem:[#allocation3 + $0x44] sm:$0xf] %vm1484, %v1465
      %v1503 = vld [vmem:[%s219 + $0x10] sm:$0xc]
      %v1504 = vld [vmem:[%s219 + $0x14] sm:$0xf]
      %v1505 = vld [vmem:[%s219 + $0x18] sm:$0xf]
      %v1506 = vld [vmem:[%s219 + $0x1c] sm:$0xf]
      %v1507 = vld [vmem:[%s219 + $0x20] sm:$0xf]
      %v1508 = vld [vmem:[%s219 + $0x24] sm:$0xf]
      %v1509 = vld [vmem:[%s219 + $0x28] sm:$0xf]
      %v1510 = vld [vmem:[%s219 + $0x2c] sm:$0xf]
      %v1511 = vld [vmem:[%s219 + $0x30] sm:$0xf]
      %v1512 = vld [vmem:[%s219 + $0x34] sm:$0xf]
      %v1513 = vld [vmem:[%s219 + $0x38] sm:$0xf]
      %v1514 = vld [vmem:[%s219 + $0x3c] sm:$0xf]
      %v1515 = vld [vmem:[%s219 + $0x40] sm:$0xf]
      %v1516 = vld [vmem:[%s219 + $0x44] sm:$0xf]
      %v1517 = vld [vmem:[%s219 + $0x48] sm:$0xf]
      %v1518 = vld [vmem:[%s219 + $0x4c] sm:$0xf]
      %v1519 = vld [vmem:[%s219 + $0x50] sm:$0xf]
      %v1520 = vld [vmem:[%s219 + $0x54] sm:$0xf]
      %v1521 = vld [vmem:[%s219 + $0x58] sm:$0x7]
      %vm1522 = vsmask.f32 1280
      %vm1523 = vsmask.f32 5392
      %vm1524 = vmor %vm1522, %vm1523
      %v1526 = vshrl.u32 %v1503, 16
      %v1528 = vrot.slane %v1526, 6
      %v1529 = vshll.u32 %v1503, 16
      %v1531 = vrot.slane %v1529, 7
      %v1532 = vor.u32 %v1528, %v1531
      %v1533 = vrot.slane %v1532, 4
      %v1535 = vshrl.u32 %v1504, 16
      %v1537 = vrot.slane %v1535, 6
      %v1538 = vshll.u32 %v1504, 16
      %v1540 = vrot.slane %v1538, 7
      %v1541 = vor.u32 %v1537, %v1540
      %v1542 = vsel %vm1524, %v1533, %v1541
      %v1543 = vrot.slane %v1541, 4
      %v1545 = vshrl.u32 %v1505, 16
      %v1547 = vrot.slane %v1545, 6
      %v1548 = vshll.u32 %v1505, 16
      %v1550 = vrot.slane %v1548, 7
      %v1551 = vor.u32 %v1547, %v1550
      %v1552 = vsel %vm1524, %v1543, %v1551
      %v1553 = vrot.slane %v1551, 4
      %v1555 = vshrl.u32 %v1506, 16
      %v1557 = vrot.slane %v1555, 6
      %v1558 = vshll.u32 %v1506, 16
      %v1560 = vrot.slane %v1558, 7
      %v1561 = vor.u32 %v1557, %v1560
      %v1562 = vsel %vm1524, %v1553, %v1561
      %v1563 = vrot.slane %v1561, 4
      %v1565 = vshrl.u32 %v1507, 16
      %v1567 = vrot.slane %v1565, 6
      %v1568 = vshll.u32 %v1507, 16
      %v1570 = vrot.slane %v1568, 7
      %v1571 = vor.u32 %v1567, %v1570
      %v1572 = vsel %vm1524, %v1563, %v1571
      %v1573 = vrot.slane %v1571, 4
      %v1575 = vshrl.u32 %v1508, 16
      %v1577 = vrot.slane %v1575, 6
      %v1578 = vshll.u32 %v1508, 16
      %v1580 = vrot.slane %v1578, 7
      %v1581 = vor.u32 %v1577, %v1580
      %v1582 = vsel %vm1524, %v1573, %v1581
      %v1583 = vrot.slane %v1581, 4
      %v1585 = vshrl.u32 %v1509, 16
      %v1587 = vrot.slane %v1585, 6
      %v1588 = vshll.u32 %v1509, 16
      %v1590 = vrot.slane %v1588, 7
      %v1591 = vor.u32 %v1587, %v1590
      %v1592 = vsel %vm1524, %v1583, %v1591
      %v1593 = vrot.slane %v1591, 4
      %v1595 = vshrl.u32 %v1510, 16
      %v1597 = vrot.slane %v1595, 6
      %v1598 = vshll.u32 %v1510, 16
      %v1600 = vrot.slane %v1598, 7
      %v1601 = vor.u32 %v1597, %v1600
      %v1602 = vsel %vm1524, %v1593, %v1601
      %v1603 = vrot.slane %v1601, 4
      %v1605 = vshrl.u32 %v1511, 16
      %v1607 = vrot.slane %v1605, 6
      %v1608 = vshll.u32 %v1511, 16
      %v1610 = vrot.slane %v1608, 7
      %v1611 = vor.u32 %v1607, %v1610
      %v1612 = vsel %vm1524, %v1603, %v1611
      %v1613 = vrot.slane %v1611, 4
      %v1615 = vshrl.u32 %v1512, 16
      %v1617 = vrot.slane %v1615, 6
      %v1618 = vshll.u32 %v1512, 16
      %v1620 = vrot.slane %v1618, 7
      %v1621 = vor.u32 %v1617, %v1620
      %v1622 = vsel %vm1524, %v1613, %v1621
      %v1623 = vrot.slane %v1621, 4
      %v1625 = vshrl.u32 %v1513, 16
      %v1627 = vrot.slane %v1625, 6
      %v1628 = vshll.u32 %v1513, 16
      %v1630 = vrot.slane %v1628, 7
      %v1631 = vor.u32 %v1627, %v1630
      %v1632 = vsel %vm1524, %v1623, %v1631
      %v1633 = vrot.slane %v1631, 4
      %v1635 = vshrl.u32 %v1514, 16
      %v1637 = vrot.slane %v1635, 6
      %v1638 = vshll.u32 %v1514, 16
      %v1640 = vrot.slane %v1638, 7
      %v1641 = vor.u32 %v1637, %v1640
      %v1642 = vsel %vm1524, %v1633, %v1641
      %v1643 = vrot.slane %v1641, 4
      %v1645 = vshrl.u32 %v1515, 16
      %v1647 = vrot.slane %v1645, 6
      %v1648 = vshll.u32 %v1515, 16
      %v1650 = vrot.slane %v1648, 7
      %v1651 = vor.u32 %v1647, %v1650
      %v1652 = vsel %vm1524, %v1643, %v1651
      %v1653 = vrot.slane %v1651, 4
      %v1655 = vshrl.u32 %v1516, 16
      %v1657 = vrot.slane %v1655, 6
      %v1658 = vshll.u32 %v1516, 16
      %v1660 = vrot.slane %v1658, 7
      %v1661 = vor.u32 %v1657, %v1660
      %v1662 = vsel %vm1524, %v1653, %v1661
      %v1663 = vrot.slane %v1661, 4
      %v1665 = vshrl.u32 %v1517, 16
      %v1667 = vrot.slane %v1665, 6
      %v1668 = vshll.u32 %v1517, 16
      %v1670 = vrot.slane %v1668, 7
      %v1671 = vor.u32 %v1667, %v1670
      %v1672 = vsel %vm1524, %v1663, %v1671
      %v1673 = vrot.slane %v1671, 4
      %v1675 = vshrl.u32 %v1518, 16
      %v1677 = vrot.slane %v1675, 6
      %v1678 = vshll.u32 %v1518, 16
      %v1680 = vrot.slane %v1678, 7
      %v1681 = vor.u32 %v1677, %v1680
      %v1682 = vsel %vm1524, %v1673, %v1681
      %v1683 = vrot.slane %v1681, 4
      %v1685 = vshrl.u32 %v1519, 16
      %v1687 = vrot.slane %v1685, 6
      %v1688 = vshll.u32 %v1519, 16
      %v1690 = vrot.slane %v1688, 7
      %v1691 = vor.u32 %v1687, %v1690
      %v1692 = vsel %vm1524, %v1683, %v1691
      %v1693 = vrot.slane %v1691, 4
      %v1695 = vshrl.u32 %v1520, 16
      %v1697 = vrot.slane %v1695, 6
      %v1698 = vshll.u32 %v1520, 16
      %v1700 = vrot.slane %v1698, 7
      %v1701 = vor.u32 %v1697, %v1700
      %v1702 = vsel %vm1524, %v1693, %v1701
      %v1703 = vrot.slane %v1701, 4
      %v1705 = vshrl.u32 %v1521, 16
      %v1707 = vrot.slane %v1705, 6
      %v1708 = vshll.u32 %v1521, 16
      %v1710 = vrot.slane %v1708, 7
      %v1711 = vor.u32 %v1707, %v1710
      %v1712 = vsel %vm1524, %v1703, %v1711
      %1713 = vrot.lane.b32.xlu0 %v1542, 56
      %v1714 = vpop.permute.xlu0 %1713
      %1715 = vrot.lane.b32.xlu0 %v1552, 56
      %v1716 = vpop.permute.xlu0 %1715
      %1717 = vrot.lane.b32.xlu0 %v1562, 56
      %v1718 = vpop.permute.xlu0 %1717
      %1719 = vrot.lane.b32.xlu0 %v1572, 56
      %v1720 = vpop.permute.xlu0 %1719
      %1721 = vrot.lane.b32.xlu0 %v1582, 56
      %v1722 = vpop.permute.xlu0 %1721
      %1723 = vrot.lane.b32.xlu0 %v1592, 56
      %v1724 = vpop.permute.xlu0 %1723
      %1725 = vrot.lane.b32.xlu0 %v1602, 56
      %v1726 = vpop.permute.xlu0 %1725
      %1727 = vrot.lane.b32.xlu0 %v1612, 56
      %v1728 = vpop.permute.xlu0 %1727
      %1729 = vrot.lane.b32.xlu0 %v1622, 56
      %v1730 = vpop.permute.xlu0 %1729
      %1731 = vrot.lane.b32.xlu0 %v1632, 56
      %v1732 = vpop.permute.xlu0 %1731
      %1733 = vrot.lane.b32.xlu0 %v1642, 56
      %v1734 = vpop.permute.xlu0 %1733
      %1735 = vrot.lane.b32.xlu0 %v1652, 56
      %v1736 = vpop.permute.xlu0 %1735
      %1737 = vrot.lane.b32.xlu0 %v1662, 56
      %v1738 = vpop.permute.xlu0 %1737
      %1739 = vrot.lane.b32.xlu0 %v1672, 56
      %v1740 = vpop.permute.xlu0 %1739
      %1741 = vrot.lane.b32.xlu0 %v1682, 56
      %v1742 = vpop.permute.xlu0 %1741
      %1743 = vrot.lane.b32.xlu0 %v1692, 56
      %v1744 = vpop.permute.xlu0 %1743
      %1745 = vrot.lane.b32.xlu0 %v1702, 56
      %v1746 = vpop.permute.xlu0 %1745
      %1747 = vrot.lane.b32.xlu0 %v1712, 56
      %v1748 = vpop.permute.xlu0 %1747
      %vm1767 = vcmask 519616
      %1768 = vst.msk [vmem:[#allocation3] sm:$0xf] %vm1767, %v1714
      %1769 = vst.msk [vmem:[#allocation3 + $0x4] sm:$0xf] %vm1767, %v1716
      %1770 = vst.msk [vmem:[#allocation3 + $0x8] sm:$0xf] %vm1767, %v1718
      %1771 = vst.msk [vmem:[#allocation3 + $0xc] sm:$0xf] %vm1767, %v1720
      %1772 = vst.msk [vmem:[#allocation3 + $0x10] sm:$0xf] %vm1767, %v1722
      %1773 = vst.msk [vmem:[#allocation3 + $0x14] sm:$0xf] %vm1767, %v1724
      %1774 = vst.msk [vmem:[#allocation3 + $0x18] sm:$0xf] %vm1767, %v1726
      %1775 = vst.msk [vmem:[#allocation3 + $0x1c] sm:$0xf] %vm1767, %v1728
      %1776 = vst.msk [vmem:[#allocation3 + $0x20] sm:$0xf] %vm1767, %v1730
      %1777 = vst.msk [vmem:[#allocation3 + $0x24] sm:$0xf] %vm1767, %v1732
      %1778 = vst.msk [vmem:[#allocation3 + $0x28] sm:$0xf] %vm1767, %v1734
      %1779 = vst.msk [vmem:[#allocation3 + $0x2c] sm:$0xf] %vm1767, %v1736
      %1780 = vst.msk [vmem:[#allocation3 + $0x30] sm:$0xf] %vm1767, %v1738
      %1781 = vst.msk [vmem:[#allocation3 + $0x34] sm:$0xf] %vm1767, %v1740
      %1782 = vst.msk [vmem:[#allocation3 + $0x38] sm:$0xf] %vm1767, %v1742
      %1783 = vst.msk [vmem:[#allocation3 + $0x3c] sm:$0xf] %vm1767, %v1744
      %1784 = vst.msk [vmem:[#allocation3 + $0x40] sm:$0xf] %vm1767, %v1746
      %1785 = vst.msk [vmem:[#allocation3 + $0x44] sm:$0xf] %vm1767, %v1748
      %v1786 = vld [vmem:[%s219 + $0x10] sm:$0x8]
      %v1787 = vld [vmem:[%s219 + $0x14] sm:$0xf]
      %v1788 = vld [vmem:[%s219 + $0x18] sm:$0xf]
      %v1789 = vld [vmem:[%s219 + $0x1c] sm:$0xf]
      %v1790 = vld [vmem:[%s219 + $0x20] sm:$0xf]
      %v1791 = vld [vmem:[%s219 + $0x24] sm:$0xf]
      %v1792 = vld [vmem:[%s219 + $0x28] sm:$0xf]
      %v1793 = vld [vmem:[%s219 + $0x2c] sm:$0xf]
      %v1794 = vld [vmem:[%s219 + $0x30] sm:$0xf]
      %v1795 = vld [vmem:[%s219 + $0x34] sm:$0xf]
      %v1796 = vld [vmem:[%s219 + $0x38] sm:$0xf]
      %v1797 = vld [vmem:[%s219 + $0x3c] sm:$0xf]
      %v1798 = vld [vmem:[%s219 + $0x40] sm:$0xf]
      %v1799 = vld [vmem:[%s219 + $0x44] sm:$0xf]
      %v1800 = vld [vmem:[%s219 + $0x48] sm:$0xf]
      %v1801 = vld [vmem:[%s219 + $0x4c] sm:$0xf]
      %v1802 = vld [vmem:[%s219 + $0x50] sm:$0xf]
      %v1803 = vld [vmem:[%s219 + $0x54] sm:$0xf]
      %v1804 = vld [vmem:[%s219 + $0x58] sm:$0x7]
      %vm1824 = vcmask 1040384
      %vm1825 = vcmask 1044484
      %vm1826 = vmor %vm1824, %vm1825
      %v1827 = vrot.slane %v1786, 7
      %v1828 = vrot.slane %v1827, 4
      %v1829 = vrot.slane %v1787, 7
      %v1830 = vsel %vm1826, %v1828, %v1829
      %v1831 = vrot.slane %v1829, 4
      %v1832 = vrot.slane %v1788, 7
      %v1833 = vsel %vm1826, %v1831, %v1832
      %v1834 = vrot.slane %v1832, 4
      %v1835 = vrot.slane %v1789, 7
      %v1836 = vsel %vm1826, %v1834, %v1835
      %v1837 = vrot.slane %v1835, 4
      %v1838 = vrot.slane %v1790, 7
      %v1839 = vsel %vm1826, %v1837, %v1838
      %v1840 = vrot.slane %v1838, 4
      %v1841 = vrot.slane %v1791, 7
      %v1842 = vsel %vm1826, %v1840, %v1841
      %v1843 = vrot.slane %v1841, 4
      %v1844 = vrot.slane %v1792, 7
      %v1845 = vsel %vm1826, %v1843, %v1844
      %v1846 = vrot.slane %v1844, 4
      %v1847 = vrot.slane %v1793, 7
      %v1848 = vsel %vm1826, %v1846, %v1847
      %v1849 = vrot.slane %v1847, 4
      %v1850 = vrot.slane %v1794, 7
      %v1851 = vsel %vm1826, %v1849, %v1850
      %v1852 = vrot.slane %v1850, 4
      %v1853 = vrot.slane %v1795, 7
      %v1854 = vsel %vm1826, %v1852, %v1853
      %v1855 = vrot.slane %v1853, 4
      %v1856 = vrot.slane %v1796, 7
      %v1857 = vsel %vm1826, %v1855, %v1856
      %v1858 = vrot.slane %v1856, 4
      %v1859 = vrot.slane %v1797, 7
      %v1860 = vsel %vm1826, %v1858, %v1859
      %v1861 = vrot.slane %v1859, 4
      %v1862 = vrot.slane %v1798, 7
      %v1863 = vsel %vm1826, %v1861, %v1862
      %v1864 = vrot.slane %v1862, 4
      %v1865 = vrot.slane %v1799, 7
      %v1866 = vsel %vm1826, %v1864, %v1865
      %v1867 = vrot.slane %v1865, 4
      %v1868 = vrot.slane %v1800, 7
      %v1869 = vsel %vm1826, %v1867, %v1868
      %v1870 = vrot.slane %v1868, 4
      %v1871 = vrot.slane %v1801, 7
      %v1872 = vsel %vm1826, %v1870, %v1871
      %v1873 = vrot.slane %v1871, 4
      %v1874 = vrot.slane %v1802, 7
      %v1875 = vsel %vm1826, %v1873, %v1874
      %v1876 = vrot.slane %v1874, 4
      %v1877 = vrot.slane %v1803, 7
      %v1878 = vsel %vm1826, %v1876, %v1877
      %v1879 = vrot.slane %v1877, 4
      %v1880 = vrot.slane %v1804, 7
      %v1881 = vsel %vm1826, %v1879, %v1880
      %1882 = vrot.lane.b32.xlu0 %v1830, 64
      %v1883 = vpop.permute.xlu0 %1882
      %1884 = vrot.lane.b32.xlu0 %v1833, 64
      %v1885 = vpop.permute.xlu0 %1884
      %1886 = vrot.lane.b32.xlu0 %v1836, 64
      %v1887 = vpop.permute.xlu0 %1886
      %1888 = vrot.lane.b32.xlu0 %v1839, 64
      %v1889 = vpop.permute.xlu0 %1888
      %1890 = vrot.lane.b32.xlu0 %v1842, 64
      %v1891 = vpop.permute.xlu0 %1890
      %1892 = vrot.lane.b32.xlu0 %v1845, 64
      %v1893 = vpop.permute.xlu0 %1892
      %1894 = vrot.lane.b32.xlu0 %v1848, 64
      %v1895 = vpop.permute.xlu0 %1894
      %1896 = vrot.lane.b32.xlu0 %v1851, 64
      %v1897 = vpop.permute.xlu0 %1896
      %1898 = vrot.lane.b32.xlu0 %v1854, 64
      %v1899 = vpop.permute.xlu0 %1898
      %1900 = vrot.lane.b32.xlu0 %v1857, 64
      %v1901 = vpop.permute.xlu0 %1900
      %1902 = vrot.lane.b32.xlu0 %v1860, 64
      %v1903 = vpop.permute.xlu0 %1902
      %1904 = vrot.lane.b32.xlu0 %v1863, 64
      %v1905 = vpop.permute.xlu0 %1904
      %1906 = vrot.lane.b32.xlu0 %v1866, 64
      %v1907 = vpop.permute.xlu0 %1906
      %1908 = vrot.lane.b32.xlu0 %v1869, 64
      %v1909 = vpop.permute.xlu0 %1908
      %1910 = vrot.lane.b32.xlu0 %v1872, 64
      %v1911 = vpop.permute.xlu0 %1910
      %1912 = vrot.lane.b32.xlu0 %v1875, 64
      %v1913 = vpop.permute.xlu0 %1912
      %1914 = vrot.lane.b32.xlu0 %v1878, 64
      %v1915 = vpop.permute.xlu0 %1914
      %1916 = vrot.lane.b32.xlu0 %v1881, 64
      %v1917 = vpop.permute.xlu0 %1916
      %vm1936 = vcmask 585216
      %1937 = vst.msk [vmem:[#allocation3] sm:$0xf] %vm1936, %v1883
      %1938 = vst.msk [vmem:[#allocation3 + $0x4] sm:$0xf] %vm1936, %v1885
      %1939 = vst.msk [vmem:[#allocation3 + $0x8] sm:$0xf] %vm1936, %v1887
      %1940 = vst.msk [vmem:[#allocation3 + $0xc] sm:$0xf] %vm1936, %v1889
      %1941 = vst.msk [vmem:[#allocation3 + $0x10] sm:$0xf] %vm1936, %v1891
      %1942 = vst.msk [vmem:[#allocation3 + $0x14] sm:$0xf] %vm1936, %v1893
      %1943 = vst.msk [vmem:[#allocation3 + $0x18] sm:$0xf] %vm1936, %v1895
      %1944 = vst.msk [vmem:[#allocation3 + $0x1c] sm:$0xf] %vm1936, %v1897
      %1945 = vst.msk [vmem:[#allocation3 + $0x20] sm:$0xf] %vm1936, %v1899
      %1946 = vst.msk [vmem:[#allocation3 + $0x24] sm:$0xf] %vm1936, %v1901
      %1947 = vst.msk [vmem:[#allocation3 + $0x28] sm:$0xf] %vm1936, %v1903
      %1948 = vst.msk [vmem:[#allocation3 + $0x2c] sm:$0xf] %vm1936, %v1905
      %1949 = vst.msk [vmem:[#allocation3 + $0x30] sm:$0xf] %vm1936, %v1907
      %1950 = vst.msk [vmem:[#allocation3 + $0x34] sm:$0xf] %vm1936, %v1909
      %1951 = vst.msk [vmem:[#allocation3 + $0x38] sm:$0xf] %vm1936, %v1911
      %1952 = vst.msk [vmem:[#allocation3 + $0x3c] sm:$0xf] %vm1936, %v1913
      %1953 = vst.msk [vmem:[#allocation3 + $0x40] sm:$0xf] %vm1936, %v1915
      %1954 = vst.msk [vmem:[#allocation3 + $0x44] sm:$0xf] %vm1936, %v1917
      %v1955 = vld [vmem:[#allocation3] sm:$0xf]
      %v1956 = vld [vmem:[#allocation3 + $0x4] sm:$0xf]
      %v1957 = vld [vmem:[#allocation3 + $0x8] sm:$0xf]
      %v1958 = vld [vmem:[#allocation3 + $0xc] sm:$0xf]
      %v1959 = vld [vmem:[#allocation3 + $0x10] sm:$0xf]
      %v1960 = vld [vmem:[#allocation3 + $0x14] sm:$0xf]
      %v1961 = vld [vmem:[#allocation3 + $0x18] sm:$0xf]
      %v1962 = vld [vmem:[#allocation3 + $0x1c] sm:$0xf]
      %v1963 = vld [vmem:[#allocation3 + $0x20] sm:$0xf]
      %v1964 = vld [vmem:[#allocation3 + $0x24] sm:$0xf]
      %v1965 = vld [vmem:[#allocation3 + $0x28] sm:$0xf]
      %v1966 = vld [vmem:[#allocation3 + $0x2c] sm:$0xf]
      %v1967 = vld [vmem:[#allocation3 + $0x30] sm:$0xf]
      %v1968 = vld [vmem:[#allocation3 + $0x34] sm:$0xf]
      %v1969 = vld [vmem:[#allocation3 + $0x38] sm:$0xf]
      %v1970 = vld [vmem:[#allocation3 + $0x3c] sm:$0xf]
      %v1971 = vld [vmem:[#allocation3 + $0x40] sm:$0xf]
      %v1972 = vld [vmem:[#allocation3 + $0x44] sm:$0xf]
      %v1973 = vld [vmem:[%s1] sm:$0xf]
      %v1974 = vld [vmem:[%s1 + $0x4] sm:$0xf]
      %v1975 = vld [vmem:[%s1 + $0x8] sm:$0xf]
      %v1976 = vld [vmem:[%s1 + $0xc] sm:$0xf]
      %v1977 = vld [vmem:[%s1 + $0x10] sm:$0xf]
      %v1978 = vld [vmem:[%s1 + $0x14] sm:$0xf]
      %v1979 = vld [vmem:[%s1 + $0x18] sm:$0xf]
      %v1980 = vld [vmem:[%s1 + $0x1c] sm:$0xf]
      %v1981 = vld [vmem:[%s1 + $0x20] sm:$0xf]
      %v1982 = vld [vmem:[%s2] sm:$0x1]
      %v1984 = vperm.slane %v1982, 0
      %v2004 = vunpack.c.l.b16 %v1955
      %v2005 = vunpack.c.l.b16 %v1956
      %v2006 = vunpack.c.l.b16 %v1957
      %v2007 = vunpack.c.l.b16 %v1958
      %v2008 = vunpack.c.l.b16 %v1959
      %v2009 = vunpack.c.l.b16 %v1960
      %v2010 = vunpack.c.l.b16 %v1961
      %v2011 = vunpack.c.l.b16 %v1962
      %v2012 = vunpack.c.l.b16 %v1963
      %v2013 = vunpack.c.l.b16 %v1964
      %v2014 = vunpack.c.l.b16 %v1965
      %v2015 = vunpack.c.l.b16 %v1966
      %v2016 = vunpack.c.l.b16 %v1967
      %v2017 = vunpack.c.l.b16 %v1968
      %v2018 = vunpack.c.l.b16 %v1969
      %v2019 = vunpack.c.l.b16 %v1970
      %v2020 = vunpack.c.l.b16 %v1971
      %v2021 = vunpack.c.l.b16 %v1972
      %v2022 = vpack.c.b16 %v2005, %v2004
      %v2023 = vpack.c.b16 %v2007, %v2006
      %v2024 = vpack.c.b16 %v2009, %v2008
      %v2025 = vpack.c.b16 %v2011, %v2010
      %v2026 = vpack.c.b16 %v2013, %v2012
      %v2027 = vpack.c.b16 %v2015, %v2014
      %v2028 = vpack.c.b16 %v2017, %v2016
      %v2029 = vpack.c.b16 %v2019, %v2018
      %v2030 = vpack.c.b16 %v2021, %v2020
      %v2040 = vunpack.c.l.b16 %v1973
      %v2041 = vunpack.c.l.b16 %v1974
      %v2042 = vunpack.c.l.b16 %v1975
      %v2043 = vunpack.c.l.b16 %v1976
      %v2044 = vunpack.c.l.b16 %v1977
      %v2045 = vunpack.c.l.b16 %v1978
      %v2046 = vunpack.c.l.b16 %v1979
      %v2047 = vunpack.c.l.b16 %v1980
      %v2048 = vunpack.c.l.b16 %v1981
      %v2049 = vpack.c.b16 %v2041, %v2040
      %v2050 = vpack.c.b16 %v2043, %v2042
      %v2051 = vpack.c.b16 %v2045, %v2044
      %v2052 = vpack.c.b16 %v2047, %v2046
      %v2053 = vpack.c.b16 %v2048, %v2048
      %vm2058 = vcmask 588800
      %v2060 = vsel %vm2058, %v2022, 0
      %v2063 = vsel %vm2058, %v2023, 0
      %v2066 = vsel %vm2058, %v2024, 0
      %v2069 = vsel %vm2058, %v2025, 0
      %v2072 = vsel %vm2058, %v2026, 0
      %v2075 = vsel %vm2058, %v2027, 0
      %v2078 = vsel %vm2058, %v2028, 0
      %v2081 = vsel %vm2058, %v2029, 0
      %v2084 = vsel %vm2058, %v2030, 0
      %vm2086 = vcmask 1043456
      %v2088 = vsel %vm2086, %v2053, 0
      %2090 = vmatpush.bf16.msra.mxu0 0
      %2091 = vmatpush.bf16.msra.mxu0 0
      %2092 = vmatpush.bf16.msra.mxu0 0
      %2093 = vmatpush.bf16.msra.mxu0 %v2088
      %2094 = vmatpush.bf16.msra.mxu0 %v2052
      %2095 = vmatpush.bf16.msra.mxu0 %v2051
      %2096 = vmatpush.bf16.msra.mxu0 %v2050
      %2097 = vmatpush.bf16.msra.mxu0 %v2049
      %2098 = vmatmul.bf16.gmra.mxu0 %v2060
      %v2099 = vpop.f32.mrf.mxu0
      %v2100 = vadd.f32 %v1984, %v2099
      %v2101 = vpop.f32.mrf.mxu0
      %v2102 = vadd.f32 %v1984, %v2101
      %2103 = vmatmul.bf16.gmra.mxu0 %v2063
      %v2104 = vpop.f32.mrf.mxu0
      %v2105 = vadd.f32 %v1984, %v2104
      %v2106 = vpop.f32.mrf.mxu0
      %v2107 = vadd.f32 %v1984, %v2106
      %2108 = vmatmul.bf16.gmra.mxu0 %v2066
      %v2109 = vpop.f32.mrf.mxu0
      %v2110 = vadd.f32 %v1984, %v2109
      %v2111 = vpop.f32.mrf.mxu0
      %v2112 = vadd.f32 %v1984, %v2111
      %2113 = vmatmul.bf16.gmra.mxu0 %v2069
      %v2114 = vpop.f32.mrf.mxu0
      %v2115 = vadd.f32 %v1984, %v2114
      %v2116 = vpop.f32.mrf.mxu0
      %v2117 = vadd.f32 %v1984, %v2116
      %2118 = vmatmul.bf16.gmra.mxu0 %v2072
      %v2119 = vpop.f32.mrf.mxu0
      %v2120 = vadd.f32 %v1984, %v2119
      %v2121 = vpop.f32.mrf.mxu0
      %v2122 = vadd.f32 %v1984, %v2121
      %2123 = vmatmul.bf16.gmra.mxu0 %v2075
      %v2124 = vpop.f32.mrf.mxu0
      %v2125 = vadd.f32 %v1984, %v2124
      %v2126 = vpop.f32.mrf.mxu0
      %v2127 = vadd.f32 %v1984, %v2126
      %2128 = vmatmul.bf16.gmra.mxu0 %v2078
      %v2129 = vpop.f32.mrf.mxu0
      %v2130 = vadd.f32 %v1984, %v2129
      %v2131 = vpop.f32.mrf.mxu0
      %v2132 = vadd.f32 %v1984, %v2131
      %2133 = vmatmul.bf16.gmra.mxu0 %v2081
      %v2134 = vpop.f32.mrf.mxu0
      %v2135 = vadd.f32 %v1984, %v2134
      %v2136 = vpop.f32.mrf.mxu0
      %v2137 = vadd.f32 %v1984, %v2136
      %2138 = vmatmul.bf16.gmra.mxu0 %v2084
      %v2139 = vpop.f32.mrf.mxu0
      %v2140 = vadd.f32 %v1984, %v2139
      %v2141 = vpop.f32.mrf.mxu0
      %v2142 = vadd.f32 %v1984, %v2141
      %2143 = vdwg.mxu0
      %v2144 = vmul.f32 %v2100, 0.01
      %v2145 = vmul.f32 %v2102, 0.01
      %v2146 = vmul.f32 %v2105, 0.01
      %v2147 = vmul.f32 %v2107, 0.01
      %v2148 = vmul.f32 %v2110, 0.01
      %v2149 = vmul.f32 %v2112, 0.01
      %v2150 = vmul.f32 %v2115, 0.01
      %v2151 = vmul.f32 %v2117, 0.01
      %v2152 = vmul.f32 %v2120, 0.01
      %v2153 = vmul.f32 %v2122, 0.01
      %v2154 = vmul.f32 %v2125, 0.01
      %v2155 = vmul.f32 %v2127, 0.01
      %v2156 = vmul.f32 %v2130, 0.01
      %v2157 = vmul.f32 %v2132, 0.01
      %v2158 = vmul.f32 %v2135, 0.01
      %v2159 = vmul.f32 %v2137, 0.01
      %v2160 = vmul.f32 %v2140, 0.01
      %v2161 = vmul.f32 %v2142, 0.01
      %v2162 = vmax.f32 %v2100, %v2144
      %v2163 = vmax.f32 %v2102, %v2145
      %v2164 = vmax.f32 %v2105, %v2146
      %v2165 = vmax.f32 %v2107, %v2147
      %v2166 = vmax.f32 %v2110, %v2148
      %v2167 = vmax.f32 %v2112, %v2149
      %v2168 = vmax.f32 %v2115, %v2150
      %v2169 = vmax.f32 %v2117, %v2151
      %v2170 = vmax.f32 %v2120, %v2152
      %v2171 = vmax.f32 %v2122, %v2153
      %v2172 = vmax.f32 %v2125, %v2154
      %v2173 = vmax.f32 %v2127, %v2155
      %v2174 = vmax.f32 %v2130, %v2156
      %v2175 = vmax.f32 %v2132, %v2157
      %v2176 = vmax.f32 %v2135, %v2158
      %v2177 = vmax.f32 %v2137, %v2159
      %v2178 = vmax.f32 %v2140, %v2160
      %v2179 = vmax.f32 %v2142, %v2161
      %v2180 = vlaneseq
      %v2181 = vshrl.u32 %v2180, 7
      %v2182 = vadd.s32 %v2181, 8
      %v2183 = vadd.s32 %v2181, 16
      %v2184 = vadd.s32 %v2181, 24
      %v2185 = vadd.s32 %v2181, 32
      %v2186 = vadd.s32 %v2181, 40
      %v2187 = vadd.s32 %v2181, 48
      %v2188 = vadd.s32 %v2181, 56
      %v2189 = vadd.s32 %v2181, 64
      %v2190 = vadd.s32 %v2181, 72
      %v2191 = vadd.s32 %v2181, 80
      %v2192 = vadd.s32 %v2181, 88
      %v2193 = vadd.s32 %v2181, 96
      %v2194 = vadd.s32 %v2181, 104
      %v2195 = vadd.s32 %v2181, 112
      %v2196 = vadd.s32 %v2181, 120
      %v2197 = vadd.s32 %v2181, 128
      %v2198 = vadd.s32 %v2181, 136
      %v2199 = vcvt.s32.f32 %v2181
      %v2200 = vcvt.s32.f32 %v2182
      %v2201 = vcvt.s32.f32 %v2183
      %v2202 = vcvt.s32.f32 %v2184
      %v2203 = vcvt.s32.f32 %v2185
      %v2204 = vcvt.s32.f32 %v2186
      %v2205 = vcvt.s32.f32 %v2187
      %v2206 = vcvt.s32.f32 %v2188
      %v2207 = vcvt.s32.f32 %v2189
      %v2208 = vcvt.s32.f32 %v2190
      %v2209 = vcvt.s32.f32 %v2191
      %v2210 = vcvt.s32.f32 %v2192
      %v2211 = vcvt.s32.f32 %v2193
      %v2212 = vcvt.s32.f32 %v2194
      %v2213 = vcvt.s32.f32 %v2195
      %v2214 = vcvt.s32.f32 %v2196
      %v2215 = vcvt.s32.f32 %v2197
      %v2216 = vcvt.s32.f32 %v2198
      %v2217 = vadd.f32 %v2199, 0.5
      %v2218 = vadd.f32 %v2200, 0.5
      %v2219 = vadd.f32 %v2201, 0.5
      %v2220 = vadd.f32 %v2202, 0.5
      %v2221 = vadd.f32 %v2203, 0.5
      %v2222 = vadd.f32 %v2204, 0.5
      %v2223 = vadd.f32 %v2205, 0.5
      %v2224 = vadd.f32 %v2206, 0.5
      %v2225 = vadd.f32 %v2207, 0.5
      %v2226 = vadd.f32 %v2208, 0.5
      %v2227 = vadd.f32 %v2209, 0.5
      %v2228 = vadd.f32 %v2210, 0.5
      %v2229 = vadd.f32 %v2211, 0.5
      %v2230 = vadd.f32 %v2212, 0.5
      %v2231 = vadd.f32 %v2213, 0.5
      %v2232 = vadd.f32 %v2214, 0.5
      %v2233 = vadd.f32 %v2215, 0.5
      %v2234 = vadd.f32 %v2216, 0.5
      %v2235 = vmul.f32 %v2217, 0.055555556
      %v2236 = vmul.f32 %v2218, 0.055555556
      %v2237 = vmul.f32 %v2219, 0.055555556
      %v2238 = vmul.f32 %v2220, 0.055555556
      %v2239 = vmul.f32 %v2221, 0.055555556
      %v2240 = vmul.f32 %v2222, 0.055555556
      %v2241 = vmul.f32 %v2223, 0.055555556
      %v2242 = vmul.f32 %v2224, 0.055555556
      %v2243 = vmul.f32 %v2225, 0.055555556
      %v2244 = vmul.f32 %v2226, 0.055555556
      %v2245 = vmul.f32 %v2227, 0.055555556
      %v2246 = vmul.f32 %v2228, 0.055555556
      %v2247 = vmul.f32 %v2229, 0.055555556
      %v2248 = vmul.f32 %v2230, 0.055555556
      %v2249 = vmul.f32 %v2231, 0.055555556
      %v2250 = vmul.f32 %v2232, 0.055555556
      %v2251 = vmul.f32 %v2233, 0.055555556
      %v2252 = vmul.f32 %v2234, 0.055555556
      %v2253 = vfloor.f32 %v2235
      %v2254 = vfloor.f32 %v2236
      %v2255 = vfloor.f32 %v2237
      %v2256 = vfloor.f32 %v2238
      %v2257 = vfloor.f32 %v2239
      %v2258 = vfloor.f32 %v2240
      %v2259 = vfloor.f32 %v2241
      %v2260 = vfloor.f32 %v2242
      %v2261 = vfloor.f32 %v2243
      %v2262 = vfloor.f32 %v2244
      %v2263 = vfloor.f32 %v2245
      %v2264 = vfloor.f32 %v2246
      %v2265 = vfloor.f32 %v2247
      %v2266 = vfloor.f32 %v2248
      %v2267 = vfloor.f32 %v2249
      %v2268 = vfloor.f32 %v2250
      %v2269 = vfloor.f32 %v2251
      %v2270 = vfloor.f32 %v2252
      %v2271 = vmul.f32 %v2253, 18.0
      %v2272 = vmul.f32 %v2254, 18.0
      %v2273 = vmul.f32 %v2255, 18.0
      %v2274 = vmul.f32 %v2256, 18.0
      %v2275 = vmul.f32 %v2257, 18.0
      %v2276 = vmul.f32 %v2258, 18.0
      %v2277 = vmul.f32 %v2259, 18.0
      %v2278 = vmul.f32 %v2260, 18.0
      %v2279 = vmul.f32 %v2261, 18.0
      %v2280 = vmul.f32 %v2262, 18.0
      %v2281 = vmul.f32 %v2263, 18.0
      %v2282 = vmul.f32 %v2264, 18.0
      %v2283 = vmul.f32 %v2265, 18.0
      %v2284 = vmul.f32 %v2266, 18.0
      %v2285 = vmul.f32 %v2267, 18.0
      %v2286 = vmul.f32 %v2268, 18.0
      %v2287 = vmul.f32 %v2269, 18.0
      %v2288 = vmul.f32 %v2270, 18.0
      %v2289 = vsub.f32 %v2199, %v2271
      %v2290 = vsub.f32 %v2200, %v2272
      %v2291 = vsub.f32 %v2201, %v2273
      %v2292 = vsub.f32 %v2202, %v2274
      %v2293 = vsub.f32 %v2203, %v2275
      %v2294 = vsub.f32 %v2204, %v2276
      %v2295 = vsub.f32 %v2205, %v2277
      %v2296 = vsub.f32 %v2206, %v2278
      %v2297 = vsub.f32 %v2207, %v2279
      %v2298 = vsub.f32 %v2208, %v2280
      %v2299 = vsub.f32 %v2209, %v2281
      %v2300 = vsub.f32 %v2210, %v2282
      %v2301 = vsub.f32 %v2211, %v2283
      %v2302 = vsub.f32 %v2212, %v2284
      %v2303 = vsub.f32 %v2213, %v2285
      %v2304 = vsub.f32 %v2214, %v2286
      %v2305 = vsub.f32 %v2215, %v2287
      %v2306 = vsub.f32 %v2216, %v2288
      %vm2307 = vcmp.lt.f32.partialorder %v2289, 16.0
      %vm2308 = vcmp.lt.f32.partialorder %v2290, 16.0
      %vm2309 = vcmp.lt.f32.partialorder %v2291, 16.0
      %vm2310 = vcmp.lt.f32.partialorder %v2292, 16.0
      %vm2311 = vcmp.lt.f32.partialorder %v2293, 16.0
      %vm2312 = vcmp.lt.f32.partialorder %v2294, 16.0
      %vm2313 = vcmp.lt.f32.partialorder %v2295, 16.0
      %vm2314 = vcmp.lt.f32.partialorder %v2296, 16.0
      %vm2315 = vcmp.lt.f32.partialorder %v2297, 16.0
      %vm2316 = vcmp.lt.f32.partialorder %v2298, 16.0
      %vm2317 = vcmp.lt.f32.partialorder %v2299, 16.0
      %vm2318 = vcmp.lt.f32.partialorder %v2300, 16.0
      %vm2319 = vcmp.lt.f32.partialorder %v2301, 16.0
      %vm2320 = vcmp.lt.f32.partialorder %v2302, 16.0
      %vm2321 = vcmp.lt.f32.partialorder %v2303, 16.0
      %vm2322 = vcmp.lt.f32.partialorder %v2304, 16.0
      %vm2323 = vcmp.lt.f32.partialorder %v2305, 16.0
      %vm2324 = vcmp.lt.f32.partialorder %v2306, 16.0
      %vm2325 = vcmp.lt.f32.partialorder %v2199, 288.0
      %vm2326 = vcmp.lt.f32.partialorder %v2200, 288.0
      %vm2327 = vcmp.lt.f32.partialorder %v2201, 288.0
      %vm2328 = vcmp.lt.f32.partialorder %v2202, 288.0
      %vm2329 = vcmp.lt.f32.partialorder %v2203, 288.0
      %vm2330 = vcmp.lt.f32.partialorder %v2204, 288.0
      %vm2331 = vcmp.lt.f32.partialorder %v2205, 288.0
      %vm2332 = vcmp.lt.f32.partialorder %v2206, 288.0
      %vm2333 = vcmp.lt.f32.partialorder %v2207, 288.0
      %vm2334 = vcmp.lt.f32.partialorder %v2208, 288.0
      %vm2335 = vcmp.lt.f32.partialorder %v2209, 288.0
      %vm2336 = vcmp.lt.f32.partialorder %v2210, 288.0
      %vm2337 = vcmp.lt.f32.partialorder %v2211, 288.0
      %vm2338 = vcmp.lt.f32.partialorder %v2212, 288.0
      %vm2339 = vcmp.lt.f32.partialorder %v2213, 288.0
      %vm2340 = vcmp.lt.f32.partialorder %v2214, 288.0
      %vm2341 = vcmp.lt.f32.partialorder %v2215, 288.0
      %vm2342 = vcmp.lt.f32.partialorder %v2216, 288.0
      %vm2343 = vmand %vm2307, %vm2325
      %vm2344 = vmand %vm2308, %vm2326
      %vm2345 = vmand %vm2309, %vm2327
      %vm2346 = vmand %vm2310, %vm2328
      %vm2347 = vmand %vm2311, %vm2329
      %vm2348 = vmand %vm2312, %vm2330
      %vm2349 = vmand %vm2313, %vm2331
      %vm2350 = vmand %vm2314, %vm2332
      %vm2351 = vmand %vm2315, %vm2333
      %vm2352 = vmand %vm2316, %vm2334
      %vm2353 = vmand %vm2317, %vm2335
      %vm2354 = vmand %vm2318, %vm2336
      %vm2355 = vmand %vm2319, %vm2337
      %vm2356 = vmand %vm2320, %vm2338
      %vm2357 = vmand %vm2321, %vm2339
      %vm2358 = vmand %vm2322, %vm2340
      %vm2359 = vmand %vm2323, %vm2341
      %vm2360 = vmand %vm2324, %vm2342
      %v2361 = vsel %vm2343, 1, 0
      %v2362 = vsel %vm2344, 1, 0
      %v2363 = vsel %vm2345, 1, 0
      %v2364 = vsel %vm2346, 1, 0
      %v2365 = vsel %vm2347, 1, 0
      %v2366 = vsel %vm2348, 1, 0
      %v2367 = vsel %vm2349, 1, 0
      %v2368 = vsel %vm2350, 1, 0
      %v2369 = vsel %vm2351, 1, 0
      %v2370 = vsel %vm2352, 1, 0
      %v2371 = vsel %vm2353, 1, 0
      %v2372 = vsel %vm2354, 1, 0
      %v2373 = vsel %vm2355, 1, 0
      %v2374 = vsel %vm2356, 1, 0
      %v2375 = vsel %vm2357, 1, 0
      %v2376 = vsel %vm2358, 1, 0
      %v2377 = vsel %vm2359, 1, 0
      %v2378 = vsel %vm2360, 1, 0
      %vm2379 = vcmp.eq.s32.totalorder %v2361, 1
      %vm2380 = vcmp.eq.s32.totalorder %v2362, 1
      %vm2381 = vcmp.eq.s32.totalorder %v2363, 1
      %vm2382 = vcmp.eq.s32.totalorder %v2364, 1
      %vm2383 = vcmp.eq.s32.totalorder %v2365, 1
      %vm2384 = vcmp.eq.s32.totalorder %v2366, 1
      %vm2385 = vcmp.eq.s32.totalorder %v2367, 1
      %vm2386 = vcmp.eq.s32.totalorder %v2368, 1
      %vm2387 = vcmp.eq.s32.totalorder %v2369, 1
      %vm2388 = vcmp.eq.s32.totalorder %v2370, 1
      %vm2389 = vcmp.eq.s32.totalorder %v2371, 1
      %vm2390 = vcmp.eq.s32.totalorder %v2372, 1
      %vm2391 = vcmp.eq.s32.totalorder %v2373, 1
      %vm2392 = vcmp.eq.s32.totalorder %v2374, 1
      %vm2393 = vcmp.eq.s32.totalorder %v2375, 1
      %vm2394 = vcmp.eq.s32.totalorder %v2376, 1
      %vm2395 = vcmp.eq.s32.totalorder %v2377, 1
      %vm2396 = vcmp.eq.s32.totalorder %v2378, 1
      %v2397 = vsel %vm2379, %v2162, 0.0
      %v2398 = vsel %vm2380, %v2163, 0.0
      %v2399 = vsel %vm2381, %v2164, 0.0
      %v2400 = vsel %vm2382, %v2165, 0.0
      %v2401 = vsel %vm2383, %v2166, 0.0
      %v2402 = vsel %vm2384, %v2167, 0.0
      %v2403 = vsel %vm2385, %v2168, 0.0
      %v2404 = vsel %vm2386, %v2169, 0.0
      %v2405 = vsel %vm2387, %v2170, 0.0
      %v2406 = vsel %vm2388, %v2171, 0.0
      %v2407 = vsel %vm2389, %v2172, 0.0
      %v2408 = vsel %vm2390, %v2173, 0.0
      %v2409 = vsel %vm2391, %v2174, 0.0
      %v2410 = vsel %vm2392, %v2175, 0.0
      %v2411 = vsel %vm2393, %v2176, 0.0
      %v2412 = vsel %vm2394, %v2177, 0.0
      %v2413 = vsel %vm2395, %v2178, 0.0
      %v2414 = vsel %vm2396, %v2179, 0.0
      %v2415 = vpack.c.bf16 %v2397, %v2397
      %v2416 = vpack.c.bf16 %v2398, %v2398
      %v2417 = vpack.c.bf16 %v2399, %v2399
      %v2418 = vpack.c.bf16 %v2400, %v2400
      %v2419 = vpack.c.bf16 %v2401, %v2401
      %v2420 = vpack.c.bf16 %v2402, %v2402
      %v2421 = vpack.c.bf16 %v2403, %v2403
      %v2422 = vpack.c.bf16 %v2404, %v2404
      %v2423 = vpack.c.bf16 %v2405, %v2405
      %v2424 = vpack.c.bf16 %v2406, %v2406
      %v2425 = vpack.c.bf16 %v2407, %v2407
      %v2426 = vpack.c.bf16 %v2408, %v2408
      %v2427 = vpack.c.bf16 %v2409, %v2409
      %v2428 = vpack.c.bf16 %v2410, %v2410
      %v2429 = vpack.c.bf16 %v2411, %v2411
      %v2430 = vpack.c.bf16 %v2412, %v2412
      %v2431 = vpack.c.bf16 %v2413, %v2413
      %v2432 = vpack.c.bf16 %v2414, %v2414
      %2433 = vst [vmem:[#allocation2 + $0x10] sm:$0xf] %v2415
      %2434 = vst [vmem:[#allocation2 + $0x14] sm:$0xf] %v2416
      %2435 = vst [vmem:[#allocation2 + $0x18] sm:$0xf] %v2417
      %2436 = vst [vmem:[#allocation2 + $0x1c] sm:$0xf] %v2418
      %2437 = vst [vmem:[#allocation2 + $0x20] sm:$0xf] %v2419
      %2438 = vst [vmem:[#allocation2 + $0x24] sm:$0xf] %v2420
      %2439 = vst [vmem:[#allocation2 + $0x28] sm:$0xf] %v2421
      %2440 = vst [vmem:[#allocation2 + $0x2c] sm:$0xf] %v2422
      %2441 = vst [vmem:[#allocation2 + $0x30] sm:$0xf] %v2423
      %2442 = vst [vmem:[#allocation2 + $0x34] sm:$0xf] %v2424
      %2443 = vst [vmem:[#allocation2 + $0x38] sm:$0xf] %v2425
      %2444 = vst [vmem:[#allocation2 + $0x3c] sm:$0xf] %v2426
      %2445 = vst [vmem:[#allocation2 + $0x40] sm:$0xf] %v2427
      %2446 = vst [vmem:[#allocation2 + $0x44] sm:$0xf] %v2428
      %2447 = vst [vmem:[#allocation2 + $0x48] sm:$0xf] %v2429
      %2448 = vst [vmem:[#allocation2 + $0x4c] sm:$0xf] %v2430
      %2449 = vst [vmem:[#allocation2 + $0x50] sm:$0xf] %v2431
      %2450 = vst [vmem:[#allocation2 + $0x54] sm:$0xf] %v2432
      %v2451 = vld [vmem:[%s219 + $0x48] sm:$0xf]
      %v2452 = vld [vmem:[%s219 + $0x4c] sm:$0xf]
      %v2453 = vld [vmem:[%s219 + $0x50] sm:$0xf]
      %v2454 = vld [vmem:[%s219 + $0x54] sm:$0xf]
      %v2455 = vld [vmem:[%s219 + $0x58] sm:$0xf]
      %v2456 = vld [vmem:[%s219 + $0x5c] sm:$0xf]
      %v2457 = vld [vmem:[%s219 + $0x60] sm:$0xf]
      %v2458 = vld [vmem:[%s219 + $0x64] sm:$0xf]
      %v2459 = vld [vmem:[%s219 + $0x68] sm:$0xf]
      %v2460 = vld [vmem:[%s219 + $0x6c] sm:$0xf]
      %v2461 = vld [vmem:[%s219 + $0x70] sm:$0xf]
      %v2462 = vld [vmem:[%s219 + $0x74] sm:$0xf]
      %v2463 = vld [vmem:[%s219 + $0x78] sm:$0xf]
      %v2464 = vld [vmem:[%s219 + $0x7c] sm:$0xf]
      %v2465 = vld [vmem:[%s219 + $0x80] sm:$0xf]
      %v2466 = vld [vmem:[%s219 + $0x84] sm:$0xf]
      %v2467 = vld [vmem:[%s219 + $0x88] sm:$0xf]
      %v2468 = vld [vmem:[%s219 + $0x8c] sm:$0xf]
      %2469 = vst.msk [vmem:[#allocation3] sm:$0xf] %vm252, %v2451
      %2470 = vst.msk [vmem:[#allocation3 + $0x4] sm:$0xf] %vm252, %v2452
      %2471 = vst.msk [vmem:[#allocation3 + $0x8] sm:$0xf] %vm252, %v2453
      %2472 = vst.msk [vmem:[#allocation3 + $0xc] sm:$0xf] %vm252, %v2454
      %2473 = vst.msk [vmem:[#allocation3 + $0x10] sm:$0xf] %vm252, %v2455
      %2474 = vst.msk [vmem:[#allocation3 + $0x14] sm:$0xf] %vm252, %v2456
      %2475 = vst.msk [vmem:[#allocation3 + $0x18] sm:$0xf] %vm252, %v2457
      %2476 = vst.msk [vmem:[#allocation3 + $0x1c] sm:$0xf] %vm252, %v2458
      %2477 = vst.msk [vmem:[#allocation3 + $0x20] sm:$0xf] %vm252, %v2459
      %2478 = vst.msk [vmem:[#allocation3 + $0x24] sm:$0xf] %vm252, %v2460
      %2479 = vst.msk [vmem:[#allocation3 + $0x28] sm:$0xf] %vm252, %v2461
      %2480 = vst.msk [vmem:[#allocation3 + $0x2c] sm:$0xf] %vm252, %v2462
      %2481 = vst.msk [vmem:[#allocation3 + $0x30] sm:$0xf] %vm252, %v2463
      %2482 = vst.msk [vmem:[#allocation3 + $0x34] sm:$0xf] %vm252, %v2464
      %2483 = vst.msk [vmem:[#allocation3 + $0x38] sm:$0xf] %vm252, %v2465
      %2484 = vst.msk [vmem:[#allocation3 + $0x3c] sm:$0xf] %vm252, %v2466
      %2485 = vst.msk [vmem:[#allocation3 + $0x40] sm:$0xf] %vm252, %v2467
      %2486 = vst.msk [vmem:[#allocation3 + $0x44] sm:$0xf] %vm252, %v2468
      %v2487 = vld [vmem:[%s219 + $0x48] sm:$0xf]
      %v2488 = vld [vmem:[%s219 + $0x4c] sm:$0xf]
      %v2489 = vld [vmem:[%s219 + $0x50] sm:$0xf]
      %v2490 = vld [vmem:[%s219 + $0x54] sm:$0xf]
      %v2491 = vld [vmem:[%s219 + $0x58] sm:$0xf]
      %v2492 = vld [vmem:[%s219 + $0x5c] sm:$0xf]
      %v2493 = vld [vmem:[%s219 + $0x60] sm:$0xf]
      %v2494 = vld [vmem:[%s219 + $0x64] sm:$0xf]
      %v2495 = vld [vmem:[%s219 + $0x68] sm:$0xf]
      %v2496 = vld [vmem:[%s219 + $0x6c] sm:$0xf]
      %v2497 = vld [vmem:[%s219 + $0x70] sm:$0xf]
      %v2498 = vld [vmem:[%s219 + $0x74] sm:$0xf]
      %v2499 = vld [vmem:[%s219 + $0x78] sm:$0xf]
      %v2500 = vld [vmem:[%s219 + $0x7c] sm:$0xf]
      %v2501 = vld [vmem:[%s219 + $0x80] sm:$0xf]
      %v2502 = vld [vmem:[%s219 + $0x84] sm:$0xf]
      %v2503 = vld [vmem:[%s219 + $0x88] sm:$0xf]
      %v2504 = vld [vmem:[%s219 + $0x8c] sm:$0xf]
      %v2505 = vld [vmem:[%s219 + $0x90] sm:$0x1]
      %v2507 = vshrl.u32 %v2487, 16
      %v2509 = vrot.slane %v2507, 4
      %v2510 = vshll.u32 %v2487, 16
      %v2512 = vrot.slane %v2510, 5
      %v2513 = vor.u32 %v2509, %v2512
      %v2514 = vrot.slane %v2513, 4
      %v2516 = vshll.u32 %v2488, 16
      %v2518 = vrot.slane %v2516, 5
      %v2519 = vsel %vm292, %v2514, %v2518
      %v2520 = vshrl.u32 %v2488, 16
      %v2522 = vrot.slane %v2520, 4
      %v2523 = vor.u32 %v2522, %v2518
      %v2524 = vrot.slane %v2523, 4
      %v2526 = vshll.u32 %v2489, 16
      %v2528 = vrot.slane %v2526, 5
      %v2529 = vsel %vm292, %v2524, %v2528
      %v2530 = vshrl.u32 %v2489, 16
      %v2532 = vrot.slane %v2530, 4
      %v2533 = vor.u32 %v2532, %v2528
      %v2534 = vrot.slane %v2533, 4
      %v2536 = vshll.u32 %v2490, 16
      %v2538 = vrot.slane %v2536, 5
      %v2539 = vsel %vm292, %v2534, %v2538
      %v2540 = vshrl.u32 %v2490, 16
      %v2542 = vrot.slane %v2540, 4
      %v2543 = vor.u32 %v2542, %v2538
      %v2544 = vrot.slane %v2543, 4
      %v2546 = vshll.u32 %v2491, 16
      %v2548 = vrot.slane %v2546, 5
      %v2549 = vsel %vm292, %v2544, %v2548
      %v2550 = vshrl.u32 %v2491, 16
      %v2552 = vrot.slane %v2550, 4
      %v2553 = vor.u32 %v2552, %v2548
      %v2554 = vrot.slane %v2553, 4
      %v2556 = vshll.u32 %v2492, 16
      %v2558 = vrot.slane %v2556, 5
      %v2559 = vsel %vm292, %v2554, %v2558
      %v2560 = vshrl.u32 %v2492, 16
      %v2562 = vrot.slane %v2560, 4
      %v2563 = vor.u32 %v2562, %v2558
      %v2564 = vrot.slane %v2563, 4
      %v2566 = vshll.u32 %v2493, 16
      %v2568 = vrot.slane %v2566, 5
      %v2569 = vsel %vm292, %v2564, %v2568
      %v2570 = vshrl.u32 %v2493, 16
      %v2572 = vrot.slane %v2570, 4
      %v2573 = vor.u32 %v2572, %v2568
      %v2574 = vrot.slane %v2573, 4
      %v2576 = vshll.u32 %v2494, 16
      %v2578 = vrot.slane %v2576, 5
      %v2579 = vsel %vm292, %v2574, %v2578
      %v2580 = vshrl.u32 %v2494, 16
      %v2582 = vrot.slane %v2580, 4
      %v2583 = vor.u32 %v2582, %v2578
      %v2584 = vrot.slane %v2583, 4
      %v2586 = vshll.u32 %v2495, 16
      %v2588 = vrot.slane %v2586, 5
      %v2589 = vsel %vm292, %v2584, %v2588
      %v2590 = vshrl.u32 %v2495, 16
      %v2592 = vrot.slane %v2590, 4
      %v2593 = vor.u32 %v2592, %v2588
      %v2594 = vrot.slane %v2593, 4
      %v2596 = vshll.u32 %v2496, 16
      %v2598 = vrot.slane %v2596, 5
      %v2599 = vsel %vm292, %v2594, %v2598
      %v2600 = vshrl.u32 %v2496, 16
      %v2602 = vrot.slane %v2600, 4
      %v2603 = vor.u32 %v2602, %v2598
      %v2604 = vrot.slane %v2603, 4
      %v2606 = vshll.u32 %v2497, 16
      %v2608 = vrot.slane %v2606, 5
      %v2609 = vsel %vm292, %v2604, %v2608
      %v2610 = vshrl.u32 %v2497, 16
      %v2612 = vrot.slane %v2610, 4
      %v2613 = vor.u32 %v2612, %v2608
      %v2614 = vrot.slane %v2613, 4
      %v2616 = vshll.u32 %v2498, 16
      %v2618 = vrot.slane %v2616, 5
      %v2619 = vsel %vm292, %v2614, %v2618
      %v2620 = vshrl.u32 %v2498, 16
      %v2622 = vrot.slane %v2620, 4
      %v2623 = vor.u32 %v2622, %v2618
      %v2624 = vrot.slane %v2623, 4
      %v2626 = vshll.u32 %v2499, 16
      %v2628 = vrot.slane %v2626, 5
      %v2629 = vsel %vm292, %v2624, %v2628
      %v2630 = vshrl.u32 %v2499, 16
      %v2632 = vrot.slane %v2630, 4
      %v2633 = vor.u32 %v2632, %v2628
      %v2634 = vrot.slane %v2633, 4
      %v2636 = vshll.u32 %v2500, 16
      %v2638 = vrot.slane %v2636, 5
      %v2639 = vsel %vm292, %v2634, %v2638
      %v2640 = vshrl.u32 %v2500, 16
      %v2642 = vrot.slane %v2640, 4
      %v2643 = vor.u32 %v2642, %v2638
      %v2644 = vrot.slane %v2643, 4
      %v2646 = vshll.u32 %v2501, 16
      %v2648 = vrot.slane %v2646, 5
      %v2649 = vsel %vm292, %v2644, %v2648
      %v2650 = vshrl.u32 %v2501, 16
      %v2652 = vrot.slane %v2650, 4
      %v2653 = vor.u32 %v2652, %v2648
      %v2654 = vrot.slane %v2653, 4
      %v2656 = vshll.u32 %v2502, 16
      %v2658 = vrot.slane %v2656, 5
      %v2659 = vsel %vm292, %v2654, %v2658
      %v2660 = vshrl.u32 %v2502, 16
      %v2662 = vrot.slane %v2660, 4
      %v2663 = vor.u32 %v2662, %v2658
      %v2664 = vrot.slane %v2663, 4
      %v2666 = vshll.u32 %v2503, 16
      %v2668 = vrot.slane %v2666, 5
      %v2669 = vsel %vm292, %v2664, %v2668
      %v2670 = vshrl.u32 %v2503, 16
      %v2672 = vrot.slane %v2670, 4
      %v2673 = vor.u32 %v2672, %v2668
      %v2674 = vrot.slane %v2673, 4
      %v2676 = vshll.u32 %v2504, 16
      %v2678 = vrot.slane %v2676, 5
      %v2679 = vsel %vm292, %v2674, %v2678
      %v2680 = vshrl.u32 %v2504, 16
      %v2682 = vrot.slane %v2680, 4
      %v2683 = vor.u32 %v2682, %v2678
      %v2684 = vrot.slane %v2683, 4
      %v2686 = vshll.u32 %v2505, 16
      %v2688 = vrot.slane %v2686, 5
      %v2689 = vsel %vm292, %v2684, %v2688
      %2690 = vrot.lane.b32.xlu0 %v2519, 8
      %v2691 = vpop.permute.xlu0 %2690
      %2692 = vrot.lane.b32.xlu0 %v2529, 8
      %v2693 = vpop.permute.xlu0 %2692
      %2694 = vrot.lane.b32.xlu0 %v2539, 8
      %v2695 = vpop.permute.xlu0 %2694
      %2696 = vrot.lane.b32.xlu0 %v2549, 8
      %v2697 = vpop.permute.xlu0 %2696
      %2698 = vrot.lane.b32.xlu0 %v2559, 8
      %v2699 = vpop.permute.xlu0 %2698
      %2700 = vrot.lane.b32.xlu0 %v2569, 8
      %v2701 = vpop.permute.xlu0 %2700
      %2702 = vrot.lane.b32.xlu0 %v2579, 8
      %v2703 = vpop.permute.xlu0 %2702
      %2704 = vrot.lane.b32.xlu0 %v2589, 8
      %v2705 = vpop.permute.xlu0 %2704
      %2706 = vrot.lane.b32.xlu0 %v2599, 8
      %v2707 = vpop.permute.xlu0 %2706
      %2708 = vrot.lane.b32.xlu0 %v2609, 8
      %v2709 = vpop.permute.xlu0 %2708
      %2710 = vrot.lane.b32.xlu0 %v2619, 8
      %v2711 = vpop.permute.xlu0 %2710
      %2712 = vrot.lane.b32.xlu0 %v2629, 8
      %v2713 = vpop.permute.xlu0 %2712
      %2714 = vrot.lane.b32.xlu0 %v2639, 8
      %v2715 = vpop.permute.xlu0 %2714
      %2716 = vrot.lane.b32.xlu0 %v2649, 8
      %v2717 = vpop.permute.xlu0 %2716
      %2718 = vrot.lane.b32.xlu0 %v2659, 8
      %v2719 = vpop.permute.xlu0 %2718
      %2720 = vrot.lane.b32.xlu0 %v2669, 8
      %v2721 = vpop.permute.xlu0 %2720
      %2722 = vrot.lane.b32.xlu0 %v2679, 8
      %v2723 = vpop.permute.xlu0 %2722
      %2724 = vrot.lane.b32.xlu0 %v2689, 8
      %v2725 = vpop.permute.xlu0 %2724
      %2744 = vst.msk [vmem:[#allocation3] sm:$0xf] %vm531, %v2691
      %2745 = vst.msk [vmem:[#allocation3 + $0x4] sm:$0xf] %vm531, %v2693
      %2746 = vst.msk [vmem:[#allocation3 + $0x8] sm:$0xf] %vm531, %v2695
      %2747 = vst.msk [vmem:[#allocation3 + $0xc] sm:$0xf] %vm531, %v2697
      %2748 = vst.msk [vmem:[#allocation3 + $0x10] sm:$0xf] %vm531, %v2699
      %2749 = vst.msk [vmem:[#allocation3 + $0x14] sm:$0xf] %vm531, %v2701
      %2750 = vst.msk [vmem:[#allocation3 + $0x18] sm:$0xf] %vm531, %v2703
      %2751 = vst.msk [vmem:[#allocation3 + $0x1c] sm:$0xf] %vm531, %v2705
      %2752 = vst.msk [vmem:[#allocation3 + $0x20] sm:$0xf] %vm531, %v2707
      %2753 = vst.msk [vmem:[#allocation3 + $0x24] sm:$0xf] %vm531, %v2709
      %2754 = vst.msk [vmem:[#allocation3 + $0x28] sm:$0xf] %vm531, %v2711
      %2755 = vst.msk [vmem:[#allocation3 + $0x2c] sm:$0xf] %vm531, %v2713
      %2756 = vst.msk [vmem:[#allocation3 + $0x30] sm:$0xf] %vm531, %v2715
      %2757 = vst.msk [vmem:[#allocation3 + $0x34] sm:$0xf] %vm531, %v2717
      %2758 = vst.msk [vmem:[#allocation3 + $0x38] sm:$0xf] %vm531, %v2719
      %2759 = vst.msk [vmem:[#allocation3 + $0x3c] sm:$0xf] %vm531, %v2721
      %2760 = vst.msk [vmem:[#allocation3 + $0x40] sm:$0xf] %vm531, %v2723
      %2761 = vst.msk [vmem:[#allocation3 + $0x44] sm:$0xf] %vm531, %v2725
      %v2762 = vld [vmem:[%s219 + $0x48] sm:$0xe]
      %v2763 = vld [vmem:[%s219 + $0x4c] sm:$0xf]
      %v2764 = vld [vmem:[%s219 + $0x50] sm:$0xf]
      %v2765 = vld [vmem:[%s219 + $0x54] sm:$0xf]
      %v2766 = vld [vmem:[%s219 + $0x58] sm:$0xf]
      %v2767 = vld [vmem:[%s219 + $0x5c] sm:$0xf]
      %v2768 = vld [vmem:[%s219 + $0x60] sm:$0xf]
      %v2769 = vld [vmem:[%s219 + $0x64] sm:$0xf]
      %v2770 = vld [vmem:[%s219 + $0x68] sm:$0xf]
      %v2771 = vld [vmem:[%s219 + $0x6c] sm:$0xf]
      %v2772 = vld [vmem:[%s219 + $0x70] sm:$0xf]
      %v2773 = vld [vmem:[%s219 + $0x74] sm:$0xf]
      %v2774 = vld [vmem:[%s219 + $0x78] sm:$0xf]
      %v2775 = vld [vmem:[%s219 + $0x7c] sm:$0xf]
      %v2776 = vld [vmem:[%s219 + $0x80] sm:$0xf]
      %v2777 = vld [vmem:[%s219 + $0x84] sm:$0xf]
      %v2778 = vld [vmem:[%s219 + $0x88] sm:$0xf]
      %v2779 = vld [vmem:[%s219 + $0x8c] sm:$0xf]
      %v2780 = vld [vmem:[%s219 + $0x90] sm:$0x1]
      %v2800 = vrot.slane %v2762, 5
      %v2801 = vrot.slane %v2800, 4
      %v2802 = vrot.slane %v2763, 5
      %v2803 = vsel %vm590, %v2801, %v2802
      %v2804 = vrot.slane %v2802, 4
      %v2805 = vrot.slane %v2764, 5
      %v2806 = vsel %vm590, %v2804, %v2805
      %v2807 = vrot.slane %v2805, 4
      %v2808 = vrot.slane %v2765, 5
      %v2809 = vsel %vm590, %v2807, %v2808
      %v2810 = vrot.slane %v2808, 4
      %v2811 = vrot.slane %v2766, 5
      %v2812 = vsel %vm590, %v2810, %v2811
      %v2813 = vrot.slane %v2811, 4
      %v2814 = vrot.slane %v2767, 5
      %v2815 = vsel %vm590, %v2813, %v2814
      %v2816 = vrot.slane %v2814, 4
      %v2817 = vrot.slane %v2768, 5
      %v2818 = vsel %vm590, %v2816, %v2817
      %v2819 = vrot.slane %v2817, 4
      %v2820 = vrot.slane %v2769, 5
      %v2821 = vsel %vm590, %v2819, %v2820
      %v2822 = vrot.slane %v2820, 4
      %v2823 = vrot.slane %v2770, 5
      %v2824 = vsel %vm590, %v2822, %v2823
      %v2825 = vrot.slane %v2823, 4
      %v2826 = vrot.slane %v2771, 5
      %v2827 = vsel %vm590, %v2825, %v2826
      %v2828 = vrot.slane %v2826, 4
      %v2829 = vrot.slane %v2772, 5
      %v2830 = vsel %vm590, %v2828, %v2829
      %v2831 = vrot.slane %v2829, 4
      %v2832 = vrot.slane %v2773, 5
      %v2833 = vsel %vm590, %v2831, %v2832
      %v2834 = vrot.slane %v2832, 4
      %v2835 = vrot.slane %v2774, 5
      %v2836 = vsel %vm590, %v2834, %v2835
      %v2837 = vrot.slane %v2835, 4
      %v2838 = vrot.slane %v2775, 5
      %v2839 = vsel %vm590, %v2837, %v2838
      %v2840 = vrot.slane %v2838, 4
      %v2841 = vrot.slane %v2776, 5
      %v2842 = vsel %vm590, %v2840, %v2841
      %v2843 = vrot.slane %v2841, 4
      %v2844 = vrot.slane %v2777, 5
      %v2845 = vsel %vm590, %v2843, %v2844
      %v2846 = vrot.slane %v2844, 4
      %v2847 = vrot.slane %v2778, 5
      %v2848 = vsel %vm590, %v2846, %v2847
      %v2849 = vrot.slane %v2847, 4
      %v2850 = vrot.slane %v2779, 5
      %v2851 = vsel %vm590, %v2849, %v2850
      %v2852 = vrot.slane %v2850, 4
      %v2853 = vrot.slane %v2780, 5
      %v2854 = vsel %vm590, %v2852, %v2853
      %2855 = vrot.lane.b32.xlu0 %v2803, 16
      %v2856 = vpop.permute.xlu0 %2855
      %2857 = vrot.lane.b32.xlu0 %v2806, 16
      %v2858 = vpop.permute.xlu0 %2857
      %2859 = vrot.lane.b32.xlu0 %v2809, 16
      %v2860 = vpop.permute.xlu0 %2859
      %2861 = vrot.lane.b32.xlu0 %v2812, 16
      %v2862 = vpop.permute.xlu0 %2861
      %2863 = vrot.lane.b32.xlu0 %v2815, 16
      %v2864 = vpop.permute.xlu0 %2863
      %2865 = vrot.lane.b32.xlu0 %v2818, 16
      %v2866 = vpop.permute.xlu0 %2865
      %2867 = vrot.lane.b32.xlu0 %v2821, 16
      %v2868 = vpop.permute.xlu0 %2867
      %2869 = vrot.lane.b32.xlu0 %v2824, 16
      %v2870 = vpop.permute.xlu0 %2869
      %2871 = vrot.lane.b32.xlu0 %v2827, 16
      %v2872 = vpop.permute.xlu0 %2871
      %2873 = vrot.lane.b32.xlu0 %v2830, 16
      %v2874 = vpop.permute.xlu0 %2873
      %2875 = vrot.lane.b32.xlu0 %v2833, 16
      %v2876 = vpop.permute.xlu0 %2875
      %2877 = vrot.lane.b32.xlu0 %v2836, 16
      %v2878 = vpop.permute.xlu0 %2877
      %2879 = vrot.lane.b32.xlu0 %v2839, 16
      %v2880 = vpop.permute.xlu0 %2879
      %2881 = vrot.lane.b32.xlu0 %v2842, 16
      %v2882 = vpop.permute.xlu0 %2881
      %2883 = vrot.lane.b32.xlu0 %v2845, 16
      %v2884 = vpop.permute.xlu0 %2883
      %2885 = vrot.lane.b32.xlu0 %v2848, 16
      %v2886 = vpop.permute.xlu0 %2885
      %2887 = vrot.lane.b32.xlu0 %v2851, 16
      %v2888 = vpop.permute.xlu0 %2887
      %2889 = vrot.lane.b32.xlu0 %v2854, 16
      %v2890 = vpop.permute.xlu0 %2889
      %2909 = vst.msk [vmem:[#allocation3] sm:$0xf] %vm700, %v2856
      %2910 = vst.msk [vmem:[#allocation3 + $0x4] sm:$0xf] %vm700, %v2858
      %2911 = vst.msk [vmem:[#allocation3 + $0x8] sm:$0xf] %vm700, %v2860
      %2912 = vst.msk [vmem:[#allocation3 + $0xc] sm:$0xf] %vm700, %v2862
      %2913 = vst.msk [vmem:[#allocation3 + $0x10] sm:$0xf] %vm700, %v2864
      %2914 = vst.msk [vmem:[#allocation3 + $0x14] sm:$0xf] %vm700, %v2866
      %2915 = vst.msk [vmem:[#allocation3 + $0x18] sm:$0xf] %vm700, %v2868
      %2916 = vst.msk [vmem:[#allocation3 + $0x1c] sm:$0xf] %vm700, %v2870
      %2917 = vst.msk [vmem:[#allocation3 + $0x20] sm:$0xf] %vm700, %v2872
      %2918 = vst.msk [vmem:[#allocation3 + $0x24] sm:$0xf] %vm700, %v2874
      %2919 = vst.msk [vmem:[#allocation3 + $0x28] sm:$0xf] %vm700, %v2876
      %2920 = vst.msk [vmem:[#allocation3 + $0x2c] sm:$0xf] %vm700, %v2878
      %2921 = vst.msk [vmem:[#allocation3 + $0x30] sm:$0xf] %vm700, %v2880
      %2922 = vst.msk [vmem:[#allocation3 + $0x34] sm:$0xf] %vm700, %v2882
      %2923 = vst.msk [vmem:[#allocation3 + $0x38] sm:$0xf] %vm700, %v2884
      %2924 = vst.msk [vmem:[#allocation3 + $0x3c] sm:$0xf] %vm700, %v2886
      %2925 = vst.msk [vmem:[#allocation3 + $0x40] sm:$0xf] %vm700, %v2888
      %2926 = vst.msk [vmem:[#allocation3 + $0x44] sm:$0xf] %vm700, %v2890
      %v2927 = vld [vmem:[%s219 + $0x50] sm:$0xe]
      %v2928 = vld [vmem:[%s219 + $0x54] sm:$0xf]
      %v2929 = vld [vmem:[%s219 + $0x58] sm:$0xf]
      %v2930 = vld [vmem:[%s219 + $0x5c] sm:$0xf]
      %v2931 = vld [vmem:[%s219 + $0x60] sm:$0xf]
      %v2932 = vld [vmem:[%s219 + $0x64] sm:$0xf]
      %v2933 = vld [vmem:[%s219 + $0x68] sm:$0xf]
      %v2934 = vld [vmem:[%s219 + $0x6c] sm:$0xf]
      %v2935 = vld [vmem:[%s219 + $0x70] sm:$0xf]
      %v2936 = vld [vmem:[%s219 + $0x74] sm:$0xf]
      %v2937 = vld [vmem:[%s219 + $0x78] sm:$0xf]
      %v2938 = vld [vmem:[%s219 + $0x7c] sm:$0xf]
      %v2939 = vld [vmem:[%s219 + $0x80] sm:$0xf]
      %v2940 = vld [vmem:[%s219 + $0x84] sm:$0xf]
      %v2941 = vld [vmem:[%s219 + $0x88] sm:$0xf]
      %v2942 = vld [vmem:[%s219 + $0x8c] sm:$0xf]
      %v2943 = vld [vmem:[%s219 + $0x90] sm:$0xf]
      %v2944 = vld [vmem:[%s219 + $0x94] sm:$0xf]
      %v2945 = vld [vmem:[%s219 + $0x98] sm:$0x1]
      %v2965 = vrot.slane %v2927, 5
      %v2966 = vrot.slane %v2965, 4
      %v2967 = vrot.slane %v2928, 5
      %v2968 = vsel %vm590, %v2966, %v2967
      %v2969 = vrot.slane %v2967, 4
      %v2970 = vrot.slane %v2929, 5
      %v2971 = vsel %vm590, %v2969, %v2970
      %v2972 = vrot.slane %v2970, 4
      %v2973 = vrot.slane %v2930, 5
      %v2974 = vsel %vm590, %v2972, %v2973
      %v2975 = vrot.slane %v2973, 4
      %v2976 = vrot.slane %v2931, 5
      %v2977 = vsel %vm590, %v2975, %v2976
      %v2978 = vrot.slane %v2976, 4
      %v2979 = vrot.slane %v2932, 5
      %v2980 = vsel %vm590, %v2978, %v2979
      %v2981 = vrot.slane %v2979, 4
      %v2982 = vrot.slane %v2933, 5
      %v2983 = vsel %vm590, %v2981, %v2982
      %v2984 = vrot.slane %v2982, 4
      %v2985 = vrot.slane %v2934, 5
      %v2986 = vsel %vm590, %v2984, %v2985
      %v2987 = vrot.slane %v2985, 4
      %v2988 = vrot.slane %v2935, 5
      %v2989 = vsel %vm590, %v2987, %v2988
      %v2990 = vrot.slane %v2988, 4
      %v2991 = vrot.slane %v2936, 5
      %v2992 = vsel %vm590, %v2990, %v2991
      %v2993 = vrot.slane %v2991, 4
      %v2994 = vrot.slane %v2937, 5
      %v2995 = vsel %vm590, %v2993, %v2994
      %v2996 = vrot.slane %v2994, 4
      %v2997 = vrot.slane %v2938, 5
      %v2998 = vsel %vm590, %v2996, %v2997
      %v2999 = vrot.slane %v2997, 4
      %v3000 = vrot.slane %v2939, 5
      %v3001 = vsel %vm590, %v2999, %v3000
      %v3002 = vrot.slane %v3000, 4
      %v3003 = vrot.slane %v2940, 5
      %v3004 = vsel %vm590, %v3002, %v3003
      %v3005 = vrot.slane %v3003, 4
      %v3006 = vrot.slane %v2941, 5
      %v3007 = vsel %vm590, %v3005, %v3006
      %v3008 = vrot.slane %v3006, 4
      %v3009 = vrot.slane %v2942, 5
      %v3010 = vsel %vm590, %v3008, %v3009
      %v3011 = vrot.slane %v3009, 4
      %v3012 = vrot.slane %v2943, 5
      %v3013 = vsel %vm590, %v3011, %v3012
      %v3014 = vrot.slane %v3012, 4
      %v3015 = vrot.slane %v2944, 5
      %v3016 = vsel %vm590, %v3014, %v3015
      %v3017 = vrot.slane %v3015, 4
      %v3018 = vrot.slane %v2945, 5
      %v3019 = vsel %vm590, %v3017, %v3018
      %3020 = vrot.lane.b32.xlu0 %v2968, 24
      %v3021 = vpop.permute.xlu0 %3020
      %3022 = vrot.lane.b32.xlu0 %v2971, 24
      %v3023 = vpop.permute.xlu0 %3022
      %3024 = vrot.lane.b32.xlu0 %v2974, 24
      %v3025 = vpop.permute.xlu0 %3024
      %3026 = vrot.lane.b32.xlu0 %v2977, 24
      %v3027 = vpop.permute.xlu0 %3026
      %3028 = vrot.lane.b32.xlu0 %v2980, 24
      %v3029 = vpop.permute.xlu0 %3028
      %3030 = vrot.lane.b32.xlu0 %v2983, 24
      %v3031 = vpop.permute.xlu0 %3030
      %3032 = vrot.lane.b32.xlu0 %v2986, 24
      %v3033 = vpop.permute.xlu0 %3032
      %3034 = vrot.lane.b32.xlu0 %v2989, 24
      %v3035 = vpop.permute.xlu0 %3034
      %3036 = vrot.lane.b32.xlu0 %v2992, 24
      %v3037 = vpop.permute.xlu0 %3036
      %3038 = vrot.lane.b32.xlu0 %v2995, 24
      %v3039 = vpop.permute.xlu0 %3038
      %3040 = vrot.lane.b32.xlu0 %v2998, 24
      %v3041 = vpop.permute.xlu0 %3040
      %3042 = vrot.lane.b32.xlu0 %v3001, 24
      %v3043 = vpop.permute.xlu0 %3042
      %3044 = vrot.lane.b32.xlu0 %v3004, 24
      %v3045 = vpop.permute.xlu0 %3044
      %3046 = vrot.lane.b32.xlu0 %v3007, 24
      %v3047 = vpop.permute.xlu0 %3046
      %3048 = vrot.lane.b32.xlu0 %v3010, 24
      %v3049 = vpop.permute.xlu0 %3048
      %3050 = vrot.lane.b32.xlu0 %v3013, 24
      %v3051 = vpop.permute.xlu0 %3050
      %3052 = vrot.lane.b32.xlu0 %v3016, 24
      %v3053 = vpop.permute.xlu0 %3052
      %3054 = vrot.lane.b32.xlu0 %v3019, 24
      %v3055 = vpop.permute.xlu0 %3054
      %3074 = vst.msk [vmem:[#allocation3] sm:$0xf] %vm866, %v3021
      %3075 = vst.msk [vmem:[#allocation3 + $0x4] sm:$0xf] %vm866, %v3023
      %3076 = vst.msk [vmem:[#allocation3 + $0x8] sm:$0xf] %vm866, %v3025
      %3077 = vst.msk [vmem:[#allocation3 + $0xc] sm:$0xf] %vm866, %v3027
      %3078 = vst.msk [vmem:[#allocation3 + $0x10] sm:$0xf] %vm866, %v3029
      %3079 = vst.msk [vmem:[#allocation3 + $0x14] sm:$0xf] %vm866, %v3031
      %3080 = vst.msk [vmem:[#allocation3 + $0x18] sm:$0xf] %vm866, %v3033
      %3081 = vst.msk [vmem:[#allocation3 + $0x1c] sm:$0xf] %vm866, %v3035
      %3082 = vst.msk [vmem:[#allocation3 + $0x20] sm:$0xf] %vm866, %v3037
      %3083 = vst.msk [vmem:[#allocation3 + $0x24] sm:$0xf] %vm866, %v3039
      %3084 = vst.msk [vmem:[#allocation3 + $0x28] sm:$0xf] %vm866, %v3041
      %3085 = vst.msk [vmem:[#allocation3 + $0x2c] sm:$0xf] %vm866, %v3043
      %3086 = vst.msk [vmem:[#allocation3 + $0x30] sm:$0xf] %vm866, %v3045
      %3087 = vst.msk [vmem:[#allocation3 + $0x34] sm:$0xf] %vm866, %v3047
      %3088 = vst.msk [vmem:[#allocation3 + $0x38] sm:$0xf] %vm866, %v3049
      %3089 = vst.msk [vmem:[#allocation3 + $0x3c] sm:$0xf] %vm866, %v3051
      %3090 = vst.msk [vmem:[#allocation3 + $0x40] sm:$0xf] %vm866, %v3053
      %3091 = vst.msk [vmem:[#allocation3 + $0x44] sm:$0xf] %vm866, %v3055
      %v3092 = vld [vmem:[%s219 + $0x50] sm:$0xe]
      %v3093 = vld [vmem:[%s219 + $0x54] sm:$0xf]
      %v3094 = vld [vmem:[%s219 + $0x58] sm:$0xf]
      %v3095 = vld [vmem:[%s219 + $0x5c] sm:$0xf]
      %v3096 = vld [vmem:[%s219 + $0x60] sm:$0xf]
      %v3097 = vld [vmem:[%s219 + $0x64] sm:$0xf]
      %v3098 = vld [vmem:[%s219 + $0x68] sm:$0xf]
      %v3099 = vld [vmem:[%s219 + $0x6c] sm:$0xf]
      %v3100 = vld [vmem:[%s219 + $0x70] sm:$0xf]
      %v3101 = vld [vmem:[%s219 + $0x74] sm:$0xf]
      %v3102 = vld [vmem:[%s219 + $0x78] sm:$0xf]
      %v3103 = vld [vmem:[%s219 + $0x7c] sm:$0xf]
      %v3104 = vld [vmem:[%s219 + $0x80] sm:$0xf]
      %v3105 = vld [vmem:[%s219 + $0x84] sm:$0xf]
      %v3106 = vld [vmem:[%s219 + $0x88] sm:$0xf]
      %v3107 = vld [vmem:[%s219 + $0x8c] sm:$0xf]
      %v3108 = vld [vmem:[%s219 + $0x90] sm:$0xf]
      %v3109 = vld [vmem:[%s219 + $0x94] sm:$0xf]
      %v3110 = vld [vmem:[%s219 + $0x98] sm:$0x3]
      %v3112 = vshrl.u32 %v3092, 16
      %v3114 = vrot.slane %v3112, 5
      %v3115 = vshll.u32 %v3092, 16
      %v3117 = vrot.slane %v3115, 6
      %v3118 = vor.u32 %v3114, %v3117
      %v3119 = vrot.slane %v3118, 4
      %v3121 = vshrl.u32 %v3093, 16
      %v3123 = vrot.slane %v3121, 5
      %v3124 = vshll.u32 %v3093, 16
      %v3126 = vrot.slane %v3124, 6
      %v3127 = vor.u32 %v3123, %v3126
      %v3128 = vsel %vm906, %v3119, %v3127
      %v3129 = vrot.slane %v3127, 4
      %v3131 = vshrl.u32 %v3094, 16
      %v3133 = vrot.slane %v3131, 5
      %v3134 = vshll.u32 %v3094, 16
      %v3136 = vrot.slane %v3134, 6
      %v3137 = vor.u32 %v3133, %v3136
      %v3138 = vsel %vm906, %v3129, %v3137
      %v3139 = vrot.slane %v3137, 4
      %v3141 = vshrl.u32 %v3095, 16
      %v3143 = vrot.slane %v3141, 5
      %v3144 = vshll.u32 %v3095, 16
      %v3146 = vrot.slane %v3144, 6
      %v3147 = vor.u32 %v3143, %v3146
      %v3148 = vsel %vm906, %v3139, %v3147
      %v3149 = vrot.slane %v3147, 4
      %v3151 = vshrl.u32 %v3096, 16
      %v3153 = vrot.slane %v3151, 5
      %v3154 = vshll.u32 %v3096, 16
      %v3156 = vrot.slane %v3154, 6
      %v3157 = vor.u32 %v3153, %v3156
      %v3158 = vsel %vm906, %v3149, %v3157
      %v3159 = vrot.slane %v3157, 4
      %v3161 = vshrl.u32 %v3097, 16
      %v3163 = vrot.slane %v3161, 5
      %v3164 = vshll.u32 %v3097, 16
      %v3166 = vrot.slane %v3164, 6
      %v3167 = vor.u32 %v3163, %v3166
      %v3168 = vsel %vm906, %v3159, %v3167
      %v3169 = vrot.slane %v3167, 4
      %v3171 = vshrl.u32 %v3098, 16
      %v3173 = vrot.slane %v3171, 5
      %v3174 = vshll.u32 %v3098, 16
      %v3176 = vrot.slane %v3174, 6
      %v3177 = vor.u32 %v3173, %v3176
      %v3178 = vsel %vm906, %v3169, %v3177
      %v3179 = vrot.slane %v3177, 4
      %v3181 = vshrl.u32 %v3099, 16
      %v3183 = vrot.slane %v3181, 5
      %v3184 = vshll.u32 %v3099, 16
      %v3186 = vrot.slane %v3184, 6
      %v3187 = vor.u32 %v3183, %v3186
      %v3188 = vsel %vm906, %v3179, %v3187
      %v3189 = vrot.slane %v3187, 4
      %v3191 = vshrl.u32 %v3100, 16
      %v3193 = vrot.slane %v3191, 5
      %v3194 = vshll.u32 %v3100, 16
      %v3196 = vrot.slane %v3194, 6
      %v3197 = vor.u32 %v3193, %v3196
      %v3198 = vsel %vm906, %v3189, %v3197
      %v3199 = vrot.slane %v3197, 4
      %v3201 = vshrl.u32 %v3101, 16
      %v3203 = vrot.slane %v3201, 5
      %v3204 = vshll.u32 %v3101, 16
      %v3206 = vrot.slane %v3204, 6
      %v3207 = vor.u32 %v3203, %v3206
      %v3208 = vsel %vm906, %v3199, %v3207
      %v3209 = vrot.slane %v3207, 4
      %v3211 = vshrl.u32 %v3102, 16
      %v3213 = vrot.slane %v3211, 5
      %v3214 = vshll.u32 %v3102, 16
      %v3216 = vrot.slane %v3214, 6
      %v3217 = vor.u32 %v3213, %v3216
      %v3218 = vsel %vm906, %v3209, %v3217
      %v3219 = vrot.slane %v3217, 4
      %v3221 = vshrl.u32 %v3103, 16
      %v3223 = vrot.slane %v3221, 5
      %v3224 = vshll.u32 %v3103, 16
      %v3226 = vrot.slane %v3224, 6
      %v3227 = vor.u32 %v3223, %v3226
      %v3228 = vsel %vm906, %v3219, %v3227
      %v3229 = vrot.slane %v3227, 4
      %v3231 = vshrl.u32 %v3104, 16
      %v3233 = vrot.slane %v3231, 5
      %v3234 = vshll.u32 %v3104, 16
      %v3236 = vrot.slane %v3234, 6
      %v3237 = vor.u32 %v3233, %v3236
      %v3238 = vsel %vm906, %v3229, %v3237
      %v3239 = vrot.slane %v3237, 4
      %v3241 = vshrl.u32 %v3105, 16
      %v3243 = vrot.slane %v3241, 5
      %v3244 = vshll.u32 %v3105, 16
      %v3246 = vrot.slane %v3244, 6
      %v3247 = vor.u32 %v3243, %v3246
      %v3248 = vsel %vm906, %v3239, %v3247
      %v3249 = vrot.slane %v3247, 4
      %v3251 = vshrl.u32 %v3106, 16
      %v3253 = vrot.slane %v3251, 5
      %v3254 = vshll.u32 %v3106, 16
      %v3256 = vrot.slane %v3254, 6
      %v3257 = vor.u32 %v3253, %v3256
      %v3258 = vsel %vm906, %v3249, %v3257
      %v3259 = vrot.slane %v3257, 4
      %v3261 = vshrl.u32 %v3107, 16
      %v3263 = vrot.slane %v3261, 5
      %v3264 = vshll.u32 %v3107, 16
      %v3266 = vrot.slane %v3264, 6
      %v3267 = vor.u32 %v3263, %v3266
      %v3268 = vsel %vm906, %v3259, %v3267
      %v3269 = vrot.slane %v3267, 4
      %v3271 = vshrl.u32 %v3108, 16
      %v3273 = vrot.slane %v3271, 5
      %v3274 = vshll.u32 %v3108, 16
      %v3276 = vrot.slane %v3274, 6
      %v3277 = vor.u32 %v3273, %v3276
      %v3278 = vsel %vm906, %v3269, %v3277
      %v3279 = vrot.slane %v3277, 4
      %v3281 = vshrl.u32 %v3109, 16
      %v3283 = vrot.slane %v3281, 5
      %v3284 = vshll.u32 %v3109, 16
      %v3286 = vrot.slane %v3284, 6
      %v3287 = vor.u32 %v3283, %v3286
      %v3288 = vsel %vm906, %v3279, %v3287
      %v3289 = vrot.slane %v3287, 4
      %v3291 = vshrl.u32 %v3110, 16
      %v3293 = vrot.slane %v3291, 5
      %v3294 = vshll.u32 %v3110, 16
      %v3296 = vrot.slane %v3294, 6
      %v3297 = vor.u32 %v3293, %v3296
      %v3298 = vsel %vm906, %v3289, %v3297
      %3299 = vrot.lane.b32.xlu0 %v3128, 32
      %v3300 = vpop.permute.xlu0 %3299
      %3301 = vrot.lane.b32.xlu0 %v3138, 32
      %v3302 = vpop.permute.xlu0 %3301
      %3303 = vrot.lane.b32.xlu0 %v3148, 32
      %v3304 = vpop.permute.xlu0 %3303
      %3305 = vrot.lane.b32.xlu0 %v3158, 32
      %v3306 = vpop.permute.xlu0 %3305
      %3307 = vrot.lane.b32.xlu0 %v3168, 32
      %v3308 = vpop.permute.xlu0 %3307
      %3309 = vrot.lane.b32.xlu0 %v3178, 32
      %v3310 = vpop.permute.xlu0 %3309
      %3311 = vrot.lane.b32.xlu0 %v3188, 32
      %v3312 = vpop.permute.xlu0 %3311
      %3313 = vrot.lane.b32.xlu0 %v3198, 32
      %v3314 = vpop.permute.xlu0 %3313
      %3315 = vrot.lane.b32.xlu0 %v3208, 32
      %v3316 = vpop.permute.xlu0 %3315
      %3317 = vrot.lane.b32.xlu0 %v3218, 32
      %v3318 = vpop.permute.xlu0 %3317
      %3319 = vrot.lane.b32.xlu0 %v3228, 32
      %v3320 = vpop.permute.xlu0 %3319
      %3321 = vrot.lane.b32.xlu0 %v3238, 32
      %v3322 = vpop.permute.xlu0 %3321
      %3323 = vrot.lane.b32.xlu0 %v3248, 32
      %v3324 = vpop.permute.xlu0 %3323
      %3325 = vrot.lane.b32.xlu0 %v3258, 32
      %v3326 = vpop.permute.xlu0 %3325
      %3327 = vrot.lane.b32.xlu0 %v3268, 32
      %v3328 = vpop.permute.xlu0 %3327
      %3329 = vrot.lane.b32.xlu0 %v3278, 32
      %v3330 = vpop.permute.xlu0 %3329
      %3331 = vrot.lane.b32.xlu0 %v3288, 32
      %v3332 = vpop.permute.xlu0 %3331
      %3333 = vrot.lane.b32.xlu0 %v3298, 32
      %v3334 = vpop.permute.xlu0 %3333
      %3353 = vst.msk [vmem:[#allocation3] sm:$0xf] %vm1149, %v3300
      %3354 = vst.msk [vmem:[#allocation3 + $0x4] sm:$0xf] %vm1149, %v3302
      %3355 = vst.msk [vmem:[#allocation3 + $0x8] sm:$0xf] %vm1149, %v3304
      %3356 = vst.msk [vmem:[#allocation3 + $0xc] sm:$0xf] %vm1149, %v3306
      %3357 = vst.msk [vmem:[#allocation3 + $0x10] sm:$0xf] %vm1149, %v3308
      %3358 = vst.msk [vmem:[#allocation3 + $0x14] sm:$0xf] %vm1149, %v3310
      %3359 = vst.msk [vmem:[#allocation3 + $0x18] sm:$0xf] %vm1149, %v3312
      %3360 = vst.msk [vmem:[#allocation3 + $0x1c] sm:$0xf] %vm1149, %v3314
      %3361 = vst.msk [vmem:[#allocation3 + $0x20] sm:$0xf] %vm1149, %v3316
      %3362 = vst.msk [vmem:[#allocation3 + $0x24] sm:$0xf] %vm1149, %v3318
      %3363 = vst.msk [vmem:[#allocation3 + $0x28] sm:$0xf] %vm1149, %v3320
      %3364 = vst.msk [vmem:[#allocation3 + $0x2c] sm:$0xf] %vm1149, %v3322
      %3365 = vst.msk [vmem:[#allocation3 + $0x30] sm:$0xf] %vm1149, %v3324
      %3366 = vst.msk [vmem:[#allocation3 + $0x34] sm:$0xf] %vm1149, %v3326
      %3367 = vst.msk [vmem:[#allocation3 + $0x38] sm:$0xf] %vm1149, %v3328
      %3368 = vst.msk [vmem:[#allocation3 + $0x3c] sm:$0xf] %vm1149, %v3330
      %3369 = vst.msk [vmem:[#allocation3 + $0x40] sm:$0xf] %vm1149, %v3332
      %3370 = vst.msk [vmem:[#allocation3 + $0x44] sm:$0xf] %vm1149, %v3334
      %v3371 = vld [vmem:[%s219 + $0x50] sm:$0xc]
      %v3372 = vld [vmem:[%s219 + $0x54] sm:$0xf]
      %v3373 = vld [vmem:[%s219 + $0x58] sm:$0xf]
      %v3374 = vld [vmem:[%s219 + $0x5c] sm:$0xf]
      %v3375 = vld [vmem:[%s219 + $0x60] sm:$0xf]
      %v3376 = vld [vmem:[%s219 + $0x64] sm:$0xf]
      %v3377 = vld [vmem:[%s219 + $0x68] sm:$0xf]
      %v3378 = vld [vmem:[%s219 + $0x6c] sm:$0xf]
      %v3379 = vld [vmem:[%s219 + $0x70] sm:$0xf]
      %v3380 = vld [vmem:[%s219 + $0x74] sm:$0xf]
      %v3381 = vld [vmem:[%s219 + $0x78] sm:$0xf]
      %v3382 = vld [vmem:[%s219 + $0x7c] sm:$0xf]
      %v3383 = vld [vmem:[%s219 + $0x80] sm:$0xf]
      %v3384 = vld [vmem:[%s219 + $0x84] sm:$0xf]
      %v3385 = vld [vmem:[%s219 + $0x88] sm:$0xf]
      %v3386 = vld [vmem:[%s219 + $0x8c] sm:$0xf]
      %v3387 = vld [vmem:[%s219 + $0x90] sm:$0xf]
      %v3388 = vld [vmem:[%s219 + $0x94] sm:$0xf]
      %v3389 = vld [vmem:[%s219 + $0x98] sm:$0x3]
      %v3409 = vrot.slane %v3371, 6
      %v3410 = vrot.slane %v3409, 4
      %v3411 = vrot.slane %v3372, 6
      %v3412 = vsel %vm1208, %v3410, %v3411
      %v3413 = vrot.slane %v3411, 4
      %v3414 = vrot.slane %v3373, 6
      %v3415 = vsel %vm1208, %v3413, %v3414
      %v3416 = vrot.slane %v3414, 4
      %v3417 = vrot.slane %v3374, 6
      %v3418 = vsel %vm1208, %v3416, %v3417
      %v3419 = vrot.slane %v3417, 4
      %v3420 = vrot.slane %v3375, 6
      %v3421 = vsel %vm1208, %v3419, %v3420
      %v3422 = vrot.slane %v3420, 4
      %v3423 = vrot.slane %v3376, 6
      %v3424 = vsel %vm1208, %v3422, %v3423
      %v3425 = vrot.slane %v3423, 4
      %v3426 = vrot.slane %v3377, 6
      %v3427 = vsel %vm1208, %v3425, %v3426
      %v3428 = vrot.slane %v3426, 4
      %v3429 = vrot.slane %v3378, 6
      %v3430 = vsel %vm1208, %v3428, %v3429
      %v3431 = vrot.slane %v3429, 4
      %v3432 = vrot.slane %v3379, 6
      %v3433 = vsel %vm1208, %v3431, %v3432
      %v3434 = vrot.slane %v3432, 4
      %v3435 = vrot.slane %v3380, 6
      %v3436 = vsel %vm1208, %v3434, %v3435
      %v3437 = vrot.slane %v3435, 4
      %v3438 = vrot.slane %v3381, 6
      %v3439 = vsel %vm1208, %v3437, %v3438
      %v3440 = vrot.slane %v3438, 4
      %v3441 = vrot.slane %v3382, 6
      %v3442 = vsel %vm1208, %v3440, %v3441
      %v3443 = vrot.slane %v3441, 4
      %v3444 = vrot.slane %v3383, 6
      %v3445 = vsel %vm1208, %v3443, %v3444
      %v3446 = vrot.slane %v3444, 4
      %v3447 = vrot.slane %v3384, 6
      %v3448 = vsel %vm1208, %v3446, %v3447
      %v3449 = vrot.slane %v3447, 4
      %v3450 = vrot.slane %v3385, 6
      %v3451 = vsel %vm1208, %v3449, %v3450
      %v3452 = vrot.slane %v3450, 4
      %v3453 = vrot.slane %v3386, 6
      %v3454 = vsel %vm1208, %v3452, %v3453
      %v3455 = vrot.slane %v3453, 4
      %v3456 = vrot.slane %v3387, 6
      %v3457 = vsel %vm1208, %v3455, %v3456
      %v3458 = vrot.slane %v3456, 4
      %v3459 = vrot.slane %v3388, 6
      %v3460 = vsel %vm1208, %v3458, %v3459
      %v3461 = vrot.slane %v3459, 4
      %v3462 = vrot.slane %v3389, 6
      %v3463 = vsel %vm1208, %v3461, %v3462
      %3464 = vrot.lane.b32.xlu0 %v3412, 40
      %v3465 = vpop.permute.xlu0 %3464
      %3466 = vrot.lane.b32.xlu0 %v3415, 40
      %v3467 = vpop.permute.xlu0 %3466
      %3468 = vrot.lane.b32.xlu0 %v3418, 40
      %v3469 = vpop.permute.xlu0 %3468
      %3470 = vrot.lane.b32.xlu0 %v3421, 40
      %v3471 = vpop.permute.xlu0 %3470
      %3472 = vrot.lane.b32.xlu0 %v3424, 40
      %v3473 = vpop.permute.xlu0 %3472
      %3474 = vrot.lane.b32.xlu0 %v3427, 40
      %v3475 = vpop.permute.xlu0 %3474
      %3476 = vrot.lane.b32.xlu0 %v3430, 40
      %v3477 = vpop.permute.xlu0 %3476
      %3478 = vrot.lane.b32.xlu0 %v3433, 40
      %v3479 = vpop.permute.xlu0 %3478
      %3480 = vrot.lane.b32.xlu0 %v3436, 40
      %v3481 = vpop.permute.xlu0 %3480
      %3482 = vrot.lane.b32.xlu0 %v3439, 40
      %v3483 = vpop.permute.xlu0 %3482
      %3484 = vrot.lane.b32.xlu0 %v3442, 40
      %v3485 = vpop.permute.xlu0 %3484
      %3486 = vrot.lane.b32.xlu0 %v3445, 40
      %v3487 = vpop.permute.xlu0 %3486
      %3488 = vrot.lane.b32.xlu0 %v3448, 40
      %v3489 = vpop.permute.xlu0 %3488
      %3490 = vrot.lane.b32.xlu0 %v3451, 40
      %v3491 = vpop.permute.xlu0 %3490
      %3492 = vrot.lane.b32.xlu0 %v3454, 40
      %v3493 = vpop.permute.xlu0 %3492
      %3494 = vrot.lane.b32.xlu0 %v3457, 40
      %v3495 = vpop.permute.xlu0 %3494
      %3496 = vrot.lane.b32.xlu0 %v3460, 40
      %v3497 = vpop.permute.xlu0 %3496
      %3498 = vrot.lane.b32.xlu0 %v3463, 40
      %v3499 = vpop.permute.xlu0 %3498
      %3518 = vst.msk [vmem:[#allocation3] sm:$0xf] %vm1318, %v3465
      %3519 = vst.msk [vmem:[#allocation3 + $0x4] sm:$0xf] %vm1318, %v3467
      %3520 = vst.msk [vmem:[#allocation3 + $0x8] sm:$0xf] %vm1318, %v3469
      %3521 = vst.msk [vmem:[#allocation3 + $0xc] sm:$0xf] %vm1318, %v3471
      %3522 = vst.msk [vmem:[#allocation3 + $0x10] sm:$0xf] %vm1318, %v3473
      %3523 = vst.msk [vmem:[#allocation3 + $0x14] sm:$0xf] %vm1318, %v3475
      %3524 = vst.msk [vmem:[#allocation3 + $0x18] sm:$0xf] %vm1318, %v3477
      %3525 = vst.msk [vmem:[#allocation3 + $0x1c] sm:$0xf] %vm1318, %v3479
      %3526 = vst.msk [vmem:[#allocation3 + $0x20] sm:$0xf] %vm1318, %v3481
      %3527 = vst.msk [vmem:[#allocation3 + $0x24] sm:$0xf] %vm1318, %v3483
      %3528 = vst.msk [vmem:[#allocation3 + $0x28] sm:$0xf] %vm1318, %v3485
      %3529 = vst.msk [vmem:[#allocation3 + $0x2c] sm:$0xf] %vm1318, %v3487
      %3530 = vst.msk [vmem:[#allocation3 + $0x30] sm:$0xf] %vm1318, %v3489
      %3531 = vst.msk [vmem:[#allocation3 + $0x34] sm:$0xf] %vm1318, %v3491
      %3532 = vst.msk [vmem:[#allocation3 + $0x38] sm:$0xf] %vm1318, %v3493
      %3533 = vst.msk [vmem:[#allocation3 + $0x3c] sm:$0xf] %vm1318, %v3495
      %3534 = vst.msk [vmem:[#allocation3 + $0x40] sm:$0xf] %vm1318, %v3497
      %3535 = vst.msk [vmem:[#allocation3 + $0x44] sm:$0xf] %vm1318, %v3499
      %v3536 = vld [vmem:[%s219 + $0x58] sm:$0xc]
      %v3537 = vld [vmem:[%s219 + $0x5c] sm:$0xf]
      %v3538 = vld [vmem:[%s219 + $0x60] sm:$0xf]
      %v3539 = vld [vmem:[%s219 + $0x64] sm:$0xf]
      %v3540 = vld [vmem:[%s219 + $0x68] sm:$0xf]
      %v3541 = vld [vmem:[%s219 + $0x6c] sm:$0xf]
      %v3542 = vld [vmem:[%s219 + $0x70] sm:$0xf]
      %v3543 = vld [vmem:[%s219 + $0x74] sm:$0xf]
      %v3544 = vld [vmem:[%s219 + $0x78] sm:$0xf]
      %v3545 = vld [vmem:[%s219 + $0x7c] sm:$0xf]
      %v3546 = vld [vmem:[%s219 + $0x80] sm:$0xf]
      %v3547 = vld [vmem:[%s219 + $0x84] sm:$0xf]
      %v3548 = vld [vmem:[%s219 + $0x88] sm:$0xf]
      %v3549 = vld [vmem:[%s219 + $0x8c] sm:$0xf]
      %v3550 = vld [vmem:[%s219 + $0x90] sm:$0xf]
      %v3551 = vld [vmem:[%s219 + $0x94] sm:$0xf]
      %v3552 = vld [vmem:[%s219 + $0x98] sm:$0xf]
      %v3553 = vld [vmem:[%s219 + $0x9c] sm:$0xf]
      %v3554 = vld [vmem:[%s219 + $0xa0] sm:$0x3]
      %v3574 = vrot.slane %v3536, 6
      %v3575 = vrot.slane %v3574, 4
      %v3576 = vrot.slane %v3537, 6
      %v3577 = vsel %vm1208, %v3575, %v3576
      %v3578 = vrot.slane %v3576, 4
      %v3579 = vrot.slane %v3538, 6
      %v3580 = vsel %vm1208, %v3578, %v3579
      %v3581 = vrot.slane %v3579, 4
      %v3582 = vrot.slane %v3539, 6
      %v3583 = vsel %vm1208, %v3581, %v3582
      %v3584 = vrot.slane %v3582, 4
      %v3585 = vrot.slane %v3540, 6
      %v3586 = vsel %vm1208, %v3584, %v3585
      %v3587 = vrot.slane %v3585, 4
      %v3588 = vrot.slane %v3541, 6
      %v3589 = vsel %vm1208, %v3587, %v3588
      %v3590 = vrot.slane %v3588, 4
      %v3591 = vrot.slane %v3542, 6
      %v3592 = vsel %vm1208, %v3590, %v3591
      %v3593 = vrot.slane %v3591, 4
      %v3594 = vrot.slane %v3543, 6
      %v3595 = vsel %vm1208, %v3593, %v3594
      %v3596 = vrot.slane %v3594, 4
      %v3597 = vrot.slane %v3544, 6
      %v3598 = vsel %vm1208, %v3596, %v3597
      %v3599 = vrot.slane %v3597, 4
      %v3600 = vrot.slane %v3545, 6
      %v3601 = vsel %vm1208, %v3599, %v3600
      %v3602 = vrot.slane %v3600, 4
      %v3603 = vrot.slane %v3546, 6
      %v3604 = vsel %vm1208, %v3602, %v3603
      %v3605 = vrot.slane %v3603, 4
      %v3606 = vrot.slane %v3547, 6
      %v3607 = vsel %vm1208, %v3605, %v3606
      %v3608 = vrot.slane %v3606, 4
      %v3609 = vrot.slane %v3548, 6
      %v3610 = vsel %vm1208, %v3608, %v3609
      %v3611 = vrot.slane %v3609, 4
      %v3612 = vrot.slane %v3549, 6
      %v3613 = vsel %vm1208, %v3611, %v3612
      %v3614 = vrot.slane %v3612, 4
      %v3615 = vrot.slane %v3550, 6
      %v3616 = vsel %vm1208, %v3614, %v3615
      %v3617 = vrot.slane %v3615, 4
      %v3618 = vrot.slane %v3551, 6
      %v3619 = vsel %vm1208, %v3617, %v3618
      %v3620 = vrot.slane %v3618, 4
      %v3621 = vrot.slane %v3552, 6
      %v3622 = vsel %vm1208, %v3620, %v3621
      %v3623 = vrot.slane %v3621, 4
      %v3624 = vrot.slane %v3553, 6
      %v3625 = vsel %vm1208, %v3623, %v3624
      %v3626 = vrot.slane %v3624, 4
      %v3627 = vrot.slane %v3554, 6
      %v3628 = vsel %vm1208, %v3626, %v3627
      %3629 = vrot.lane.b32.xlu0 %v3577, 48
      %v3630 = vpop.permute.xlu0 %3629
      %3631 = vrot.lane.b32.xlu0 %v3580, 48
      %v3632 = vpop.permute.xlu0 %3631
      %3633 = vrot.lane.b32.xlu0 %v3583, 48
      %v3634 = vpop.permute.xlu0 %3633
      %3635 = vrot.lane.b32.xlu0 %v3586, 48
      %v3636 = vpop.permute.xlu0 %3635
      %3637 = vrot.lane.b32.xlu0 %v3589, 48
      %v3638 = vpop.permute.xlu0 %3637
      %3639 = vrot.lane.b32.xlu0 %v3592, 48
      %v3640 = vpop.permute.xlu0 %3639
      %3641 = vrot.lane.b32.xlu0 %v3595, 48
      %v3642 = vpop.permute.xlu0 %3641
      %3643 = vrot.lane.b32.xlu0 %v3598, 48
      %v3644 = vpop.permute.xlu0 %3643
      %3645 = vrot.lane.b32.xlu0 %v3601, 48
      %v3646 = vpop.permute.xlu0 %3645
      %3647 = vrot.lane.b32.xlu0 %v3604, 48
      %v3648 = vpop.permute.xlu0 %3647
      %3649 = vrot.lane.b32.xlu0 %v3607, 48
      %v3650 = vpop.permute.xlu0 %3649
      %3651 = vrot.lane.b32.xlu0 %v3610, 48
      %v3652 = vpop.permute.xlu0 %3651
      %3653 = vrot.lane.b32.xlu0 %v3613, 48
      %v3654 = vpop.permute.xlu0 %3653
      %3655 = vrot.lane.b32.xlu0 %v3616, 48
      %v3656 = vpop.permute.xlu0 %3655
      %3657 = vrot.lane.b32.xlu0 %v3619, 48
      %v3658 = vpop.permute.xlu0 %3657
      %3659 = vrot.lane.b32.xlu0 %v3622, 48
      %v3660 = vpop.permute.xlu0 %3659
      %3661 = vrot.lane.b32.xlu0 %v3625, 48
      %v3662 = vpop.permute.xlu0 %3661
      %3663 = vrot.lane.b32.xlu0 %v3628, 48
      %v3664 = vpop.permute.xlu0 %3663
      %3683 = vst.msk [vmem:[#allocation3] sm:$0xf] %vm1484, %v3630
      %3684 = vst.msk [vmem:[#allocation3 + $0x4] sm:$0xf] %vm1484, %v3632
      %3685 = vst.msk [vmem:[#allocation3 + $0x8] sm:$0xf] %vm1484, %v3634
      %3686 = vst.msk [vmem:[#allocation3 + $0xc] sm:$0xf] %vm1484, %v3636
      %3687 = vst.msk [vmem:[#allocation3 + $0x10] sm:$0xf] %vm1484, %v3638
      %3688 = vst.msk [vmem:[#allocation3 + $0x14] sm:$0xf] %vm1484, %v3640
      %3689 = vst.msk [vmem:[#allocation3 + $0x18] sm:$0xf] %vm1484, %v3642
      %3690 = vst.msk [vmem:[#allocation3 + $0x1c] sm:$0xf] %vm1484, %v3644
      %3691 = vst.msk [vmem:[#allocation3 + $0x20] sm:$0xf] %vm1484, %v3646
      %3692 = vst.msk [vmem:[#allocation3 + $0x24] sm:$0xf] %vm1484, %v3648
      %3693 = vst.msk [vmem:[#allocation3 + $0x28] sm:$0xf] %vm1484, %v3650
      %3694 = vst.msk [vmem:[#allocation3 + $0x2c] sm:$0xf] %vm1484, %v3652
      %3695 = vst.msk [vmem:[#allocation3 + $0x30] sm:$0xf] %vm1484, %v3654
      %3696 = vst.msk [vmem:[#allocation3 + $0x34] sm:$0xf] %vm1484, %v3656
      %3697 = vst.msk [vmem:[#allocation3 + $0x38] sm:$0xf] %vm1484, %v3658
      %3698 = vst.msk [vmem:[#allocation3 + $0x3c] sm:$0xf] %vm1484, %v3660
      %3699 = vst.msk [vmem:[#allocation3 + $0x40] sm:$0xf] %vm1484, %v3662
      %3700 = vst.msk [vmem:[#allocation3 + $0x44] sm:$0xf] %vm1484, %v3664
      %v3701 = vld [vmem:[%s219 + $0x58] sm:$0xc]
      %v3702 = vld [vmem:[%s219 + $0x5c] sm:$0xf]
      %v3703 = vld [vmem:[%s219 + $0x60] sm:$0xf]
      %v3704 = vld [vmem:[%s219 + $0x64] sm:$0xf]
      %v3705 = vld [vmem:[%s219 + $0x68] sm:$0xf]
      %v3706 = vld [vmem:[%s219 + $0x6c] sm:$0xf]
      %v3707 = vld [vmem:[%s219 + $0x70] sm:$0xf]
      %v3708 = vld [vmem:[%s219 + $0x74] sm:$0xf]
      %v3709 = vld [vmem:[%s219 + $0x78] sm:$0xf]
      %v3710 = vld [vmem:[%s219 + $0x7c] sm:$0xf]
      %v3711 = vld [vmem:[%s219 + $0x80] sm:$0xf]
      %v3712 = vld [vmem:[%s219 + $0x84] sm:$0xf]
      %v3713 = vld [vmem:[%s219 + $0x88] sm:$0xf]
      %v3714 = vld [vmem:[%s219 + $0x8c] sm:$0xf]
      %v3715 = vld [vmem:[%s219 + $0x90] sm:$0xf]
      %v3716 = vld [vmem:[%s219 + $0x94] sm:$0xf]
      %v3717 = vld [vmem:[%s219 + $0x98] sm:$0xf]
      %v3718 = vld [vmem:[%s219 + $0x9c] sm:$0xf]
      %v3719 = vld [vmem:[%s219 + $0xa0] sm:$0x7]
      %v3721 = vshrl.u32 %v3701, 16
      %v3723 = vrot.slane %v3721, 6
      %v3724 = vshll.u32 %v3701, 16
      %v3726 = vrot.slane %v3724, 7
      %v3727 = vor.u32 %v3723, %v3726
      %v3728 = vrot.slane %v3727, 4
      %v3730 = vshrl.u32 %v3702, 16
      %v3732 = vrot.slane %v3730, 6
      %v3733 = vshll.u32 %v3702, 16
      %v3735 = vrot.slane %v3733, 7
      %v3736 = vor.u32 %v3732, %v3735
      %v3737 = vsel %vm1524, %v3728, %v3736
      %v3738 = vrot.slane %v3736, 4
      %v3740 = vshrl.u32 %v3703, 16
      %v3742 = vrot.slane %v3740, 6
      %v3743 = vshll.u32 %v3703, 16
      %v3745 = vrot.slane %v3743, 7
      %v3746 = vor.u32 %v3742, %v3745
      %v3747 = vsel %vm1524, %v3738, %v3746
      %v3748 = vrot.slane %v3746, 4
      %v3750 = vshrl.u32 %v3704, 16
      %v3752 = vrot.slane %v3750, 6
      %v3753 = vshll.u32 %v3704, 16
      %v3755 = vrot.slane %v3753, 7
      %v3756 = vor.u32 %v3752, %v3755
      %v3757 = vsel %vm1524, %v3748, %v3756
      %v3758 = vrot.slane %v3756, 4
      %v3760 = vshrl.u32 %v3705, 16
      %v3762 = vrot.slane %v3760, 6
      %v3763 = vshll.u32 %v3705, 16
      %v3765 = vrot.slane %v3763, 7
      %v3766 = vor.u32 %v3762, %v3765
      %v3767 = vsel %vm1524, %v3758, %v3766
      %v3768 = vrot.slane %v3766, 4
      %v3770 = vshrl.u32 %v3706, 16
      %v3772 = vrot.slane %v3770, 6
      %v3773 = vshll.u32 %v3706, 16
      %v3775 = vrot.slane %v3773, 7
      %v3776 = vor.u32 %v3772, %v3775
      %v3777 = vsel %vm1524, %v3768, %v3776
      %v3778 = vrot.slane %v3776, 4
      %v3780 = vshrl.u32 %v3707, 16
      %v3782 = vrot.slane %v3780, 6
      %v3783 = vshll.u32 %v3707, 16
      %v3785 = vrot.slane %v3783, 7
      %v3786 = vor.u32 %v3782, %v3785
      %v3787 = vsel %vm1524, %v3778, %v3786
      %v3788 = vrot.slane %v3786, 4
      %v3790 = vshrl.u32 %v3708, 16
      %v3792 = vrot.slane %v3790, 6
      %v3793 = vshll.u32 %v3708, 16
      %v3795 = vrot.slane %v3793, 7
      %v3796 = vor.u32 %v3792, %v3795
      %v3797 = vsel %vm1524, %v3788, %v3796
      %v3798 = vrot.slane %v3796, 4
      %v3800 = vshrl.u32 %v3709, 16
      %v3802 = vrot.slane %v3800, 6
      %v3803 = vshll.u32 %v3709, 16
      %v3805 = vrot.slane %v3803, 7
      %v3806 = vor.u32 %v3802, %v3805
      %v3807 = vsel %vm1524, %v3798, %v3806
      %v3808 = vrot.slane %v3806, 4
      %v3810 = vshrl.u32 %v3710, 16
      %v3812 = vrot.slane %v3810, 6
      %v3813 = vshll.u32 %v3710, 16
      %v3815 = vrot.slane %v3813, 7
      %v3816 = vor.u32 %v3812, %v3815
      %v3817 = vsel %vm1524, %v3808, %v3816
      %v3818 = vrot.slane %v3816, 4
      %v3820 = vshrl.u32 %v3711, 16
      %v3822 = vrot.slane %v3820, 6
      %v3823 = vshll.u32 %v3711, 16
      %v3825 = vrot.slane %v3823, 7
      %v3826 = vor.u32 %v3822, %v3825
      %v3827 = vsel %vm1524, %v3818, %v3826
      %v3828 = vrot.slane %v3826, 4
      %v3830 = vshrl.u32 %v3712, 16
      %v3832 = vrot.slane %v3830, 6
      %v3833 = vshll.u32 %v3712, 16
      %v3835 = vrot.slane %v3833, 7
      %v3836 = vor.u32 %v3832, %v3835
      %v3837 = vsel %vm1524, %v3828, %v3836
      %v3838 = vrot.slane %v3836, 4
      %v3840 = vshrl.u32 %v3713, 16
      %v3842 = vrot.slane %v3840, 6
      %v3843 = vshll.u32 %v3713, 16
      %v3845 = vrot.slane %v3843, 7
      %v3846 = vor.u32 %v3842, %v3845
      %v3847 = vsel %vm1524, %v3838, %v3846
      %v3848 = vrot.slane %v3846, 4
      %v3850 = vshrl.u32 %v3714, 16
      %v3852 = vrot.slane %v3850, 6
      %v3853 = vshll.u32 %v3714, 16
      %v3855 = vrot.slane %v3853, 7
      %v3856 = vor.u32 %v3852, %v3855
      %v3857 = vsel %vm1524, %v3848, %v3856
      %v3858 = vrot.slane %v3856, 4
      %v3860 = vshrl.u32 %v3715, 16
      %v3862 = vrot.slane %v3860, 6
      %v3863 = vshll.u32 %v3715, 16
      %v3865 = vrot.slane %v3863, 7
      %v3866 = vor.u32 %v3862, %v3865
      %v3867 = vsel %vm1524, %v3858, %v3866
      %v3868 = vrot.slane %v3866, 4
      %v3870 = vshrl.u32 %v3716, 16
      %v3872 = vrot.slane %v3870, 6
      %v3873 = vshll.u32 %v3716, 16
      %v3875 = vrot.slane %v3873, 7
      %v3876 = vor.u32 %v3872, %v3875
      %v3877 = vsel %vm1524, %v3868, %v3876
      %v3878 = vrot.slane %v3876, 4
      %v3880 = vshrl.u32 %v3717, 16
      %v3882 = vrot.slane %v3880, 6
      %v3883 = vshll.u32 %v3717, 16
      %v3885 = vrot.slane %v3883, 7
      %v3886 = vor.u32 %v3882, %v3885
      %v3887 = vsel %vm1524, %v3878, %v3886
      %v3888 = vrot.slane %v3886, 4
      %v3890 = vshrl.u32 %v3718, 16
      %v3892 = vrot.slane %v3890, 6
      %v3893 = vshll.u32 %v3718, 16
      %v3895 = vrot.slane %v3893, 7
      %v3896 = vor.u32 %v3892, %v3895
      %v3897 = vsel %vm1524, %v3888, %v3896
      %v3898 = vrot.slane %v3896, 4
      %v3900 = vshrl.u32 %v3719, 16
      %v3902 = vrot.slane %v3900, 6
      %v3903 = vshll.u32 %v3719, 16
      %v3905 = vrot.slane %v3903, 7
      %v3906 = vor.u32 %v3902, %v3905
      %v3907 = vsel %vm1524, %v3898, %v3906
      %3908 = vrot.lane.b32.xlu0 %v3737, 56
      %v3909 = vpop.permute.xlu0 %3908
      %3910 = vrot.lane.b32.xlu0 %v3747, 56
      %v3911 = vpop.permute.xlu0 %3910
      %3912 = vrot.lane.b32.xlu0 %v3757, 56
      %v3913 = vpop.permute.xlu0 %3912
      %3914 = vrot.lane.b32.xlu0 %v3767, 56
      %v3915 = vpop.permute.xlu0 %3914
      %3916 = vrot.lane.b32.xlu0 %v3777, 56
      %v3917 = vpop.permute.xlu0 %3916
      %3918 = vrot.lane.b32.xlu0 %v3787, 56
      %v3919 = vpop.permute.xlu0 %3918
      %3920 = vrot.lane.b32.xlu0 %v3797, 56
      %v3921 = vpop.permute.xlu0 %3920
      %3922 = vrot.lane.b32.xlu0 %v3807, 56
      %v3923 = vpop.permute.xlu0 %3922
      %3924 = vrot.lane.b32.xlu0 %v3817, 56
      %v3925 = vpop.permute.xlu0 %3924
      %3926 = vrot.lane.b32.xlu0 %v3827, 56
      %v3927 = vpop.permute.xlu0 %3926
      %3928 = vrot.lane.b32.xlu0 %v3837, 56
      %v3929 = vpop.permute.xlu0 %3928
      %3930 = vrot.lane.b32.xlu0 %v3847, 56
      %v3931 = vpop.permute.xlu0 %3930
      %3932 = vrot.lane.b32.xlu0 %v3857, 56
      %v3933 = vpop.permute.xlu0 %3932
      %3934 = vrot.lane.b32.xlu0 %v3867, 56
      %v3935 = vpop.permute.xlu0 %3934
      %3936 = vrot.lane.b32.xlu0 %v3877, 56
      %v3937 = vpop.permute.xlu0 %3936
      %3938 = vrot.lane.b32.xlu0 %v3887, 56
      %v3939 = vpop.permute.xlu0 %3938
      %3940 = vrot.lane.b32.xlu0 %v3897, 56
      %v3941 = vpop.permute.xlu0 %3940
      %3942 = vrot.lane.b32.xlu0 %v3907, 56
      %v3943 = vpop.permute.xlu0 %3942
      %3962 = vst.msk [vmem:[#allocation3] sm:$0xf] %vm1767, %v3909
      %3963 = vst.msk [vmem:[#allocation3 + $0x4] sm:$0xf] %vm1767, %v3911
      %3964 = vst.msk [vmem:[#allocation3 + $0x8] sm:$0xf] %vm1767, %v3913
      %3965 = vst.msk [vmem:[#allocation3 + $0xc] sm:$0xf] %vm1767, %v3915
      %3966 = vst.msk [vmem:[#allocation3 + $0x10] sm:$0xf] %vm1767, %v3917
      %3967 = vst.msk [vmem:[#allocation3 + $0x14] sm:$0xf] %vm1767, %v3919
      %3968 = vst.msk [vmem:[#allocation3 + $0x18] sm:$0xf] %vm1767, %v3921
      %3969 = vst.msk [vmem:[#allocation3 + $0x1c] sm:$0xf] %vm1767, %v3923
      %3970 = vst.msk [vmem:[#allocation3 + $0x20] sm:$0xf] %vm1767, %v3925
      %3971 = vst.msk [vmem:[#allocation3 + $0x24] sm:$0xf] %vm1767, %v3927
      %3972 = vst.msk [vmem:[#allocation3 + $0x28] sm:$0xf] %vm1767, %v3929
      %3973 = vst.msk [vmem:[#allocation3 + $0x2c] sm:$0xf] %vm1767, %v3931
      %3974 = vst.msk [vmem:[#allocation3 + $0x30] sm:$0xf] %vm1767, %v3933
      %3975 = vst.msk [vmem:[#allocation3 + $0x34] sm:$0xf] %vm1767, %v3935
      %3976 = vst.msk [vmem:[#allocation3 + $0x38] sm:$0xf] %vm1767, %v3937
      %3977 = vst.msk [vmem:[#allocation3 + $0x3c] sm:$0xf] %vm1767, %v3939
      %3978 = vst.msk [vmem:[#allocation3 + $0x40] sm:$0xf] %vm1767, %v3941
      %3979 = vst.msk [vmem:[#allocation3 + $0x44] sm:$0xf] %vm1767, %v3943
      %v3980 = vld [vmem:[%s219 + $0x58] sm:$0x8]
      %v3981 = vld [vmem:[%s219 + $0x5c] sm:$0xf]
      %v3982 = vld [vmem:[%s219 + $0x60] sm:$0xf]
      %v3983 = vld [vmem:[%s219 + $0x64] sm:$0xf]
      %v3984 = vld [vmem:[%s219 + $0x68] sm:$0xf]
      %v3985 = vld [vmem:[%s219 + $0x6c] sm:$0xf]
      %v3986 = vld [vmem:[%s219 + $0x70] sm:$0xf]
      %v3987 = vld [vmem:[%s219 + $0x74] sm:$0xf]
      %v3988 = vld [vmem:[%s219 + $0x78] sm:$0xf]
      %v3989 = vld [vmem:[%s219 + $0x7c] sm:$0xf]
      %v3990 = vld [vmem:[%s219 + $0x80] sm:$0xf]
      %v3991 = vld [vmem:[%s219 + $0x84] sm:$0xf]
      %v3992 = vld [vmem:[%s219 + $0x88] sm:$0xf]
      %v3993 = vld [vmem:[%s219 + $0x8c] sm:$0xf]
      %v3994 = vld [vmem:[%s219 + $0x90] sm:$0xf]
      %v3995 = vld [vmem:[%s219 + $0x94] sm:$0xf]
      %v3996 = vld [vmem:[%s219 + $0x98] sm:$0xf]
      %v3997 = vld [vmem:[%s219 + $0x9c] sm:$0xf]
      %v3998 = vld [vmem:[%s219 + $0xa0] sm:$0x7]
      %v4018 = vrot.slane %v3980, 7
      %v4019 = vrot.slane %v4018, 4
      %v4020 = vrot.slane %v3981, 7
      %v4021 = vsel %vm1826, %v4019, %v4020
      %v4022 = vrot.slane %v4020, 4
      %v4023 = vrot.slane %v3982, 7
      %v4024 = vsel %vm1826, %v4022, %v4023
      %v4025 = vrot.slane %v4023, 4
      %v4026 = vrot.slane %v3983, 7
      %v4027 = vsel %vm1826, %v4025, %v4026
      %v4028 = vrot.slane %v4026, 4
      %v4029 = vrot.slane %v3984, 7
      %v4030 = vsel %vm1826, %v4028, %v4029
      %v4031 = vrot.slane %v4029, 4
      %v4032 = vrot.slane %v3985, 7
      %v4033 = vsel %vm1826, %v4031, %v4032
      %v4034 = vrot.slane %v4032, 4
      %v4035 = vrot.slane %v3986, 7
      %v4036 = vsel %vm1826, %v4034, %v4035
      %v4037 = vrot.slane %v4035, 4
      %v4038 = vrot.slane %v3987, 7
      %v4039 = vsel %vm1826, %v4037, %v4038
      %v4040 = vrot.slane %v4038, 4
      %v4041 = vrot.slane %v3988, 7
      %v4042 = vsel %vm1826, %v4040, %v4041
      %v4043 = vrot.slane %v4041, 4
      %v4044 = vrot.slane %v3989, 7
      %v4045 = vsel %vm1826, %v4043, %v4044
      %v4046 = vrot.slane %v4044, 4
      %v4047 = vrot.slane %v3990, 7
      %v4048 = vsel %vm1826, %v4046, %v4047
      %v4049 = vrot.slane %v4047, 4
      %v4050 = vrot.slane %v3991, 7
      %v4051 = vsel %vm1826, %v4049, %v4050
      %v4052 = vrot.slane %v4050, 4
      %v4053 = vrot.slane %v3992, 7
      %v4054 = vsel %vm1826, %v4052, %v4053
      %v4055 = vrot.slane %v4053, 4
      %v4056 = vrot.slane %v3993, 7
      %v4057 = vsel %vm1826, %v4055, %v4056
      %v4058 = vrot.slane %v4056, 4
      %v4059 = vrot.slane %v3994, 7
      %v4060 = vsel %vm1826, %v4058, %v4059
      %v4061 = vrot.slane %v4059, 4
      %v4062 = vrot.slane %v3995, 7
      %v4063 = vsel %vm1826, %v4061, %v4062
      %v4064 = vrot.slane %v4062, 4
      %v4065 = vrot.slane %v3996, 7
      %v4066 = vsel %vm1826, %v4064, %v4065
      %v4067 = vrot.slane %v4065, 4
      %v4068 = vrot.slane %v3997, 7
      %v4069 = vsel %vm1826, %v4067, %v4068
      %v4070 = vrot.slane %v4068, 4
      %v4071 = vrot.slane %v3998, 7
      %v4072 = vsel %vm1826, %v4070, %v4071
      %4073 = vrot.lane.b32.xlu0 %v4021, 64
      %v4074 = vpop.permute.xlu0 %4073
      %4075 = vrot.lane.b32.xlu0 %v4024, 64
      %v4076 = vpop.permute.xlu0 %4075
      %4077 = vrot.lane.b32.xlu0 %v4027, 64
      %v4078 = vpop.permute.xlu0 %4077
      %4079 = vrot.lane.b32.xlu0 %v4030, 64
      %v4080 = vpop.permute.xlu0 %4079
      %4081 = vrot.lane.b32.xlu0 %v4033, 64
      %v4082 = vpop.permute.xlu0 %4081
      %4083 = vrot.lane.b32.xlu0 %v4036, 64
      %v4084 = vpop.permute.xlu0 %4083
      %4085 = vrot.lane.b32.xlu0 %v4039, 64
      %v4086 = vpop.permute.xlu0 %4085
      %4087 = vrot.lane.b32.xlu0 %v4042, 64
      %v4088 = vpop.permute.xlu0 %4087
      %4089 = vrot.lane.b32.xlu0 %v4045, 64
      %v4090 = vpop.permute.xlu0 %4089
      %4091 = vrot.lane.b32.xlu0 %v4048, 64
      %v4092 = vpop.permute.xlu0 %4091
      %4093 = vrot.lane.b32.xlu0 %v4051, 64
      %v4094 = vpop.permute.xlu0 %4093
      %4095 = vrot.lane.b32.xlu0 %v4054, 64
      %v4096 = vpop.permute.xlu0 %4095
      %4097 = vrot.lane.b32.xlu0 %v4057, 64
      %v4098 = vpop.permute.xlu0 %4097
      %4099 = vrot.lane.b32.xlu0 %v4060, 64
      %v4100 = vpop.permute.xlu0 %4099
      %4101 = vrot.lane.b32.xlu0 %v4063, 64
      %v4102 = vpop.permute.xlu0 %4101
      %4103 = vrot.lane.b32.xlu0 %v4066, 64
      %v4104 = vpop.permute.xlu0 %4103
      %4105 = vrot.lane.b32.xlu0 %v4069, 64
      %v4106 = vpop.permute.xlu0 %4105
      %4107 = vrot.lane.b32.xlu0 %v4072, 64
      %v4108 = vpop.permute.xlu0 %4107
      %4127 = vst.msk [vmem:[#allocation3] sm:$0xf] %vm1936, %v4074
      %4128 = vst.msk [vmem:[#allocation3 + $0x4] sm:$0xf] %vm1936, %v4076
      %4129 = vst.msk [vmem:[#allocation3 + $0x8] sm:$0xf] %vm1936, %v4078
      %4130 = vst.msk [vmem:[#allocation3 + $0xc] sm:$0xf] %vm1936, %v4080
      %4131 = vst.msk [vmem:[#allocation3 + $0x10] sm:$0xf] %vm1936, %v4082
      %4132 = vst.msk [vmem:[#allocation3 + $0x14] sm:$0xf] %vm1936, %v4084
      %4133 = vst.msk [vmem:[#allocation3 + $0x18] sm:$0xf] %vm1936, %v4086
      %4134 = vst.msk [vmem:[#allocation3 + $0x1c] sm:$0xf] %vm1936, %v4088
      %4135 = vst.msk [vmem:[#allocation3 + $0x20] sm:$0xf] %vm1936, %v4090
      %4136 = vst.msk [vmem:[#allocation3 + $0x24] sm:$0xf] %vm1936, %v4092
      %4137 = vst.msk [vmem:[#allocation3 + $0x28] sm:$0xf] %vm1936, %v4094
      %4138 = vst.msk [vmem:[#allocation3 + $0x2c] sm:$0xf] %vm1936, %v4096
      %4139 = vst.msk [vmem:[#allocation3 + $0x30] sm:$0xf] %vm1936, %v4098
      %4140 = vst.msk [vmem:[#allocation3 + $0x34] sm:$0xf] %vm1936, %v4100
      %4141 = vst.msk [vmem:[#allocation3 + $0x38] sm:$0xf] %vm1936, %v4102
      %4142 = vst.msk [vmem:[#allocation3 + $0x3c] sm:$0xf] %vm1936, %v4104
      %4143 = vst.msk [vmem:[#allocation3 + $0x40] sm:$0xf] %vm1936, %v4106
      %4144 = vst.msk [vmem:[#allocation3 + $0x44] sm:$0xf] %vm1936, %v4108
      %v4145 = vld [vmem:[#allocation3] sm:$0xf]
      %v4146 = vld [vmem:[#allocation3 + $0x4] sm:$0xf]
      %v4147 = vld [vmem:[#allocation3 + $0x8] sm:$0xf]
      %v4148 = vld [vmem:[#allocation3 + $0xc] sm:$0xf]
      %v4149 = vld [vmem:[#allocation3 + $0x10] sm:$0xf]
      %v4150 = vld [vmem:[#allocation3 + $0x14] sm:$0xf]
      %v4151 = vld [vmem:[#allocation3 + $0x18] sm:$0xf]
      %v4152 = vld [vmem:[#allocation3 + $0x1c] sm:$0xf]
      %v4153 = vld [vmem:[#allocation3 + $0x20] sm:$0xf]
      %v4154 = vld [vmem:[#allocation3 + $0x24] sm:$0xf]
      %v4155 = vld [vmem:[#allocation3 + $0x28] sm:$0xf]
      %v4156 = vld [vmem:[#allocation3 + $0x2c] sm:$0xf]
      %v4157 = vld [vmem:[#allocation3 + $0x30] sm:$0xf]
      %v4158 = vld [vmem:[#allocation3 + $0x34] sm:$0xf]
      %v4159 = vld [vmem:[#allocation3 + $0x38] sm:$0xf]
      %v4160 = vld [vmem:[#allocation3 + $0x3c] sm:$0xf]
      %v4161 = vld [vmem:[#allocation3 + $0x40] sm:$0xf]
      %v4162 = vld [vmem:[#allocation3 + $0x44] sm:$0xf]
      %v4163 = vld [vmem:[%s1] sm:$0xf]
      %v4164 = vld [vmem:[%s1 + $0x4] sm:$0xf]
      %v4165 = vld [vmem:[%s1 + $0x8] sm:$0xf]
      %v4166 = vld [vmem:[%s1 + $0xc] sm:$0xf]
      %v4167 = vld [vmem:[%s1 + $0x10] sm:$0xf]
      %v4168 = vld [vmem:[%s1 + $0x14] sm:$0xf]
      %v4169 = vld [vmem:[%s1 + $0x18] sm:$0xf]
      %v4170 = vld [vmem:[%s1 + $0x1c] sm:$0xf]
      %v4171 = vld [vmem:[%s1 + $0x20] sm:$0xf]
      %v4172 = vld [vmem:[%s2] sm:$0x1]
      %v4174 = vperm.slane %v4172, 0
      %v4194 = vunpack.c.l.b16 %v4145
      %v4195 = vunpack.c.l.b16 %v4146
      %v4196 = vunpack.c.l.b16 %v4147
      %v4197 = vunpack.c.l.b16 %v4148
      %v4198 = vunpack.c.l.b16 %v4149
      %v4199 = vunpack.c.l.b16 %v4150
      %v4200 = vunpack.c.l.b16 %v4151
      %v4201 = vunpack.c.l.b16 %v4152
      %v4202 = vunpack.c.l.b16 %v4153
      %v4203 = vunpack.c.l.b16 %v4154
      %v4204 = vunpack.c.l.b16 %v4155
      %v4205 = vunpack.c.l.b16 %v4156
      %v4206 = vunpack.c.l.b16 %v4157
      %v4207 = vunpack.c.l.b16 %v4158
      %v4208 = vunpack.c.l.b16 %v4159
      %v4209 = vunpack.c.l.b16 %v4160
      %v4210 = vunpack.c.l.b16 %v4161
      %v4211 = vunpack.c.l.b16 %v4162
      %v4212 = vpack.c.b16 %v4195, %v4194
      %v4213 = vpack.c.b16 %v4197, %v4196
      %v4214 = vpack.c.b16 %v4199, %v4198
      %v4215 = vpack.c.b16 %v4201, %v4200
      %v4216 = vpack.c.b16 %v4203, %v4202
      %v4217 = vpack.c.b16 %v4205, %v4204
      %v4218 = vpack.c.b16 %v4207, %v4206
      %v4219 = vpack.c.b16 %v4209, %v4208
      %v4220 = vpack.c.b16 %v4211, %v4210
      %v4230 = vunpack.c.l.b16 %v4163
      %v4231 = vunpack.c.l.b16 %v4164
      %v4232 = vunpack.c.l.b16 %v4165
      %v4233 = vunpack.c.l.b16 %v4166
      %v4234 = vunpack.c.l.b16 %v4167
      %v4235 = vunpack.c.l.b16 %v4168
      %v4236 = vunpack.c.l.b16 %v4169
      %v4237 = vunpack.c.l.b16 %v4170
      %v4238 = vunpack.c.l.b16 %v4171
      %v4239 = vpack.c.b16 %v4231, %v4230
      %v4240 = vpack.c.b16 %v4233, %v4232
      %v4241 = vpack.c.b16 %v4235, %v4234
      %v4242 = vpack.c.b16 %v4237, %v4236
      %v4243 = vpack.c.b16 %v4238, %v4238
      %v4249 = vsel %vm2058, %v4212, 0
      %v4252 = vsel %vm2058, %v4213, 0
      %v4255 = vsel %vm2058, %v4214, 0
      %v4258 = vsel %vm2058, %v4215, 0
      %v4261 = vsel %vm2058, %v4216, 0
      %v4264 = vsel %vm2058, %v4217, 0
      %v4267 = vsel %vm2058, %v4218, 0
      %v4270 = vsel %vm2058, %v4219, 0
      %v4273 = vsel %vm2058, %v4220, 0
      %v4276 = vsel %vm2086, %v4243, 0
      %4278 = vmatpush.bf16.msra.mxu0 0
      %4279 = vmatpush.bf16.msra.mxu0 0
      %4280 = vmatpush.bf16.msra.mxu0 0
      %4281 = vmatpush.bf16.msra.mxu0 %v4276
      %4282 = vmatpush.bf16.msra.mxu0 %v4242
      %4283 = vmatpush.bf16.msra.mxu0 %v4241
      %4284 = vmatpush.bf16.msra.mxu0 %v4240
      %4285 = vmatpush.bf16.msra.mxu0 %v4239
      %4286 = vmatmul.bf16.gmra.mxu0 %v4249
      %v4287 = vpop.f32.mrf.mxu0
      %v4288 = vadd.f32 %v4174, %v4287
      %v4289 = vpop.f32.mrf.mxu0
      %v4290 = vadd.f32 %v4174, %v4289
      %4291 = vmatmul.bf16.gmra.mxu0 %v4252
      %v4292 = vpop.f32.mrf.mxu0
      %v4293 = vadd.f32 %v4174, %v4292
      %v4294 = vpop.f32.mrf.mxu0
      %v4295 = vadd.f32 %v4174, %v4294
      %4296 = vmatmul.bf16.gmra.mxu0 %v4255
      %v4297 = vpop.f32.mrf.mxu0
      %v4298 = vadd.f32 %v4174, %v4297
      %v4299 = vpop.f32.mrf.mxu0
      %v4300 = vadd.f32 %v4174, %v4299
      %4301 = vmatmul.bf16.gmra.mxu0 %v4258
      %v4302 = vpop.f32.mrf.mxu0
      %v4303 = vadd.f32 %v4174, %v4302
      %v4304 = vpop.f32.mrf.mxu0
      %v4305 = vadd.f32 %v4174, %v4304
      %4306 = vmatmul.bf16.gmra.mxu0 %v4261
      %v4307 = vpop.f32.mrf.mxu0
      %v4308 = vadd.f32 %v4174, %v4307
      %v4309 = vpop.f32.mrf.mxu0
      %v4310 = vadd.f32 %v4174, %v4309
      %4311 = vmatmul.bf16.gmra.mxu0 %v4264
      %v4312 = vpop.f32.mrf.mxu0
      %v4313 = vadd.f32 %v4174, %v4312
      %v4314 = vpop.f32.mrf.mxu0
      %v4315 = vadd.f32 %v4174, %v4314
      %4316 = vmatmul.bf16.gmra.mxu0 %v4267
      %v4317 = vpop.f32.mrf.mxu0
      %v4318 = vadd.f32 %v4174, %v4317
      %v4319 = vpop.f32.mrf.mxu0
      %v4320 = vadd.f32 %v4174, %v4319
      %4321 = vmatmul.bf16.gmra.mxu0 %v4270
      %v4322 = vpop.f32.mrf.mxu0
      %v4323 = vadd.f32 %v4174, %v4322
      %v4324 = vpop.f32.mrf.mxu0
      %v4325 = vadd.f32 %v4174, %v4324
      %4326 = vmatmul.bf16.gmra.mxu0 %v4273
      %v4327 = vpop.f32.mrf.mxu0
      %v4328 = vadd.f32 %v4174, %v4327
      %v4329 = vpop.f32.mrf.mxu0
      %v4330 = vadd.f32 %v4174, %v4329
      %4331 = vdwg.mxu0
      %v4332 = vmul.f32 %v4288, 0.01
      %v4333 = vmul.f32 %v4290, 0.01
      %v4334 = vmul.f32 %v4293, 0.01
      %v4335 = vmul.f32 %v4295, 0.01
      %v4336 = vmul.f32 %v4298, 0.01
      %v4337 = vmul.f32 %v4300, 0.01
      %v4338 = vmul.f32 %v4303, 0.01
      %v4339 = vmul.f32 %v4305, 0.01
      %v4340 = vmul.f32 %v4308, 0.01
      %v4341 = vmul.f32 %v4310, 0.01
      %v4342 = vmul.f32 %v4313, 0.01
      %v4343 = vmul.f32 %v4315, 0.01
      %v4344 = vmul.f32 %v4318, 0.01
      %v4345 = vmul.f32 %v4320, 0.01
      %v4346 = vmul.f32 %v4323, 0.01
      %v4347 = vmul.f32 %v4325, 0.01
      %v4348 = vmul.f32 %v4328, 0.01
      %v4349 = vmul.f32 %v4330, 0.01
      %v4350 = vmax.f32 %v4288, %v4332
      %v4351 = vmax.f32 %v4290, %v4333
      %v4352 = vmax.f32 %v4293, %v4334
      %v4353 = vmax.f32 %v4295, %v4335
      %v4354 = vmax.f32 %v4298, %v4336
      %v4355 = vmax.f32 %v4300, %v4337
      %v4356 = vmax.f32 %v4303, %v4338
      %v4357 = vmax.f32 %v4305, %v4339
      %v4358 = vmax.f32 %v4308, %v4340
      %v4359 = vmax.f32 %v4310, %v4341
      %v4360 = vmax.f32 %v4313, %v4342
      %v4361 = vmax.f32 %v4315, %v4343
      %v4362 = vmax.f32 %v4318, %v4344
      %v4363 = vmax.f32 %v4320, %v4345
      %v4364 = vmax.f32 %v4323, %v4346
      %v4365 = vmax.f32 %v4325, %v4347
      %v4366 = vmax.f32 %v4328, %v4348
      %v4367 = vmax.f32 %v4330, %v4349
      %v4368 = vadd.s32 %v2181, 144
      %v4369 = vadd.s32 %v2182, 144
      %v4370 = vadd.s32 %v2183, 144
      %v4371 = vadd.s32 %v2184, 144
      %v4372 = vadd.s32 %v2185, 144
      %v4373 = vadd.s32 %v2186, 144
      %v4374 = vadd.s32 %v2187, 144
      %v4375 = vadd.s32 %v2188, 144
      %v4376 = vadd.s32 %v2189, 144
      %v4377 = vadd.s32 %v2190, 144
      %v4378 = vadd.s32 %v2191, 144
      %v4379 = vadd.s32 %v2192, 144
      %v4380 = vadd.s32 %v2193, 144
      %v4381 = vadd.s32 %v2194, 144
      %v4382 = vadd.s32 %v2195, 144
      %v4383 = vadd.s32 %v2196, 144
      %v4384 = vadd.s32 %v2197, 144
      %v4385 = vadd.s32 %v2198, 144
      %v4386 = vcvt.s32.f32 %v4368
      %v4387 = vcvt.s32.f32 %v4369
      %v4388 = vcvt.s32.f32 %v4370
      %v4389 = vcvt.s32.f32 %v4371
      %v4390 = vcvt.s32.f32 %v4372
      %v4391 = vcvt.s32.f32 %v4373
      %v4392 = vcvt.s32.f32 %v4374
      %v4393 = vcvt.s32.f32 %v4375
      %v4394 = vcvt.s32.f32 %v4376
      %v4395 = vcvt.s32.f32 %v4377
      %v4396 = vcvt.s32.f32 %v4378
      %v4397 = vcvt.s32.f32 %v4379
      %v4398 = vcvt.s32.f32 %v4380
      %v4399 = vcvt.s32.f32 %v4381
      %v4400 = vcvt.s32.f32 %v4382
      %v4401 = vcvt.s32.f32 %v4383
      %v4402 = vcvt.s32.f32 %v4384
      %v4403 = vcvt.s32.f32 %v4385
      %v4404 = vadd.f32 %v4386, 0.5
      %v4405 = vadd.f32 %v4387, 0.5
      %v4406 = vadd.f32 %v4388, 0.5
      %v4407 = vadd.f32 %v4389, 0.5
      %v4408 = vadd.f32 %v4390, 0.5
      %v4409 = vadd.f32 %v4391, 0.5
      %v4410 = vadd.f32 %v4392, 0.5
      %v4411 = vadd.f32 %v4393, 0.5
      %v4412 = vadd.f32 %v4394, 0.5
      %v4413 = vadd.f32 %v4395, 0.5
      %v4414 = vadd.f32 %v4396, 0.5
      %v4415 = vadd.f32 %v4397, 0.5
      %v4416 = vadd.f32 %v4398, 0.5
      %v4417 = vadd.f32 %v4399, 0.5
      %v4418 = vadd.f32 %v4400, 0.5
      %v4419 = vadd.f32 %v4401, 0.5
      %v4420 = vadd.f32 %v4402, 0.5
      %v4421 = vadd.f32 %v4403, 0.5
      %v4422 = vmul.f32 %v4404, 0.055555556
      %v4423 = vmul.f32 %v4405, 0.055555556
      %v4424 = vmul.f32 %v4406, 0.055555556
      %v4425 = vmul.f32 %v4407, 0.055555556
      %v4426 = vmul.f32 %v4408, 0.055555556
      %v4427 = vmul.f32 %v4409, 0.055555556
      %v4428 = vmul.f32 %v4410, 0.055555556
      %v4429 = vmul.f32 %v4411, 0.055555556
      %v4430 = vmul.f32 %v4412, 0.055555556
      %v4431 = vmul.f32 %v4413, 0.055555556
      %v4432 = vmul.f32 %v4414, 0.055555556
      %v4433 = vmul.f32 %v4415, 0.055555556
      %v4434 = vmul.f32 %v4416, 0.055555556
      %v4435 = vmul.f32 %v4417, 0.055555556
      %v4436 = vmul.f32 %v4418, 0.055555556
      %v4437 = vmul.f32 %v4419, 0.055555556
      %v4438 = vmul.f32 %v4420, 0.055555556
      %v4439 = vmul.f32 %v4421, 0.055555556
      %v4440 = vfloor.f32 %v4422
      %v4441 = vfloor.f32 %v4423
      %v4442 = vfloor.f32 %v4424
      %v4443 = vfloor.f32 %v4425
      %v4444 = vfloor.f32 %v4426
      %v4445 = vfloor.f32 %v4427
      %v4446 = vfloor.f32 %v4428
      %v4447 = vfloor.f32 %v4429
      %v4448 = vfloor.f32 %v4430
      %v4449 = vfloor.f32 %v4431
      %v4450 = vfloor.f32 %v4432
      %v4451 = vfloor.f32 %v4433
      %v4452 = vfloor.f32 %v4434
      %v4453 = vfloor.f32 %v4435
      %v4454 = vfloor.f32 %v4436
      %v4455 = vfloor.f32 %v4437
      %v4456 = vfloor.f32 %v4438
      %v4457 = vfloor.f32 %v4439
      %v4458 = vmul.f32 %v4440, 18.0
      %v4459 = vmul.f32 %v4441, 18.0
      %v4460 = vmul.f32 %v4442, 18.0
      %v4461 = vmul.f32 %v4443, 18.0
      %v4462 = vmul.f32 %v4444, 18.0
      %v4463 = vmul.f32 %v4445, 18.0
      %v4464 = vmul.f32 %v4446, 18.0
      %v4465 = vmul.f32 %v4447, 18.0
      %v4466 = vmul.f32 %v4448, 18.0
      %v4467 = vmul.f32 %v4449, 18.0
      %v4468 = vmul.f32 %v4450, 18.0
      %v4469 = vmul.f32 %v4451, 18.0
      %v4470 = vmul.f32 %v4452, 18.0
      %v4471 = vmul.f32 %v4453, 18.0
      %v4472 = vmul.f32 %v4454, 18.0
      %v4473 = vmul.f32 %v4455, 18.0
      %v4474 = vmul.f32 %v4456, 18.0
      %v4475 = vmul.f32 %v4457, 18.0
      %v4476 = vsub.f32 %v4386, %v4458
      %v4477 = vsub.f32 %v4387, %v4459
      %v4478 = vsub.f32 %v4388, %v4460
      %v4479 = vsub.f32 %v4389, %v4461
      %v4480 = vsub.f32 %v4390, %v4462
      %v4481 = vsub.f32 %v4391, %v4463
      %v4482 = vsub.f32 %v4392, %v4464
      %v4483 = vsub.f32 %v4393, %v4465
      %v4484 = vsub.f32 %v4394, %v4466
      %v4485 = vsub.f32 %v4395, %v4467
      %v4486 = vsub.f32 %v4396, %v4468
      %v4487 = vsub.f32 %v4397, %v4469
      %v4488 = vsub.f32 %v4398, %v4470
      %v4489 = vsub.f32 %v4399, %v4471
      %v4490 = vsub.f32 %v4400, %v4472
      %v4491 = vsub.f32 %v4401, %v4473
      %v4492 = vsub.f32 %v4402, %v4474
      %v4493 = vsub.f32 %v4403, %v4475
      %vm4494 = vcmp.lt.f32.partialorder %v4476, 16.0
      %vm4495 = vcmp.lt.f32.partialorder %v4477, 16.0
      %vm4496 = vcmp.lt.f32.partialorder %v4478, 16.0
      %vm4497 = vcmp.lt.f32.partialorder %v4479, 16.0
      %vm4498 = vcmp.lt.f32.partialorder %v4480, 16.0
      %vm4499 = vcmp.lt.f32.partialorder %v4481, 16.0
      %vm4500 = vcmp.lt.f32.partialorder %v4482, 16.0
      %vm4501 = vcmp.lt.f32.partialorder %v4483, 16.0
      %vm4502 = vcmp.lt.f32.partialorder %v4484, 16.0
      %vm4503 = vcmp.lt.f32.partialorder %v4485, 16.0
      %vm4504 = vcmp.lt.f32.partialorder %v4486, 16.0
      %vm4505 = vcmp.lt.f32.partialorder %v4487, 16.0
      %vm4506 = vcmp.lt.f32.partialorder %v4488, 16.0
      %vm4507 = vcmp.lt.f32.partialorder %v4489, 16.0
      %vm4508 = vcmp.lt.f32.partialorder %v4490, 16.0
      %vm4509 = vcmp.lt.f32.partialorder %v4491, 16.0
      %vm4510 = vcmp.lt.f32.partialorder %v4492, 16.0
      %vm4511 = vcmp.lt.f32.partialorder %v4493, 16.0
      %vm4512 = vcmp.lt.f32.partialorder %v4386, 288.0
      %vm4513 = vcmp.lt.f32.partialorder %v4387, 288.0
      %vm4514 = vcmp.lt.f32.partialorder %v4388, 288.0
      %vm4515 = vcmp.lt.f32.partialorder %v4389, 288.0
      %vm4516 = vcmp.lt.f32.partialorder %v4390, 288.0
      %vm4517 = vcmp.lt.f32.partialorder %v4391, 288.0
      %vm4518 = vcmp.lt.f32.partialorder %v4392, 288.0
      %vm4519 = vcmp.lt.f32.partialorder %v4393, 288.0
      %vm4520 = vcmp.lt.f32.partialorder %v4394, 288.0
      %vm4521 = vcmp.lt.f32.partialorder %v4395, 288.0
      %vm4522 = vcmp.lt.f32.partialorder %v4396, 288.0
      %vm4523 = vcmp.lt.f32.partialorder %v4397, 288.0
      %vm4524 = vcmp.lt.f32.partialorder %v4398, 288.0
      %vm4525 = vcmp.lt.f32.partialorder %v4399, 288.0
      %vm4526 = vcmp.lt.f32.partialorder %v4400, 288.0
      %vm4527 = vcmp.lt.f32.partialorder %v4401, 288.0
      %vm4528 = vcmp.lt.f32.partialorder %v4402, 288.0
      %vm4529 = vcmp.lt.f32.partialorder %v4403, 288.0
      %vm4530 = vmand %vm4494, %vm4512
      %vm4531 = vmand %vm4495, %vm4513
      %vm4532 = vmand %vm4496, %vm4514
      %vm4533 = vmand %vm4497, %vm4515
      %vm4534 = vmand %vm4498, %vm4516
      %vm4535 = vmand %vm4499, %vm4517
      %vm4536 = vmand %vm4500, %vm4518
      %vm4537 = vmand %vm4501, %vm4519
      %vm4538 = vmand %vm4502, %vm4520
      %vm4539 = vmand %vm4503, %vm4521
      %vm4540 = vmand %vm4504, %vm4522
      %vm4541 = vmand %vm4505, %vm4523
      %vm4542 = vmand %vm4506, %vm4524
      %vm4543 = vmand %vm4507, %vm4525
      %vm4544 = vmand %vm4508, %vm4526
      %vm4545 = vmand %vm4509, %vm4527
      %vm4546 = vmand %vm4510, %vm4528
      %vm4547 = vmand %vm4511, %vm4529
      %v4548 = vsel %vm4530, 1, 0
      %v4549 = vsel %vm4531, 1, 0
      %v4550 = vsel %vm4532, 1, 0
      %v4551 = vsel %vm4533, 1, 0
      %v4552 = vsel %vm4534, 1, 0
      %v4553 = vsel %vm4535, 1, 0
      %v4554 = vsel %vm4536, 1, 0
      %v4555 = vsel %vm4537, 1, 0
      %v4556 = vsel %vm4538, 1, 0
      %v4557 = vsel %vm4539, 1, 0
      %v4558 = vsel %vm4540, 1, 0
      %v4559 = vsel %vm4541, 1, 0
      %v4560 = vsel %vm4542, 1, 0
      %v4561 = vsel %vm4543, 1, 0
      %v4562 = vsel %vm4544, 1, 0
      %v4563 = vsel %vm4545, 1, 0
      %v4564 = vsel %vm4546, 1, 0
      %v4565 = vsel %vm4547, 1, 0
      %vm4566 = vcmp.eq.s32.totalorder %v4548, 1
      %vm4567 = vcmp.eq.s32.totalorder %v4549, 1
      %vm4568 = vcmp.eq.s32.totalorder %v4550, 1
      %vm4569 = vcmp.eq.s32.totalorder %v4551, 1
      %vm4570 = vcmp.eq.s32.totalorder %v4552, 1
      %vm4571 = vcmp.eq.s32.totalorder %v4553, 1
      %vm4572 = vcmp.eq.s32.totalorder %v4554, 1
      %vm4573 = vcmp.eq.s32.totalorder %v4555, 1
      %vm4574 = vcmp.eq.s32.totalorder %v4556, 1
      %vm4575 = vcmp.eq.s32.totalorder %v4557, 1
      %vm4576 = vcmp.eq.s32.totalorder %v4558, 1
      %vm4577 = vcmp.eq.s32.totalorder %v4559, 1
      %vm4578 = vcmp.eq.s32.totalorder %v4560, 1
      %vm4579 = vcmp.eq.s32.totalorder %v4561, 1
      %vm4580 = vcmp.eq.s32.totalorder %v4562, 1
      %vm4581 = vcmp.eq.s32.totalorder %v4563, 1
      %vm4582 = vcmp.eq.s32.totalorder %v4564, 1
      %vm4583 = vcmp.eq.s32.totalorder %v4565, 1
      %v4584 = vsel %vm4566, %v4350, 0.0
      %v4585 = vsel %vm4567, %v4351, 0.0
      %v4586 = vsel %vm4568, %v4352, 0.0
      %v4587 = vsel %vm4569, %v4353, 0.0
      %v4588 = vsel %vm4570, %v4354, 0.0
      %v4589 = vsel %vm4571, %v4355, 0.0
      %v4590 = vsel %vm4572, %v4356, 0.0
      %v4591 = vsel %vm4573, %v4357, 0.0
      %v4592 = vsel %vm4574, %v4358, 0.0
      %v4593 = vsel %vm4575, %v4359, 0.0
      %v4594 = vsel %vm4576, %v4360, 0.0
      %v4595 = vsel %vm4577, %v4361, 0.0
      %v4596 = vsel %vm4578, %v4362, 0.0
      %v4597 = vsel %vm4579, %v4363, 0.0
      %v4598 = vsel %vm4580, %v4364, 0.0
      %v4599 = vsel %vm4581, %v4365, 0.0
      %v4600 = vsel %vm4582, %v4366, 0.0
      %v4601 = vsel %vm4583, %v4367, 0.0
      %v4602 = vpack.c.bf16 %v4584, %v4584
      %v4603 = vpack.c.bf16 %v4585, %v4585
      %v4604 = vpack.c.bf16 %v4586, %v4586
      %v4605 = vpack.c.bf16 %v4587, %v4587
      %v4606 = vpack.c.bf16 %v4588, %v4588
      %v4607 = vpack.c.bf16 %v4589, %v4589
      %v4608 = vpack.c.bf16 %v4590, %v4590
      %v4609 = vpack.c.bf16 %v4591, %v4591
      %v4610 = vpack.c.bf16 %v4592, %v4592
      %v4611 = vpack.c.bf16 %v4593, %v4593
      %v4612 = vpack.c.bf16 %v4594, %v4594
      %v4613 = vpack.c.bf16 %v4595, %v4595
      %v4614 = vpack.c.bf16 %v4596, %v4596
      %v4615 = vpack.c.bf16 %v4597, %v4597
      %v4616 = vpack.c.bf16 %v4598, %v4598
      %v4617 = vpack.c.bf16 %v4599, %v4599
      %v4618 = vpack.c.bf16 %v4600, %v4600
      %v4619 = vpack.c.bf16 %v4601, %v4601
      %4620 = vst [vmem:[#allocation2 + $0x58] sm:$0xf] %v4602
      %4621 = vst [vmem:[#allocation2 + $0x5c] sm:$0xf] %v4603
      %4622 = vst [vmem:[#allocation2 + $0x60] sm:$0xf] %v4604
      %4623 = vst [vmem:[#allocation2 + $0x64] sm:$0xf] %v4605
      %4624 = vst [vmem:[#allocation2 + $0x68] sm:$0xf] %v4606
      %4625 = vst [vmem:[#allocation2 + $0x6c] sm:$0xf] %v4607
      %4626 = vst [vmem:[#allocation2 + $0x70] sm:$0xf] %v4608
      %4627 = vst [vmem:[#allocation2 + $0x74] sm:$0xf] %v4609
      %4628 = vst [vmem:[#allocation2 + $0x78] sm:$0xf] %v4610
      %4629 = vst [vmem:[#allocation2 + $0x7c] sm:$0xf] %v4611
      %4630 = vst [vmem:[#allocation2 + $0x80] sm:$0xf] %v4612
      %4631 = vst [vmem:[#allocation2 + $0x84] sm:$0xf] %v4613
      %4632 = vst [vmem:[#allocation2 + $0x88] sm:$0xf] %v4614
      %4633 = vst [vmem:[#allocation2 + $0x8c] sm:$0xf] %v4615
      %4634 = vst [vmem:[#allocation2 + $0x90] sm:$0xf] %v4616
      %4635 = vst [vmem:[#allocation2 + $0x94] sm:$0xf] %v4617
      %4636 = vst [vmem:[#allocation2 + $0x98] sm:$0xf] %v4618
      %4637 = vst [vmem:[#allocation2 + $0x9c] sm:$0xf] %v4619
      %v4638 = vld [vmem:[#allocation2 + $0x4] sm:$0xc]
      %v4639 = vld [vmem:[#allocation2 + $0x8] sm:$0xf]
      %v4640 = vld [vmem:[#allocation2 + $0xc] sm:$0xf]
      %v4641 = vld [vmem:[#allocation2 + $0x10] sm:$0xf]
      %v4642 = vld [vmem:[#allocation2 + $0x14] sm:$0xf]
      %v4643 = vld [vmem:[#allocation2 + $0x18] sm:$0xf]
      %v4644 = vld [vmem:[#allocation2 + $0x1c] sm:$0xf]
      %v4645 = vld [vmem:[#allocation2 + $0x20] sm:$0xf]
      %v4646 = vld [vmem:[#allocation2 + $0x24] sm:$0xf]
      %v4647 = vld [vmem:[#allocation2 + $0x28] sm:$0xf]
      %v4648 = vld [vmem:[#allocation2 + $0x2c] sm:$0xf]
      %v4649 = vld [vmem:[#allocation2 + $0x30] sm:$0xf]
      %v4650 = vld [vmem:[#allocation2 + $0x34] sm:$0xf]
      %v4651 = vld [vmem:[#allocation2 + $0x38] sm:$0xf]
      %v4652 = vld [vmem:[#allocation2 + $0x3c] sm:$0xf]
      %v4653 = vld [vmem:[#allocation2 + $0x40] sm:$0xf]
      %v4654 = vld [vmem:[#allocation2 + $0x44] sm:$0xf]
      %v4655 = vld [vmem:[#allocation2 + $0x48] sm:$0xf]
      %v4656 = vld [vmem:[#allocation2 + $0x4c] sm:$0x7]
      %v4658 = vshrl.u32 %v4638, 16
      %v4660 = vrot.slane %v4658, 6
      %v4661 = vshll.u32 %v4638, 16
      %v4663 = vrot.slane %v4661, 7
      %v4664 = vor.u32 %v4660, %v4663
      %v4665 = vrot.slane %v4664, 4
      %v4667 = vshrl.u32 %v4639, 16
      %v4669 = vrot.slane %v4667, 6
      %v4670 = vshll.u32 %v4639, 16
      %v4672 = vrot.slane %v4670, 7
      %v4673 = vor.u32 %v4669, %v4672
      %v4674 = vsel %vm1524, %v4665, %v4673
      %v4675 = vrot.slane %v4673, 4
      %v4677 = vshrl.u32 %v4640, 16
      %v4679 = vrot.slane %v4677, 6
      %v4680 = vshll.u32 %v4640, 16
      %v4682 = vrot.slane %v4680, 7
      %v4683 = vor.u32 %v4679, %v4682
      %v4684 = vsel %vm1524, %v4675, %v4683
      %v4685 = vrot.slane %v4683, 4
      %v4687 = vshrl.u32 %v4641, 16
      %v4689 = vrot.slane %v4687, 6
      %v4690 = vshll.u32 %v4641, 16
      %v4692 = vrot.slane %v4690, 7
      %v4693 = vor.u32 %v4689, %v4692
      %v4694 = vsel %vm1524, %v4685, %v4693
      %v4695 = vrot.slane %v4693, 4
      %v4697 = vshrl.u32 %v4642, 16
      %v4699 = vrot.slane %v4697, 6
      %v4700 = vshll.u32 %v4642, 16
      %v4702 = vrot.slane %v4700, 7
      %v4703 = vor.u32 %v4699, %v4702
      %v4704 = vsel %vm1524, %v4695, %v4703
      %v4705 = vrot.slane %v4703, 4
      %v4707 = vshrl.u32 %v4643, 16
      %v4709 = vrot.slane %v4707, 6
      %v4710 = vshll.u32 %v4643, 16
      %v4712 = vrot.slane %v4710, 7
      %v4713 = vor.u32 %v4709, %v4712
      %v4714 = vsel %vm1524, %v4705, %v4713
      %v4715 = vrot.slane %v4713, 4
      %v4717 = vshrl.u32 %v4644, 16
      %v4719 = vrot.slane %v4717, 6
      %v4720 = vshll.u32 %v4644, 16
      %v4722 = vrot.slane %v4720, 7
      %v4723 = vor.u32 %v4719, %v4722
      %v4724 = vsel %vm1524, %v4715, %v4723
      %v4725 = vrot.slane %v4723, 4
      %v4727 = vshrl.u32 %v4645, 16
      %v4729 = vrot.slane %v4727, 6
      %v4730 = vshll.u32 %v4645, 16
      %v4732 = vrot.slane %v4730, 7
      %v4733 = vor.u32 %v4729, %v4732
      %v4734 = vsel %vm1524, %v4725, %v4733
      %v4735 = vrot.slane %v4733, 4
      %v4737 = vshrl.u32 %v4646, 16
      %v4739 = vrot.slane %v4737, 6
      %v4740 = vshll.u32 %v4646, 16
      %v4742 = vrot.slane %v4740, 7
      %v4743 = vor.u32 %v4739, %v4742
      %v4744 = vsel %vm1524, %v4735, %v4743
      %v4745 = vrot.slane %v4743, 4
      %v4747 = vshrl.u32 %v4647, 16
      %v4749 = vrot.slane %v4747, 6
      %v4750 = vshll.u32 %v4647, 16
      %v4752 = vrot.slane %v4750, 7
      %v4753 = vor.u32 %v4749, %v4752
      %v4754 = vsel %vm1524, %v4745, %v4753
      %v4755 = vrot.slane %v4753, 4
      %v4757 = vshrl.u32 %v4648, 16
      %v4759 = vrot.slane %v4757, 6
      %v4760 = vshll.u32 %v4648, 16
      %v4762 = vrot.slane %v4760, 7
      %v4763 = vor.u32 %v4759, %v4762
      %v4764 = vsel %vm1524, %v4755, %v4763
      %v4765 = vrot.slane %v4763, 4
      %v4767 = vshrl.u32 %v4649, 16
      %v4769 = vrot.slane %v4767, 6
      %v4770 = vshll.u32 %v4649, 16
      %v4772 = vrot.slane %v4770, 7
      %v4773 = vor.u32 %v4769, %v4772
      %v4774 = vsel %vm1524, %v4765, %v4773
      %v4775 = vrot.slane %v4773, 4
      %v4777 = vshrl.u32 %v4650, 16
      %v4779 = vrot.slane %v4777, 6
      %v4780 = vshll.u32 %v4650, 16
      %v4782 = vrot.slane %v4780, 7
      %v4783 = vor.u32 %v4779, %v4782
      %v4784 = vsel %vm1524, %v4775, %v4783
      %v4785 = vrot.slane %v4783, 4
      %v4787 = vshrl.u32 %v4651, 16
      %v4789 = vrot.slane %v4787, 6
      %v4790 = vshll.u32 %v4651, 16
      %v4792 = vrot.slane %v4790, 7
      %v4793 = vor.u32 %v4789, %v4792
      %v4794 = vsel %vm1524, %v4785, %v4793
      %v4795 = vrot.slane %v4793, 4
      %v4797 = vshrl.u32 %v4652, 16
      %v4799 = vrot.slane %v4797, 6
      %v4800 = vshll.u32 %v4652, 16
      %v4802 = vrot.slane %v4800, 7
      %v4803 = vor.u32 %v4799, %v4802
      %v4804 = vsel %vm1524, %v4795, %v4803
      %v4805 = vrot.slane %v4803, 4
      %v4807 = vshrl.u32 %v4653, 16
      %v4809 = vrot.slane %v4807, 6
      %v4810 = vshll.u32 %v4653, 16
      %v4812 = vrot.slane %v4810, 7
      %v4813 = vor.u32 %v4809, %v4812
      %v4814 = vsel %vm1524, %v4805, %v4813
      %v4815 = vrot.slane %v4813, 4
      %v4817 = vshrl.u32 %v4654, 16
      %v4819 = vrot.slane %v4817, 6
      %v4820 = vshll.u32 %v4654, 16
      %v4822 = vrot.slane %v4820, 7
      %v4823 = vor.u32 %v4819, %v4822
      %v4824 = vsel %vm1524, %v4815, %v4823
      %v4825 = vrot.slane %v4823, 4
      %v4827 = vshrl.u32 %v4655, 16
      %v4829 = vrot.slane %v4827, 6
      %v4830 = vshll.u32 %v4655, 16
      %v4832 = vrot.slane %v4830, 7
      %v4833 = vor.u32 %v4829, %v4832
      %v4834 = vsel %vm1524, %v4825, %v4833
      %v4835 = vrot.slane %v4833, 4
      %v4837 = vshrl.u32 %v4656, 16
      %v4839 = vrot.slane %v4837, 6
      %v4840 = vshll.u32 %v4656, 16
      %v4842 = vrot.slane %v4840, 7
      %v4843 = vor.u32 %v4839, %v4842
      %v4844 = vsel %vm1524, %v4835, %v4843
      %4863 = vst [vmem:[#allocation4] sm:$0xf] %v4674
      %4864 = vst [vmem:[#allocation4 + $0x24] sm:$0xf] %v4684
      %4865 = vst [vmem:[#allocation4 + $0x48] sm:$0xf] %v4694
      %4866 = vst [vmem:[#allocation4 + $0x6c] sm:$0xf] %v4704
      %4867 = vst [vmem:[#allocation4 + $0x90] sm:$0xf] %v4714
      %4868 = vst [vmem:[#allocation4 + $0xb4] sm:$0xf] %v4724
      %4869 = vst [vmem:[#allocation4 + $0xd8] sm:$0xf] %v4734
      %4870 = vst [vmem:[#allocation4 + $0xfc] sm:$0xf] %v4744
      %4871 = vst [vmem:[#allocation4 + $0x120] sm:$0xf] %v4754
      %4872 = vst [vmem:[#allocation4 + $0x144] sm:$0xf] %v4764
      %4873 = vst [vmem:[#allocation4 + $0x168] sm:$0xf] %v4774
      %4874 = vst [vmem:[#allocation4 + $0x18c] sm:$0xf] %v4784
      %4875 = vst [vmem:[#allocation4 + $0x1b0] sm:$0xf] %v4794
      %4876 = vst [vmem:[#allocation4 + $0x1d4] sm:$0xf] %v4804
      %4877 = vst [vmem:[#allocation4 + $0x1f8] sm:$0xf] %v4814
      %4878 = vst [vmem:[#allocation4 + $0x21c] sm:$0xf] %v4824
      %4879 = vst [vmem:[#allocation4 + $0x240] sm:$0xf] %v4834
      %4880 = vst [vmem:[#allocation4 + $0x264] sm:$0xf] %v4844
      %v4881 = vld [vmem:[#allocation2 + $0x4] sm:$0x8]
      %v4882 = vld [vmem:[#allocation2 + $0x8] sm:$0xf]
      %v4883 = vld [vmem:[#allocation2 + $0xc] sm:$0xf]
      %v4884 = vld [vmem:[#allocation2 + $0x10] sm:$0xf]
      %v4885 = vld [vmem:[#allocation2 + $0x14] sm:$0xf]
      %v4886 = vld [vmem:[#allocation2 + $0x18] sm:$0xf]
      %v4887 = vld [vmem:[#allocation2 + $0x1c] sm:$0xf]
      %v4888 = vld [vmem:[#allocation2 + $0x20] sm:$0xf]
      %v4889 = vld [vmem:[#allocation2 + $0x24] sm:$0xf]
      %v4890 = vld [vmem:[#allocation2 + $0x28] sm:$0xf]
      %v4891 = vld [vmem:[#allocation2 + $0x2c] sm:$0xf]
      %v4892 = vld [vmem:[#allocation2 + $0x30] sm:$0xf]
      %v4893 = vld [vmem:[#allocation2 + $0x34] sm:$0xf]
      %v4894 = vld [vmem:[#allocation2 + $0x38] sm:$0xf]
      %v4895 = vld [vmem:[#allocation2 + $0x3c] sm:$0xf]
      %v4896 = vld [vmem:[#allocation2 + $0x40] sm:$0xf]
      %v4897 = vld [vmem:[#allocation2 + $0x44] sm:$0xf]
      %v4898 = vld [vmem:[#allocation2 + $0x48] sm:$0xf]
      %v4899 = vld [vmem:[#allocation2 + $0x4c] sm:$0x7]
      %v4919 = vrot.slane %v4881, 7
      %v4920 = vrot.slane %v4919, 4
      %v4921 = vrot.slane %v4882, 7
      %v4922 = vsel %vm1826, %v4920, %v4921
      %v4923 = vrot.slane %v4921, 4
      %v4924 = vrot.slane %v4883, 7
      %v4925 = vsel %vm1826, %v4923, %v4924
      %v4926 = vrot.slane %v4924, 4
      %v4927 = vrot.slane %v4884, 7
      %v4928 = vsel %vm1826, %v4926, %v4927
      %v4929 = vrot.slane %v4927, 4
      %v4930 = vrot.slane %v4885, 7
      %v4931 = vsel %vm1826, %v4929, %v4930
      %v4932 = vrot.slane %v4930, 4
      %v4933 = vrot.slane %v4886, 7
      %v4934 = vsel %vm1826, %v4932, %v4933
      %v4935 = vrot.slane %v4933, 4
      %v4936 = vrot.slane %v4887, 7
      %v4937 = vsel %vm1826, %v4935, %v4936
      %v4938 = vrot.slane %v4936, 4
      %v4939 = vrot.slane %v4888, 7
      %v4940 = vsel %vm1826, %v4938, %v4939
      %v4941 = vrot.slane %v4939, 4
      %v4942 = vrot.slane %v4889, 7
      %v4943 = vsel %vm1826, %v4941, %v4942
      %v4944 = vrot.slane %v4942, 4
      %v4945 = vrot.slane %v4890, 7
      %v4946 = vsel %vm1826, %v4944, %v4945
      %v4947 = vrot.slane %v4945, 4
      %v4948 = vrot.slane %v4891, 7
      %v4949 = vsel %vm1826, %v4947, %v4948
      %v4950 = vrot.slane %v4948, 4
      %v4951 = vrot.slane %v4892, 7
      %v4952 = vsel %vm1826, %v4950, %v4951
      %v4953 = vrot.slane %v4951, 4
      %v4954 = vrot.slane %v4893, 7
      %v4955 = vsel %vm1826, %v4953, %v4954
      %v4956 = vrot.slane %v4954, 4
      %v4957 = vrot.slane %v4894, 7
      %v4958 = vsel %vm1826, %v4956, %v4957
      %v4959 = vrot.slane %v4957, 4
      %v4960 = vrot.slane %v4895, 7
      %v4961 = vsel %vm1826, %v4959, %v4960
      %v4962 = vrot.slane %v4960, 4
      %v4963 = vrot.slane %v4896, 7
      %v4964 = vsel %vm1826, %v4962, %v4963
      %v4965 = vrot.slane %v4963, 4
      %v4966 = vrot.slane %v4897, 7
      %v4967 = vsel %vm1826, %v4965, %v4966
      %v4968 = vrot.slane %v4966, 4
      %v4969 = vrot.slane %v4898, 7
      %v4970 = vsel %vm1826, %v4968, %v4969
      %v4971 = vrot.slane %v4969, 4
      %v4972 = vrot.slane %v4899, 7
      %v4973 = vsel %vm1826, %v4971, %v4972
      %4992 = vst [vmem:[#allocation4 + $0x4] sm:$0xf] %v4922
      %4993 = vst [vmem:[#allocation4 + $0x28] sm:$0xf] %v4925
      %4994 = vst [vmem:[#allocation4 + $0x4c] sm:$0xf] %v4928
      %4995 = vst [vmem:[#allocation4 + $0x70] sm:$0xf] %v4931
      %4996 = vst [vmem:[#allocation4 + $0x94] sm:$0xf] %v4934
      %4997 = vst [vmem:[#allocation4 + $0xb8] sm:$0xf] %v4937
      %4998 = vst [vmem:[#allocation4 + $0xdc] sm:$0xf] %v4940
      %4999 = vst [vmem:[#allocation4 + $0x100] sm:$0xf] %v4943
      %5000 = vst [vmem:[#allocation4 + $0x124] sm:$0xf] %v4946
      %5001 = vst [vmem:[#allocation4 + $0x148] sm:$0xf] %v4949
      %5002 = vst [vmem:[#allocation4 + $0x16c] sm:$0xf] %v4952
      %5003 = vst [vmem:[#allocation4 + $0x190] sm:$0xf] %v4955
      %5004 = vst [vmem:[#allocation4 + $0x1b4] sm:$0xf] %v4958
      %5005 = vst [vmem:[#allocation4 + $0x1d8] sm:$0xf] %v4961
      %5006 = vst [vmem:[#allocation4 + $0x1fc] sm:$0xf] %v4964
      %5007 = vst [vmem:[#allocation4 + $0x220] sm:$0xf] %v4967
      %5008 = vst [vmem:[#allocation4 + $0x244] sm:$0xf] %v4970
      %5009 = vst [vmem:[#allocation4 + $0x268] sm:$0xf] %v4973
      %v5010 = vld [vmem:[#allocation2 + $0x4] sm:$0x8]
      %v5011 = vld [vmem:[#allocation2 + $0x8] sm:$0xf]
      %v5012 = vld [vmem:[#allocation2 + $0xc] sm:$0xf]
      %v5013 = vld [vmem:[#allocation2 + $0x10] sm:$0xf]
      %v5014 = vld [vmem:[#allocation2 + $0x14] sm:$0xf]
      %v5015 = vld [vmem:[#allocation2 + $0x18] sm:$0xf]
      %v5016 = vld [vmem:[#allocation2 + $0x1c] sm:$0xf]
      %v5017 = vld [vmem:[#allocation2 + $0x20] sm:$0xf]
      %v5018 = vld [vmem:[#allocation2 + $0x24] sm:$0xf]
      %v5019 = vld [vmem:[#allocation2 + $0x28] sm:$0xf]
      %v5020 = vld [vmem:[#allocation2 + $0x2c] sm:$0xf]
      %v5021 = vld [vmem:[#allocation2 + $0x30] sm:$0xf]
      %v5022 = vld [vmem:[#allocation2 + $0x34] sm:$0xf]
      %v5023 = vld [vmem:[#allocation2 + $0x38] sm:$0xf]
      %v5024 = vld [vmem:[#allocation2 + $0x3c] sm:$0xf]
      %v5025 = vld [vmem:[#allocation2 + $0x40] sm:$0xf]
      %v5026 = vld [vmem:[#allocation2 + $0x44] sm:$0xf]
      %v5027 = vld [vmem:[#allocation2 + $0x48] sm:$0xf]
      %v5028 = vld [vmem:[#allocation2 + $0x4c] sm:$0xf]
      %vm5029 = vsmask.f32 256
      %vm5030 = vsmask.f32 4368
      %vm5031 = vmor %vm5029, %vm5030
      %v5033 = vshrl.u32 %v5010, 16
      %v5035 = vrot.slane %v5033, 7
      %v5036 = vrot.slane %v5035, 4
      %v5038 = vshrl.u32 %v5011, 16
      %v5040 = vrot.slane %v5038, 7
      %v5041 = vshll.u32 %v5011, 16
      %v5043 = vor.u32 %v5040, %v5041
      %v5044 = vsel %vm5031, %v5036, %v5043
      %v5045 = vrot.slane %v5040, 4
      %v5047 = vshrl.u32 %v5012, 16
      %v5049 = vrot.slane %v5047, 7
      %v5050 = vshll.u32 %v5012, 16
      %v5052 = vor.u32 %v5049, %v5050
      %v5053 = vsel %vm5031, %v5045, %v5052
      %v5054 = vrot.slane %v5049, 4
      %v5056 = vshrl.u32 %v5013, 16
      %v5058 = vrot.slane %v5056, 7
      %v5059 = vshll.u32 %v5013, 16
      %v5061 = vor.u32 %v5058, %v5059
      %v5062 = vsel %vm5031, %v5054, %v5061
      %v5063 = vrot.slane %v5058, 4
      %v5065 = vshrl.u32 %v5014, 16
      %v5067 = vrot.slane %v5065, 7
      %v5068 = vshll.u32 %v5014, 16
      %v5070 = vor.u32 %v5067, %v5068
      %v5071 = vsel %vm5031, %v5063, %v5070
      %v5072 = vrot.slane %v5067, 4
      %v5074 = vshrl.u32 %v5015, 16
      %v5076 = vrot.slane %v5074, 7
      %v5077 = vshll.u32 %v5015, 16
      %v5079 = vor.u32 %v5076, %v5077
      %v5080 = vsel %vm5031, %v5072, %v5079
      %v5081 = vrot.slane %v5076, 4
      %v5083 = vshrl.u32 %v5016, 16
      %v5085 = vrot.slane %v5083, 7
      %v5086 = vshll.u32 %v5016, 16
      %v5088 = vor.u32 %v5085, %v5086
      %v5089 = vsel %vm5031, %v5081, %v5088
      %v5090 = vrot.slane %v5085, 4
      %v5092 = vshrl.u32 %v5017, 16
      %v5094 = vrot.slane %v5092, 7
      %v5095 = vshll.u32 %v5017, 16
      %v5097 = vor.u32 %v5094, %v5095
      %v5098 = vsel %vm5031, %v5090, %v5097
      %v5099 = vrot.slane %v5094, 4
      %v5101 = vshrl.u32 %v5018, 16
      %v5103 = vrot.slane %v5101, 7
      %v5104 = vshll.u32 %v5018, 16
      %v5106 = vor.u32 %v5103, %v5104
      %v5107 = vsel %vm5031, %v5099, %v5106
      %v5108 = vrot.slane %v5103, 4
      %v5110 = vshrl.u32 %v5019, 16
      %v5112 = vrot.slane %v5110, 7
      %v5113 = vshll.u32 %v5019, 16
      %v5115 = vor.u32 %v5112, %v5113
      %v5116 = vsel %vm5031, %v5108, %v5115
      %v5117 = vrot.slane %v5112, 4
      %v5119 = vshrl.u32 %v5020, 16
      %v5121 = vrot.slane %v5119, 7
      %v5122 = vshll.u32 %v5020, 16
      %v5124 = vor.u32 %v5121, %v5122
      %v5125 = vsel %vm5031, %v5117, %v5124
      %v5126 = vrot.slane %v5121, 4
      %v5128 = vshrl.u32 %v5021, 16
      %v5130 = vrot.slane %v5128, 7
      %v5131 = vshll.u32 %v5021, 16
      %v5133 = vor.u32 %v5130, %v5131
      %v5134 = vsel %vm5031, %v5126, %v5133
      %v5135 = vrot.slane %v5130, 4
      %v5137 = vshrl.u32 %v5022, 16
      %v5139 = vrot.slane %v5137, 7
      %v5140 = vshll.u32 %v5022, 16
      %v5142 = vor.u32 %v5139, %v5140
      %v5143 = vsel %vm5031, %v5135, %v5142
      %v5144 = vrot.slane %v5139, 4
      %v5146 = vshrl.u32 %v5023, 16
      %v5148 = vrot.slane %v5146, 7
      %v5149 = vshll.u32 %v5023, 16
      %v5151 = vor.u32 %v5148, %v5149
      %v5152 = vsel %vm5031, %v5144, %v5151
      %v5153 = vrot.slane %v5148, 4
      %v5155 = vshrl.u32 %v5024, 16
      %v5157 = vrot.slane %v5155, 7
      %v5158 = vshll.u32 %v5024, 16
      %v5160 = vor.u32 %v5157, %v5158
      %v5161 = vsel %vm5031, %v5153, %v5160
      %v5162 = vrot.slane %v5157, 4
      %v5164 = vshrl.u32 %v5025, 16
      %v5166 = vrot.slane %v5164, 7
      %v5167 = vshll.u32 %v5025, 16
      %v5169 = vor.u32 %v5166, %v5167
      %v5170 = vsel %vm5031, %v5162, %v5169
      %v5171 = vrot.slane %v5166, 4
      %v5173 = vshrl.u32 %v5026, 16
      %v5175 = vrot.slane %v5173, 7
      %v5176 = vshll.u32 %v5026, 16
      %v5178 = vor.u32 %v5175, %v5176
      %v5179 = vsel %vm5031, %v5171, %v5178
      %v5180 = vrot.slane %v5175, 4
      %v5182 = vshrl.u32 %v5027, 16
      %v5184 = vrot.slane %v5182, 7
      %v5185 = vshll.u32 %v5027, 16
      %v5187 = vor.u32 %v5184, %v5185
      %v5188 = vsel %vm5031, %v5180, %v5187
      %v5189 = vrot.slane %v5184, 4
      %v5191 = vshrl.u32 %v5028, 16
      %v5193 = vrot.slane %v5191, 7
      %v5194 = vshll.u32 %v5028, 16
      %v5196 = vor.u32 %v5193, %v5194
      %v5197 = vsel %vm5031, %v5189, %v5196
      %5216 = vst [vmem:[#allocation4 + $0x8] sm:$0xf] %v5044
      %5217 = vst [vmem:[#allocation4 + $0x2c] sm:$0xf] %v5053
      %5218 = vst [vmem:[#allocation4 + $0x50] sm:$0xf] %v5062
      %5219 = vst [vmem:[#allocation4 + $0x74] sm:$0xf] %v5071
      %5220 = vst [vmem:[#allocation4 + $0x98] sm:$0xf] %v5080
      %5221 = vst [vmem:[#allocation4 + $0xbc] sm:$0xf] %v5089
      %5222 = vst [vmem:[#allocation4 + $0xe0] sm:$0xf] %v5098
      %5223 = vst [vmem:[#allocation4 + $0x104] sm:$0xf] %v5107
      %5224 = vst [vmem:[#allocation4 + $0x128] sm:$0xf] %v5116
      %5225 = vst [vmem:[#allocation4 + $0x14c] sm:$0xf] %v5125
      %5226 = vst [vmem:[#allocation4 + $0x170] sm:$0xf] %v5134
      %5227 = vst [vmem:[#allocation4 + $0x194] sm:$0xf] %v5143
      %5228 = vst [vmem:[#allocation4 + $0x1b8] sm:$0xf] %v5152
      %5229 = vst [vmem:[#allocation4 + $0x1dc] sm:$0xf] %v5161
      %5230 = vst [vmem:[#allocation4 + $0x200] sm:$0xf] %v5170
      %5231 = vst [vmem:[#allocation4 + $0x224] sm:$0xf] %v5179
      %5232 = vst [vmem:[#allocation4 + $0x248] sm:$0xf] %v5188
      %5233 = vst [vmem:[#allocation4 + $0x26c] sm:$0xf] %v5197
      %v5234 = vld [vmem:[#allocation2 + $0xc] sm:$0x8]
      %v5235 = vld [vmem:[#allocation2 + $0x10] sm:$0xf]
      %v5236 = vld [vmem:[#allocation2 + $0x14] sm:$0xf]
      %v5237 = vld [vmem:[#allocation2 + $0x18] sm:$0xf]
      %v5238 = vld [vmem:[#allocation2 + $0x1c] sm:$0xf]
      %v5239 = vld [vmem:[#allocation2 + $0x20] sm:$0xf]
      %v5240 = vld [vmem:[#allocation2 + $0x24] sm:$0xf]
      %v5241 = vld [vmem:[#allocation2 + $0x28] sm:$0xf]
      %v5242 = vld [vmem:[#allocation2 + $0x2c] sm:$0xf]
      %v5243 = vld [vmem:[#allocation2 + $0x30] sm:$0xf]
      %v5244 = vld [vmem:[#allocation2 + $0x34] sm:$0xf]
      %v5245 = vld [vmem:[#allocation2 + $0x38] sm:$0xf]
      %v5246 = vld [vmem:[#allocation2 + $0x3c] sm:$0xf]
      %v5247 = vld [vmem:[#allocation2 + $0x40] sm:$0xf]
      %v5248 = vld [vmem:[#allocation2 + $0x44] sm:$0xf]
      %v5249 = vld [vmem:[#allocation2 + $0x48] sm:$0xf]
      %v5250 = vld [vmem:[#allocation2 + $0x4c] sm:$0xf]
      %v5251 = vld [vmem:[#allocation2 + $0x50] sm:$0xf]
      %v5252 = vld [vmem:[#allocation2 + $0x54] sm:$0xf]
      %v5254 = vshrl.u32 %v5234, 16
      %v5256 = vrot.slane %v5254, 7
      %v5257 = vrot.slane %v5256, 4
      %v5259 = vshrl.u32 %v5235, 16
      %v5261 = vrot.slane %v5259, 7
      %v5262 = vshll.u32 %v5235, 16
      %v5264 = vor.u32 %v5261, %v5262
      %v5265 = vsel %vm5031, %v5257, %v5264
      %v5266 = vrot.slane %v5261, 4
      %v5268 = vshrl.u32 %v5236, 16
      %v5270 = vrot.slane %v5268, 7
      %v5271 = vshll.u32 %v5236, 16
      %v5273 = vor.u32 %v5270, %v5271
      %v5274 = vsel %vm5031, %v5266, %v5273
      %v5275 = vrot.slane %v5270, 4
      %v5277 = vshrl.u32 %v5237, 16
      %v5279 = vrot.slane %v5277, 7
      %v5280 = vshll.u32 %v5237, 16
      %v5282 = vor.u32 %v5279, %v5280
      %v5283 = vsel %vm5031, %v5275, %v5282
      %v5284 = vrot.slane %v5279, 4
      %v5286 = vshrl.u32 %v5238, 16
      %v5288 = vrot.slane %v5286, 7
      %v5289 = vshll.u32 %v5238, 16
      %v5291 = vor.u32 %v5288, %v5289
      %v5292 = vsel %vm5031, %v5284, %v5291
      %v5293 = vrot.slane %v5288, 4
      %v5295 = vshrl.u32 %v5239, 16
      %v5297 = vrot.slane %v5295, 7
      %v5298 = vshll.u32 %v5239, 16
      %v5300 = vor.u32 %v5297, %v5298
      %v5301 = vsel %vm5031, %v5293, %v5300
      %v5302 = vrot.slane %v5297, 4
      %v5304 = vshrl.u32 %v5240, 16
      %v5306 = vrot.slane %v5304, 7
      %v5307 = vshll.u32 %v5240, 16
      %v5309 = vor.u32 %v5306, %v5307
      %v5310 = vsel %vm5031, %v5302, %v5309
      %v5311 = vrot.slane %v5306, 4
      %v5313 = vshrl.u32 %v5241, 16
      %v5315 = vrot.slane %v5313, 7
      %v5316 = vshll.u32 %v5241, 16
      %v5318 = vor.u32 %v5315, %v5316
      %v5319 = vsel %vm5031, %v5311, %v5318
      %v5320 = vrot.slane %v5315, 4
      %v5322 = vshrl.u32 %v5242, 16
      %v5324 = vrot.slane %v5322, 7
      %v5325 = vshll.u32 %v5242, 16
      %v5327 = vor.u32 %v5324, %v5325
      %v5328 = vsel %vm5031, %v5320, %v5327
      %v5329 = vrot.slane %v5324, 4
      %v5331 = vshrl.u32 %v5243, 16
      %v5333 = vrot.slane %v5331, 7
      %v5334 = vshll.u32 %v5243, 16
      %v5336 = vor.u32 %v5333, %v5334
      %v5337 = vsel %vm5031, %v5329, %v5336
      %v5338 = vrot.slane %v5333, 4
      %v5340 = vshrl.u32 %v5244, 16
      %v5342 = vrot.slane %v5340, 7
      %v5343 = vshll.u32 %v5244, 16
      %v5345 = vor.u32 %v5342, %v5343
      %v5346 = vsel %vm5031, %v5338, %v5345
      %v5347 = vrot.slane %v5342, 4
      %v5349 = vshrl.u32 %v5245, 16
      %v5351 = vrot.slane %v5349, 7
      %v5352 = vshll.u32 %v5245, 16
      %v5354 = vor.u32 %v5351, %v5352
      %v5355 = vsel %vm5031, %v5347, %v5354
      %v5356 = vrot.slane %v5351, 4
      %v5358 = vshrl.u32 %v5246, 16
      %v5360 = vrot.slane %v5358, 7
      %v5361 = vshll.u32 %v5246, 16
      %v5363 = vor.u32 %v5360, %v5361
      %v5364 = vsel %vm5031, %v5356, %v5363
      %v5365 = vrot.slane %v5360, 4
      %v5367 = vshrl.u32 %v5247, 16
      %v5369 = vrot.slane %v5367, 7
      %v5370 = vshll.u32 %v5247, 16
      %v5372 = vor.u32 %v5369, %v5370
      %v5373 = vsel %vm5031, %v5365, %v5372
      %v5374 = vrot.slane %v5369, 4
      %v5376 = vshrl.u32 %v5248, 16
      %v5378 = vrot.slane %v5376, 7
      %v5379 = vshll.u32 %v5248, 16
      %v5381 = vor.u32 %v5378, %v5379
      %v5382 = vsel %vm5031, %v5374, %v5381
      %v5383 = vrot.slane %v5378, 4
      %v5385 = vshrl.u32 %v5249, 16
      %v5387 = vrot.slane %v5385, 7
      %v5388 = vshll.u32 %v5249, 16
      %v5390 = vor.u32 %v5387, %v5388
      %v5391 = vsel %vm5031, %v5383, %v5390
      %v5392 = vrot.slane %v5387, 4
      %v5394 = vshrl.u32 %v5250, 16
      %v5396 = vrot.slane %v5394, 7
      %v5397 = vshll.u32 %v5250, 16
      %v5399 = vor.u32 %v5396, %v5397
      %v5400 = vsel %vm5031, %v5392, %v5399
      %v5401 = vrot.slane %v5396, 4
      %v5403 = vshrl.u32 %v5251, 16
      %v5405 = vrot.slane %v5403, 7
      %v5406 = vshll.u32 %v5251, 16
      %v5408 = vor.u32 %v5405, %v5406
      %v5409 = vsel %vm5031, %v5401, %v5408
      %v5410 = vrot.slane %v5405, 4
      %v5412 = vshrl.u32 %v5252, 16
      %v5414 = vrot.slane %v5412, 7
      %v5415 = vshll.u32 %v5252, 16
      %v5417 = vor.u32 %v5414, %v5415
      %v5418 = vsel %vm5031, %v5410, %v5417
      %5437 = vst [vmem:[#allocation4 + $0xc] sm:$0xf] %v5265
      %5438 = vst [vmem:[#allocation4 + $0x30] sm:$0xf] %v5274
      %5439 = vst [vmem:[#allocation4 + $0x54] sm:$0xf] %v5283
      %5440 = vst [vmem:[#allocation4 + $0x78] sm:$0xf] %v5292
      %5441 = vst [vmem:[#allocation4 + $0x9c] sm:$0xf] %v5301
      %5442 = vst [vmem:[#allocation4 + $0xc0] sm:$0xf] %v5310
      %5443 = vst [vmem:[#allocation4 + $0xe4] sm:$0xf] %v5319
      %5444 = vst [vmem:[#allocation4 + $0x108] sm:$0xf] %v5328
      %5445 = vst [vmem:[#allocation4 + $0x12c] sm:$0xf] %v5337
      %5446 = vst [vmem:[#allocation4 + $0x150] sm:$0xf] %v5346
      %5447 = vst [vmem:[#allocation4 + $0x174] sm:$0xf] %v5355
      %5448 = vst [vmem:[#allocation4 + $0x198] sm:$0xf] %v5364
      %5449 = vst [vmem:[#allocation4 + $0x1bc] sm:$0xf] %v5373
      %5450 = vst [vmem:[#allocation4 + $0x1e0] sm:$0xf] %v5382
      %5451 = vst [vmem:[#allocation4 + $0x204] sm:$0xf] %v5391
      %5452 = vst [vmem:[#allocation4 + $0x228] sm:$0xf] %v5400
      %5453 = vst [vmem:[#allocation4 + $0x24c] sm:$0xf] %v5409
      %5454 = vst [vmem:[#allocation4 + $0x270] sm:$0xf] %v5418
      %v5455 = vld [vmem:[#allocation2 + $0x10] sm:$0xf]
      %v5456 = vld [vmem:[#allocation2 + $0x14] sm:$0xf]
      %v5457 = vld [vmem:[#allocation2 + $0x18] sm:$0xf]
      %v5458 = vld [vmem:[#allocation2 + $0x1c] sm:$0xf]
      %v5459 = vld [vmem:[#allocation2 + $0x20] sm:$0xf]
      %v5460 = vld [vmem:[#allocation2 + $0x24] sm:$0xf]
      %v5461 = vld [vmem:[#allocation2 + $0x28] sm:$0xf]
      %v5462 = vld [vmem:[#allocation2 + $0x2c] sm:$0xf]
      %v5463 = vld [vmem:[#allocation2 + $0x30] sm:$0xf]
      %v5464 = vld [vmem:[#allocation2 + $0x34] sm:$0xf]
      %v5465 = vld [vmem:[#allocation2 + $0x38] sm:$0xf]
      %v5466 = vld [vmem:[#allocation2 + $0x3c] sm:$0xf]
      %v5467 = vld [vmem:[#allocation2 + $0x40] sm:$0xf]
      %v5468 = vld [vmem:[#allocation2 + $0x44] sm:$0xf]
      %v5469 = vld [vmem:[#allocation2 + $0x48] sm:$0xf]
      %v5470 = vld [vmem:[#allocation2 + $0x4c] sm:$0xf]
      %v5471 = vld [vmem:[#allocation2 + $0x50] sm:$0xf]
      %v5472 = vld [vmem:[#allocation2 + $0x54] sm:$0xf]
      %5473 = vst [vmem:[#allocation4 + $0x10] sm:$0xf] %v5455
      %5474 = vst [vmem:[#allocation4 + $0x34] sm:$0xf] %v5456
      %5475 = vst [vmem:[#allocation4 + $0x58] sm:$0xf] %v5457
      %5476 = vst [vmem:[#allocation4 + $0x7c] sm:$0xf] %v5458
      %5477 = vst [vmem:[#allocation4 + $0xa0] sm:$0xf] %v5459
      %5478 = vst [vmem:[#allocation4 + $0xc4] sm:$0xf] %v5460
      %5479 = vst [vmem:[#allocation4 + $0xe8] sm:$0xf] %v5461
      %5480 = vst [vmem:[#allocation4 + $0x10c] sm:$0xf] %v5462
      %5481 = vst [vmem:[#allocation4 + $0x130] sm:$0xf] %v5463
      %5482 = vst [vmem:[#allocation4 + $0x154] sm:$0xf] %v5464
      %5483 = vst [vmem:[#allocation4 + $0x178] sm:$0xf] %v5465
      %5484 = vst [vmem:[#allocation4 + $0x19c] sm:$0xf] %v5466
      %5485 = vst [vmem:[#allocation4 + $0x1c0] sm:$0xf] %v5467
      %5486 = vst [vmem:[#allocation4 + $0x1e4] sm:$0xf] %v5468
      %5487 = vst [vmem:[#allocation4 + $0x208] sm:$0xf] %v5469
      %5488 = vst [vmem:[#allocation4 + $0x22c] sm:$0xf] %v5470
      %5489 = vst [vmem:[#allocation4 + $0x250] sm:$0xf] %v5471
      %5490 = vst [vmem:[#allocation4 + $0x274] sm:$0xf] %v5472
      %v5491 = vld [vmem:[#allocation2 + $0x10] sm:$0xf]
      %v5492 = vld [vmem:[#allocation2 + $0x14] sm:$0xf]
      %v5493 = vld [vmem:[#allocation2 + $0x18] sm:$0xf]
      %v5494 = vld [vmem:[#allocation2 + $0x1c] sm:$0xf]
      %v5495 = vld [vmem:[#allocation2 + $0x20] sm:$0xf]
      %v5496 = vld [vmem:[#allocation2 + $0x24] sm:$0xf]
      %v5497 = vld [vmem:[#allocation2 + $0x28] sm:$0xf]
      %v5498 = vld [vmem:[#allocation2 + $0x2c] sm:$0xf]
      %v5499 = vld [vmem:[#allocation2 + $0x30] sm:$0xf]
      %v5500 = vld [vmem:[#allocation2 + $0x34] sm:$0xf]
      %v5501 = vld [vmem:[#allocation2 + $0x38] sm:$0xf]
      %v5502 = vld [vmem:[#allocation2 + $0x3c] sm:$0xf]
      %v5503 = vld [vmem:[#allocation2 + $0x40] sm:$0xf]
      %v5504 = vld [vmem:[#allocation2 + $0x44] sm:$0xf]
      %v5505 = vld [vmem:[#allocation2 + $0x48] sm:$0xf]
      %v5506 = vld [vmem:[#allocation2 + $0x4c] sm:$0xf]
      %v5507 = vld [vmem:[#allocation2 + $0x50] sm:$0xf]
      %v5508 = vld [vmem:[#allocation2 + $0x54] sm:$0xf]
      %v5509 = vld [vmem:[#allocation2 + $0x58] sm:$0x1]
      %v5511 = vshrl.u32 %v5491, 16
      %v5513 = vrot.slane %v5511, 4
      %v5514 = vshll.u32 %v5491, 16
      %v5516 = vrot.slane %v5514, 5
      %v5517 = vor.u32 %v5513, %v5516
      %v5518 = vrot.slane %v5517, 4
      %v5520 = vshll.u32 %v5492, 16
      %v5522 = vrot.slane %v5520, 5
      %v5523 = vsel %vm292, %v5518, %v5522
      %v5524 = vshrl.u32 %v5492, 16
      %v5526 = vrot.slane %v5524, 4
      %v5527 = vor.u32 %v5526, %v5522
      %v5528 = vrot.slane %v5527, 4
      %v5530 = vshll.u32 %v5493, 16
      %v5532 = vrot.slane %v5530, 5
      %v5533 = vsel %vm292, %v5528, %v5532
      %v5534 = vshrl.u32 %v5493, 16
      %v5536 = vrot.slane %v5534, 4
      %v5537 = vor.u32 %v5536, %v5532
      %v5538 = vrot.slane %v5537, 4
      %v5540 = vshll.u32 %v5494, 16
      %v5542 = vrot.slane %v5540, 5
      %v5543 = vsel %vm292, %v5538, %v5542
      %v5544 = vshrl.u32 %v5494, 16
      %v5546 = vrot.slane %v5544, 4
      %v5547 = vor.u32 %v5546, %v5542
      %v5548 = vrot.slane %v5547, 4
      %v5550 = vshll.u32 %v5495, 16
      %v5552 = vrot.slane %v5550, 5
      %v5553 = vsel %vm292, %v5548, %v5552
      %v5554 = vshrl.u32 %v5495, 16
      %v5556 = vrot.slane %v5554, 4
      %v5557 = vor.u32 %v5556, %v5552
      %v5558 = vrot.slane %v5557, 4
      %v5560 = vshll.u32 %v5496, 16
      %v5562 = vrot.slane %v5560, 5
      %v5563 = vsel %vm292, %v5558, %v5562
      %v5564 = vshrl.u32 %v5496, 16
      %v5566 = vrot.slane %v5564, 4
      %v5567 = vor.u32 %v5566, %v5562
      %v5568 = vrot.slane %v5567, 4
      %v5570 = vshll.u32 %v5497, 16
      %v5572 = vrot.slane %v5570, 5
      %v5573 = vsel %vm292, %v5568, %v5572
      %v5574 = vshrl.u32 %v5497, 16
      %v5576 = vrot.slane %v5574, 4
      %v5577 = vor.u32 %v5576, %v5572
      %v5578 = vrot.slane %v5577, 4
      %v5580 = vshll.u32 %v5498, 16
      %v5582 = vrot.slane %v5580, 5
      %v5583 = vsel %vm292, %v5578, %v5582
      %v5584 = vshrl.u32 %v5498, 16
      %v5586 = vrot.slane %v5584, 4
      %v5587 = vor.u32 %v5586, %v5582
      %v5588 = vrot.slane %v5587, 4
      %v5590 = vshll.u32 %v5499, 16
      %v5592 = vrot.slane %v5590, 5
      %v5593 = vsel %vm292, %v5588, %v5592
      %v5594 = vshrl.u32 %v5499, 16
      %v5596 = vrot.slane %v5594, 4
      %v5597 = vor.u32 %v5596, %v5592
      %v5598 = vrot.slane %v5597, 4
      %v5600 = vshll.u32 %v5500, 16
      %v5602 = vrot.slane %v5600, 5
      %v5603 = vsel %vm292, %v5598, %v5602
      %v5604 = vshrl.u32 %v5500, 16
      %v5606 = vrot.slane %v5604, 4
      %v5607 = vor.u32 %v5606, %v5602
      %v5608 = vrot.slane %v5607, 4
      %v5610 = vshll.u32 %v5501, 16
      %v5612 = vrot.slane %v5610, 5
      %v5613 = vsel %vm292, %v5608, %v5612
      %v5614 = vshrl.u32 %v5501, 16
      %v5616 = vrot.slane %v5614, 4
      %v5617 = vor.u32 %v5616, %v5612
      %v5618 = vrot.slane %v5617, 4
      %v5620 = vshll.u32 %v5502, 16
      %v5622 = vrot.slane %v5620, 5
      %v5623 = vsel %vm292, %v5618, %v5622
      %v5624 = vshrl.u32 %v5502, 16
      %v5626 = vrot.slane %v5624, 4
      %v5627 = vor.u32 %v5626, %v5622
      %v5628 = vrot.slane %v5627, 4
      %v5630 = vshll.u32 %v5503, 16
      %v5632 = vrot.slane %v5630, 5
      %v5633 = vsel %vm292, %v5628, %v5632
      %v5634 = vshrl.u32 %v5503, 16
      %v5636 = vrot.slane %v5634, 4
      %v5637 = vor.u32 %v5636, %v5632
      %v5638 = vrot.slane %v5637, 4
      %v5640 = vshll.u32 %v5504, 16
      %v5642 = vrot.slane %v5640, 5
      %v5643 = vsel %vm292, %v5638, %v5642
      %v5644 = vshrl.u32 %v5504, 16
      %v5646 = vrot.slane %v5644, 4
      %v5647 = vor.u32 %v5646, %v5642
      %v5648 = vrot.slane %v5647, 4
      %v5650 = vshll.u32 %v5505, 16
      %v5652 = vrot.slane %v5650, 5
      %v5653 = vsel %vm292, %v5648, %v5652
      %v5654 = vshrl.u32 %v5505, 16
      %v5656 = vrot.slane %v5654, 4
      %v5657 = vor.u32 %v5656, %v5652
      %v5658 = vrot.slane %v5657, 4
      %v5660 = vshll.u32 %v5506, 16
      %v5662 = vrot.slane %v5660, 5
      %v5663 = vsel %vm292, %v5658, %v5662
      %v5664 = vshrl.u32 %v5506, 16
      %v5666 = vrot.slane %v5664, 4
      %v5667 = vor.u32 %v5666, %v5662
      %v5668 = vrot.slane %v5667, 4
      %v5670 = vshll.u32 %v5507, 16
      %v5672 = vrot.slane %v5670, 5
      %v5673 = vsel %vm292, %v5668, %v5672
      %v5674 = vshrl.u32 %v5507, 16
      %v5676 = vrot.slane %v5674, 4
      %v5677 = vor.u32 %v5676, %v5672
      %v5678 = vrot.slane %v5677, 4
      %v5680 = vshll.u32 %v5508, 16
      %v5682 = vrot.slane %v5680, 5
      %v5683 = vsel %vm292, %v5678, %v5682
      %v5684 = vshrl.u32 %v5508, 16
      %v5686 = vrot.slane %v5684, 4
      %v5687 = vor.u32 %v5686, %v5682
      %v5688 = vrot.slane %v5687, 4
      %v5690 = vshll.u32 %v5509, 16
      %v5692 = vrot.slane %v5690, 5
      %v5693 = vsel %vm292, %v5688, %v5692
      %5712 = vst [vmem:[#allocation4 + $0x14] sm:$0xf] %v5523
      %5713 = vst [vmem:[#allocation4 + $0x38] sm:$0xf] %v5533
      %5714 = vst [vmem:[#allocation4 + $0x5c] sm:$0xf] %v5543
      %5715 = vst [vmem:[#allocation4 + $0x80] sm:$0xf] %v5553
      %5716 = vst [vmem:[#allocation4 + $0xa4] sm:$0xf] %v5563
      %5717 = vst [vmem:[#allocation4 + $0xc8] sm:$0xf] %v5573
      %5718 = vst [vmem:[#allocation4 + $0xec] sm:$0xf] %v5583
      %5719 = vst [vmem:[#allocation4 + $0x110] sm:$0xf] %v5593
      %5720 = vst [vmem:[#allocation4 + $0x134] sm:$0xf] %v5603
      %5721 = vst [vmem:[#allocation4 + $0x158] sm:$0xf] %v5613
      %5722 = vst [vmem:[#allocation4 + $0x17c] sm:$0xf] %v5623
      %5723 = vst [vmem:[#allocation4 + $0x1a0] sm:$0xf] %v5633
      %5724 = vst [vmem:[#allocation4 + $0x1c4] sm:$0xf] %v5643
      %5725 = vst [vmem:[#allocation4 + $0x1e8] sm:$0xf] %v5653
      %5726 = vst [vmem:[#allocation4 + $0x20c] sm:$0xf] %v5663
      %5727 = vst [vmem:[#allocation4 + $0x230] sm:$0xf] %v5673
      %5728 = vst [vmem:[#allocation4 + $0x254] sm:$0xf] %v5683
      %5729 = vst [vmem:[#allocation4 + $0x278] sm:$0xf] %v5693
      %v5730 = vld [vmem:[#allocation2 + $0x18] sm:$0xf]
      %v5731 = vld [vmem:[#allocation2 + $0x1c] sm:$0xf]
      %v5732 = vld [vmem:[#allocation2 + $0x20] sm:$0xf]
      %v5733 = vld [vmem:[#allocation2 + $0x24] sm:$0xf]
      %v5734 = vld [vmem:[#allocation2 + $0x28] sm:$0xf]
      %v5735 = vld [vmem:[#allocation2 + $0x2c] sm:$0xf]
      %v5736 = vld [vmem:[#allocation2 + $0x30] sm:$0xf]
      %v5737 = vld [vmem:[#allocation2 + $0x34] sm:$0xf]
      %v5738 = vld [vmem:[#allocation2 + $0x38] sm:$0xf]
      %v5739 = vld [vmem:[#allocation2 + $0x3c] sm:$0xf]
      %v5740 = vld [vmem:[#allocation2 + $0x40] sm:$0xf]
      %v5741 = vld [vmem:[#allocation2 + $0x44] sm:$0xf]
      %v5742 = vld [vmem:[#allocation2 + $0x48] sm:$0xf]
      %v5743 = vld [vmem:[#allocation2 + $0x4c] sm:$0xf]
      %v5744 = vld [vmem:[#allocation2 + $0x50] sm:$0xf]
      %v5745 = vld [vmem:[#allocation2 + $0x54] sm:$0xf]
      %v5746 = vld [vmem:[#allocation2 + $0x58] sm:$0xf]
      %v5747 = vld [vmem:[#allocation2 + $0x5c] sm:$0xf]
      %v5748 = vld [vmem:[#allocation2 + $0x60] sm:$0x1]
      %v5750 = vshrl.u32 %v5730, 16
      %v5752 = vrot.slane %v5750, 4
      %v5753 = vshll.u32 %v5730, 16
      %v5755 = vrot.slane %v5753, 5
      %v5756 = vor.u32 %v5752, %v5755
      %v5757 = vrot.slane %v5756, 4
      %v5759 = vshll.u32 %v5731, 16
      %v5761 = vrot.slane %v5759, 5
      %v5762 = vsel %vm292, %v5757, %v5761
      %v5763 = vshrl.u32 %v5731, 16
      %v5765 = vrot.slane %v5763, 4
      %v5766 = vor.u32 %v5765, %v5761
      %v5767 = vrot.slane %v5766, 4
      %v5769 = vshll.u32 %v5732, 16
      %v5771 = vrot.slane %v5769, 5
      %v5772 = vsel %vm292, %v5767, %v5771
      %v5773 = vshrl.u32 %v5732, 16
      %v5775 = vrot.slane %v5773, 4
      %v5776 = vor.u32 %v5775, %v5771
      %v5777 = vrot.slane %v5776, 4
      %v5779 = vshll.u32 %v5733, 16
      %v5781 = vrot.slane %v5779, 5
      %v5782 = vsel %vm292, %v5777, %v5781
      %v5783 = vshrl.u32 %v5733, 16
      %v5785 = vrot.slane %v5783, 4
      %v5786 = vor.u32 %v5785, %v5781
      %v5787 = vrot.slane %v5786, 4
      %v5789 = vshll.u32 %v5734, 16
      %v5791 = vrot.slane %v5789, 5
      %v5792 = vsel %vm292, %v5787, %v5791
      %v5793 = vshrl.u32 %v5734, 16
      %v5795 = vrot.slane %v5793, 4
      %v5796 = vor.u32 %v5795, %v5791
      %v5797 = vrot.slane %v5796, 4
      %v5799 = vshll.u32 %v5735, 16
      %v5801 = vrot.slane %v5799, 5
      %v5802 = vsel %vm292, %v5797, %v5801
      %v5803 = vshrl.u32 %v5735, 16
      %v5805 = vrot.slane %v5803, 4
      %v5806 = vor.u32 %v5805, %v5801
      %v5807 = vrot.slane %v5806, 4
      %v5809 = vshll.u32 %v5736, 16
      %v5811 = vrot.slane %v5809, 5
      %v5812 = vsel %vm292, %v5807, %v5811
      %v5813 = vshrl.u32 %v5736, 16
      %v5815 = vrot.slane %v5813, 4
      %v5816 = vor.u32 %v5815, %v5811
      %v5817 = vrot.slane %v5816, 4
      %v5819 = vshll.u32 %v5737, 16
      %v5821 = vrot.slane %v5819, 5
      %v5822 = vsel %vm292, %v5817, %v5821
      %v5823 = vshrl.u32 %v5737, 16
      %v5825 = vrot.slane %v5823, 4
      %v5826 = vor.u32 %v5825, %v5821
      %v5827 = vrot.slane %v5826, 4
      %v5829 = vshll.u32 %v5738, 16
      %v5831 = vrot.slane %v5829, 5
      %v5832 = vsel %vm292, %v5827, %v5831
      %v5833 = vshrl.u32 %v5738, 16
      %v5835 = vrot.slane %v5833, 4
      %v5836 = vor.u32 %v5835, %v5831
      %v5837 = vrot.slane %v5836, 4
      %v5839 = vshll.u32 %v5739, 16
      %v5841 = vrot.slane %v5839, 5
      %v5842 = vsel %vm292, %v5837, %v5841
      %v5843 = vshrl.u32 %v5739, 16
      %v5845 = vrot.slane %v5843, 4
      %v5846 = vor.u32 %v5845, %v5841
      %v5847 = vrot.slane %v5846, 4
      %v5849 = vshll.u32 %v5740, 16
      %v5851 = vrot.slane %v5849, 5
      %v5852 = vsel %vm292, %v5847, %v5851
      %v5853 = vshrl.u32 %v5740, 16
      %v5855 = vrot.slane %v5853, 4
      %v5856 = vor.u32 %v5855, %v5851
      %v5857 = vrot.slane %v5856, 4
      %v5859 = vshll.u32 %v5741, 16
      %v5861 = vrot.slane %v5859, 5
      %v5862 = vsel %vm292, %v5857, %v5861
      %v5863 = vshrl.u32 %v5741, 16
      %v5865 = vrot.slane %v5863, 4
      %v5866 = vor.u32 %v5865, %v5861
      %v5867 = vrot.slane %v5866, 4
      %v5869 = vshll.u32 %v5742, 16
      %v5871 = vrot.slane %v5869, 5
      %v5872 = vsel %vm292, %v5867, %v5871
      %v5873 = vshrl.u32 %v5742, 16
      %v5875 = vrot.slane %v5873, 4
      %v5876 = vor.u32 %v5875, %v5871
      %v5877 = vrot.slane %v5876, 4
      %v5879 = vshll.u32 %v5743, 16
      %v5881 = vrot.slane %v5879, 5
      %v5882 = vsel %vm292, %v5877, %v5881
      %v5883 = vshrl.u32 %v5743, 16
      %v5885 = vrot.slane %v5883, 4
      %v5886 = vor.u32 %v5885, %v5881
      %v5887 = vrot.slane %v5886, 4
      %v5889 = vshll.u32 %v5744, 16
      %v5891 = vrot.slane %v5889, 5
      %v5892 = vsel %vm292, %v5887, %v5891
      %v5893 = vshrl.u32 %v5744, 16
      %v5895 = vrot.slane %v5893, 4
      %v5896 = vor.u32 %v5895, %v5891
      %v5897 = vrot.slane %v5896, 4
      %v5899 = vshll.u32 %v5745, 16
      %v5901 = vrot.slane %v5899, 5
      %v5902 = vsel %vm292, %v5897, %v5901
      %v5903 = vshrl.u32 %v5745, 16
      %v5905 = vrot.slane %v5903, 4
      %v5906 = vor.u32 %v5905, %v5901
      %v5907 = vrot.slane %v5906, 4
      %v5909 = vshll.u32 %v5746, 16
      %v5911 = vrot.slane %v5909, 5
      %v5912 = vsel %vm292, %v5907, %v5911
      %v5913 = vshrl.u32 %v5746, 16
      %v5915 = vrot.slane %v5913, 4
      %v5916 = vor.u32 %v5915, %v5911
      %v5917 = vrot.slane %v5916, 4
      %v5919 = vshll.u32 %v5747, 16
      %v5921 = vrot.slane %v5919, 5
      %v5922 = vsel %vm292, %v5917, %v5921
      %v5923 = vshrl.u32 %v5747, 16
      %v5925 = vrot.slane %v5923, 4
      %v5926 = vor.u32 %v5925, %v5921
      %v5927 = vrot.slane %v5926, 4
      %v5929 = vshll.u32 %v5748, 16
      %v5931 = vrot.slane %v5929, 5
      %v5932 = vsel %vm292, %v5927, %v5931
      %5951 = vst [vmem:[#allocation4 + $0x18] sm:$0xf] %v5762
      %5952 = vst [vmem:[#allocation4 + $0x3c] sm:$0xf] %v5772
      %5953 = vst [vmem:[#allocation4 + $0x60] sm:$0xf] %v5782
      %5954 = vst [vmem:[#allocation4 + $0x84] sm:$0xf] %v5792
      %5955 = vst [vmem:[#allocation4 + $0xa8] sm:$0xf] %v5802
      %5956 = vst [vmem:[#allocation4 + $0xcc] sm:$0xf] %v5812
      %5957 = vst [vmem:[#allocation4 + $0xf0] sm:$0xf] %v5822
      %5958 = vst [vmem:[#allocation4 + $0x114] sm:$0xf] %v5832
      %5959 = vst [vmem:[#allocation4 + $0x138] sm:$0xf] %v5842
      %5960 = vst [vmem:[#allocation4 + $0x15c] sm:$0xf] %v5852
      %5961 = vst [vmem:[#allocation4 + $0x180] sm:$0xf] %v5862
      %5962 = vst [vmem:[#allocation4 + $0x1a4] sm:$0xf] %v5872
      %5963 = vst [vmem:[#allocation4 + $0x1c8] sm:$0xf] %v5882
      %5964 = vst [vmem:[#allocation4 + $0x1ec] sm:$0xf] %v5892
      %5965 = vst [vmem:[#allocation4 + $0x210] sm:$0xf] %v5902
      %5966 = vst [vmem:[#allocation4 + $0x234] sm:$0xf] %v5912
      %5967 = vst [vmem:[#allocation4 + $0x258] sm:$0xf] %v5922
      %5968 = vst [vmem:[#allocation4 + $0x27c] sm:$0xf] %v5932
      %v5969 = vld [vmem:[#allocation2 + $0x18] sm:$0xe]
      %v5970 = vld [vmem:[#allocation2 + $0x1c] sm:$0xf]
      %v5971 = vld [vmem:[#allocation2 + $0x20] sm:$0xf]
      %v5972 = vld [vmem:[#allocation2 + $0x24] sm:$0xf]
      %v5973 = vld [vmem:[#allocation2 + $0x28] sm:$0xf]
      %v5974 = vld [vmem:[#allocation2 + $0x2c] sm:$0xf]
      %v5975 = vld [vmem:[#allocation2 + $0x30] sm:$0xf]
      %v5976 = vld [vmem:[#allocation2 + $0x34] sm:$0xf]
      %v5977 = vld [vmem:[#allocation2 + $0x38] sm:$0xf]
      %v5978 = vld [vmem:[#allocation2 + $0x3c] sm:$0xf]
      %v5979 = vld [vmem:[#allocation2 + $0x40] sm:$0xf]
      %v5980 = vld [vmem:[#allocation2 + $0x44] sm:$0xf]
      %v5981 = vld [vmem:[#allocation2 + $0x48] sm:$0xf]
      %v5982 = vld [vmem:[#allocation2 + $0x4c] sm:$0xf]
      %v5983 = vld [vmem:[#allocation2 + $0x50] sm:$0xf]
      %v5984 = vld [vmem:[#allocation2 + $0x54] sm:$0xf]
      %v5985 = vld [vmem:[#allocation2 + $0x58] sm:$0xf]
      %v5986 = vld [vmem:[#allocation2 + $0x5c] sm:$0xf]
      %v5987 = vld [vmem:[#allocation2 + $0x60] sm:$0x1]
      %v6007 = vrot.slane %v5969, 5
      %v6008 = vrot.slane %v6007, 4
      %v6009 = vrot.slane %v5970, 5
      %v6010 = vsel %vm590, %v6008, %v6009
      %v6011 = vrot.slane %v6009, 4
      %v6012 = vrot.slane %v5971, 5
      %v6013 = vsel %vm590, %v6011, %v6012
      %v6014 = vrot.slane %v6012, 4
      %v6015 = vrot.slane %v5972, 5
      %v6016 = vsel %vm590, %v6014, %v6015
      %v6017 = vrot.slane %v6015, 4
      %v6018 = vrot.slane %v5973, 5
      %v6019 = vsel %vm590, %v6017, %v6018
      %v6020 = vrot.slane %v6018, 4
      %v6021 = vrot.slane %v5974, 5
      %v6022 = vsel %vm590, %v6020, %v6021
      %v6023 = vrot.slane %v6021, 4
      %v6024 = vrot.slane %v5975, 5
      %v6025 = vsel %vm590, %v6023, %v6024
      %v6026 = vrot.slane %v6024, 4
      %v6027 = vrot.slane %v5976, 5
      %v6028 = vsel %vm590, %v6026, %v6027
      %v6029 = vrot.slane %v6027, 4
      %v6030 = vrot.slane %v5977, 5
      %v6031 = vsel %vm590, %v6029, %v6030
      %v6032 = vrot.slane %v6030, 4
      %v6033 = vrot.slane %v5978, 5
      %v6034 = vsel %vm590, %v6032, %v6033
      %v6035 = vrot.slane %v6033, 4
      %v6036 = vrot.slane %v5979, 5
      %v6037 = vsel %vm590, %v6035, %v6036
      %v6038 = vrot.slane %v6036, 4
      %v6039 = vrot.slane %v5980, 5
      %v6040 = vsel %vm590, %v6038, %v6039
      %v6041 = vrot.slane %v6039, 4
      %v6042 = vrot.slane %v5981, 5
      %v6043 = vsel %vm590, %v6041, %v6042
      %v6044 = vrot.slane %v6042, 4
      %v6045 = vrot.slane %v5982, 5
      %v6046 = vsel %vm590, %v6044, %v6045
      %v6047 = vrot.slane %v6045, 4
      %v6048 = vrot.slane %v5983, 5
      %v6049 = vsel %vm590, %v6047, %v6048
      %v6050 = vrot.slane %v6048, 4
      %v6051 = vrot.slane %v5984, 5
      %v6052 = vsel %vm590, %v6050, %v6051
      %v6053 = vrot.slane %v6051, 4
      %v6054 = vrot.slane %v5985, 5
      %v6055 = vsel %vm590, %v6053, %v6054
      %v6056 = vrot.slane %v6054, 4
      %v6057 = vrot.slane %v5986, 5
      %v6058 = vsel %vm590, %v6056, %v6057
      %v6059 = vrot.slane %v6057, 4
      %v6060 = vrot.slane %v5987, 5
      %v6061 = vsel %vm590, %v6059, %v6060
      %6080 = vst [vmem:[#allocation4 + $0x1c] sm:$0xf] %v6010
      %6081 = vst [vmem:[#allocation4 + $0x40] sm:$0xf] %v6013
      %6082 = vst [vmem:[#allocation4 + $0x64] sm:$0xf] %v6016
      %6083 = vst [vmem:[#allocation4 + $0x88] sm:$0xf] %v6019
      %6084 = vst [vmem:[#allocation4 + $0xac] sm:$0xf] %v6022
      %6085 = vst [vmem:[#allocation4 + $0xd0] sm:$0xf] %v6025
      %6086 = vst [vmem:[#allocation4 + $0xf4] sm:$0xf] %v6028
      %6087 = vst [vmem:[#allocation4 + $0x118] sm:$0xf] %v6031
      %6088 = vst [vmem:[#allocation4 + $0x13c] sm:$0xf] %v6034
      %6089 = vst [vmem:[#allocation4 + $0x160] sm:$0xf] %v6037
      %6090 = vst [vmem:[#allocation4 + $0x184] sm:$0xf] %v6040
      %6091 = vst [vmem:[#allocation4 + $0x1a8] sm:$0xf] %v6043
      %6092 = vst [vmem:[#allocation4 + $0x1cc] sm:$0xf] %v6046
      %6093 = vst [vmem:[#allocation4 + $0x1f0] sm:$0xf] %v6049
      %6094 = vst [vmem:[#allocation4 + $0x214] sm:$0xf] %v6052
      %6095 = vst [vmem:[#allocation4 + $0x238] sm:$0xf] %v6055
      %6096 = vst [vmem:[#allocation4 + $0x25c] sm:$0xf] %v6058
      %6097 = vst [vmem:[#allocation4 + $0x280] sm:$0xf] %v6061
      %v6098 = vld [vmem:[#allocation2 + $0x18] sm:$0xe]
      %v6099 = vld [vmem:[#allocation2 + $0x1c] sm:$0xf]
      %v6100 = vld [vmem:[#allocation2 + $0x20] sm:$0xf]
      %v6101 = vld [vmem:[#allocation2 + $0x24] sm:$0xf]
      %v6102 = vld [vmem:[#allocation2 + $0x28] sm:$0xf]
      %v6103 = vld [vmem:[#allocation2 + $0x2c] sm:$0xf]
      %v6104 = vld [vmem:[#allocation2 + $0x30] sm:$0xf]
      %v6105 = vld [vmem:[#allocation2 + $0x34] sm:$0xf]
      %v6106 = vld [vmem:[#allocation2 + $0x38] sm:$0xf]
      %v6107 = vld [vmem:[#allocation2 + $0x3c] sm:$0xf]
      %v6108 = vld [vmem:[#allocation2 + $0x40] sm:$0xf]
      %v6109 = vld [vmem:[#allocation2 + $0x44] sm:$0xf]
      %v6110 = vld [vmem:[#allocation2 + $0x48] sm:$0xf]
      %v6111 = vld [vmem:[#allocation2 + $0x4c] sm:$0xf]
      %v6112 = vld [vmem:[#allocation2 + $0x50] sm:$0xf]
      %v6113 = vld [vmem:[#allocation2 + $0x54] sm:$0xf]
      %v6114 = vld [vmem:[#allocation2 + $0x58] sm:$0xf]
      %v6115 = vld [vmem:[#allocation2 + $0x5c] sm:$0xf]
      %v6116 = vld [vmem:[#allocation2 + $0x60] sm:$0x3]
      %v6118 = vshrl.u32 %v6098, 16
      %v6120 = vrot.slane %v6118, 5
      %v6121 = vshll.u32 %v6098, 16
      %v6123 = vrot.slane %v6121, 6
      %v6124 = vor.u32 %v6120, %v6123
      %v6125 = vrot.slane %v6124, 4
      %v6127 = vshrl.u32 %v6099, 16
      %v6129 = vrot.slane %v6127, 5
      %v6130 = vshll.u32 %v6099, 16
      %v6132 = vrot.slane %v6130, 6
      %v6133 = vor.u32 %v6129, %v6132
      %v6134 = vsel %vm906, %v6125, %v6133
      %v6135 = vrot.slane %v6133, 4
      %v6137 = vshrl.u32 %v6100, 16
      %v6139 = vrot.slane %v6137, 5
      %v6140 = vshll.u32 %v6100, 16
      %v6142 = vrot.slane %v6140, 6
      %v6143 = vor.u32 %v6139, %v6142
      %v6144 = vsel %vm906, %v6135, %v6143
      %v6145 = vrot.slane %v6143, 4
      %v6147 = vshrl.u32 %v6101, 16
      %v6149 = vrot.slane %v6147, 5
      %v6150 = vshll.u32 %v6101, 16
      %v6152 = vrot.slane %v6150, 6
      %v6153 = vor.u32 %v6149, %v6152
      %v6154 = vsel %vm906, %v6145, %v6153
      %v6155 = vrot.slane %v6153, 4
      %v6157 = vshrl.u32 %v6102, 16
      %v6159 = vrot.slane %v6157, 5
      %v6160 = vshll.u32 %v6102, 16
      %v6162 = vrot.slane %v6160, 6
      %v6163 = vor.u32 %v6159, %v6162
      %v6164 = vsel %vm906, %v6155, %v6163
      %v6165 = vrot.slane %v6163, 4
      %v6167 = vshrl.u32 %v6103, 16
      %v6169 = vrot.slane %v6167, 5
      %v6170 = vshll.u32 %v6103, 16
      %v6172 = vrot.slane %v6170, 6
      %v6173 = vor.u32 %v6169, %v6172
      %v6174 = vsel %vm906, %v6165, %v6173
      %v6175 = vrot.slane %v6173, 4
      %v6177 = vshrl.u32 %v6104, 16
      %v6179 = vrot.slane %v6177, 5
      %v6180 = vshll.u32 %v6104, 16
      %v6182 = vrot.slane %v6180, 6
      %v6183 = vor.u32 %v6179, %v6182
      %v6184 = vsel %vm906, %v6175, %v6183
      %v6185 = vrot.slane %v6183, 4
      %v6187 = vshrl.u32 %v6105, 16
      %v6189 = vrot.slane %v6187, 5
      %v6190 = vshll.u32 %v6105, 16
      %v6192 = vrot.slane %v6190, 6
      %v6193 = vor.u32 %v6189, %v6192
      %v6194 = vsel %vm906, %v6185, %v6193
      %v6195 = vrot.slane %v6193, 4
      %v6197 = vshrl.u32 %v6106, 16
      %v6199 = vrot.slane %v6197, 5
      %v6200 = vshll.u32 %v6106, 16
      %v6202 = vrot.slane %v6200, 6
      %v6203 = vor.u32 %v6199, %v6202
      %v6204 = vsel %vm906, %v6195, %v6203
      %v6205 = vrot.slane %v6203, 4
      %v6207 = vshrl.u32 %v6107, 16
      %v6209 = vrot.slane %v6207, 5
      %v6210 = vshll.u32 %v6107, 16
      %v6212 = vrot.slane %v6210, 6
      %v6213 = vor.u32 %v6209, %v6212
      %v6214 = vsel %vm906, %v6205, %v6213
      %v6215 = vrot.slane %v6213, 4
      %v6217 = vshrl.u32 %v6108, 16
      %v6219 = vrot.slane %v6217, 5
      %v6220 = vshll.u32 %v6108, 16
      %v6222 = vrot.slane %v6220, 6
      %v6223 = vor.u32 %v6219, %v6222
      %v6224 = vsel %vm906, %v6215, %v6223
      %v6225 = vrot.slane %v6223, 4
      %v6227 = vshrl.u32 %v6109, 16
      %v6229 = vrot.slane %v6227, 5
      %v6230 = vshll.u32 %v6109, 16
      %v6232 = vrot.slane %v6230, 6
      %v6233 = vor.u32 %v6229, %v6232
      %v6234 = vsel %vm906, %v6225, %v6233
      %v6235 = vrot.slane %v6233, 4
      %v6237 = vshrl.u32 %v6110, 16
      %v6239 = vrot.slane %v6237, 5
      %v6240 = vshll.u32 %v6110, 16
      %v6242 = vrot.slane %v6240, 6
      %v6243 = vor.u32 %v6239, %v6242
      %v6244 = vsel %vm906, %v6235, %v6243
      %v6245 = vrot.slane %v6243, 4
      %v6247 = vshrl.u32 %v6111, 16
      %v6249 = vrot.slane %v6247, 5
      %v6250 = vshll.u32 %v6111, 16
      %v6252 = vrot.slane %v6250, 6
      %v6253 = vor.u32 %v6249, %v6252
      %v6254 = vsel %vm906, %v6245, %v6253
      %v6255 = vrot.slane %v6253, 4
      %v6257 = vshrl.u32 %v6112, 16
      %v6259 = vrot.slane %v6257, 5
      %v6260 = vshll.u32 %v6112, 16
      %v6262 = vrot.slane %v6260, 6
      %v6263 = vor.u32 %v6259, %v6262
      %v6264 = vsel %vm906, %v6255, %v6263
      %v6265 = vrot.slane %v6263, 4
      %v6267 = vshrl.u32 %v6113, 16
      %v6269 = vrot.slane %v6267, 5
      %v6270 = vshll.u32 %v6113, 16
      %v6272 = vrot.slane %v6270, 6
      %v6273 = vor.u32 %v6269, %v6272
      %v6274 = vsel %vm906, %v6265, %v6273
      %v6275 = vrot.slane %v6273, 4
      %v6277 = vshrl.u32 %v6114, 16
      %v6279 = vrot.slane %v6277, 5
      %v6280 = vshll.u32 %v6114, 16
      %v6282 = vrot.slane %v6280, 6
      %v6283 = vor.u32 %v6279, %v6282
      %v6284 = vsel %vm906, %v6275, %v6283
      %v6285 = vrot.slane %v6283, 4
      %v6287 = vshrl.u32 %v6115, 16
      %v6289 = vrot.slane %v6287, 5
      %v6290 = vshll.u32 %v6115, 16
      %v6292 = vrot.slane %v6290, 6
      %v6293 = vor.u32 %v6289, %v6292
      %v6294 = vsel %vm906, %v6285, %v6293
      %v6295 = vrot.slane %v6293, 4
      %v6297 = vshrl.u32 %v6116, 16
      %v6299 = vrot.slane %v6297, 5
      %v6300 = vshll.u32 %v6116, 16
      %v6302 = vrot.slane %v6300, 6
      %v6303 = vor.u32 %v6299, %v6302
      %v6304 = vsel %vm906, %v6295, %v6303
      %6323 = vst [vmem:[#allocation4 + $0x20] sm:$0xf] %v6134
      %6324 = vst [vmem:[#allocation4 + $0x44] sm:$0xf] %v6144
      %6325 = vst [vmem:[#allocation4 + $0x68] sm:$0xf] %v6154
      %6326 = vst [vmem:[#allocation4 + $0x8c] sm:$0xf] %v6164
      %6327 = vst [vmem:[#allocation4 + $0xb0] sm:$0xf] %v6174
      %6328 = vst [vmem:[#allocation4 + $0xd4] sm:$0xf] %v6184
      %6329 = vst [vmem:[#allocation4 + $0xf8] sm:$0xf] %v6194
      %6330 = vst [vmem:[#allocation4 + $0x11c] sm:$0xf] %v6204
      %6331 = vst [vmem:[#allocation4 + $0x140] sm:$0xf] %v6214
      %6332 = vst [vmem:[#allocation4 + $0x164] sm:$0xf] %v6224
      %6333 = vst [vmem:[#allocation4 + $0x188] sm:$0xf] %v6234
      %6334 = vst [vmem:[#allocation4 + $0x1ac] sm:$0xf] %v6244
      %6335 = vst [vmem:[#allocation4 + $0x1d0] sm:$0xf] %v6254
      %6336 = vst [vmem:[#allocation4 + $0x1f4] sm:$0xf] %v6264
      %6337 = vst [vmem:[#allocation4 + $0x218] sm:$0xf] %v6274
      %6338 = vst [vmem:[#allocation4 + $0x23c] sm:$0xf] %v6284
      %6339 = vst [vmem:[#allocation4 + $0x260] sm:$0xf] %v6294
      %6340 = vst [vmem:[#allocation4 + $0x284] sm:$0xf] %v6304
      %v6341 = vld [vmem:[#allocation4] sm:$0xff]
      %v6342 = vld [vmem:[#allocation4 + $0x8] sm:$0xff]
      %v6343 = vld [vmem:[#allocation4 + $0x10] sm:$0xff]
      %v6344 = vld [vmem:[#allocation4 + $0x18] sm:$0xff]
      %v6345 = vld [vmem:[#allocation4 + $0x20] sm:$0xf]
      %v6346 = vld [vmem:[#allocation4 + $0x24] sm:$0xff]
      %v6347 = vld [vmem:[#allocation4 + $0x2c] sm:$0xff]
      %v6348 = vld [vmem:[#allocation4 + $0x34] sm:$0xff]
      %v6349 = vld [vmem:[#allocation4 + $0x3c] sm:$0xff]
      %v6350 = vld [vmem:[#allocation4 + $0x44] sm:$0xf]
      %v6351 = vld [vmem:[#allocation4 + $0x48] sm:$0xff]
      %v6352 = vld [vmem:[#allocation4 + $0x50] sm:$0xff]
      %v6353 = vld [vmem:[#allocation4 + $0x58] sm:$0xff]
      %v6354 = vld [vmem:[#allocation4 + $0x60] sm:$0xff]
      %v6355 = vld [vmem:[#allocation4 + $0x68] sm:$0xf]
      %v6356 = vld [vmem:[#allocation4 + $0x6c] sm:$0xff]
      %v6357 = vld [vmem:[#allocation4 + $0x74] sm:$0xff]
      %v6358 = vld [vmem:[#allocation4 + $0x7c] sm:$0xff]
      %v6359 = vld [vmem:[#allocation4 + $0x84] sm:$0xff]
      %v6360 = vld [vmem:[#allocation4 + $0x8c] sm:$0xf]
      %v6361 = vld [vmem:[#allocation4 + $0x90] sm:$0xff]
      %v6362 = vld [vmem:[#allocation4 + $0x98] sm:$0xff]
      %v6363 = vld [vmem:[#allocation4 + $0xa0] sm:$0xff]
      %v6364 = vld [vmem:[#allocation4 + $0xa8] sm:$0xff]
      %v6365 = vld [vmem:[#allocation4 + $0xb0] sm:$0xf]
      %v6366 = vld [vmem:[#allocation4 + $0xb4] sm:$0xff]
      %v6367 = vld [vmem:[#allocation4 + $0xbc] sm:$0xff]
      %v6368 = vld [vmem:[#allocation4 + $0xc4] sm:$0xff]
      %v6369 = vld [vmem:[#allocation4 + $0xcc] sm:$0xff]
      %v6370 = vld [vmem:[#allocation4 + $0xd4] sm:$0xf]
      %v6371 = vld [vmem:[#allocation4 + $0xd8] sm:$0xff]
      %v6372 = vld [vmem:[#allocation4 + $0xe0] sm:$0xff]
      %v6373 = vld [vmem:[#allocation4 + $0xe8] sm:$0xff]
      %v6374 = vld [vmem:[#allocation4 + $0xf0] sm:$0xff]
      %v6375 = vld [vmem:[#allocation4 + $0xf8] sm:$0xf]
      %v6376 = vld [vmem:[#allocation4 + $0xfc] sm:$0xff]
      %v6377 = vld [vmem:[#allocation4 + $0x104] sm:$0xff]
      %v6378 = vld [vmem:[#allocation4 + $0x10c] sm:$0xff]
      %v6379 = vld [vmem:[#allocation4 + $0x114] sm:$0xff]
      %v6380 = vld [vmem:[#allocation4 + $0x11c] sm:$0xf]
      %v6381 = vld [vmem:[#allocation4 + $0x120] sm:$0xff]
      %v6382 = vld [vmem:[#allocation4 + $0x128] sm:$0xff]
      %v6383 = vld [vmem:[#allocation4 + $0x130] sm:$0xff]
      %v6384 = vld [vmem:[#allocation4 + $0x138] sm:$0xff]
      %v6385 = vld [vmem:[#allocation4 + $0x140] sm:$0xf]
      %v6386 = vld [vmem:[#allocation4 + $0x144] sm:$0xff]
      %v6387 = vld [vmem:[#allocation4 + $0x14c] sm:$0xff]
      %v6388 = vld [vmem:[#allocation4 + $0x154] sm:$0xff]
      %v6389 = vld [vmem:[#allocation4 + $0x15c] sm:$0xff]
      %v6390 = vld [vmem:[#allocation4 + $0x164] sm:$0xf]
      %v6391 = vld [vmem:[#allocation4 + $0x168] sm:$0xff]
      %v6392 = vld [vmem:[#allocation4 + $0x170] sm:$0xff]
      %v6393 = vld [vmem:[#allocation4 + $0x178] sm:$0xff]
      %v6394 = vld [vmem:[#allocation4 + $0x180] sm:$0xff]
      %v6395 = vld [vmem:[#allocation4 + $0x188] sm:$0xf]
      %v6396 = vld [vmem:[#allocation4 + $0x18c] sm:$0xff]
      %v6397 = vld [vmem:[#allocation4 + $0x194] sm:$0xff]
      %v6398 = vld [vmem:[#allocation4 + $0x19c] sm:$0xff]
      %v6399 = vld [vmem:[#allocation4 + $0x1a4] sm:$0xff]
      %v6400 = vld [vmem:[#allocation4 + $0x1ac] sm:$0xf]
      %v6401 = vld [vmem:[#allocation4 + $0x1b0] sm:$0xff]
      %v6402 = vld [vmem:[#allocation4 + $0x1b8] sm:$0xff]
      %v6403 = vld [vmem:[#allocation4 + $0x1c0] sm:$0xff]
      %v6404 = vld [vmem:[#allocation4 + $0x1c8] sm:$0xff]
      %v6405 = vld [vmem:[#allocation4 + $0x1d0] sm:$0xf]
      %v6406 = vld [vmem:[#allocation4 + $0x1d4] sm:$0xff]
      %v6407 = vld [vmem:[#allocation4 + $0x1dc] sm:$0xff]
      %v6408 = vld [vmem:[#allocation4 + $0x1e4] sm:$0xff]
      %v6409 = vld [vmem:[#allocation4 + $0x1ec] sm:$0xff]
      %v6410 = vld [vmem:[#allocation4 + $0x1f4] sm:$0xf]
      %v6411 = vld [vmem:[#allocation4 + $0x1f8] sm:$0xff]
      %v6412 = vld [vmem:[#allocation4 + $0x200] sm:$0xff]
      %v6413 = vld [vmem:[#allocation4 + $0x208] sm:$0xff]
      %v6414 = vld [vmem:[#allocation4 + $0x210] sm:$0xff]
      %v6415 = vld [vmem:[#allocation4 + $0x218] sm:$0xf]
      %v6416 = vld [vmem:[#allocation4 + $0x21c] sm:$0xff]
      %v6417 = vld [vmem:[#allocation4 + $0x224] sm:$0xff]
      %v6418 = vld [vmem:[#allocation4 + $0x22c] sm:$0xff]
      %v6419 = vld [vmem:[#allocation4 + $0x234] sm:$0xff]
      %v6420 = vld [vmem:[#allocation4 + $0x23c] sm:$0xf]
      %v6421 = vld [vmem:[#allocation4 + $0x240] sm:$0xff]
      %v6422 = vld [vmem:[#allocation4 + $0x248] sm:$0xff]
      %v6423 = vld [vmem:[#allocation4 + $0x250] sm:$0xff]
      %v6424 = vld [vmem:[#allocation4 + $0x258] sm:$0xff]
      %v6425 = vld [vmem:[#allocation4 + $0x260] sm:$0xf]
      %v6426 = vld [vmem:[#allocation4 + $0x264] sm:$0xff]
      %v6427 = vld [vmem:[#allocation4 + $0x26c] sm:$0xff]
      %v6428 = vld [vmem:[#allocation4 + $0x274] sm:$0xff]
      %v6429 = vld [vmem:[#allocation4 + $0x27c] sm:$0xff]
      %v6430 = vld [vmem:[#allocation4 + $0x284] sm:$0xf]
      %v6431 = vld [vmem:[%s3] sm:$0xf]
      %v6432 = vld [vmem:[%s3 + $0x4] sm:$0xf]
      %v6433 = vld [vmem:[%s3 + $0x8] sm:$0xf]
      %v6434 = vld [vmem:[%s3 + $0xc] sm:$0xf]
      %v6435 = vld [vmem:[%s3 + $0x10] sm:$0xf]
      %v6436 = vld [vmem:[%s3 + $0x14] sm:$0xf]
      %v6437 = vld [vmem:[%s3 + $0x18] sm:$0xf]
      %v6438 = vld [vmem:[%s3 + $0x1c] sm:$0xf]
      %v6439 = vld [vmem:[%s3 + $0x20] sm:$0xf]
      %v6440 = vld [vmem:[%s3 + $0x24] sm:$0xf]
      %v6441 = vld [vmem:[%s3 + $0x28] sm:$0xf]
      %v6442 = vld [vmem:[%s3 + $0x2c] sm:$0xf]
      %v6443 = vld [vmem:[%s3 + $0x30] sm:$0xf]
      %v6444 = vld [vmem:[%s3 + $0x34] sm:$0xf]
      %v6445 = vld [vmem:[%s3 + $0x38] sm:$0xf]
      %v6446 = vld [vmem:[%s3 + $0x3c] sm:$0xf]
      %v6447 = vld [vmem:[%s3 + $0x40] sm:$0xf]
      %v6448 = vld [vmem:[%s3 + $0x44] sm:$0xf]
      %v6449 = vld [vmem:[%s3 + $0x48] sm:$0xf]
      %v6450 = vld [vmem:[%s3 + $0x4c] sm:$0xf]
      %v6451 = vld [vmem:[%s3 + $0x50] sm:$0xf]
      %v6452 = vld [vmem:[%s3 + $0x54] sm:$0xf]
      %v6453 = vld [vmem:[%s3 + $0x58] sm:$0xf]
      %v6454 = vld [vmem:[%s3 + $0x5c] sm:$0xf]
      %v6455 = vld [vmem:[%s3 + $0x60] sm:$0xf]
      %v6456 = vld [vmem:[%s3 + $0x64] sm:$0xf]
      %v6457 = vld [vmem:[%s3 + $0x68] sm:$0xf]
      %v6458 = vld [vmem:[%s3 + $0x6c] sm:$0xf]
      %v6459 = vld [vmem:[%s3 + $0x70] sm:$0xf]
      %v6460 = vld [vmem:[%s3 + $0x74] sm:$0xf]
      %v6461 = vld [vmem:[%s3 + $0x78] sm:$0xf]
      %v6462 = vld [vmem:[%s3 + $0x7c] sm:$0xf]
      %v6463 = vld [vmem:[%s3 + $0x80] sm:$0xf]
      %v6464 = vld [vmem:[%s3 + $0x84] sm:$0xf]
      %v6465 = vld [vmem:[%s3 + $0x88] sm:$0xf]
      %v6466 = vld [vmem:[%s3 + $0x8c] sm:$0xf]
      %v6467 = vld [vmem:[%s3 + $0x90] sm:$0xf]
      %v6468 = vld [vmem:[%s3 + $0x94] sm:$0xf]
      %v6469 = vld [vmem:[%s3 + $0x98] sm:$0xf]
      %v6470 = vld [vmem:[%s3 + $0x9c] sm:$0xf]
      %v6471 = vld [vmem:[%s3 + $0xa0] sm:$0xf]
      %v6472 = vld [vmem:[%s3 + $0xa4] sm:$0xf]
      %v6473 = vld [vmem:[%s3 + $0xa8] sm:$0xf]
      %v6474 = vld [vmem:[%s3 + $0xac] sm:$0xf]
      %v6475 = vld [vmem:[%s3 + $0xb0] sm:$0xf]
      %v6476 = vld [vmem:[%s3 + $0xb4] sm:$0xf]
      %v6477 = vld [vmem:[%s3 + $0xb8] sm:$0xf]
      %v6478 = vld [vmem:[%s3 + $0xbc] sm:$0xf]
      %v6479 = vld [vmem:[%s3 + $0xc0] sm:$0xf]
      %v6480 = vld [vmem:[%s3 + $0xc4] sm:$0xf]
      %v6481 = vld [vmem:[%s3 + $0xc8] sm:$0xf]
      %v6482 = vld [vmem:[%s3 + $0xcc] sm:$0xf]
      %v6483 = vld [vmem:[%s3 + $0xd0] sm:$0xf]
      %v6484 = vld [vmem:[%s3 + $0xd4] sm:$0xf]
      %v6485 = vld [vmem:[%s3 + $0xd8] sm:$0xf]
      %v6486 = vld [vmem:[%s3 + $0xdc] sm:$0xf]
      %v6487 = vld [vmem:[%s3 + $0xe0] sm:$0xf]
      %v6488 = vld [vmem:[%s3 + $0xe4] sm:$0xf]
      %v6489 = vld [vmem:[%s3 + $0xe8] sm:$0xf]
      %v6490 = vld [vmem:[%s3 + $0xec] sm:$0xf]
      %v6491 = vld [vmem:[%s3 + $0xf0] sm:$0xf]
      %v6492 = vld [vmem:[%s3 + $0xf4] sm:$0xf]
      %v6493 = vld [vmem:[%s3 + $0xf8] sm:$0xf]
      %v6494 = vld [vmem:[%s3 + $0xfc] sm:$0xf]
      %v6495 = vld [vmem:[%s3 + $0x100] sm:$0xf]
      %v6496 = vld [vmem:[%s3 + $0x104] sm:$0xf]
      %v6497 = vld [vmem:[%s3 + $0x108] sm:$0xf]
      %v6498 = vld [vmem:[%s3 + $0x10c] sm:$0xf]
      %v6499 = vld [vmem:[%s3 + $0x110] sm:$0xf]
      %v6500 = vld [vmem:[%s3 + $0x114] sm:$0xf]
      %v6501 = vld [vmem:[%s3 + $0x118] sm:$0xf]
      %v6502 = vld [vmem:[%s3 + $0x11c] sm:$0xf]
      %v6503 = vld [vmem:[%s3 + $0x120] sm:$0xf]
      %v6504 = vld [vmem:[%s3 + $0x124] sm:$0xf]
      %v6505 = vld [vmem:[%s3 + $0x128] sm:$0xf]
      %v6506 = vld [vmem:[%s3 + $0x12c] sm:$0xf]
      %v6507 = vld [vmem:[%s3 + $0x130] sm:$0xf]
      %v6508 = vld [vmem:[%s3 + $0x134] sm:$0xf]
      %v6509 = vld [vmem:[%s3 + $0x138] sm:$0xf]
      %v6510 = vld [vmem:[%s3 + $0x13c] sm:$0xf]
      %v6511 = vld [vmem:[%s3 + $0x140] sm:$0xf]
      %v6512 = vld [vmem:[%s3 + $0x144] sm:$0xf]
      %v6513 = vld [vmem:[%s3 + $0x148] sm:$0xf]
      %v6514 = vld [vmem:[%s3 + $0x14c] sm:$0xf]
      %v6515 = vld [vmem:[%s3 + $0x150] sm:$0xf]
      %v6516 = vld [vmem:[%s3 + $0x154] sm:$0xf]
      %v6517 = vld [vmem:[%s3 + $0x158] sm:$0xf]
      %v6518 = vld [vmem:[%s3 + $0x15c] sm:$0xf]
      %v6519 = vld [vmem:[%s3 + $0x160] sm:$0xf]
      %v6520 = vld [vmem:[%s3 + $0x164] sm:$0xf]
      %v6521 = vld [vmem:[%s3 + $0x168] sm:$0xf]
      %v6522 = vld [vmem:[%s3 + $0x16c] sm:$0xf]
      %v6523 = vld [vmem:[%s3 + $0x170] sm:$0xf]
      %v6524 = vld [vmem:[%s3 + $0x174] sm:$0xf]
      %v6525 = vld [vmem:[%s3 + $0x178] sm:$0xf]
      %v6526 = vld [vmem:[%s3 + $0x17c] sm:$0xf]
      %v6527 = vld [vmem:[%s3 + $0x180] sm:$0xf]
      %v6528 = vld [vmem:[%s3 + $0x184] sm:$0xf]
      %v6529 = vld [vmem:[%s3 + $0x188] sm:$0xf]
      %v6530 = vld [vmem:[%s3 + $0x18c] sm:$0xf]
      %v6531 = vld [vmem:[%s3 + $0x190] sm:$0xf]
      %v6532 = vld [vmem:[%s3 + $0x194] sm:$0xf]
      %v6533 = vld [vmem:[%s3 + $0x198] sm:$0xf]
      %v6534 = vld [vmem:[%s3 + $0x19c] sm:$0xf]
      %v6535 = vld [vmem:[%s3 + $0x1a0] sm:$0xf]
      %v6536 = vld [vmem:[%s3 + $0x1a4] sm:$0xf]
      %v6537 = vld [vmem:[%s3 + $0x1a8] sm:$0xf]
      %v6538 = vld [vmem:[%s3 + $0x1ac] sm:$0xf]
      %v6539 = vld [vmem:[%s3 + $0x1b0] sm:$0xf]
      %v6540 = vld [vmem:[%s3 + $0x1b4] sm:$0xf]
      %v6541 = vld [vmem:[%s3 + $0x1b8] sm:$0xf]
      %v6542 = vld [vmem:[%s3 + $0x1bc] sm:$0xf]
      %v6543 = vld [vmem:[%s3 + $0x1c0] sm:$0xf]
      %v6544 = vld [vmem:[%s3 + $0x1c4] sm:$0xf]
      %v6545 = vld [vmem:[%s3 + $0x1c8] sm:$0xf]
      %v6546 = vld [vmem:[%s3 + $0x1cc] sm:$0xf]
      %v6547 = vld [vmem:[%s3 + $0x1d0] sm:$0xf]
      %v6548 = vld [vmem:[%s3 + $0x1d4] sm:$0xf]
      %v6549 = vld [vmem:[%s3 + $0x1d8] sm:$0xf]
      %v6550 = vld [vmem:[%s3 + $0x1dc] sm:$0xf]
      %v6551 = vld [vmem:[%s3 + $0x1e0] sm:$0xf]
      %v6552 = vld [vmem:[%s3 + $0x1e4] sm:$0xf]
      %v6553 = vld [vmem:[%s3 + $0x1e8] sm:$0xf]
      %v6554 = vld [vmem:[%s3 + $0x1ec] sm:$0xf]
      %v6555 = vld [vmem:[%s3 + $0x1f0] sm:$0xf]
      %v6556 = vld [vmem:[%s3 + $0x1f4] sm:$0xf]
      %v6557 = vld [vmem:[%s3 + $0x1f8] sm:$0xf]
      %v6558 = vld [vmem:[%s3 + $0x1fc] sm:$0xf]
      %v6559 = vld [vmem:[%s3 + $0x200] sm:$0xf]
      %v6560 = vld [vmem:[%s3 + $0x204] sm:$0xf]
      %v6561 = vld [vmem:[%s3 + $0x208] sm:$0xf]
      %v6562 = vld [vmem:[%s3 + $0x20c] sm:$0xf]
      %v6563 = vld [vmem:[%s3 + $0x210] sm:$0xf]
      %v6564 = vld [vmem:[%s3 + $0x214] sm:$0xf]
      %v6565 = vld [vmem:[%s3 + $0x218] sm:$0xf]
      %v6566 = vld [vmem:[%s3 + $0x21c] sm:$0xf]
      %v6567 = vld [vmem:[%s3 + $0x220] sm:$0xf]
      %v6568 = vld [vmem:[%s3 + $0x224] sm:$0xf]
      %v6569 = vld [vmem:[%s3 + $0x228] sm:$0xf]
      %v6570 = vld [vmem:[%s3 + $0x22c] sm:$0xf]
      %v6571 = vld [vmem:[%s3 + $0x230] sm:$0xf]
      %v6572 = vld [vmem:[%s3 + $0x234] sm:$0xf]
      %v6573 = vld [vmem:[%s3 + $0x238] sm:$0xf]
      %v6574 = vld [vmem:[%s3 + $0x23c] sm:$0xf]
      %v6575 = vld [vmem:[%s4] sm:$0x1]
      %v6577 = vperm.slane %v6575, 0
      %v6669 = vunpack.c.l.b16 %v6341
      %v6670 = vunpack.c.h.b16 %v6341
      %v6671 = vunpack.c.l.b16 %v6342
      %v6672 = vunpack.c.h.b16 %v6342
      %v6673 = vunpack.c.l.b16 %v6343
      %v6674 = vunpack.c.h.b16 %v6343
      %v6675 = vunpack.c.l.b16 %v6344
      %v6676 = vunpack.c.h.b16 %v6344
      %v6677 = vunpack.c.l.b16 %v6345
      %v6678 = vunpack.c.l.b16 %v6346
      %v6679 = vunpack.c.h.b16 %v6346
      %v6680 = vunpack.c.l.b16 %v6347
      %v6681 = vunpack.c.h.b16 %v6347
      %v6682 = vunpack.c.l.b16 %v6348
      %v6683 = vunpack.c.h.b16 %v6348
      %v6684 = vunpack.c.l.b16 %v6349
      %v6685 = vunpack.c.h.b16 %v6349
      %v6686 = vunpack.c.l.b16 %v6350
      %v6687 = vunpack.c.l.b16 %v6351
      %v6688 = vunpack.c.h.b16 %v6351
      %v6689 = vunpack.c.l.b16 %v6352
      %v6690 = vunpack.c.h.b16 %v6352
      %v6691 = vunpack.c.l.b16 %v6353
      %v6692 = vunpack.c.h.b16 %v6353
      %v6693 = vunpack.c.l.b16 %v6354
      %v6694 = vunpack.c.h.b16 %v6354
      %v6695 = vunpack.c.l.b16 %v6355
      %v6696 = vunpack.c.l.b16 %v6356
      %v6697 = vunpack.c.h.b16 %v6356
      %v6698 = vunpack.c.l.b16 %v6357
      %v6699 = vunpack.c.h.b16 %v6357
      %v6700 = vunpack.c.l.b16 %v6358
      %v6701 = vunpack.c.h.b16 %v6358
      %v6702 = vunpack.c.l.b16 %v6359
      %v6703 = vunpack.c.h.b16 %v6359
      %v6704 = vunpack.c.l.b16 %v6360
      %v6705 = vunpack.c.l.b16 %v6361
      %v6706 = vunpack.c.h.b16 %v6361
      %v6707 = vunpack.c.l.b16 %v6362
      %v6708 = vunpack.c.h.b16 %v6362
      %v6709 = vunpack.c.l.b16 %v6363
      %v6710 = vunpack.c.h.b16 %v6363
      %v6711 = vunpack.c.l.b16 %v6364
      %v6712 = vunpack.c.h.b16 %v6364
      %v6713 = vunpack.c.l.b16 %v6365
      %v6714 = vunpack.c.l.b16 %v6366
      %v6715 = vunpack.c.h.b16 %v6366
      %v6716 = vunpack.c.l.b16 %v6367
      %v6717 = vunpack.c.h.b16 %v6367
      %v6718 = vunpack.c.l.b16 %v6368
      %v6719 = vunpack.c.h.b16 %v6368
      %v6720 = vunpack.c.l.b16 %v6369
      %v6721 = vunpack.c.h.b16 %v6369
      %v6722 = vunpack.c.l.b16 %v6370
      %v6723 = vunpack.c.l.b16 %v6371
      %v6724 = vunpack.c.h.b16 %v6371
      %v6725 = vunpack.c.l.b16 %v6372
      %v6726 = vunpack.c.h.b16 %v6372
      %v6727 = vunpack.c.l.b16 %v6373
      %v6728 = vunpack.c.h.b16 %v6373
      %v6729 = vunpack.c.l.b16 %v6374
      %v6730 = vunpack.c.h.b16 %v6374
      %v6731 = vunpack.c.l.b16 %v6375
      %v6732 = vunpack.c.l.b16 %v6376
      %v6733 = vunpack.c.h.b16 %v6376
      %v6734 = vunpack.c.l.b16 %v6377
      %v6735 = vunpack.c.h.b16 %v6377
      %v6736 = vunpack.c.l.b16 %v6378
      %v6737 = vunpack.c.h.b16 %v6378
      %v6738 = vunpack.c.l.b16 %v6379
      %v6739 = vunpack.c.h.b16 %v6379
      %v6740 = vunpack.c.l.b16 %v6380
      %v6741 = vunpack.c.l.b16 %v6381
      %v6742 = vunpack.c.h.b16 %v6381
      %v6743 = vunpack.c.l.b16 %v6382
      %v6744 = vunpack.c.h.b16 %v6382
      %v6745 = vunpack.c.l.b16 %v6383
      %v6746 = vunpack.c.h.b16 %v6383
      %v6747 = vunpack.c.l.b16 %v6384
      %v6748 = vunpack.c.h.b16 %v6384
      %v6749 = vunpack.c.l.b16 %v6385
      %v6750 = vunpack.c.l.b16 %v6386
      %v6751 = vunpack.c.h.b16 %v6386
      %v6752 = vunpack.c.l.b16 %v6387
      %v6753 = vunpack.c.h.b16 %v6387
      %v6754 = vunpack.c.l.b16 %v6388
      %v6755 = vunpack.c.h.b16 %v6388
      %v6756 = vunpack.c.l.b16 %v6389
      %v6757 = vunpack.c.h.b16 %v6389
      %v6758 = vunpack.c.l.b16 %v6390
      %v6759 = vunpack.c.l.b16 %v6391
      %v6760 = vunpack.c.h.b16 %v6391
      %v6761 = vunpack.c.l.b16 %v6392
      %v6762 = vunpack.c.h.b16 %v6392
      %v6763 = vunpack.c.l.b16 %v6393
      %v6764 = vunpack.c.h.b16 %v6393
      %v6765 = vunpack.c.l.b16 %v6394
      %v6766 = vunpack.c.h.b16 %v6394
      %v6767 = vunpack.c.l.b16 %v6395
      %v6768 = vunpack.c.l.b16 %v6396
      %v6769 = vunpack.c.h.b16 %v6396
      %v6770 = vunpack.c.l.b16 %v6397
      %v6771 = vunpack.c.h.b16 %v6397
      %v6772 = vunpack.c.l.b16 %v6398
      %v6773 = vunpack.c.h.b16 %v6398
      %v6774 = vunpack.c.l.b16 %v6399
      %v6775 = vunpack.c.h.b16 %v6399
      %v6776 = vunpack.c.l.b16 %v6400
      %v6777 = vunpack.c.l.b16 %v6401
      %v6778 = vunpack.c.h.b16 %v6401
      %v6779 = vunpack.c.l.b16 %v6402
      %v6780 = vunpack.c.h.b16 %v6402
      %v6781 = vunpack.c.l.b16 %v6403
      %v6782 = vunpack.c.h.b16 %v6403
      %v6783 = vunpack.c.l.b16 %v6404
      %v6784 = vunpack.c.h.b16 %v6404
      %v6785 = vunpack.c.l.b16 %v6405
      %v6786 = vunpack.c.l.b16 %v6406
      %v6787 = vunpack.c.h.b16 %v6406
      %v6788 = vunpack.c.l.b16 %v6407
      %v6789 = vunpack.c.h.b16 %v6407
      %v6790 = vunpack.c.l.b16 %v6408
      %v6791 = vunpack.c.h.b16 %v6408
      %v6792 = vunpack.c.l.b16 %v6409
      %v6793 = vunpack.c.h.b16 %v6409
      %v6794 = vunpack.c.l.b16 %v6410
      %v6795 = vunpack.c.l.b16 %v6411
      %v6796 = vunpack.c.h.b16 %v6411
      %v6797 = vunpack.c.l.b16 %v6412
      %v6798 = vunpack.c.h.b16 %v6412
      %v6799 = vunpack.c.l.b16 %v6413
      %v6800 = vunpack.c.h.b16 %v6413
      %v6801 = vunpack.c.l.b16 %v6414
      %v6802 = vunpack.c.h.b16 %v6414
      %v6803 = vunpack.c.l.b16 %v6415
      %v6804 = vunpack.c.l.b16 %v6416
      %v6805 = vunpack.c.h.b16 %v6416
      %v6806 = vunpack.c.l.b16 %v6417
      %v6807 = vunpack.c.h.b16 %v6417
      %v6808 = vunpack.c.l.b16 %v6418
      %v6809 = vunpack.c.h.b16 %v6418
      %v6810 = vunpack.c.l.b16 %v6419
      %v6811 = vunpack.c.h.b16 %v6419
      %v6812 = vunpack.c.l.b16 %v6420
      %v6813 = vunpack.c.l.b16 %v6421
      %v6814 = vunpack.c.h.b16 %v6421
      %v6815 = vunpack.c.l.b16 %v6422
      %v6816 = vunpack.c.h.b16 %v6422
      %v6817 = vunpack.c.l.b16 %v6423
      %v6818 = vunpack.c.h.b16 %v6423
      %v6819 = vunpack.c.l.b16 %v6424
      %v6820 = vunpack.c.h.b16 %v6424
      %v6821 = vunpack.c.l.b16 %v6425
      %v6822 = vunpack.c.l.b16 %v6426
      %v6823 = vunpack.c.h.b16 %v6426
      %v6824 = vunpack.c.l.b16 %v6427
      %v6825 = vunpack.c.h.b16 %v6427
      %v6826 = vunpack.c.l.b16 %v6428
      %v6827 = vunpack.c.h.b16 %v6428
      %v6828 = vunpack.c.l.b16 %v6429
      %v6829 = vunpack.c.h.b16 %v6429
      %v6830 = vunpack.c.l.b16 %v6430
      %v6831 = vpack.c.b16 %v6678, %v6669
      %v6832 = vpack.c.b16 %v6679, %v6670
      %v6833 = vpack.c.b16 %v6680, %v6671
      %v6834 = vpack.c.b16 %v6681, %v6672
      %v6835 = vpack.c.b16 %v6682, %v6673
      %v6836 = vpack.c.b16 %v6683, %v6674
      %v6837 = vpack.c.b16 %v6684, %v6675
      %v6838 = vpack.c.b16 %v6685, %v6676
      %v6839 = vpack.c.b16 %v6686, %v6677
      %v6840 = vpack.c.b16 %v6696, %v6687
      %v6841 = vpack.c.b16 %v6697, %v6688
      %v6842 = vpack.c.b16 %v6698, %v6689
      %v6843 = vpack.c.b16 %v6699, %v6690
      %v6844 = vpack.c.b16 %v6700, %v6691
      %v6845 = vpack.c.b16 %v6701, %v6692
      %v6846 = vpack.c.b16 %v6702, %v6693
      %v6847 = vpack.c.b16 %v6703, %v6694
      %v6848 = vpack.c.b16 %v6704, %v6695
      %v6849 = vpack.c.b16 %v6714, %v6705
      %v6850 = vpack.c.b16 %v6715, %v6706
      %v6851 = vpack.c.b16 %v6716, %v6707
      %v6852 = vpack.c.b16 %v6717, %v6708
      %v6853 = vpack.c.b16 %v6718, %v6709
      %v6854 = vpack.c.b16 %v6719, %v6710
      %v6855 = vpack.c.b16 %v6720, %v6711
      %v6856 = vpack.c.b16 %v6721, %v6712
      %v6857 = vpack.c.b16 %v6722, %v6713
      %v6858 = vpack.c.b16 %v6732, %v6723
      %v6859 = vpack.c.b16 %v6733, %v6724
      %v6860 = vpack.c.b16 %v6734, %v6725
      %v6861 = vpack.c.b16 %v6735, %v6726
      %v6862 = vpack.c.b16 %v6736, %v6727
      %v6863 = vpack.c.b16 %v6737, %v6728
      %v6864 = vpack.c.b16 %v6738, %v6729
      %v6865 = vpack.c.b16 %v6739, %v6730
      %v6866 = vpack.c.b16 %v6740, %v6731
      %v6867 = vpack.c.b16 %v6750, %v6741
      %v6868 = vpack.c.b16 %v6751, %v6742
      %v6869 = vpack.c.b16 %v6752, %v6743
      %v6870 = vpack.c.b16 %v6753, %v6744
      %v6871 = vpack.c.b16 %v6754, %v6745
      %v6872 = vpack.c.b16 %v6755, %v6746
      %v6873 = vpack.c.b16 %v6756, %v6747
      %v6874 = vpack.c.b16 %v6757, %v6748
      %v6875 = vpack.c.b16 %v6758, %v6749
      %v6876 = vpack.c.b16 %v6768, %v6759
      %v6877 = vpack.c.b16 %v6769, %v6760
      %v6878 = vpack.c.b16 %v6770, %v6761
      %v6879 = vpack.c.b16 %v6771, %v6762
      %v6880 = vpack.c.b16 %v6772, %v6763
      %v6881 = vpack.c.b16 %v6773, %v6764
      %v6882 = vpack.c.b16 %v6774, %v6765
      %v6883 = vpack.c.b16 %v6775, %v6766
      %v6884 = vpack.c.b16 %v6776, %v6767
      %v6885 = vpack.c.b16 %v6786, %v6777
      %v6886 = vpack.c.b16 %v6787, %v6778
      %v6887 = vpack.c.b16 %v6788, %v6779
      %v6888 = vpack.c.b16 %v6789, %v6780
      %v6889 = vpack.c.b16 %v6790, %v6781
      %v6890 = vpack.c.b16 %v6791, %v6782
      %v6891 = vpack.c.b16 %v6792, %v6783
      %v6892 = vpack.c.b16 %v6793, %v6784
      %v6893 = vpack.c.b16 %v6794, %v6785
      %v6894 = vpack.c.b16 %v6804, %v6795
      %v6895 = vpack.c.b16 %v6805, %v6796
      %v6896 = vpack.c.b16 %v6806, %v6797
      %v6897 = vpack.c.b16 %v6807, %v6798
      %v6898 = vpack.c.b16 %v6808, %v6799
      %v6899 = vpack.c.b16 %v6809, %v6800
      %v6900 = vpack.c.b16 %v6810, %v6801
      %v6901 = vpack.c.b16 %v6811, %v6802
      %v6902 = vpack.c.b16 %v6812, %v6803
      %v6903 = vpack.c.b16 %v6822, %v6813
      %v6904 = vpack.c.b16 %v6823, %v6814
      %v6905 = vpack.c.b16 %v6824, %v6815
      %v6906 = vpack.c.b16 %v6825, %v6816
      %v6907 = vpack.c.b16 %v6826, %v6817
      %v6908 = vpack.c.b16 %v6827, %v6818
      %v6909 = vpack.c.b16 %v6828, %v6819
      %v6910 = vpack.c.b16 %v6829, %v6820
      %v6911 = vpack.c.b16 %v6830, %v6821
      %v7137 = vunpack.c.l.b16 %v6431
      %v7138 = vunpack.c.l.b16 %v6432
      %v7139 = vunpack.c.l.b16 %v6433
      %v7140 = vunpack.c.l.b16 %v6434
      %v7141 = vunpack.c.l.b16 %v6435
      %v7142 = vunpack.c.l.b16 %v6436
      %v7143 = vunpack.c.l.b16 %v6437
      %v7144 = vunpack.c.l.b16 %v6438
      %v7145 = vunpack.c.l.b16 %v6439
      %v7146 = vunpack.c.l.b16 %v6440
      %v7147 = vunpack.c.l.b16 %v6441
      %v7148 = vunpack.c.l.b16 %v6442
      %v7149 = vunpack.c.l.b16 %v6443
      %v7150 = vunpack.c.l.b16 %v6444
      %v7151 = vunpack.c.l.b16 %v6445
      %v7152 = vunpack.c.l.b16 %v6446
      %v7153 = vunpack.c.l.b16 %v6447
      %v7154 = vunpack.c.l.b16 %v6448
      %v7155 = vunpack.c.l.b16 %v6449
      %v7156 = vunpack.c.l.b16 %v6450
      %v7157 = vunpack.c.l.b16 %v6451
      %v7158 = vunpack.c.l.b16 %v6452
      %v7159 = vunpack.c.l.b16 %v6453
      %v7160 = vunpack.c.l.b16 %v6454
      %v7161 = vunpack.c.l.b16 %v6455
      %v7162 = vunpack.c.l.b16 %v6456
      %v7163 = vunpack.c.l.b16 %v6457
      %v7164 = vunpack.c.l.b16 %v6458
      %v7165 = vunpack.c.l.b16 %v6459
      %v7166 = vunpack.c.l.b16 %v6460
      %v7167 = vunpack.c.l.b16 %v6461
      %v7168 = vunpack.c.l.b16 %v6462
      %v7169 = vunpack.c.l.b16 %v6463
      %v7170 = vunpack.c.l.b16 %v6464
      %v7171 = vunpack.c.l.b16 %v6465
      %v7172 = vunpack.c.l.b16 %v6466
      %v7173 = vunpack.c.l.b16 %v6467
      %v7174 = vunpack.c.l.b16 %v6468
      %v7175 = vunpack.c.l.b16 %v6469
      %v7176 = vunpack.c.l.b16 %v6470
      %v7177 = vunpack.c.l.b16 %v6471
      %v7178 = vunpack.c.l.b16 %v6472
      %v7179 = vunpack.c.l.b16 %v6473
      %v7180 = vunpack.c.l.b16 %v6474
      %v7181 = vunpack.c.l.b16 %v6475
      %v7182 = vunpack.c.l.b16 %v6476
      %v7183 = vunpack.c.l.b16 %v6477
      %v7184 = vunpack.c.l.b16 %v6478
      %v7185 = vunpack.c.l.b16 %v6479
      %v7186 = vunpack.c.l.b16 %v6480
      %v7187 = vunpack.c.l.b16 %v6481
      %v7188 = vunpack.c.l.b16 %v6482
      %v7189 = vunpack.c.l.b16 %v6483
      %v7190 = vunpack.c.l.b16 %v6484
      %v7191 = vunpack.c.l.b16 %v6485
      %v7192 = vunpack.c.l.b16 %v6486
      %v7193 = vunpack.c.l.b16 %v6487
      %v7194 = vunpack.c.l.b16 %v6488
      %v7195 = vunpack.c.l.b16 %v6489
      %v7196 = vunpack.c.l.b16 %v6490
      %v7197 = vunpack.c.l.b16 %v6491
      %v7198 = vunpack.c.l.b16 %v6492
      %v7199 = vunpack.c.l.b16 %v6493
      %v7200 = vunpack.c.l.b16 %v6494
      %v7201 = vunpack.c.l.b16 %v6495
      %v7202 = vunpack.c.l.b16 %v6496
      %v7203 = vunpack.c.l.b16 %v6497
      %v7204 = vunpack.c.l.b16 %v6498
      %v7205 = vunpack.c.l.b16 %v6499
      %v7206 = vunpack.c.l.b16 %v6500
      %v7207 = vunpack.c.l.b16 %v6501
      %v7208 = vunpack.c.l.b16 %v6502
      %v7209 = vunpack.c.l.b16 %v6503
      %v7210 = vunpack.c.l.b16 %v6504
      %v7211 = vunpack.c.l.b16 %v6505
      %v7212 = vunpack.c.l.b16 %v6506
      %v7213 = vunpack.c.l.b16 %v6507
      %v7214 = vunpack.c.l.b16 %v6508
      %v7215 = vunpack.c.l.b16 %v6509
      %v7216 = vunpack.c.l.b16 %v6510
      %v7217 = vunpack.c.l.b16 %v6511
      %v7218 = vunpack.c.l.b16 %v6512
      %v7219 = vunpack.c.l.b16 %v6513
      %v7220 = vunpack.c.l.b16 %v6514
      %v7221 = vunpack.c.l.b16 %v6515
      %v7222 = vunpack.c.l.b16 %v6516
      %v7223 = vunpack.c.l.b16 %v6517
      %v7224 = vunpack.c.l.b16 %v6518
      %v7225 = vunpack.c.l.b16 %v6519
      %v7226 = vunpack.c.l.b16 %v6520
      %v7227 = vunpack.c.l.b16 %v6521
      %v7228 = vunpack.c.l.b16 %v6522
      %v7229 = vunpack.c.l.b16 %v6523
      %v7230 = vunpack.c.l.b16 %v6524
      %v7231 = vunpack.c.l.b16 %v6525
      %v7232 = vunpack.c.l.b16 %v6526
      %v7233 = vunpack.c.l.b16 %v6527
      %v7234 = vunpack.c.l.b16 %v6528
      %v7235 = vunpack.c.l.b16 %v6529
      %v7236 = vunpack.c.l.b16 %v6530
      %v7237 = vunpack.c.l.b16 %v6531
      %v7238 = vunpack.c.l.b16 %v6532
      %v7239 = vunpack.c.l.b16 %v6533
      %v7240 = vunpack.c.l.b16 %v6534
      %v7241 = vunpack.c.l.b16 %v6535
      %v7242 = vunpack.c.l.b16 %v6536
      %v7243 = vunpack.c.l.b16 %v6537
      %v7244 = vunpack.c.l.b16 %v6538
      %v7245 = vunpack.c.l.b16 %v6539
      %v7246 = vunpack.c.l.b16 %v6540
      %v7247 = vunpack.c.l.b16 %v6541
      %v7248 = vunpack.c.l.b16 %v6542
      %v7249 = vunpack.c.l.b16 %v6543
      %v7250 = vunpack.c.l.b16 %v6544
      %v7251 = vunpack.c.l.b16 %v6545
      %v7252 = vunpack.c.l.b16 %v6546
      %v7253 = vunpack.c.l.b16 %v6547
      %v7254 = vunpack.c.l.b16 %v6548
      %v7255 = vunpack.c.l.b16 %v6549
      %v7256 = vunpack.c.l.b16 %v6550
      %v7257 = vunpack.c.l.b16 %v6551
      %v7258 = vunpack.c.l.b16 %v6552
      %v7259 = vunpack.c.l.b16 %v6553
      %v7260 = vunpack.c.l.b16 %v6554
      %v7261 = vunpack.c.l.b16 %v6555
      %v7262 = vunpack.c.l.b16 %v6556
      %v7263 = vunpack.c.l.b16 %v6557
      %v7264 = vunpack.c.l.b16 %v6558
      %v7265 = vunpack.c.l.b16 %v6559
      %v7266 = vunpack.c.l.b16 %v6560
      %v7267 = vunpack.c.l.b16 %v6561
      %v7268 = vunpack.c.l.b16 %v6562
      %v7269 = vunpack.c.l.b16 %v6563
      %v7270 = vunpack.c.l.b16 %v6564
      %v7271 = vunpack.c.l.b16 %v6565
      %v7272 = vunpack.c.l.b16 %v6566
      %v7273 = vunpack.c.l.b16 %v6567
      %v7274 = vunpack.c.l.b16 %v6568
      %v7275 = vunpack.c.l.b16 %v6569
      %v7276 = vunpack.c.l.b16 %v6570
      %v7277 = vunpack.c.l.b16 %v6571
      %v7278 = vunpack.c.l.b16 %v6572
      %v7279 = vunpack.c.l.b16 %v6573
      %v7280 = vunpack.c.l.b16 %v6574
      %v7281 = vpack.c.b16 %v7138, %v7137
      %v7282 = vpack.c.b16 %v7140, %v7139
      %v7283 = vpack.c.b16 %v7142, %v7141
      %v7284 = vpack.c.b16 %v7144, %v7143
      %v7285 = vpack.c.b16 %v7146, %v7145
      %v7286 = vpack.c.b16 %v7148, %v7147
      %v7287 = vpack.c.b16 %v7150, %v7149
      %v7288 = vpack.c.b16 %v7152, %v7151
      %v7289 = vpack.c.b16 %v7154, %v7153
      %v7290 = vpack.c.b16 %v7156, %v7155
      %v7291 = vpack.c.b16 %v7158, %v7157
      %v7292 = vpack.c.b16 %v7160, %v7159
      %v7293 = vpack.c.b16 %v7162, %v7161
      %v7294 = vpack.c.b16 %v7164, %v7163
      %v7295 = vpack.c.b16 %v7166, %v7165
      %v7296 = vpack.c.b16 %v7168, %v7167
      %v7297 = vpack.c.b16 %v7170, %v7169
      %v7298 = vpack.c.b16 %v7172, %v7171
      %v7299 = vpack.c.b16 %v7174, %v7173
      %v7300 = vpack.c.b16 %v7176, %v7175
      %v7301 = vpack.c.b16 %v7178, %v7177
      %v7302 = vpack.c.b16 %v7180, %v7179
      %v7303 = vpack.c.b16 %v7182, %v7181
      %v7304 = vpack.c.b16 %v7184, %v7183
      %v7305 = vpack.c.b16 %v7186, %v7185
      %v7306 = vpack.c.b16 %v7188, %v7187
      %v7307 = vpack.c.b16 %v7190, %v7189
      %v7308 = vpack.c.b16 %v7192, %v7191
      %v7309 = vpack.c.b16 %v7194, %v7193
      %v7310 = vpack.c.b16 %v7196, %v7195
      %v7311 = vpack.c.b16 %v7198, %v7197
      %v7312 = vpack.c.b16 %v7200, %v7199
      %v7313 = vpack.c.b16 %v7202, %v7201
      %v7314 = vpack.c.b16 %v7204, %v7203
      %v7315 = vpack.c.b16 %v7206, %v7205
      %v7316 = vpack.c.b16 %v7208, %v7207
      %v7317 = vpack.c.b16 %v7210, %v7209
      %v7318 = vpack.c.b16 %v7212, %v7211
      %v7319 = vpack.c.b16 %v7214, %v7213
      %v7320 = vpack.c.b16 %v7216, %v7215
      %v7321 = vpack.c.b16 %v7218, %v7217
      %v7322 = vpack.c.b16 %v7220, %v7219
      %v7323 = vpack.c.b16 %v7222, %v7221
      %v7324 = vpack.c.b16 %v7224, %v7223
      %v7325 = vpack.c.b16 %v7226, %v7225
      %v7326 = vpack.c.b16 %v7228, %v7227
      %v7327 = vpack.c.b16 %v7230, %v7229
      %v7328 = vpack.c.b16 %v7232, %v7231
      %v7329 = vpack.c.b16 %v7234, %v7233
      %v7330 = vpack.c.b16 %v7236, %v7235
      %v7331 = vpack.c.b16 %v7238, %v7237
      %v7332 = vpack.c.b16 %v7240, %v7239
      %v7333 = vpack.c.b16 %v7242, %v7241
      %v7334 = vpack.c.b16 %v7244, %v7243
      %v7335 = vpack.c.b16 %v7246, %v7245
      %v7336 = vpack.c.b16 %v7248, %v7247
      %v7337 = vpack.c.b16 %v7250, %v7249
      %v7338 = vpack.c.b16 %v7252, %v7251
      %v7339 = vpack.c.b16 %v7254, %v7253
      %v7340 = vpack.c.b16 %v7256, %v7255
      %v7341 = vpack.c.b16 %v7258, %v7257
      %v7342 = vpack.c.b16 %v7260, %v7259
      %v7343 = vpack.c.b16 %v7262, %v7261
      %v7344 = vpack.c.b16 %v7264, %v7263
      %v7345 = vpack.c.b16 %v7266, %v7265
      %v7346 = vpack.c.b16 %v7268, %v7267
      %v7347 = vpack.c.b16 %v7270, %v7269
      %v7348 = vpack.c.b16 %v7272, %v7271
      %v7349 = vpack.c.b16 %v7274, %v7273
      %v7350 = vpack.c.b16 %v7276, %v7275
      %v7351 = vpack.c.b16 %v7278, %v7277
      %v7352 = vpack.c.b16 %v7280, %v7279
      %7425 = vmatpush.bf16.msra.mxu0 %v7288
      %7426 = vmatpush.bf16.msra.mxu0 %v7287
      %7427 = vmatpush.bf16.msra.mxu0 %v7286
      %7428 = vmatpush.bf16.msra.mxu0 %v7285
      %7429 = vmatpush.bf16.msra.mxu0 %v7284
      %7430 = vmatpush.bf16.msra.mxu0 %v7283
      %7431 = vmatpush.bf16.msra.mxu0 %v7282
      %7432 = vmatpush.bf16.msra.mxu0 %v7281
      %7433 = vmatmul.bf16.gmra.mxu0 %v6831
      %v7434 = vpop.f32.mrf.mxu0
      %v7435 = vadd.f32 %v6577, %v7434
      %v7436 = vpop.f32.mrf.mxu0
      %v7437 = vadd.f32 %v6577, %v7436
      %7438 = vmatmul.bf16.gmra.mxu0 %v6840
      %v7439 = vpop.f32.mrf.mxu0
      %v7440 = vadd.f32 %v6577, %v7439
      %v7441 = vpop.f32.mrf.mxu0
      %v7442 = vadd.f32 %v6577, %v7441
      %7443 = vmatmul.bf16.gmra.mxu0 %v6849
      %v7444 = vpop.f32.mrf.mxu0
      %v7445 = vadd.f32 %v6577, %v7444
      %v7446 = vpop.f32.mrf.mxu0
      %v7447 = vadd.f32 %v6577, %v7446
      %7448 = vmatmul.bf16.gmra.mxu0 %v6858
      %v7449 = vpop.f32.mrf.mxu0
      %v7450 = vadd.f32 %v6577, %v7449
      %v7451 = vpop.f32.mrf.mxu0
      %v7452 = vadd.f32 %v6577, %v7451
      %7453 = vmatmul.bf16.gmra.mxu0 %v6867
      %v7454 = vpop.f32.mrf.mxu0
      %v7455 = vadd.f32 %v6577, %v7454
      %v7456 = vpop.f32.mrf.mxu0
      %v7457 = vadd.f32 %v6577, %v7456
      %7458 = vmatmul.bf16.gmra.mxu0 %v6876
      %v7459 = vpop.f32.mrf.mxu0
      %v7460 = vadd.f32 %v6577, %v7459
      %v7461 = vpop.f32.mrf.mxu0
      %v7462 = vadd.f32 %v6577, %v7461
      %7463 = vmatmul.bf16.gmra.mxu0 %v6885
      %v7464 = vpop.f32.mrf.mxu0
      %v7465 = vadd.f32 %v6577, %v7464
      %v7466 = vpop.f32.mrf.mxu0
      %v7467 = vadd.f32 %v6577, %v7466
      %7468 = vmatmul.bf16.gmra.mxu0 %v6894
      %v7469 = vpop.f32.mrf.mxu0
      %v7470 = vadd.f32 %v6577, %v7469
      %v7471 = vpop.f32.mrf.mxu0
      %v7472 = vadd.f32 %v6577, %v7471
      %7473 = vmatmul.bf16.gmra.mxu0 %v6903
      %v7474 = vpop.f32.mrf.mxu0
      %v7475 = vadd.f32 %v6577, %v7474
      %v7476 = vpop.f32.mrf.mxu0
      %v7477 = vadd.f32 %v6577, %v7476
      %7478 = vdwg.mxu0
      %7479 = vmatpush.bf16.msra.mxu0 %v7296
      %7480 = vmatpush.bf16.msra.mxu0 %v7295
      %7481 = vmatpush.bf16.msra.mxu0 %v7294
      %7482 = vmatpush.bf16.msra.mxu0 %v7293
      %7483 = vmatpush.bf16.msra.mxu0 %v7292
      %7484 = vmatpush.bf16.msra.mxu0 %v7291
      %7485 = vmatpush.bf16.msra.mxu0 %v7290
      %7486 = vmatpush.bf16.msra.mxu0 %v7289
      %7487 = vmatmul.bf16.gmra.mxu0 %v6832
      %v7488 = vpop.f32.mrf.mxu0
      %v7489 = vadd.f32 %v7435, %v7488
      %v7490 = vpop.f32.mrf.mxu0
      %v7491 = vadd.f32 %v7437, %v7490
      %7492 = vmatmul.bf16.gmra.mxu0 %v6841
      %v7493 = vpop.f32.mrf.mxu0
      %v7494 = vadd.f32 %v7440, %v7493
      %v7495 = vpop.f32.mrf.mxu0
      %v7496 = vadd.f32 %v7442, %v7495
      %7497 = vmatmul.bf16.gmra.mxu0 %v6850
      %v7498 = vpop.f32.mrf.mxu0
      %v7499 = vadd.f32 %v7445, %v7498
      %v7500 = vpop.f32.mrf.mxu0
      %v7501 = vadd.f32 %v7447, %v7500
      %7502 = vmatmul.bf16.gmra.mxu0 %v6859
      %v7503 = vpop.f32.mrf.mxu0
      %v7504 = vadd.f32 %v7450, %v7503
      %v7505 = vpop.f32.mrf.mxu0
      %v7506 = vadd.f32 %v7452, %v7505
      %7507 = vmatmul.bf16.gmra.mxu0 %v6868
      %v7508 = vpop.f32.mrf.mxu0
      %v7509 = vadd.f32 %v7455, %v7508
      %v7510 = vpop.f32.mrf.mxu0
      %v7511 = vadd.f32 %v7457, %v7510
      %7512 = vmatmul.bf16.gmra.mxu0 %v6877
      %v7513 = vpop.f32.mrf.mxu0
      %v7514 = vadd.f32 %v7460, %v7513
      %v7515 = vpop.f32.mrf.mxu0
      %v7516 = vadd.f32 %v7462, %v7515
      %7517 = vmatmul.bf16.gmra.mxu0 %v6886
      %v7518 = vpop.f32.mrf.mxu0
      %v7519 = vadd.f32 %v7465, %v7518
      %v7520 = vpop.f32.mrf.mxu0
      %v7521 = vadd.f32 %v7467, %v7520
      %7522 = vmatmul.bf16.gmra.mxu0 %v6895
      %v7523 = vpop.f32.mrf.mxu0
      %v7524 = vadd.f32 %v7470, %v7523
      %v7525 = vpop.f32.mrf.mxu0
      %v7526 = vadd.f32 %v7472, %v7525
      %7527 = vmatmul.bf16.gmra.mxu0 %v6904
      %v7528 = vpop.f32.mrf.mxu0
      %v7529 = vadd.f32 %v7475, %v7528
      %v7530 = vpop.f32.mrf.mxu0
      %v7531 = vadd.f32 %v7477, %v7530
      %7532 = vdwg.mxu0
      %7533 = vmatpush.bf16.msra.mxu0 %v7304
      %7534 = vmatpush.bf16.msra.mxu0 %v7303
      %7535 = vmatpush.bf16.msra.mxu0 %v7302
      %7536 = vmatpush.bf16.msra.mxu0 %v7301
      %7537 = vmatpush.bf16.msra.mxu0 %v7300
      %7538 = vmatpush.bf16.msra.mxu0 %v7299
      %7539 = vmatpush.bf16.msra.mxu0 %v7298
      %7540 = vmatpush.bf16.msra.mxu0 %v7297
      %7541 = vmatmul.bf16.gmra.mxu0 %v6833
      %v7542 = vpop.f32.mrf.mxu0
      %v7543 = vadd.f32 %v7489, %v7542
      %v7544 = vpop.f32.mrf.mxu0
      %v7545 = vadd.f32 %v7491, %v7544
      %7546 = vmatmul.bf16.gmra.mxu0 %v6842
      %v7547 = vpop.f32.mrf.mxu0
      %v7548 = vadd.f32 %v7494, %v7547
      %v7549 = vpop.f32.mrf.mxu0
      %v7550 = vadd.f32 %v7496, %v7549
      %7551 = vmatmul.bf16.gmra.mxu0 %v6851
      %v7552 = vpop.f32.mrf.mxu0
      %v7553 = vadd.f32 %v7499, %v7552
      %v7554 = vpop.f32.mrf.mxu0
      %v7555 = vadd.f32 %v7501, %v7554
      %7556 = vmatmul.bf16.gmra.mxu0 %v6860
      %v7557 = vpop.f32.mrf.mxu0
      %v7558 = vadd.f32 %v7504, %v7557
      %v7559 = vpop.f32.mrf.mxu0
      %v7560 = vadd.f32 %v7506, %v7559
      %7561 = vmatmul.bf16.gmra.mxu0 %v6869
      %v7562 = vpop.f32.mrf.mxu0
      %v7563 = vadd.f32 %v7509, %v7562
      %v7564 = vpop.f32.mrf.mxu0
      %v7565 = vadd.f32 %v7511, %v7564
      %7566 = vmatmul.bf16.gmra.mxu0 %v6878
      %v7567 = vpop.f32.mrf.mxu0
      %v7568 = vadd.f32 %v7514, %v7567
      %v7569 = vpop.f32.mrf.mxu0
      %v7570 = vadd.f32 %v7516, %v7569
      %7571 = vmatmul.bf16.gmra.mxu0 %v6887
      %v7572 = vpop.f32.mrf.mxu0
      %v7573 = vadd.f32 %v7519, %v7572
      %v7574 = vpop.f32.mrf.mxu0
      %v7575 = vadd.f32 %v7521, %v7574
      %7576 = vmatmul.bf16.gmra.mxu0 %v6896
      %v7577 = vpop.f32.mrf.mxu0
      %v7578 = vadd.f32 %v7524, %v7577
      %v7579 = vpop.f32.mrf.mxu0
      %v7580 = vadd.f32 %v7526, %v7579
      %7581 = vmatmul.bf16.gmra.mxu0 %v6905
      %v7582 = vpop.f32.mrf.mxu0
      %v7583 = vadd.f32 %v7529, %v7582
      %v7584 = vpop.f32.mrf.mxu0
      %v7585 = vadd.f32 %v7531, %v7584
      %7586 = vdwg.mxu0
      %7587 = vmatpush.bf16.msra.mxu0 %v7312
      %7588 = vmatpush.bf16.msra.mxu0 %v7311
      %7589 = vmatpush.bf16.msra.mxu0 %v7310
      %7590 = vmatpush.bf16.msra.mxu0 %v7309
      %7591 = vmatpush.bf16.msra.mxu0 %v7308
      %7592 = vmatpush.bf16.msra.mxu0 %v7307
      %7593 = vmatpush.bf16.msra.mxu0 %v7306
      %7594 = vmatpush.bf16.msra.mxu0 %v7305
      %7595 = vmatmul.bf16.gmra.mxu0 %v6834
      %v7596 = vpop.f32.mrf.mxu0
      %v7597 = vadd.f32 %v7543, %v7596
      %v7598 = vpop.f32.mrf.mxu0
      %v7599 = vadd.f32 %v7545, %v7598
      %7600 = vmatmul.bf16.gmra.mxu0 %v6843
      %v7601 = vpop.f32.mrf.mxu0
      %v7602 = vadd.f32 %v7548, %v7601
      %v7603 = vpop.f32.mrf.mxu0
      %v7604 = vadd.f32 %v7550, %v7603
      %7605 = vmatmul.bf16.gmra.mxu0 %v6852
      %v7606 = vpop.f32.mrf.mxu0
      %v7607 = vadd.f32 %v7553, %v7606
      %v7608 = vpop.f32.mrf.mxu0
      %v7609 = vadd.f32 %v7555, %v7608
      %7610 = vmatmul.bf16.gmra.mxu0 %v6861
      %v7611 = vpop.f32.mrf.mxu0
      %v7612 = vadd.f32 %v7558, %v7611
      %v7613 = vpop.f32.mrf.mxu0
      %v7614 = vadd.f32 %v7560, %v7613
      %7615 = vmatmul.bf16.gmra.mxu0 %v6870
      %v7616 = vpop.f32.mrf.mxu0
      %v7617 = vadd.f32 %v7563, %v7616
      %v7618 = vpop.f32.mrf.mxu0
      %v7619 = vadd.f32 %v7565, %v7618
      %7620 = vmatmul.bf16.gmra.mxu0 %v6879
      %v7621 = vpop.f32.mrf.mxu0
      %v7622 = vadd.f32 %v7568, %v7621
      %v7623 = vpop.f32.mrf.mxu0
      %v7624 = vadd.f32 %v7570, %v7623
      %7625 = vmatmul.bf16.gmra.mxu0 %v6888
      %v7626 = vpop.f32.mrf.mxu0
      %v7627 = vadd.f32 %v7573, %v7626
      %v7628 = vpop.f32.mrf.mxu0
      %v7629 = vadd.f32 %v7575, %v7628
      %7630 = vmatmul.bf16.gmra.mxu0 %v6897
      %v7631 = vpop.f32.mrf.mxu0
      %v7632 = vadd.f32 %v7578, %v7631
      %v7633 = vpop.f32.mrf.mxu0
      %v7634 = vadd.f32 %v7580, %v7633
      %7635 = vmatmul.bf16.gmra.mxu0 %v6906
      %v7636 = vpop.f32.mrf.mxu0
      %v7637 = vadd.f32 %v7583, %v7636
      %v7638 = vpop.f32.mrf.mxu0
      %v7639 = vadd.f32 %v7585, %v7638
      %7640 = vdwg.mxu0
      %7641 = vmatpush.bf16.msra.mxu0 %v7320
      %7642 = vmatpush.bf16.msra.mxu0 %v7319
      %7643 = vmatpush.bf16.msra.mxu0 %v7318
      %7644 = vmatpush.bf16.msra.mxu0 %v7317
      %7645 = vmatpush.bf16.msra.mxu0 %v7316
      %7646 = vmatpush.bf16.msra.mxu0 %v7315
      %7647 = vmatpush.bf16.msra.mxu0 %v7314
      %7648 = vmatpush.bf16.msra.mxu0 %v7313
      %7649 = vmatmul.bf16.gmra.mxu0 %v6835
      %v7650 = vpop.f32.mrf.mxu0
      %v7651 = vadd.f32 %v7597, %v7650
      %v7652 = vpop.f32.mrf.mxu0
      %v7653 = vadd.f32 %v7599, %v7652
      %7654 = vmatmul.bf16.gmra.mxu0 %v6844
      %v7655 = vpop.f32.mrf.mxu0
      %v7656 = vadd.f32 %v7602, %v7655
      %v7657 = vpop.f32.mrf.mxu0
      %v7658 = vadd.f32 %v7604, %v7657
      %7659 = vmatmul.bf16.gmra.mxu0 %v6853
      %v7660 = vpop.f32.mrf.mxu0
      %v7661 = vadd.f32 %v7607, %v7660
      %v7662 = vpop.f32.mrf.mxu0
      %v7663 = vadd.f32 %v7609, %v7662
      %7664 = vmatmul.bf16.gmra.mxu0 %v6862
      %v7665 = vpop.f32.mrf.mxu0
      %v7666 = vadd.f32 %v7612, %v7665
      %v7667 = vpop.f32.mrf.mxu0
      %v7668 = vadd.f32 %v7614, %v7667
      %7669 = vmatmul.bf16.gmra.mxu0 %v6871
      %v7670 = vpop.f32.mrf.mxu0
      %v7671 = vadd.f32 %v7617, %v7670
      %v7672 = vpop.f32.mrf.mxu0
      %v7673 = vadd.f32 %v7619, %v7672
      %7674 = vmatmul.bf16.gmra.mxu0 %v6880
      %v7675 = vpop.f32.mrf.mxu0
      %v7676 = vadd.f32 %v7622, %v7675
      %v7677 = vpop.f32.mrf.mxu0
      %v7678 = vadd.f32 %v7624, %v7677
      %7679 = vmatmul.bf16.gmra.mxu0 %v6889
      %v7680 = vpop.f32.mrf.mxu0
      %v7681 = vadd.f32 %v7627, %v7680
      %v7682 = vpop.f32.mrf.mxu0
      %v7683 = vadd.f32 %v7629, %v7682
      %7684 = vmatmul.bf16.gmra.mxu0 %v6898
      %v7685 = vpop.f32.mrf.mxu0
      %v7686 = vadd.f32 %v7632, %v7685
      %v7687 = vpop.f32.mrf.mxu0
      %v7688 = vadd.f32 %v7634, %v7687
      %7689 = vmatmul.bf16.gmra.mxu0 %v6907
      %v7690 = vpop.f32.mrf.mxu0
      %v7691 = vadd.f32 %v7637, %v7690
      %v7692 = vpop.f32.mrf.mxu0
      %v7693 = vadd.f32 %v7639, %v7692
      %7694 = vdwg.mxu0
      %7695 = vmatpush.bf16.msra.mxu0 %v7328
      %7696 = vmatpush.bf16.msra.mxu0 %v7327
      %7697 = vmatpush.bf16.msra.mxu0 %v7326
      %7698 = vmatpush.bf16.msra.mxu0 %v7325
      %7699 = vmatpush.bf16.msra.mxu0 %v7324
      %7700 = vmatpush.bf16.msra.mxu0 %v7323
      %7701 = vmatpush.bf16.msra.mxu0 %v7322
      %7702 = vmatpush.bf16.msra.mxu0 %v7321
      %7703 = vmatmul.bf16.gmra.mxu0 %v6836
      %v7704 = vpop.f32.mrf.mxu0
      %v7705 = vadd.f32 %v7651, %v7704
      %v7706 = vpop.f32.mrf.mxu0
      %v7707 = vadd.f32 %v7653, %v7706
      %7708 = vmatmul.bf16.gmra.mxu0 %v6845
      %v7709 = vpop.f32.mrf.mxu0
      %v7710 = vadd.f32 %v7656, %v7709
      %v7711 = vpop.f32.mrf.mxu0
      %v7712 = vadd.f32 %v7658, %v7711
      %7713 = vmatmul.bf16.gmra.mxu0 %v6854
      %v7714 = vpop.f32.mrf.mxu0
      %v7715 = vadd.f32 %v7661, %v7714
      %v7716 = vpop.f32.mrf.mxu0
      %v7717 = vadd.f32 %v7663, %v7716
      %7718 = vmatmul.bf16.gmra.mxu0 %v6863
      %v7719 = vpop.f32.mrf.mxu0
      %v7720 = vadd.f32 %v7666, %v7719
      %v7721 = vpop.f32.mrf.mxu0
      %v7722 = vadd.f32 %v7668, %v7721
      %7723 = vmatmul.bf16.gmra.mxu0 %v6872
      %v7724 = vpop.f32.mrf.mxu0
      %v7725 = vadd.f32 %v7671, %v7724
      %v7726 = vpop.f32.mrf.mxu0
      %v7727 = vadd.f32 %v7673, %v7726
      %7728 = vmatmul.bf16.gmra.mxu0 %v6881
      %v7729 = vpop.f32.mrf.mxu0
      %v7730 = vadd.f32 %v7676, %v7729
      %v7731 = vpop.f32.mrf.mxu0
      %v7732 = vadd.f32 %v7678, %v7731
      %7733 = vmatmul.bf16.gmra.mxu0 %v6890
      %v7734 = vpop.f32.mrf.mxu0
      %v7735 = vadd.f32 %v7681, %v7734
      %v7736 = vpop.f32.mrf.mxu0
      %v7737 = vadd.f32 %v7683, %v7736
      %7738 = vmatmul.bf16.gmra.mxu0 %v6899
      %v7739 = vpop.f32.mrf.mxu0
      %v7740 = vadd.f32 %v7686, %v7739
      %v7741 = vpop.f32.mrf.mxu0
      %v7742 = vadd.f32 %v7688, %v7741
      %7743 = vmatmul.bf16.gmra.mxu0 %v6908
      %v7744 = vpop.f32.mrf.mxu0
      %v7745 = vadd.f32 %v7691, %v7744
      %v7746 = vpop.f32.mrf.mxu0
      %v7747 = vadd.f32 %v7693, %v7746
      %7748 = vdwg.mxu0
      %7749 = vmatpush.bf16.msra.mxu0 %v7336
      %7750 = vmatpush.bf16.msra.mxu0 %v7335
      %7751 = vmatpush.bf16.msra.mxu0 %v7334
      %7752 = vmatpush.bf16.msra.mxu0 %v7333
      %7753 = vmatpush.bf16.msra.mxu0 %v7332
      %7754 = vmatpush.bf16.msra.mxu0 %v7331
      %7755 = vmatpush.bf16.msra.mxu0 %v7330
      %7756 = vmatpush.bf16.msra.mxu0 %v7329
      %7757 = vmatmul.bf16.gmra.mxu0 %v6837
      %v7758 = vpop.f32.mrf.mxu0
      %v7759 = vadd.f32 %v7705, %v7758
      %v7760 = vpop.f32.mrf.mxu0
      %v7761 = vadd.f32 %v7707, %v7760
      %7762 = vmatmul.bf16.gmra.mxu0 %v6846
      %v7763 = vpop.f32.mrf.mxu0
      %v7764 = vadd.f32 %v7710, %v7763
      %v7765 = vpop.f32.mrf.mxu0
      %v7766 = vadd.f32 %v7712, %v7765
      %7767 = vmatmul.bf16.gmra.mxu0 %v6855
      %v7768 = vpop.f32.mrf.mxu0
      %v7769 = vadd.f32 %v7715, %v7768
      %v7770 = vpop.f32.mrf.mxu0
      %v7771 = vadd.f32 %v7717, %v7770
      %7772 = vmatmul.bf16.gmra.mxu0 %v6864
      %v7773 = vpop.f32.mrf.mxu0
      %v7774 = vadd.f32 %v7720, %v7773
      %v7775 = vpop.f32.mrf.mxu0
      %v7776 = vadd.f32 %v7722, %v7775
      %7777 = vmatmul.bf16.gmra.mxu0 %v6873
      %v7778 = vpop.f32.mrf.mxu0
      %v7779 = vadd.f32 %v7725, %v7778
      %v7780 = vpop.f32.mrf.mxu0
      %v7781 = vadd.f32 %v7727, %v7780
      %7782 = vmatmul.bf16.gmra.mxu0 %v6882
      %v7783 = vpop.f32.mrf.mxu0
      %v7784 = vadd.f32 %v7730, %v7783
      %v7785 = vpop.f32.mrf.mxu0
      %v7786 = vadd.f32 %v7732, %v7785
      %7787 = vmatmul.bf16.gmra.mxu0 %v6891
      %v7788 = vpop.f32.mrf.mxu0
      %v7789 = vadd.f32 %v7735, %v7788
      %v7790 = vpop.f32.mrf.mxu0
      %v7791 = vadd.f32 %v7737, %v7790
      %7792 = vmatmul.bf16.gmra.mxu0 %v6900
      %v7793 = vpop.f32.mrf.mxu0
      %v7794 = vadd.f32 %v7740, %v7793
      %v7795 = vpop.f32.mrf.mxu0
      %v7796 = vadd.f32 %v7742, %v7795
      %7797 = vmatmul.bf16.gmra.mxu0 %v6909
      %v7798 = vpop.f32.mrf.mxu0
      %v7799 = vadd.f32 %v7745, %v7798
      %v7800 = vpop.f32.mrf.mxu0
      %v7801 = vadd.f32 %v7747, %v7800
      %7802 = vdwg.mxu0
      %7803 = vmatpush.bf16.msra.mxu0 %v7344
      %7804 = vmatpush.bf16.msra.mxu0 %v7343
      %7805 = vmatpush.bf16.msra.mxu0 %v7342
      %7806 = vmatpush.bf16.msra.mxu0 %v7341
      %7807 = vmatpush.bf16.msra.mxu0 %v7340
      %7808 = vmatpush.bf16.msra.mxu0 %v7339
      %7809 = vmatpush.bf16.msra.mxu0 %v7338
      %7810 = vmatpush.bf16.msra.mxu0 %v7337
      %7811 = vmatmul.bf16.gmra.mxu0 %v6838
      %v7812 = vpop.f32.mrf.mxu0
      %v7813 = vadd.f32 %v7759, %v7812
      %v7814 = vpop.f32.mrf.mxu0
      %v7815 = vadd.f32 %v7761, %v7814
      %7816 = vmatmul.bf16.gmra.mxu0 %v6847
      %v7817 = vpop.f32.mrf.mxu0
      %v7818 = vadd.f32 %v7764, %v7817
      %v7819 = vpop.f32.mrf.mxu0
      %v7820 = vadd.f32 %v7766, %v7819
      %7821 = vmatmul.bf16.gmra.mxu0 %v6856
      %v7822 = vpop.f32.mrf.mxu0
      %v7823 = vadd.f32 %v7769, %v7822
      %v7824 = vpop.f32.mrf.mxu0
      %v7825 = vadd.f32 %v7771, %v7824
      %7826 = vmatmul.bf16.gmra.mxu0 %v6865
      %v7827 = vpop.f32.mrf.mxu0
      %v7828 = vadd.f32 %v7774, %v7827
      %v7829 = vpop.f32.mrf.mxu0
      %v7830 = vadd.f32 %v7776, %v7829
      %7831 = vmatmul.bf16.gmra.mxu0 %v6874
      %v7832 = vpop.f32.mrf.mxu0
      %v7833 = vadd.f32 %v7779, %v7832
      %v7834 = vpop.f32.mrf.mxu0
      %v7835 = vadd.f32 %v7781, %v7834
      %7836 = vmatmul.bf16.gmra.mxu0 %v6883
      %v7837 = vpop.f32.mrf.mxu0
      %v7838 = vadd.f32 %v7784, %v7837
      %v7839 = vpop.f32.mrf.mxu0
      %v7840 = vadd.f32 %v7786, %v7839
      %7841 = vmatmul.bf16.gmra.mxu0 %v6892
      %v7842 = vpop.f32.mrf.mxu0
      %v7843 = vadd.f32 %v7789, %v7842
      %v7844 = vpop.f32.mrf.mxu0
      %v7845 = vadd.f32 %v7791, %v7844
      %7846 = vmatmul.bf16.gmra.mxu0 %v6901
      %v7847 = vpop.f32.mrf.mxu0
      %v7848 = vadd.f32 %v7794, %v7847
      %v7849 = vpop.f32.mrf.mxu0
      %v7850 = vadd.f32 %v7796, %v7849
      %7851 = vmatmul.bf16.gmra.mxu0 %v6910
      %v7852 = vpop.f32.mrf.mxu0
      %v7853 = vadd.f32 %v7799, %v7852
      %v7854 = vpop.f32.mrf.mxu0
      %v7855 = vadd.f32 %v7801, %v7854
      %7856 = vdwg.mxu0
      %7857 = vmatpush.bf16.msra.mxu0 %v7352
      %7858 = vmatpush.bf16.msra.mxu0 %v7351
      %7859 = vmatpush.bf16.msra.mxu0 %v7350
      %7860 = vmatpush.bf16.msra.mxu0 %v7349
      %7861 = vmatpush.bf16.msra.mxu0 %v7348
      %7862 = vmatpush.bf16.msra.mxu0 %v7347
      %7863 = vmatpush.bf16.msra.mxu0 %v7346
      %7864 = vmatpush.bf16.msra.mxu0 %v7345
      %7865 = vmatmul.bf16.gmra.mxu0 %v6839
      %v7866 = vpop.f32.mrf.mxu0
      %v7867 = vadd.f32 %v7813, %v7866
      %v7868 = vpop.f32.mrf.mxu0
      %v7869 = vadd.f32 %v7815, %v7868
      %7870 = vmatmul.bf16.gmra.mxu0 %v6848
      %v7871 = vpop.f32.mrf.mxu0
      %v7872 = vadd.f32 %v7818, %v7871
      %v7873 = vpop.f32.mrf.mxu0
      %v7874 = vadd.f32 %v7820, %v7873
      %7875 = vmatmul.bf16.gmra.mxu0 %v6857
      %v7876 = vpop.f32.mrf.mxu0
      %v7877 = vadd.f32 %v7823, %v7876
      %v7878 = vpop.f32.mrf.mxu0
      %v7879 = vadd.f32 %v7825, %v7878
      %7880 = vmatmul.bf16.gmra.mxu0 %v6866
      %v7881 = vpop.f32.mrf.mxu0
      %v7882 = vadd.f32 %v7828, %v7881
      %v7883 = vpop.f32.mrf.mxu0
      %v7884 = vadd.f32 %v7830, %v7883
      %7885 = vmatmul.bf16.gmra.mxu0 %v6875
      %v7886 = vpop.f32.mrf.mxu0
      %v7887 = vadd.f32 %v7833, %v7886
      %v7888 = vpop.f32.mrf.mxu0
      %v7889 = vadd.f32 %v7835, %v7888
      %7890 = vmatmul.bf16.gmra.mxu0 %v6884
      %v7891 = vpop.f32.mrf.mxu0
      %v7892 = vadd.f32 %v7838, %v7891
      %v7893 = vpop.f32.mrf.mxu0
      %v7894 = vadd.f32 %v7840, %v7893
      %7895 = vmatmul.bf16.gmra.mxu0 %v6893
      %v7896 = vpop.f32.mrf.mxu0
      %v7897 = vadd.f32 %v7843, %v7896
      %v7898 = vpop.f32.mrf.mxu0
      %v7899 = vadd.f32 %v7845, %v7898
      %7900 = vmatmul.bf16.gmra.mxu0 %v6902
      %v7901 = vpop.f32.mrf.mxu0
      %v7902 = vadd.f32 %v7848, %v7901
      %v7903 = vpop.f32.mrf.mxu0
      %v7904 = vadd.f32 %v7850, %v7903
      %7905 = vmatmul.bf16.gmra.mxu0 %v6911
      %v7906 = vpop.f32.mrf.mxu0
      %v7907 = vadd.f32 %v7853, %v7906
      %v7908 = vpop.f32.mrf.mxu0
      %v7909 = vadd.f32 %v7855, %v7908
      %7910 = vdwg.mxu0
      %v7911 = vmul.f32 %v7867, 0.01
      %v7912 = vmul.f32 %v7869, 0.01
      %v7913 = vmul.f32 %v7872, 0.01
      %v7914 = vmul.f32 %v7874, 0.01
      %v7915 = vmul.f32 %v7877, 0.01
      %v7916 = vmul.f32 %v7879, 0.01
      %v7917 = vmul.f32 %v7882, 0.01
      %v7918 = vmul.f32 %v7884, 0.01
      %v7919 = vmul.f32 %v7887, 0.01
      %v7920 = vmul.f32 %v7889, 0.01
      %v7921 = vmul.f32 %v7892, 0.01
      %v7922 = vmul.f32 %v7894, 0.01
      %v7923 = vmul.f32 %v7897, 0.01
      %v7924 = vmul.f32 %v7899, 0.01
      %v7925 = vmul.f32 %v7902, 0.01
      %v7926 = vmul.f32 %v7904, 0.01
      %v7927 = vmul.f32 %v7907, 0.01
      %v7928 = vmul.f32 %v7909, 0.01
      %v7929 = vmax.f32 %v7867, %v7911
      %v7930 = vmax.f32 %v7869, %v7912
      %v7931 = vmax.f32 %v7872, %v7913
      %v7932 = vmax.f32 %v7874, %v7914
      %v7933 = vmax.f32 %v7877, %v7915
      %v7934 = vmax.f32 %v7879, %v7916
      %v7935 = vmax.f32 %v7882, %v7917
      %v7936 = vmax.f32 %v7884, %v7918
      %v7937 = vmax.f32 %v7887, %v7919
      %v7938 = vmax.f32 %v7889, %v7920
      %v7939 = vmax.f32 %v7892, %v7921
      %v7940 = vmax.f32 %v7894, %v7922
      %v7941 = vmax.f32 %v7897, %v7923
      %v7942 = vmax.f32 %v7899, %v7924
      %v7943 = vmax.f32 %v7902, %v7925
      %v7944 = vmax.f32 %v7904, %v7926
      %v7945 = vmax.f32 %v7907, %v7927
      %v7946 = vmax.f32 %v7909, %v7928
      %v7947 = vpack.c.bf16 %v7929, %v7929
      %v7948 = vpack.c.bf16 %v7930, %v7930
      %v7949 = vpack.c.bf16 %v7931, %v7931
      %v7950 = vpack.c.bf16 %v7932, %v7932
      %v7951 = vpack.c.bf16 %v7933, %v7933
      %v7952 = vpack.c.bf16 %v7934, %v7934
      %v7953 = vpack.c.bf16 %v7935, %v7935
      %v7954 = vpack.c.bf16 %v7936, %v7936
      %v7955 = vpack.c.bf16 %v7937, %v7937
      %v7956 = vpack.c.bf16 %v7938, %v7938
      %v7957 = vpack.c.bf16 %v7939, %v7939
      %v7958 = vpack.c.bf16 %v7940, %v7940
      %v7959 = vpack.c.bf16 %v7941, %v7941
      %v7960 = vpack.c.bf16 %v7942, %v7942
      %v7961 = vpack.c.bf16 %v7943, %v7943
      %v7962 = vpack.c.bf16 %v7944, %v7944
      %v7963 = vpack.c.bf16 %v7945, %v7945
      %v7964 = vpack.c.bf16 %v7946, %v7946
      %7965 = vst [vmem:[%s224] sm:$0xf] %v7947
      %7966 = vst [vmem:[%s224 + $0x4] sm:$0xf] %v7948
      %7967 = vst [vmem:[%s224 + $0x8] sm:$0xf] %v7949
      %7968 = vst [vmem:[%s224 + $0xc] sm:$0xf] %v7950
      %7969 = vst [vmem:[%s224 + $0x10] sm:$0xf] %v7951
      %7970 = vst [vmem:[%s224 + $0x14] sm:$0xf] %v7952
      %7971 = vst [vmem:[%s224 + $0x18] sm:$0xf] %v7953
      %7972 = vst [vmem:[%s224 + $0x1c] sm:$0xf] %v7954
      %7973 = vst [vmem:[%s224 + $0x20] sm:$0xf] %v7955
      %7974 = vst [vmem:[%s224 + $0x24] sm:$0xf] %v7956
      %7975 = vst [vmem:[%s224 + $0x28] sm:$0xf] %v7957
      %7976 = vst [vmem:[%s224 + $0x2c] sm:$0xf] %v7958
      %7977 = vst [vmem:[%s224 + $0x30] sm:$0xf] %v7959
      %7978 = vst [vmem:[%s224 + $0x34] sm:$0xf] %v7960
      %7979 = vst [vmem:[%s224 + $0x38] sm:$0xf] %v7961
      %7980 = vst [vmem:[%s224 + $0x3c] sm:$0xf] %v7962
      %7981 = vst [vmem:[%s224 + $0x40] sm:$0xf] %v7963
      %7982 = vst [vmem:[%s224 + $0x44] sm:$0xf] %v7964
      %v7983 = vld [vmem:[#allocation2 + $0x4c] sm:$0xc]
      %v7984 = vld [vmem:[#allocation2 + $0x50] sm:$0xf]
      %v7985 = vld [vmem:[#allocation2 + $0x54] sm:$0xf]
      %v7986 = vld [vmem:[#allocation2 + $0x58] sm:$0xf]
      %v7987 = vld [vmem:[#allocation2 + $0x5c] sm:$0xf]
      %v7988 = vld [vmem:[#allocation2 + $0x60] sm:$0xf]
      %v7989 = vld [vmem:[#allocation2 + $0x64] sm:$0xf]
      %v7990 = vld [vmem:[#allocation2 + $0x68] sm:$0xf]
      %v7991 = vld [vmem:[#allocation2 + $0x6c] sm:$0xf]
      %v7992 = vld [vmem:[#allocation2 + $0x70] sm:$0xf]
      %v7993 = vld [vmem:[#allocation2 + $0x74] sm:$0xf]
      %v7994 = vld [vmem:[#allocation2 + $0x78] sm:$0xf]
      %v7995 = vld [vmem:[#allocation2 + $0x7c] sm:$0xf]
      %v7996 = vld [vmem:[#allocation2 + $0x80] sm:$0xf]
      %v7997 = vld [vmem:[#allocation2 + $0x84] sm:$0xf]
      %v7998 = vld [vmem:[#allocation2 + $0x88] sm:$0xf]
      %v7999 = vld [vmem:[#allocation2 + $0x8c] sm:$0xf]
      %v8000 = vld [vmem:[#allocation2 + $0x90] sm:$0xf]
      %v8001 = vld [vmem:[#allocation2 + $0x94] sm:$0x7]
      %v8003 = vshrl.u32 %v7983, 16
      %v8005 = vrot.slane %v8003, 6
      %v8006 = vshll.u32 %v7983, 16
      %v8008 = vrot.slane %v8006, 7
      %v8009 = vor.u32 %v8005, %v8008
      %v8010 = vrot.slane %v8009, 4
      %v8012 = vshrl.u32 %v7984, 16
      %v8014 = vrot.slane %v8012, 6
      %v8015 = vshll.u32 %v7984, 16
      %v8017 = vrot.slane %v8015, 7
      %v8018 = vor.u32 %v8014, %v8017
      %v8019 = vsel %vm1524, %v8010, %v8018
      %v8020 = vrot.slane %v8018, 4
      %v8022 = vshrl.u32 %v7985, 16
      %v8024 = vrot.slane %v8022, 6
      %v8025 = vshll.u32 %v7985, 16
      %v8027 = vrot.slane %v8025, 7
      %v8028 = vor.u32 %v8024, %v8027
      %v8029 = vsel %vm1524, %v8020, %v8028
      %v8030 = vrot.slane %v8028, 4
      %v8032 = vshrl.u32 %v7986, 16
      %v8034 = vrot.slane %v8032, 6
      %v8035 = vshll.u32 %v7986, 16
      %v8037 = vrot.slane %v8035, 7
      %v8038 = vor.u32 %v8034, %v8037
      %v8039 = vsel %vm1524, %v8030, %v8038
      %v8040 = vrot.slane %v8038, 4
      %v8042 = vshrl.u32 %v7987, 16
      %v8044 = vrot.slane %v8042, 6
      %v8045 = vshll.u32 %v7987, 16
      %v8047 = vrot.slane %v8045, 7
      %v8048 = vor.u32 %v8044, %v8047
      %v8049 = vsel %vm1524, %v8040, %v8048
      %v8050 = vrot.slane %v8048, 4
      %v8052 = vshrl.u32 %v7988, 16
      %v8054 = vrot.slane %v8052, 6
      %v8055 = vshll.u32 %v7988, 16
      %v8057 = vrot.slane %v8055, 7
      %v8058 = vor.u32 %v8054, %v8057
      %v8059 = vsel %vm1524, %v8050, %v8058
      %v8060 = vrot.slane %v8058, 4
      %v8062 = vshrl.u32 %v7989, 16
      %v8064 = vrot.slane %v8062, 6
      %v8065 = vshll.u32 %v7989, 16
      %v8067 = vrot.slane %v8065, 7
      %v8068 = vor.u32 %v8064, %v8067
      %v8069 = vsel %vm1524, %v8060, %v8068
      %v8070 = vrot.slane %v8068, 4
      %v8072 = vshrl.u32 %v7990, 16
      %v8074 = vrot.slane %v8072, 6
      %v8075 = vshll.u32 %v7990, 16
      %v8077 = vrot.slane %v8075, 7
      %v8078 = vor.u32 %v8074, %v8077
      %v8079 = vsel %vm1524, %v8070, %v8078
      %v8080 = vrot.slane %v8078, 4
      %v8082 = vshrl.u32 %v7991, 16
      %v8084 = vrot.slane %v8082, 6
      %v8085 = vshll.u32 %v7991, 16
      %v8087 = vrot.slane %v8085, 7
      %v8088 = vor.u32 %v8084, %v8087
      %v8089 = vsel %vm1524, %v8080, %v8088
      %v8090 = vrot.slane %v8088, 4
      %v8092 = vshrl.u32 %v7992, 16
      %v8094 = vrot.slane %v8092, 6
      %v8095 = vshll.u32 %v7992, 16
      %v8097 = vrot.slane %v8095, 7
      %v8098 = vor.u32 %v8094, %v8097
      %v8099 = vsel %vm1524, %v8090, %v8098
      %v8100 = vrot.slane %v8098, 4
      %v8102 = vshrl.u32 %v7993, 16
      %v8104 = vrot.slane %v8102, 6
      %v8105 = vshll.u32 %v7993, 16
      %v8107 = vrot.slane %v8105, 7
      %v8108 = vor.u32 %v8104, %v8107
      %v8109 = vsel %vm1524, %v8100, %v8108
      %v8110 = vrot.slane %v8108, 4
      %v8112 = vshrl.u32 %v7994, 16
      %v8114 = vrot.slane %v8112, 6
      %v8115 = vshll.u32 %v7994, 16
      %v8117 = vrot.slane %v8115, 7
      %v8118 = vor.u32 %v8114, %v8117
      %v8119 = vsel %vm1524, %v8110, %v8118
      %v8120 = vrot.slane %v8118, 4
      %v8122 = vshrl.u32 %v7995, 16
      %v8124 = vrot.slane %v8122, 6
      %v8125 = vshll.u32 %v7995, 16
      %v8127 = vrot.slane %v8125, 7
      %v8128 = vor.u32 %v8124, %v8127
      %v8129 = vsel %vm1524, %v8120, %v8128
      %v8130 = vrot.slane %v8128, 4
      %v8132 = vshrl.u32 %v7996, 16
      %v8134 = vrot.slane %v8132, 6
      %v8135 = vshll.u32 %v7996, 16
      %v8137 = vrot.slane %v8135, 7
      %v8138 = vor.u32 %v8134, %v8137
      %v8139 = vsel %vm1524, %v8130, %v8138
      %v8140 = vrot.slane %v8138, 4
      %v8142 = vshrl.u32 %v7997, 16
      %v8144 = vrot.slane %v8142, 6
      %v8145 = vshll.u32 %v7997, 16
      %v8147 = vrot.slane %v8145, 7
      %v8148 = vor.u32 %v8144, %v8147
      %v8149 = vsel %vm1524, %v8140, %v8148
      %v8150 = vrot.slane %v8148, 4
      %v8152 = vshrl.u32 %v7998, 16
      %v8154 = vrot.slane %v8152, 6
      %v8155 = vshll.u32 %v7998, 16
      %v8157 = vrot.slane %v8155, 7
      %v8158 = vor.u32 %v8154, %v8157
      %v8159 = vsel %vm1524, %v8150, %v8158
      %v8160 = vrot.slane %v8158, 4
      %v8162 = vshrl.u32 %v7999, 16
      %v8164 = vrot.slane %v8162, 6
      %v8165 = vshll.u32 %v7999, 16
      %v8167 = vrot.slane %v8165, 7
      %v8168 = vor.u32 %v8164, %v8167
      %v8169 = vsel %vm1524, %v8160, %v8168
      %v8170 = vrot.slane %v8168, 4
      %v8172 = vshrl.u32 %v8000, 16
      %v8174 = vrot.slane %v8172, 6
      %v8175 = vshll.u32 %v8000, 16
      %v8177 = vrot.slane %v8175, 7
      %v8178 = vor.u32 %v8174, %v8177
      %v8179 = vsel %vm1524, %v8170, %v8178
      %v8180 = vrot.slane %v8178, 4
      %v8182 = vshrl.u32 %v8001, 16
      %v8184 = vrot.slane %v8182, 6
      %v8185 = vshll.u32 %v8001, 16
      %v8187 = vrot.slane %v8185, 7
      %v8188 = vor.u32 %v8184, %v8187
      %v8189 = vsel %vm1524, %v8180, %v8188
      %8208 = vst [vmem:[#allocation4] sm:$0xf] %v8019
      %8209 = vst [vmem:[#allocation4 + $0x24] sm:$0xf] %v8029
      %8210 = vst [vmem:[#allocation4 + $0x48] sm:$0xf] %v8039
      %8211 = vst [vmem:[#allocation4 + $0x6c] sm:$0xf] %v8049
      %8212 = vst [vmem:[#allocation4 + $0x90] sm:$0xf] %v8059
      %8213 = vst [vmem:[#allocation4 + $0xb4] sm:$0xf] %v8069
      %8214 = vst [vmem:[#allocation4 + $0xd8] sm:$0xf] %v8079
      %8215 = vst [vmem:[#allocation4 + $0xfc] sm:$0xf] %v8089
      %8216 = vst [vmem:[#allocation4 + $0x120] sm:$0xf] %v8099
      %8217 = vst [vmem:[#allocation4 + $0x144] sm:$0xf] %v8109
      %8218 = vst [vmem:[#allocation4 + $0x168] sm:$0xf] %v8119
      %8219 = vst [vmem:[#allocation4 + $0x18c] sm:$0xf] %v8129
      %8220 = vst [vmem:[#allocation4 + $0x1b0] sm:$0xf] %v8139
      %8221 = vst [vmem:[#allocation4 + $0x1d4] sm:$0xf] %v8149
      %8222 = vst [vmem:[#allocation4 + $0x1f8] sm:$0xf] %v8159
      %8223 = vst [vmem:[#allocation4 + $0x21c] sm:$0xf] %v8169
      %8224 = vst [vmem:[#allocation4 + $0x240] sm:$0xf] %v8179
      %8225 = vst [vmem:[#allocation4 + $0x264] sm:$0xf] %v8189
      %v8226 = vld [vmem:[#allocation2 + $0x4c] sm:$0x8]
      %v8227 = vld [vmem:[#allocation2 + $0x50] sm:$0xf]
      %v8228 = vld [vmem:[#allocation2 + $0x54] sm:$0xf]
      %v8229 = vld [vmem:[#allocation2 + $0x58] sm:$0xf]
      %v8230 = vld [vmem:[#allocation2 + $0x5c] sm:$0xf]
      %v8231 = vld [vmem:[#allocation2 + $0x60] sm:$0xf]
      %v8232 = vld [vmem:[#allocation2 + $0x64] sm:$0xf]
      %v8233 = vld [vmem:[#allocation2 + $0x68] sm:$0xf]
      %v8234 = vld [vmem:[#allocation2 + $0x6c] sm:$0xf]
      %v8235 = vld [vmem:[#allocation2 + $0x70] sm:$0xf]
      %v8236 = vld [vmem:[#allocation2 + $0x74] sm:$0xf]
      %v8237 = vld [vmem:[#allocation2 + $0x78] sm:$0xf]
      %v8238 = vld [vmem:[#allocation2 + $0x7c] sm:$0xf]
      %v8239 = vld [vmem:[#allocation2 + $0x80] sm:$0xf]
      %v8240 = vld [vmem:[#allocation2 + $0x84] sm:$0xf]
      %v8241 = vld [vmem:[#allocation2 + $0x88] sm:$0xf]
      %v8242 = vld [vmem:[#allocation2 + $0x8c] sm:$0xf]
      %v8243 = vld [vmem:[#allocation2 + $0x90] sm:$0xf]
      %v8244 = vld [vmem:[#allocation2 + $0x94] sm:$0x7]
      %v8264 = vrot.slane %v8226, 7
      %v8265 = vrot.slane %v8264, 4
      %v8266 = vrot.slane %v8227, 7
      %v8267 = vsel %vm1826, %v8265, %v8266
      %v8268 = vrot.slane %v8266, 4
      %v8269 = vrot.slane %v8228, 7
      %v8270 = vsel %vm1826, %v8268, %v8269
      %v8271 = vrot.slane %v8269, 4
      %v8272 = vrot.slane %v8229, 7
      %v8273 = vsel %vm1826, %v8271, %v8272
      %v8274 = vrot.slane %v8272, 4
      %v8275 = vrot.slane %v8230, 7
      %v8276 = vsel %vm1826, %v8274, %v8275
      %v8277 = vrot.slane %v8275, 4
      %v8278 = vrot.slane %v8231, 7
      %v8279 = vsel %vm1826, %v8277, %v8278
      %v8280 = vrot.slane %v8278, 4
      %v8281 = vrot.slane %v8232, 7
      %v8282 = vsel %vm1826, %v8280, %v8281
      %v8283 = vrot.slane %v8281, 4
      %v8284 = vrot.slane %v8233, 7
      %v8285 = vsel %vm1826, %v8283, %v8284
      %v8286 = vrot.slane %v8284, 4
      %v8287 = vrot.slane %v8234, 7
      %v8288 = vsel %vm1826, %v8286, %v8287
      %v8289 = vrot.slane %v8287, 4
      %v8290 = vrot.slane %v8235, 7
      %v8291 = vsel %vm1826, %v8289, %v8290
      %v8292 = vrot.slane %v8290, 4
      %v8293 = vrot.slane %v8236, 7
      %v8294 = vsel %vm1826, %v8292, %v8293
      %v8295 = vrot.slane %v8293, 4
      %v8296 = vrot.slane %v8237, 7
      %v8297 = vsel %vm1826, %v8295, %v8296
      %v8298 = vrot.slane %v8296, 4
      %v8299 = vrot.slane %v8238, 7
      %v8300 = vsel %vm1826, %v8298, %v8299
      %v8301 = vrot.slane %v8299, 4
      %v8302 = vrot.slane %v8239, 7
      %v8303 = vsel %vm1826, %v8301, %v8302
      %v8304 = vrot.slane %v8302, 4
      %v8305 = vrot.slane %v8240, 7
      %v8306 = vsel %vm1826, %v8304, %v8305
      %v8307 = vrot.slane %v8305, 4
      %v8308 = vrot.slane %v8241, 7
      %v8309 = vsel %vm1826, %v8307, %v8308
      %v8310 = vrot.slane %v8308, 4
      %v8311 = vrot.slane %v8242, 7
      %v8312 = vsel %vm1826, %v8310, %v8311
      %v8313 = vrot.slane %v8311, 4
      %v8314 = vrot.slane %v8243, 7
      %v8315 = vsel %vm1826, %v8313, %v8314
      %v8316 = vrot.slane %v8314, 4
      %v8317 = vrot.slane %v8244, 7
      %v8318 = vsel %vm1826, %v8316, %v8317
      %8337 = vst [vmem:[#allocation4 + $0x4] sm:$0xf] %v8267
      %8338 = vst [vmem:[#allocation4 + $0x28] sm:$0xf] %v8270
      %8339 = vst [vmem:[#allocation4 + $0x4c] sm:$0xf] %v8273
      %8340 = vst [vmem:[#allocation4 + $0x70] sm:$0xf] %v8276
      %8341 = vst [vmem:[#allocation4 + $0x94] sm:$0xf] %v8279
      %8342 = vst [vmem:[#allocation4 + $0xb8] sm:$0xf] %v8282
      %8343 = vst [vmem:[#allocation4 + $0xdc] sm:$0xf] %v8285
      %8344 = vst [vmem:[#allocation4 + $0x100] sm:$0xf] %v8288
      %8345 = vst [vmem:[#allocation4 + $0x124] sm:$0xf] %v8291
      %8346 = vst [vmem:[#allocation4 + $0x148] sm:$0xf] %v8294
      %8347 = vst [vmem:[#allocation4 + $0x16c] sm:$0xf] %v8297
      %8348 = vst [vmem:[#allocation4 + $0x190] sm:$0xf] %v8300
      %8349 = vst [vmem:[#allocation4 + $0x1b4] sm:$0xf] %v8303
      %8350 = vst [vmem:[#allocation4 + $0x1d8] sm:$0xf] %v8306
      %8351 = vst [vmem:[#allocation4 + $0x1fc] sm:$0xf] %v8309
      %8352 = vst [vmem:[#allocation4 + $0x220] sm:$0xf] %v8312
      %8353 = vst [vmem:[#allocation4 + $0x244] sm:$0xf] %v8315
      %8354 = vst [vmem:[#allocation4 + $0x268] sm:$0xf] %v8318
      %v8355 = vld [vmem:[#allocation2 + $0x4c] sm:$0x8]
      %v8356 = vld [vmem:[#allocation2 + $0x50] sm:$0xf]
      %v8357 = vld [vmem:[#allocation2 + $0x54] sm:$0xf]
      %v8358 = vld [vmem:[#allocation2 + $0x58] sm:$0xf]
      %v8359 = vld [vmem:[#allocation2 + $0x5c] sm:$0xf]
      %v8360 = vld [vmem:[#allocation2 + $0x60] sm:$0xf]
      %v8361 = vld [vmem:[#allocation2 + $0x64] sm:$0xf]
      %v8362 = vld [vmem:[#allocation2 + $0x68] sm:$0xf]
      %v8363 = vld [vmem:[#allocation2 + $0x6c] sm:$0xf]
      %v8364 = vld [vmem:[#allocation2 + $0x70] sm:$0xf]
      %v8365 = vld [vmem:[#allocation2 + $0x74] sm:$0xf]
      %v8366 = vld [vmem:[#allocation2 + $0x78] sm:$0xf]
      %v8367 = vld [vmem:[#allocation2 + $0x7c] sm:$0xf]
      %v8368 = vld [vmem:[#allocation2 + $0x80] sm:$0xf]
      %v8369 = vld [vmem:[#allocation2 + $0x84] sm:$0xf]
      %v8370 = vld [vmem:[#allocation2 + $0x88] sm:$0xf]
      %v8371 = vld [vmem:[#allocation2 + $0x8c] sm:$0xf]
      %v8372 = vld [vmem:[#allocation2 + $0x90] sm:$0xf]
      %v8373 = vld [vmem:[#allocation2 + $0x94] sm:$0xf]
      %v8375 = vshrl.u32 %v8355, 16
      %v8377 = vrot.slane %v8375, 7
      %v8378 = vrot.slane %v8377, 4
      %v8380 = vshrl.u32 %v8356, 16
      %v8382 = vrot.slane %v8380, 7
      %v8383 = vshll.u32 %v8356, 16
      %v8385 = vor.u32 %v8382, %v8383
      %v8386 = vsel %vm5031, %v8378, %v8385
      %v8387 = vrot.slane %v8382, 4
      %v8389 = vshrl.u32 %v8357, 16
      %v8391 = vrot.slane %v8389, 7
      %v8392 = vshll.u32 %v8357, 16
      %v8394 = vor.u32 %v8391, %v8392
      %v8395 = vsel %vm5031, %v8387, %v8394
      %v8396 = vrot.slane %v8391, 4
      %v8398 = vshrl.u32 %v8358, 16
      %v8400 = vrot.slane %v8398, 7
      %v8401 = vshll.u32 %v8358, 16
      %v8403 = vor.u32 %v8400, %v8401
      %v8404 = vsel %vm5031, %v8396, %v8403
      %v8405 = vrot.slane %v8400, 4
      %v8407 = vshrl.u32 %v8359, 16
      %v8409 = vrot.slane %v8407, 7
      %v8410 = vshll.u32 %v8359, 16
      %v8412 = vor.u32 %v8409, %v8410
      %v8413 = vsel %vm5031, %v8405, %v8412
      %v8414 = vrot.slane %v8409, 4
      %v8416 = vshrl.u32 %v8360, 16
      %v8418 = vrot.slane %v8416, 7
      %v8419 = vshll.u32 %v8360, 16
      %v8421 = vor.u32 %v8418, %v8419
      %v8422 = vsel %vm5031, %v8414, %v8421
      %v8423 = vrot.slane %v8418, 4
      %v8425 = vshrl.u32 %v8361, 16
      %v8427 = vrot.slane %v8425, 7
      %v8428 = vshll.u32 %v8361, 16
      %v8430 = vor.u32 %v8427, %v8428
      %v8431 = vsel %vm5031, %v8423, %v8430
      %v8432 = vrot.slane %v8427, 4
      %v8434 = vshrl.u32 %v8362, 16
      %v8436 = vrot.slane %v8434, 7
      %v8437 = vshll.u32 %v8362, 16
      %v8439 = vor.u32 %v8436, %v8437
      %v8440 = vsel %vm5031, %v8432, %v8439
      %v8441 = vrot.slane %v8436, 4
      %v8443 = vshrl.u32 %v8363, 16
      %v8445 = vrot.slane %v8443, 7
      %v8446 = vshll.u32 %v8363, 16
      %v8448 = vor.u32 %v8445, %v8446
      %v8449 = vsel %vm5031, %v8441, %v8448
      %v8450 = vrot.slane %v8445, 4
      %v8452 = vshrl.u32 %v8364, 16
      %v8454 = vrot.slane %v8452, 7
      %v8455 = vshll.u32 %v8364, 16
      %v8457 = vor.u32 %v8454, %v8455
      %v8458 = vsel %vm5031, %v8450, %v8457
      %v8459 = vrot.slane %v8454, 4
      %v8461 = vshrl.u32 %v8365, 16
      %v8463 = vrot.slane %v8461, 7
      %v8464 = vshll.u32 %v8365, 16
      %v8466 = vor.u32 %v8463, %v8464
      %v8467 = vsel %vm5031, %v8459, %v8466
      %v8468 = vrot.slane %v8463, 4
      %v8470 = vshrl.u32 %v8366, 16
      %v8472 = vrot.slane %v8470, 7
      %v8473 = vshll.u32 %v8366, 16
      %v8475 = vor.u32 %v8472, %v8473
      %v8476 = vsel %vm5031, %v8468, %v8475
      %v8477 = vrot.slane %v8472, 4
      %v8479 = vshrl.u32 %v8367, 16
      %v8481 = vrot.slane %v8479, 7
      %v8482 = vshll.u32 %v8367, 16
      %v8484 = vor.u32 %v8481, %v8482
      %v8485 = vsel %vm5031, %v8477, %v8484
      %v8486 = vrot.slane %v8481, 4
      %v8488 = vshrl.u32 %v8368, 16
      %v8490 = vrot.slane %v8488, 7
      %v8491 = vshll.u32 %v8368, 16
      %v8493 = vor.u32 %v8490, %v8491
      %v8494 = vsel %vm5031, %v8486, %v8493
      %v8495 = vrot.slane %v8490, 4
      %v8497 = vshrl.u32 %v8369, 16
      %v8499 = vrot.slane %v8497, 7
      %v8500 = vshll.u32 %v8369, 16
      %v8502 = vor.u32 %v8499, %v8500
      %v8503 = vsel %vm5031, %v8495, %v8502
      %v8504 = vrot.slane %v8499, 4
      %v8506 = vshrl.u32 %v8370, 16
      %v8508 = vrot.slane %v8506, 7
      %v8509 = vshll.u32 %v8370, 16
      %v8511 = vor.u32 %v8508, %v8509
      %v8512 = vsel %vm5031, %v8504, %v8511
      %v8513 = vrot.slane %v8508, 4
      %v8515 = vshrl.u32 %v8371, 16
      %v8517 = vrot.slane %v8515, 7
      %v8518 = vshll.u32 %v8371, 16
      %v8520 = vor.u32 %v8517, %v8518
      %v8521 = vsel %vm5031, %v8513, %v8520
      %v8522 = vrot.slane %v8517, 4
      %v8524 = vshrl.u32 %v8372, 16
      %v8526 = vrot.slane %v8524, 7
      %v8527 = vshll.u32 %v8372, 16
      %v8529 = vor.u32 %v8526, %v8527
      %v8530 = vsel %vm5031, %v8522, %v8529
      %v8531 = vrot.slane %v8526, 4
      %v8533 = vshrl.u32 %v8373, 16
      %v8535 = vrot.slane %v8533, 7
      %v8536 = vshll.u32 %v8373, 16
      %v8538 = vor.u32 %v8535, %v8536
      %v8539 = vsel %vm5031, %v8531, %v8538
      %8558 = vst [vmem:[#allocation4 + $0x8] sm:$0xf] %v8386
      %8559 = vst [vmem:[#allocation4 + $0x2c] sm:$0xf] %v8395
      %8560 = vst [vmem:[#allocation4 + $0x50] sm:$0xf] %v8404
      %8561 = vst [vmem:[#allocation4 + $0x74] sm:$0xf] %v8413
      %8562 = vst [vmem:[#allocation4 + $0x98] sm:$0xf] %v8422
      %8563 = vst [vmem:[#allocation4 + $0xbc] sm:$0xf] %v8431
      %8564 = vst [vmem:[#allocation4 + $0xe0] sm:$0xf] %v8440
      %8565 = vst [vmem:[#allocation4 + $0x104] sm:$0xf] %v8449
      %8566 = vst [vmem:[#allocation4 + $0x128] sm:$0xf] %v8458
      %8567 = vst [vmem:[#allocation4 + $0x14c] sm:$0xf] %v8467
      %8568 = vst [vmem:[#allocation4 + $0x170] sm:$0xf] %v8476
      %8569 = vst [vmem:[#allocation4 + $0x194] sm:$0xf] %v8485
      %8570 = vst [vmem:[#allocation4 + $0x1b8] sm:$0xf] %v8494
      %8571 = vst [vmem:[#allocation4 + $0x1dc] sm:$0xf] %v8503
      %8572 = vst [vmem:[#allocation4 + $0x200] sm:$0xf] %v8512
      %8573 = vst [vmem:[#allocation4 + $0x224] sm:$0xf] %v8521
      %8574 = vst [vmem:[#allocation4 + $0x248] sm:$0xf] %v8530
      %8575 = vst [vmem:[#allocation4 + $0x26c] sm:$0xf] %v8539
      %v8576 = vld [vmem:[#allocation2 + $0x54] sm:$0x8]
      %v8577 = vld [vmem:[#allocation2 + $0x58] sm:$0xf]
      %v8578 = vld [vmem:[#allocation2 + $0x5c] sm:$0xf]
      %v8579 = vld [vmem:[#allocation2 + $0x60] sm:$0xf]
      %v8580 = vld [vmem:[#allocation2 + $0x64] sm:$0xf]
      %v8581 = vld [vmem:[#allocation2 + $0x68] sm:$0xf]
      %v8582 = vld [vmem:[#allocation2 + $0x6c] sm:$0xf]
      %v8583 = vld [vmem:[#allocation2 + $0x70] sm:$0xf]
      %v8584 = vld [vmem:[#allocation2 + $0x74] sm:$0xf]
      %v8585 = vld [vmem:[#allocation2 + $0x78] sm:$0xf]
      %v8586 = vld [vmem:[#allocation2 + $0x7c] sm:$0xf]
      %v8587 = vld [vmem:[#allocation2 + $0x80] sm:$0xf]
      %v8588 = vld [vmem:[#allocation2 + $0x84] sm:$0xf]
      %v8589 = vld [vmem:[#allocation2 + $0x88] sm:$0xf]
      %v8590 = vld [vmem:[#allocation2 + $0x8c] sm:$0xf]
      %v8591 = vld [vmem:[#allocation2 + $0x90] sm:$0xf]
      %v8592 = vld [vmem:[#allocation2 + $0x94] sm:$0xf]
      %v8593 = vld [vmem:[#allocation2 + $0x98] sm:$0xf]
      %v8594 = vld [vmem:[#allocation2 + $0x9c] sm:$0xf]
      %v8596 = vshrl.u32 %v8576, 16
      %v8598 = vrot.slane %v8596, 7
      %v8599 = vrot.slane %v8598, 4
      %v8601 = vshrl.u32 %v8577, 16
      %v8603 = vrot.slane %v8601, 7
      %v8604 = vshll.u32 %v8577, 16
      %v8606 = vor.u32 %v8603, %v8604
      %v8607 = vsel %vm5031, %v8599, %v8606
      %v8608 = vrot.slane %v8603, 4
      %v8610 = vshrl.u32 %v8578, 16
      %v8612 = vrot.slane %v8610, 7
      %v8613 = vshll.u32 %v8578, 16
      %v8615 = vor.u32 %v8612, %v8613
      %v8616 = vsel %vm5031, %v8608, %v8615
      %v8617 = vrot.slane %v8612, 4
      %v8619 = vshrl.u32 %v8579, 16
      %v8621 = vrot.slane %v8619, 7
      %v8622 = vshll.u32 %v8579, 16
      %v8624 = vor.u32 %v8621, %v8622
      %v8625 = vsel %vm5031, %v8617, %v8624
      %v8626 = vrot.slane %v8621, 4
      %v8628 = vshrl.u32 %v8580, 16
      %v8630 = vrot.slane %v8628, 7
      %v8631 = vshll.u32 %v8580, 16
      %v8633 = vor.u32 %v8630, %v8631
      %v8634 = vsel %vm5031, %v8626, %v8633
      %v8635 = vrot.slane %v8630, 4
      %v8637 = vshrl.u32 %v8581, 16
      %v8639 = vrot.slane %v8637, 7
      %v8640 = vshll.u32 %v8581, 16
      %v8642 = vor.u32 %v8639, %v8640
      %v8643 = vsel %vm5031, %v8635, %v8642
      %v8644 = vrot.slane %v8639, 4
      %v8646 = vshrl.u32 %v8582, 16
      %v8648 = vrot.slane %v8646, 7
      %v8649 = vshll.u32 %v8582, 16
      %v8651 = vor.u32 %v8648, %v8649
      %v8652 = vsel %vm5031, %v8644, %v8651
      %v8653 = vrot.slane %v8648, 4
      %v8655 = vshrl.u32 %v8583, 16
      %v8657 = vrot.slane %v8655, 7
      %v8658 = vshll.u32 %v8583, 16
      %v8660 = vor.u32 %v8657, %v8658
      %v8661 = vsel %vm5031, %v8653, %v8660
      %v8662 = vrot.slane %v8657, 4
      %v8664 = vshrl.u32 %v8584, 16
      %v8666 = vrot.slane %v8664, 7
      %v8667 = vshll.u32 %v8584, 16
      %v8669 = vor.u32 %v8666, %v8667
      %v8670 = vsel %vm5031, %v8662, %v8669
      %v8671 = vrot.slane %v8666, 4
      %v8673 = vshrl.u32 %v8585, 16
      %v8675 = vrot.slane %v8673, 7
      %v8676 = vshll.u32 %v8585, 16
      %v8678 = vor.u32 %v8675, %v8676
      %v8679 = vsel %vm5031, %v8671, %v8678
      %v8680 = vrot.slane %v8675, 4
      %v8682 = vshrl.u32 %v8586, 16
      %v8684 = vrot.slane %v8682, 7
      %v8685 = vshll.u32 %v8586, 16
      %v8687 = vor.u32 %v8684, %v8685
      %v8688 = vsel %vm5031, %v8680, %v8687
      %v8689 = vrot.slane %v8684, 4
      %v8691 = vshrl.u32 %v8587, 16
      %v8693 = vrot.slane %v8691, 7
      %v8694 = vshll.u32 %v8587, 16
      %v8696 = vor.u32 %v8693, %v8694
      %v8697 = vsel %vm5031, %v8689, %v8696
      %v8698 = vrot.slane %v8693, 4
      %v8700 = vshrl.u32 %v8588, 16
      %v8702 = vrot.slane %v8700, 7
      %v8703 = vshll.u32 %v8588, 16
      %v8705 = vor.u32 %v8702, %v8703
      %v8706 = vsel %vm5031, %v8698, %v8705
      %v8707 = vrot.slane %v8702, 4
      %v8709 = vshrl.u32 %v8589, 16
      %v8711 = vrot.slane %v8709, 7
      %v8712 = vshll.u32 %v8589, 16
      %v8714 = vor.u32 %v8711, %v8712
      %v8715 = vsel %vm5031, %v8707, %v8714
      %v8716 = vrot.slane %v8711, 4
      %v8718 = vshrl.u32 %v8590, 16
      %v8720 = vrot.slane %v8718, 7
      %v8721 = vshll.u32 %v8590, 16
      %v8723 = vor.u32 %v8720, %v8721
      %v8724 = vsel %vm5031, %v8716, %v8723
      %v8725 = vrot.slane %v8720, 4
      %v8727 = vshrl.u32 %v8591, 16
      %v8729 = vrot.slane %v8727, 7
      %v8730 = vshll.u32 %v8591, 16
      %v8732 = vor.u32 %v8729, %v8730
      %v8733 = vsel %vm5031, %v8725, %v8732
      %v8734 = vrot.slane %v8729, 4
      %v8736 = vshrl.u32 %v8592, 16
      %v8738 = vrot.slane %v8736, 7
      %v8739 = vshll.u32 %v8592, 16
      %v8741 = vor.u32 %v8738, %v8739
      %v8742 = vsel %vm5031, %v8734, %v8741
      %v8743 = vrot.slane %v8738, 4
      %v8745 = vshrl.u32 %v8593, 16
      %v8747 = vrot.slane %v8745, 7
      %v8748 = vshll.u32 %v8593, 16
      %v8750 = vor.u32 %v8747, %v8748
      %v8751 = vsel %vm5031, %v8743, %v8750
      %v8752 = vrot.slane %v8747, 4
      %v8754 = vshrl.u32 %v8594, 16
      %v8756 = vrot.slane %v8754, 7
      %v8757 = vshll.u32 %v8594, 16
      %v8759 = vor.u32 %v8756, %v8757
      %v8760 = vsel %vm5031, %v8752, %v8759
      %8779 = vst [vmem:[#allocation4 + $0xc] sm:$0xf] %v8607
      %8780 = vst [vmem:[#allocation4 + $0x30] sm:$0xf] %v8616
      %8781 = vst [vmem:[#allocation4 + $0x54] sm:$0xf] %v8625
      %8782 = vst [vmem:[#allocation4 + $0x78] sm:$0xf] %v8634
      %8783 = vst [vmem:[#allocation4 + $0x9c] sm:$0xf] %v8643
      %8784 = vst [vmem:[#allocation4 + $0xc0] sm:$0xf] %v8652
      %8785 = vst [vmem:[#allocation4 + $0xe4] sm:$0xf] %v8661
      %8786 = vst [vmem:[#allocation4 + $0x108] sm:$0xf] %v8670
      %8787 = vst [vmem:[#allocation4 + $0x12c] sm:$0xf] %v8679
      %8788 = vst [vmem:[#allocation4 + $0x150] sm:$0xf] %v8688
      %8789 = vst [vmem:[#allocation4 + $0x174] sm:$0xf] %v8697
      %8790 = vst [vmem:[#allocation4 + $0x198] sm:$0xf] %v8706
      %8791 = vst [vmem:[#allocation4 + $0x1bc] sm:$0xf] %v8715
      %8792 = vst [vmem:[#allocation4 + $0x1e0] sm:$0xf] %v8724
      %8793 = vst [vmem:[#allocation4 + $0x204] sm:$0xf] %v8733
      %8794 = vst [vmem:[#allocation4 + $0x228] sm:$0xf] %v8742
      %8795 = vst [vmem:[#allocation4 + $0x24c] sm:$0xf] %v8751
      %8796 = vst [vmem:[#allocation4 + $0x270] sm:$0xf] %v8760
      %v8797 = vld [vmem:[#allocation2 + $0x58] sm:$0xf]
      %v8798 = vld [vmem:[#allocation2 + $0x5c] sm:$0xf]
      %v8799 = vld [vmem:[#allocation2 + $0x60] sm:$0xf]
      %v8800 = vld [vmem:[#allocation2 + $0x64] sm:$0xf]
      %v8801 = vld [vmem:[#allocation2 + $0x68] sm:$0xf]
      %v8802 = vld [vmem:[#allocation2 + $0x6c] sm:$0xf]
      %v8803 = vld [vmem:[#allocation2 + $0x70] sm:$0xf]
      %v8804 = vld [vmem:[#allocation2 + $0x74] sm:$0xf]
      %v8805 = vld [vmem:[#allocation2 + $0x78] sm:$0xf]
      %v8806 = vld [vmem:[#allocation2 + $0x7c] sm:$0xf]
      %v8807 = vld [vmem:[#allocation2 + $0x80] sm:$0xf]
      %v8808 = vld [vmem:[#allocation2 + $0x84] sm:$0xf]
      %v8809 = vld [vmem:[#allocation2 + $0x88] sm:$0xf]
      %v8810 = vld [vmem:[#allocation2 + $0x8c] sm:$0xf]
      %v8811 = vld [vmem:[#allocation2 + $0x90] sm:$0xf]
      %v8812 = vld [vmem:[#allocation2 + $0x94] sm:$0xf]
      %v8813 = vld [vmem:[#allocation2 + $0x98] sm:$0xf]
      %v8814 = vld [vmem:[#allocation2 + $0x9c] sm:$0xf]
      %8815 = vst [vmem:[#allocation4 + $0x10] sm:$0xf] %v8797
      %8816 = vst [vmem:[#allocation4 + $0x34] sm:$0xf] %v8798
      %8817 = vst [vmem:[#allocation4 + $0x58] sm:$0xf] %v8799
      %8818 = vst [vmem:[#allocation4 + $0x7c] sm:$0xf] %v8800
      %8819 = vst [vmem:[#allocation4 + $0xa0] sm:$0xf] %v8801
      %8820 = vst [vmem:[#allocation4 + $0xc4] sm:$0xf] %v8802
      %8821 = vst [vmem:[#allocation4 + $0xe8] sm:$0xf] %v8803
      %8822 = vst [vmem:[#allocation4 + $0x10c] sm:$0xf] %v8804
      %8823 = vst [vmem:[#allocation4 + $0x130] sm:$0xf] %v8805
      %8824 = vst [vmem:[#allocation4 + $0x154] sm:$0xf] %v8806
      %8825 = vst [vmem:[#allocation4 + $0x178] sm:$0xf] %v8807
      %8826 = vst [vmem:[#allocation4 + $0x19c] sm:$0xf] %v8808
      %8827 = vst [vmem:[#allocation4 + $0x1c0] sm:$0xf] %v8809
      %8828 = vst [vmem:[#allocation4 + $0x1e4] sm:$0xf] %v8810
      %8829 = vst [vmem:[#allocation4 + $0x208] sm:$0xf] %v8811
      %8830 = vst [vmem:[#allocation4 + $0x22c] sm:$0xf] %v8812
      %8831 = vst [vmem:[#allocation4 + $0x250] sm:$0xf] %v8813
      %8832 = vst [vmem:[#allocation4 + $0x274] sm:$0xf] %v8814
      %v8833 = vld [vmem:[#allocation2 + $0x58] sm:$0xf]
      %v8834 = vld [vmem:[#allocation2 + $0x5c] sm:$0xf]
      %v8835 = vld [vmem:[#allocation2 + $0x60] sm:$0xf]
      %v8836 = vld [vmem:[#allocation2 + $0x64] sm:$0xf]
      %v8837 = vld [vmem:[#allocation2 + $0x68] sm:$0xf]
      %v8838 = vld [vmem:[#allocation2 + $0x6c] sm:$0xf]
      %v8839 = vld [vmem:[#allocation2 + $0x70] sm:$0xf]
      %v8840 = vld [vmem:[#allocation2 + $0x74] sm:$0xf]
      %v8841 = vld [vmem:[#allocation2 + $0x78] sm:$0xf]
      %v8842 = vld [vmem:[#allocation2 + $0x7c] sm:$0xf]
      %v8843 = vld [vmem:[#allocation2 + $0x80] sm:$0xf]
      %v8844 = vld [vmem:[#allocation2 + $0x84] sm:$0xf]
      %v8845 = vld [vmem:[#allocation2 + $0x88] sm:$0xf]
      %v8846 = vld [vmem:[#allocation2 + $0x8c] sm:$0xf]
      %v8847 = vld [vmem:[#allocation2 + $0x90] sm:$0xf]
      %v8848 = vld [vmem:[#allocation2 + $0x94] sm:$0xf]
      %v8849 = vld [vmem:[#allocation2 + $0x98] sm:$0xf]
      %v8850 = vld [vmem:[#allocation2 + $0x9c] sm:$0xf]
      %v8851 = vld [vmem:[#allocation2 + $0xa0] sm:$0x1]
      %v8853 = vshrl.u32 %v8833, 16
      %v8855 = vrot.slane %v8853, 4
      %v8856 = vshll.u32 %v8833, 16
      %v8858 = vrot.slane %v8856, 5
      %v8859 = vor.u32 %v8855, %v8858
      %v8860 = vrot.slane %v8859, 4
      %v8862 = vshll.u32 %v8834, 16
      %v8864 = vrot.slane %v8862, 5
      %v8865 = vsel %vm292, %v8860, %v8864
      %v8866 = vshrl.u32 %v8834, 16
      %v8868 = vrot.slane %v8866, 4
      %v8869 = vor.u32 %v8868, %v8864
      %v8870 = vrot.slane %v8869, 4
      %v8872 = vshll.u32 %v8835, 16
      %v8874 = vrot.slane %v8872, 5
      %v8875 = vsel %vm292, %v8870, %v8874
      %v8876 = vshrl.u32 %v8835, 16
      %v8878 = vrot.slane %v8876, 4
      %v8879 = vor.u32 %v8878, %v8874
      %v8880 = vrot.slane %v8879, 4
      %v8882 = vshll.u32 %v8836, 16
      %v8884 = vrot.slane %v8882, 5
      %v8885 = vsel %vm292, %v8880, %v8884
      %v8886 = vshrl.u32 %v8836, 16
      %v8888 = vrot.slane %v8886, 4
      %v8889 = vor.u32 %v8888, %v8884
      %v8890 = vrot.slane %v8889, 4
      %v8892 = vshll.u32 %v8837, 16
      %v8894 = vrot.slane %v8892, 5
      %v8895 = vsel %vm292, %v8890, %v8894
      %v8896 = vshrl.u32 %v8837, 16
      %v8898 = vrot.slane %v8896, 4
      %v8899 = vor.u32 %v8898, %v8894
      %v8900 = vrot.slane %v8899, 4
      %v8902 = vshll.u32 %v8838, 16
      %v8904 = vrot.slane %v8902, 5
      %v8905 = vsel %vm292, %v8900, %v8904
      %v8906 = vshrl.u32 %v8838, 16
      %v8908 = vrot.slane %v8906, 4
      %v8909 = vor.u32 %v8908, %v8904
      %v8910 = vrot.slane %v8909, 4
      %v8912 = vshll.u32 %v8839, 16
      %v8914 = vrot.slane %v8912, 5
      %v8915 = vsel %vm292, %v8910, %v8914
      %v8916 = vshrl.u32 %v8839, 16
      %v8918 = vrot.slane %v8916, 4
      %v8919 = vor.u32 %v8918, %v8914
      %v8920 = vrot.slane %v8919, 4
      %v8922 = vshll.u32 %v8840, 16
      %v8924 = vrot.slane %v8922, 5
      %v8925 = vsel %vm292, %v8920, %v8924
      %v8926 = vshrl.u32 %v8840, 16
      %v8928 = vrot.slane %v8926, 4
      %v8929 = vor.u32 %v8928, %v8924
      %v8930 = vrot.slane %v8929, 4
      %v8932 = vshll.u32 %v8841, 16
      %v8934 = vrot.slane %v8932, 5
      %v8935 = vsel %vm292, %v8930, %v8934
      %v8936 = vshrl.u32 %v8841, 16
      %v8938 = vrot.slane %v8936, 4
      %v8939 = vor.u32 %v8938, %v8934
      %v8940 = vrot.slane %v8939, 4
      %v8942 = vshll.u32 %v8842, 16
      %v8944 = vrot.slane %v8942, 5
      %v8945 = vsel %vm292, %v8940, %v8944
      %v8946 = vshrl.u32 %v8842, 16
      %v8948 = vrot.slane %v8946, 4
      %v8949 = vor.u32 %v8948, %v8944
      %v8950 = vrot.slane %v8949, 4
      %v8952 = vshll.u32 %v8843, 16
      %v8954 = vrot.slane %v8952, 5
      %v8955 = vsel %vm292, %v8950, %v8954
      %v8956 = vshrl.u32 %v8843, 16
      %v8958 = vrot.slane %v8956, 4
      %v8959 = vor.u32 %v8958, %v8954
      %v8960 = vrot.slane %v8959, 4
      %v8962 = vshll.u32 %v8844, 16
      %v8964 = vrot.slane %v8962, 5
      %v8965 = vsel %vm292, %v8960, %v8964
      %v8966 = vshrl.u32 %v8844, 16
      %v8968 = vrot.slane %v8966, 4
      %v8969 = vor.u32 %v8968, %v8964
      %v8970 = vrot.slane %v8969, 4
      %v8972 = vshll.u32 %v8845, 16
      %v8974 = vrot.slane %v8972, 5
      %v8975 = vsel %vm292, %v8970, %v8974
      %v8976 = vshrl.u32 %v8845, 16
      %v8978 = vrot.slane %v8976, 4
      %v8979 = vor.u32 %v8978, %v8974
      %v8980 = vrot.slane %v8979, 4
      %v8982 = vshll.u32 %v8846, 16
      %v8984 = vrot.slane %v8982, 5
      %v8985 = vsel %vm292, %v8980, %v8984
      %v8986 = vshrl.u32 %v8846, 16
      %v8988 = vrot.slane %v8986, 4
      %v8989 = vor.u32 %v8988, %v8984
      %v8990 = vrot.slane %v8989, 4
      %v8992 = vshll.u32 %v8847, 16
      %v8994 = vrot.slane %v8992, 5
      %v8995 = vsel %vm292, %v8990, %v8994
      %v8996 = vshrl.u32 %v8847, 16
      %v8998 = vrot.slane %v8996, 4
      %v8999 = vor.u32 %v8998, %v8994
      %v9000 = vrot.slane %v8999, 4
      %v9002 = vshll.u32 %v8848, 16
      %v9004 = vrot.slane %v9002, 5
      %v9005 = vsel %vm292, %v9000, %v9004
      %v9006 = vshrl.u32 %v8848, 16
      %v9008 = vrot.slane %v9006, 4
      %v9009 = vor.u32 %v9008, %v9004
      %v9010 = vrot.slane %v9009, 4
      %v9012 = vshll.u32 %v8849, 16
      %v9014 = vrot.slane %v9012, 5
      %v9015 = vsel %vm292, %v9010, %v9014
      %v9016 = vshrl.u32 %v8849, 16
      %v9018 = vrot.slane %v9016, 4
      %v9019 = vor.u32 %v9018, %v9014
      %v9020 = vrot.slane %v9019, 4
      %v9022 = vshll.u32 %v8850, 16
      %v9024 = vrot.slane %v9022, 5
      %v9025 = vsel %vm292, %v9020, %v9024
      %v9026 = vshrl.u32 %v8850, 16
      %v9028 = vrot.slane %v9026, 4
      %v9029 = vor.u32 %v9028, %v9024
      %v9030 = vrot.slane %v9029, 4
      %v9032 = vshll.u32 %v8851, 16
      %v9034 = vrot.slane %v9032, 5
      %v9035 = vsel %vm292, %v9030, %v9034
      %9054 = vst [vmem:[#allocation4 + $0x14] sm:$0xf] %v8865
      %9055 = vst [vmem:[#allocation4 + $0x38] sm:$0xf] %v8875
      %9056 = vst [vmem:[#allocation4 + $0x5c] sm:$0xf] %v8885
      %9057 = vst [vmem:[#allocation4 + $0x80] sm:$0xf] %v8895
      %9058 = vst [vmem:[#allocation4 + $0xa4] sm:$0xf] %v8905
      %9059 = vst [vmem:[#allocation4 + $0xc8] sm:$0xf] %v8915
      %9060 = vst [vmem:[#allocation4 + $0xec] sm:$0xf] %v8925
      %9061 = vst [vmem:[#allocation4 + $0x110] sm:$0xf] %v8935
      %9062 = vst [vmem:[#allocation4 + $0x134] sm:$0xf] %v8945
      %9063 = vst [vmem:[#allocation4 + $0x158] sm:$0xf] %v8955
      %9064 = vst [vmem:[#allocation4 + $0x17c] sm:$0xf] %v8965
      %9065 = vst [vmem:[#allocation4 + $0x1a0] sm:$0xf] %v8975
      %9066 = vst [vmem:[#allocation4 + $0x1c4] sm:$0xf] %v8985
      %9067 = vst [vmem:[#allocation4 + $0x1e8] sm:$0xf] %v8995
      %9068 = vst [vmem:[#allocation4 + $0x20c] sm:$0xf] %v9005
      %9069 = vst [vmem:[#allocation4 + $0x230] sm:$0xf] %v9015
      %9070 = vst [vmem:[#allocation4 + $0x254] sm:$0xf] %v9025
      %9071 = vst [vmem:[#allocation4 + $0x278] sm:$0xf] %v9035
      %v9072 = vld [vmem:[#allocation2 + $0x60] sm:$0xf]
      %v9073 = vld [vmem:[#allocation2 + $0x64] sm:$0xf]
      %v9074 = vld [vmem:[#allocation2 + $0x68] sm:$0xf]
      %v9075 = vld [vmem:[#allocation2 + $0x6c] sm:$0xf]
      %v9076 = vld [vmem:[#allocation2 + $0x70] sm:$0xf]
      %v9077 = vld [vmem:[#allocation2 + $0x74] sm:$0xf]
      %v9078 = vld [vmem:[#allocation2 + $0x78] sm:$0xf]
      %v9079 = vld [vmem:[#allocation2 + $0x7c] sm:$0xf]
      %v9080 = vld [vmem:[#allocation2 + $0x80] sm:$0xf]
      %v9081 = vld [vmem:[#allocation2 + $0x84] sm:$0xf]
      %v9082 = vld [vmem:[#allocation2 + $0x88] sm:$0xf]
      %v9083 = vld [vmem:[#allocation2 + $0x8c] sm:$0xf]
      %v9084 = vld [vmem:[#allocation2 + $0x90] sm:$0xf]
      %v9085 = vld [vmem:[#allocation2 + $0x94] sm:$0xf]
      %v9086 = vld [vmem:[#allocation2 + $0x98] sm:$0xf]
      %v9087 = vld [vmem:[#allocation2 + $0x9c] sm:$0xf]
      %v9088 = vld [vmem:[#allocation2 + $0xa0] sm:$0xf]
      %v9089 = vld [vmem:[#allocation2 + $0xa4] sm:$0xf]
      %v9090 = vld [vmem:[#allocation2 + $0xa8] sm:$0x1]
      %v9092 = vshrl.u32 %v9072, 16
      %v9094 = vrot.slane %v9092, 4
      %v9095 = vshll.u32 %v9072, 16
      %v9097 = vrot.slane %v9095, 5
      %v9098 = vor.u32 %v9094, %v9097
      %v9099 = vrot.slane %v9098, 4
      %v9101 = vshll.u32 %v9073, 16
      %v9103 = vrot.slane %v9101, 5
      %v9104 = vsel %vm292, %v9099, %v9103
      %v9105 = vshrl.u32 %v9073, 16
      %v9107 = vrot.slane %v9105, 4
      %v9108 = vor.u32 %v9107, %v9103
      %v9109 = vrot.slane %v9108, 4
      %v9111 = vshll.u32 %v9074, 16
      %v9113 = vrot.slane %v9111, 5
      %v9114 = vsel %vm292, %v9109, %v9113
      %v9115 = vshrl.u32 %v9074, 16
      %v9117 = vrot.slane %v9115, 4
      %v9118 = vor.u32 %v9117, %v9113
      %v9119 = vrot.slane %v9118, 4
      %v9121 = vshll.u32 %v9075, 16
      %v9123 = vrot.slane %v9121, 5
      %v9124 = vsel %vm292, %v9119, %v9123
      %v9125 = vshrl.u32 %v9075, 16
      %v9127 = vrot.slane %v9125, 4
      %v9128 = vor.u32 %v9127, %v9123
      %v9129 = vrot.slane %v9128, 4
      %v9131 = vshll.u32 %v9076, 16
      %v9133 = vrot.slane %v9131, 5
      %v9134 = vsel %vm292, %v9129, %v9133
      %v9135 = vshrl.u32 %v9076, 16
      %v9137 = vrot.slane %v9135, 4
      %v9138 = vor.u32 %v9137, %v9133
      %v9139 = vrot.slane %v9138, 4
      %v9141 = vshll.u32 %v9077, 16
      %v9143 = vrot.slane %v9141, 5
      %v9144 = vsel %vm292, %v9139, %v9143
      %v9145 = vshrl.u32 %v9077, 16
      %v9147 = vrot.slane %v9145, 4
      %v9148 = vor.u32 %v9147, %v9143
      %v9149 = vrot.slane %v9148, 4
      %v9151 = vshll.u32 %v9078, 16
      %v9153 = vrot.slane %v9151, 5
      %v9154 = vsel %vm292, %v9149, %v9153
      %v9155 = vshrl.u32 %v9078, 16
      %v9157 = vrot.slane %v9155, 4
      %v9158 = vor.u32 %v9157, %v9153
      %v9159 = vrot.slane %v9158, 4
      %v9161 = vshll.u32 %v9079, 16
      %v9163 = vrot.slane %v9161, 5
      %v9164 = vsel %vm292, %v9159, %v9163
      %v9165 = vshrl.u32 %v9079, 16
      %v9167 = vrot.slane %v9165, 4
      %v9168 = vor.u32 %v9167, %v9163
      %v9169 = vrot.slane %v9168, 4
      %v9171 = vshll.u32 %v9080, 16
      %v9173 = vrot.slane %v9171, 5
      %v9174 = vsel %vm292, %v9169, %v9173
      %v9175 = vshrl.u32 %v9080, 16
      %v9177 = vrot.slane %v9175, 4
      %v9178 = vor.u32 %v9177, %v9173
      %v9179 = vrot.slane %v9178, 4
      %v9181 = vshll.u32 %v9081, 16
      %v9183 = vrot.slane %v9181, 5
      %v9184 = vsel %vm292, %v9179, %v9183
      %v9185 = vshrl.u32 %v9081, 16
      %v9187 = vrot.slane %v9185, 4
      %v9188 = vor.u32 %v9187, %v9183
      %v9189 = vrot.slane %v9188, 4
      %v9191 = vshll.u32 %v9082, 16
      %v9193 = vrot.slane %v9191, 5
      %v9194 = vsel %vm292, %v9189, %v9193
      %v9195 = vshrl.u32 %v9082, 16
      %v9197 = vrot.slane %v9195, 4
      %v9198 = vor.u32 %v9197, %v9193
      %v9199 = vrot.slane %v9198, 4
      %v9201 = vshll.u32 %v9083, 16
      %v9203 = vrot.slane %v9201, 5
      %v9204 = vsel %vm292, %v9199, %v9203
      %v9205 = vshrl.u32 %v9083, 16
      %v9207 = vrot.slane %v9205, 4
      %v9208 = vor.u32 %v9207, %v9203
      %v9209 = vrot.slane %v9208, 4
      %v9211 = vshll.u32 %v9084, 16
      %v9213 = vrot.slane %v9211, 5
      %v9214 = vsel %vm292, %v9209, %v9213
      %v9215 = vshrl.u32 %v9084, 16
      %v9217 = vrot.slane %v9215, 4
      %v9218 = vor.u32 %v9217, %v9213
      %v9219 = vrot.slane %v9218, 4
      %v9221 = vshll.u32 %v9085, 16
      %v9223 = vrot.slane %v9221, 5
      %v9224 = vsel %vm292, %v9219, %v9223
      %v9225 = vshrl.u32 %v9085, 16
      %v9227 = vrot.slane %v9225, 4
      %v9228 = vor.u32 %v9227, %v9223
      %v9229 = vrot.slane %v9228, 4
      %v9231 = vshll.u32 %v9086, 16
      %v9233 = vrot.slane %v9231, 5
      %v9234 = vsel %vm292, %v9229, %v9233
      %v9235 = vshrl.u32 %v9086, 16
      %v9237 = vrot.slane %v9235, 4
      %v9238 = vor.u32 %v9237, %v9233
      %v9239 = vrot.slane %v9238, 4
      %v9241 = vshll.u32 %v9087, 16
      %v9243 = vrot.slane %v9241, 5
      %v9244 = vsel %vm292, %v9239, %v9243
      %v9245 = vshrl.u32 %v9087, 16
      %v9247 = vrot.slane %v9245, 4
      %v9248 = vor.u32 %v9247, %v9243
      %v9249 = vrot.slane %v9248, 4
      %v9251 = vshll.u32 %v9088, 16
      %v9253 = vrot.slane %v9251, 5
      %v9254 = vsel %vm292, %v9249, %v9253
      %v9255 = vshrl.u32 %v9088, 16
      %v9257 = vrot.slane %v9255, 4
      %v9258 = vor.u32 %v9257, %v9253
      %v9259 = vrot.slane %v9258, 4
      %v9261 = vshll.u32 %v9089, 16
      %v9263 = vrot.slane %v9261, 5
      %v9264 = vsel %vm292, %v9259, %v9263
      %v9265 = vshrl.u32 %v9089, 16
      %v9267 = vrot.slane %v9265, 4
      %v9268 = vor.u32 %v9267, %v9263
      %v9269 = vrot.slane %v9268, 4
      %v9271 = vshll.u32 %v9090, 16
      %v9273 = vrot.slane %v9271, 5
      %v9274 = vsel %vm292, %v9269, %v9273
      %9293 = vst [vmem:[#allocation4 + $0x18] sm:$0xf] %v9104
      %9294 = vst [vmem:[#allocation4 + $0x3c] sm:$0xf] %v9114
      %9295 = vst [vmem:[#allocation4 + $0x60] sm:$0xf] %v9124
      %9296 = vst [vmem:[#allocation4 + $0x84] sm:$0xf] %v9134
      %9297 = vst [vmem:[#allocation4 + $0xa8] sm:$0xf] %v9144
      %9298 = vst [vmem:[#allocation4 + $0xcc] sm:$0xf] %v9154
      %9299 = vst [vmem:[#allocation4 + $0xf0] sm:$0xf] %v9164
      %9300 = vst [vmem:[#allocation4 + $0x114] sm:$0xf] %v9174
      %9301 = vst [vmem:[#allocation4 + $0x138] sm:$0xf] %v9184
      %9302 = vst [vmem:[#allocation4 + $0x15c] sm:$0xf] %v9194
      %9303 = vst [vmem:[#allocation4 + $0x180] sm:$0xf] %v9204
      %9304 = vst [vmem:[#allocation4 + $0x1a4] sm:$0xf] %v9214
      %9305 = vst [vmem:[#allocation4 + $0x1c8] sm:$0xf] %v9224
      %9306 = vst [vmem:[#allocation4 + $0x1ec] sm:$0xf] %v9234
      %9307 = vst [vmem:[#allocation4 + $0x210] sm:$0xf] %v9244
      %9308 = vst [vmem:[#allocation4 + $0x234] sm:$0xf] %v9254
      %9309 = vst [vmem:[#allocation4 + $0x258] sm:$0xf] %v9264
      %9310 = vst [vmem:[#allocation4 + $0x27c] sm:$0xf] %v9274
      %v9311 = vld [vmem:[#allocation2 + $0x60] sm:$0xe]
      %v9312 = vld [vmem:[#allocation2 + $0x64] sm:$0xf]
      %v9313 = vld [vmem:[#allocation2 + $0x68] sm:$0xf]
      %v9314 = vld [vmem:[#allocation2 + $0x6c] sm:$0xf]
      %v9315 = vld [vmem:[#allocation2 + $0x70] sm:$0xf]
      %v9316 = vld [vmem:[#allocation2 + $0x74] sm:$0xf]
      %v9317 = vld [vmem:[#allocation2 + $0x78] sm:$0xf]
      %v9318 = vld [vmem:[#allocation2 + $0x7c] sm:$0xf]
      %v9319 = vld [vmem:[#allocation2 + $0x80] sm:$0xf]
      %v9320 = vld [vmem:[#allocation2 + $0x84] sm:$0xf]
      %v9321 = vld [vmem:[#allocation2 + $0x88] sm:$0xf]
      %v9322 = vld [vmem:[#allocation2 + $0x8c] sm:$0xf]
      %v9323 = vld [vmem:[#allocation2 + $0x90] sm:$0xf]
      %v9324 = vld [vmem:[#allocation2 + $0x94] sm:$0xf]
      %v9325 = vld [vmem:[#allocation2 + $0x98] sm:$0xf]
      %v9326 = vld [vmem:[#allocation2 + $0x9c] sm:$0xf]
      %v9327 = vld [vmem:[#allocation2 + $0xa0] sm:$0xf]
      %v9328 = vld [vmem:[#allocation2 + $0xa4] sm:$0xf]
      %v9329 = vld [vmem:[#allocation2 + $0xa8] sm:$0x1]
      %v9349 = vrot.slane %v9311, 5
      %v9350 = vrot.slane %v9349, 4
      %v9351 = vrot.slane %v9312, 5
      %v9352 = vsel %vm590, %v9350, %v9351
      %v9353 = vrot.slane %v9351, 4
      %v9354 = vrot.slane %v9313, 5
      %v9355 = vsel %vm590, %v9353, %v9354
      %v9356 = vrot.slane %v9354, 4
      %v9357 = vrot.slane %v9314, 5
      %v9358 = vsel %vm590, %v9356, %v9357
      %v9359 = vrot.slane %v9357, 4
      %v9360 = vrot.slane %v9315, 5
      %v9361 = vsel %vm590, %v9359, %v9360
      %v9362 = vrot.slane %v9360, 4
      %v9363 = vrot.slane %v9316, 5
      %v9364 = vsel %vm590, %v9362, %v9363
      %v9365 = vrot.slane %v9363, 4
      %v9366 = vrot.slane %v9317, 5
      %v9367 = vsel %vm590, %v9365, %v9366
      %v9368 = vrot.slane %v9366, 4
      %v9369 = vrot.slane %v9318, 5
      %v9370 = vsel %vm590, %v9368, %v9369
      %v9371 = vrot.slane %v9369, 4
      %v9372 = vrot.slane %v9319, 5
      %v9373 = vsel %vm590, %v9371, %v9372
      %v9374 = vrot.slane %v9372, 4
      %v9375 = vrot.slane %v9320, 5
      %v9376 = vsel %vm590, %v9374, %v9375
      %v9377 = vrot.slane %v9375, 4
      %v9378 = vrot.slane %v9321, 5
      %v9379 = vsel %vm590, %v9377, %v9378
      %v9380 = vrot.slane %v9378, 4
      %v9381 = vrot.slane %v9322, 5
      %v9382 = vsel %vm590, %v9380, %v9381
      %v9383 = vrot.slane %v9381, 4
      %v9384 = vrot.slane %v9323, 5
      %v9385 = vsel %vm590, %v9383, %v9384
      %v9386 = vrot.slane %v9384, 4
      %v9387 = vrot.slane %v9324, 5
      %v9388 = vsel %vm590, %v9386, %v9387
      %v9389 = vrot.slane %v9387, 4
      %v9390 = vrot.slane %v9325, 5
      %v9391 = vsel %vm590, %v9389, %v9390
      %v9392 = vrot.slane %v9390, 4
      %v9393 = vrot.slane %v9326, 5
      %v9394 = vsel %vm590, %v9392, %v9393
      %v9395 = vrot.slane %v9393, 4
      %v9396 = vrot.slane %v9327, 5
      %v9397 = vsel %vm590, %v9395, %v9396
      %v9398 = vrot.slane %v9396, 4
      %v9399 = vrot.slane %v9328, 5
      %v9400 = vsel %vm590, %v9398, %v9399
      %v9401 = vrot.slane %v9399, 4
      %v9402 = vrot.slane %v9329, 5
      %v9403 = vsel %vm590, %v9401, %v9402
      %9422 = vst [vmem:[#allocation4 + $0x1c] sm:$0xf] %v9352
      %9423 = vst [vmem:[#allocation4 + $0x40] sm:$0xf] %v9355
      %9424 = vst [vmem:[#allocation4 + $0x64] sm:$0xf] %v9358
      %9425 = vst [vmem:[#allocation4 + $0x88] sm:$0xf] %v9361
      %9426 = vst [vmem:[#allocation4 + $0xac] sm:$0xf] %v9364
      %9427 = vst [vmem:[#allocation4 + $0xd0] sm:$0xf] %v9367
      %9428 = vst [vmem:[#allocation4 + $0xf4] sm:$0xf] %v9370
      %9429 = vst [vmem:[#allocation4 + $0x118] sm:$0xf] %v9373
      %9430 = vst [vmem:[#allocation4 + $0x13c] sm:$0xf] %v9376
      %9431 = vst [vmem:[#allocation4 + $0x160] sm:$0xf] %v9379
      %9432 = vst [vmem:[#allocation4 + $0x184] sm:$0xf] %v9382
      %9433 = vst [vmem:[#allocation4 + $0x1a8] sm:$0xf] %v9385
      %9434 = vst [vmem:[#allocation4 + $0x1cc] sm:$0xf] %v9388
      %9435 = vst [vmem:[#allocation4 + $0x1f0] sm:$0xf] %v9391
      %9436 = vst [vmem:[#allocation4 + $0x214] sm:$0xf] %v9394
      %9437 = vst [vmem:[#allocation4 + $0x238] sm:$0xf] %v9397
      %9438 = vst [vmem:[#allocation4 + $0x25c] sm:$0xf] %v9400
      %9439 = vst [vmem:[#allocation4 + $0x280] sm:$0xf] %v9403
      %v9440 = vld [vmem:[#allocation2 + $0x60] sm:$0xe]
      %v9441 = vld [vmem:[#allocation2 + $0x64] sm:$0xf]
      %v9442 = vld [vmem:[#allocation2 + $0x68] sm:$0xf]
      %v9443 = vld [vmem:[#allocation2 + $0x6c] sm:$0xf]
      %v9444 = vld [vmem:[#allocation2 + $0x70] sm:$0xf]
      %v9445 = vld [vmem:[#allocation2 + $0x74] sm:$0xf]
      %v9446 = vld [vmem:[#allocation2 + $0x78] sm:$0xf]
      %v9447 = vld [vmem:[#allocation2 + $0x7c] sm:$0xf]
      %v9448 = vld [vmem:[#allocation2 + $0x80] sm:$0xf]
      %v9449 = vld [vmem:[#allocation2 + $0x84] sm:$0xf]
      %v9450 = vld [vmem:[#allocation2 + $0x88] sm:$0xf]
      %v9451 = vld [vmem:[#allocation2 + $0x8c] sm:$0xf]
      %v9452 = vld [vmem:[#allocation2 + $0x90] sm:$0xf]
      %v9453 = vld [vmem:[#allocation2 + $0x94] sm:$0xf]
      %v9454 = vld [vmem:[#allocation2 + $0x98] sm:$0xf]
      %v9455 = vld [vmem:[#allocation2 + $0x9c] sm:$0xf]
      %v9456 = vld [vmem:[#allocation2 + $0xa0] sm:$0xf]
      %v9457 = vld [vmem:[#allocation2 + $0xa4] sm:$0xf]
      %v9458 = vld [vmem:[#allocation2 + $0xa8] sm:$0x3]
      %v9460 = vshrl.u32 %v9440, 16
      %v9462 = vrot.slane %v9460, 5
      %v9463 = vshll.u32 %v9440, 16
      %v9465 = vrot.slane %v9463, 6
      %v9466 = vor.u32 %v9462, %v9465
      %v9467 = vrot.slane %v9466, 4
      %v9469 = vshrl.u32 %v9441, 16
      %v9471 = vrot.slane %v9469, 5
      %v9472 = vshll.u32 %v9441, 16
      %v9474 = vrot.slane %v9472, 6
      %v9475 = vor.u32 %v9471, %v9474
      %v9476 = vsel %vm906, %v9467, %v9475
      %v9477 = vrot.slane %v9475, 4
      %v9479 = vshrl.u32 %v9442, 16
      %v9481 = vrot.slane %v9479, 5
      %v9482 = vshll.u32 %v9442, 16
      %v9484 = vrot.slane %v9482, 6
      %v9485 = vor.u32 %v9481, %v9484
      %v9486 = vsel %vm906, %v9477, %v9485
      %v9487 = vrot.slane %v9485, 4
      %v9489 = vshrl.u32 %v9443, 16
      %v9491 = vrot.slane %v9489, 5
      %v9492 = vshll.u32 %v9443, 16
      %v9494 = vrot.slane %v9492, 6
      %v9495 = vor.u32 %v9491, %v9494
      %v9496 = vsel %vm906, %v9487, %v9495
      %v9497 = vrot.slane %v9495, 4
      %v9499 = vshrl.u32 %v9444, 16
      %v9501 = vrot.slane %v9499, 5
      %v9502 = vshll.u32 %v9444, 16
      %v9504 = vrot.slane %v9502, 6
      %v9505 = vor.u32 %v9501, %v9504
      %v9506 = vsel %vm906, %v9497, %v9505
      %v9507 = vrot.slane %v9505, 4
      %v9509 = vshrl.u32 %v9445, 16
      %v9511 = vrot.slane %v9509, 5
      %v9512 = vshll.u32 %v9445, 16
      %v9514 = vrot.slane %v9512, 6
      %v9515 = vor.u32 %v9511, %v9514
      %v9516 = vsel %vm906, %v9507, %v9515
      %v9517 = vrot.slane %v9515, 4
      %v9519 = vshrl.u32 %v9446, 16
      %v9521 = vrot.slane %v9519, 5
      %v9522 = vshll.u32 %v9446, 16
      %v9524 = vrot.slane %v9522, 6
      %v9525 = vor.u32 %v9521, %v9524
      %v9526 = vsel %vm906, %v9517, %v9525
      %v9527 = vrot.slane %v9525, 4
      %v9529 = vshrl.u32 %v9447, 16
      %v9531 = vrot.slane %v9529, 5
      %v9532 = vshll.u32 %v9447, 16
      %v9534 = vrot.slane %v9532, 6
      %v9535 = vor.u32 %v9531, %v9534
      %v9536 = vsel %vm906, %v9527, %v9535
      %v9537 = vrot.slane %v9535, 4
      %v9539 = vshrl.u32 %v9448, 16
      %v9541 = vrot.slane %v9539, 5
      %v9542 = vshll.u32 %v9448, 16
      %v9544 = vrot.slane %v9542, 6
      %v9545 = vor.u32 %v9541, %v9544
      %v9546 = vsel %vm906, %v9537, %v9545
      %v9547 = vrot.slane %v9545, 4
      %v9549 = vshrl.u32 %v9449, 16
      %v9551 = vrot.slane %v9549, 5
      %v9552 = vshll.u32 %v9449, 16
      %v9554 = vrot.slane %v9552, 6
      %v9555 = vor.u32 %v9551, %v9554
      %v9556 = vsel %vm906, %v9547, %v9555
      %v9557 = vrot.slane %v9555, 4
      %v9559 = vshrl.u32 %v9450, 16
      %v9561 = vrot.slane %v9559, 5
      %v9562 = vshll.u32 %v9450, 16
      %v9564 = vrot.slane %v9562, 6
      %v9565 = vor.u32 %v9561, %v9564
      %v9566 = vsel %vm906, %v9557, %v9565
      %v9567 = vrot.slane %v9565, 4
      %v9569 = vshrl.u32 %v9451, 16
      %v9571 = vrot.slane %v9569, 5
      %v9572 = vshll.u32 %v9451, 16
      %v9574 = vrot.slane %v9572, 6
      %v9575 = vor.u32 %v9571, %v9574
      %v9576 = vsel %vm906, %v9567, %v9575
      %v9577 = vrot.slane %v9575, 4
      %v9579 = vshrl.u32 %v9452, 16
      %v9581 = vrot.slane %v9579, 5
      %v9582 = vshll.u32 %v9452, 16
      %v9584 = vrot.slane %v9582, 6
      %v9585 = vor.u32 %v9581, %v9584
      %v9586 = vsel %vm906, %v9577, %v9585
      %v9587 = vrot.slane %v9585, 4
      %v9589 = vshrl.u32 %v9453, 16
      %v9591 = vrot.slane %v9589, 5
      %v9592 = vshll.u32 %v9453, 16
      %v9594 = vrot.slane %v9592, 6
      %v9595 = vor.u32 %v9591, %v9594
      %v9596 = vsel %vm906, %v9587, %v9595
      %v9597 = vrot.slane %v9595, 4
      %v9599 = vshrl.u32 %v9454, 16
      %v9601 = vrot.slane %v9599, 5
      %v9602 = vshll.u32 %v9454, 16
      %v9604 = vrot.slane %v9602, 6
      %v9605 = vor.u32 %v9601, %v9604
      %v9606 = vsel %vm906, %v9597, %v9605
      %v9607 = vrot.slane %v9605, 4
      %v9609 = vshrl.u32 %v9455, 16
      %v9611 = vrot.slane %v9609, 5
      %v9612 = vshll.u32 %v9455, 16
      %v9614 = vrot.slane %v9612, 6
      %v9615 = vor.u32 %v9611, %v9614
      %v9616 = vsel %vm906, %v9607, %v9615
      %v9617 = vrot.slane %v9615, 4
      %v9619 = vshrl.u32 %v9456, 16
      %v9621 = vrot.slane %v9619, 5
      %v9622 = vshll.u32 %v9456, 16
      %v9624 = vrot.slane %v9622, 6
      %v9625 = vor.u32 %v9621, %v9624
      %v9626 = vsel %vm906, %v9617, %v9625
      %v9627 = vrot.slane %v9625, 4
      %v9629 = vshrl.u32 %v9457, 16
      %v9631 = vrot.slane %v9629, 5
      %v9632 = vshll.u32 %v9457, 16
      %v9634 = vrot.slane %v9632, 6
      %v9635 = vor.u32 %v9631, %v9634
      %v9636 = vsel %vm906, %v9627, %v9635
      %v9637 = vrot.slane %v9635, 4
      %v9639 = vshrl.u32 %v9458, 16
      %v9641 = vrot.slane %v9639, 5
      %v9642 = vshll.u32 %v9458, 16
      %v9644 = vrot.slane %v9642, 6
      %v9645 = vor.u32 %v9641, %v9644
      %v9646 = vsel %vm906, %v9637, %v9645
      %9665 = vst [vmem:[#allocation4 + $0x20] sm:$0xf] %v9476
      %9666 = vst [vmem:[#allocation4 + $0x44] sm:$0xf] %v9486
      %9667 = vst [vmem:[#allocation4 + $0x68] sm:$0xf] %v9496
      %9668 = vst [vmem:[#allocation4 + $0x8c] sm:$0xf] %v9506
      %9669 = vst [vmem:[#allocation4 + $0xb0] sm:$0xf] %v9516
      %9670 = vst [vmem:[#allocation4 + $0xd4] sm:$0xf] %v9526
      %9671 = vst [vmem:[#allocation4 + $0xf8] sm:$0xf] %v9536
      %9672 = vst [vmem:[#allocation4 + $0x11c] sm:$0xf] %v9546
      %9673 = vst [vmem:[#allocation4 + $0x140] sm:$0xf] %v9556
      %9674 = vst [vmem:[#allocation4 + $0x164] sm:$0xf] %v9566
      %9675 = vst [vmem:[#allocation4 + $0x188] sm:$0xf] %v9576
      %9676 = vst [vmem:[#allocation4 + $0x1ac] sm:$0xf] %v9586
      %9677 = vst [vmem:[#allocation4 + $0x1d0] sm:$0xf] %v9596
      %9678 = vst [vmem:[#allocation4 + $0x1f4] sm:$0xf] %v9606
      %9679 = vst [vmem:[#allocation4 + $0x218] sm:$0xf] %v9616
      %9680 = vst [vmem:[#allocation4 + $0x23c] sm:$0xf] %v9626
      %9681 = vst [vmem:[#allocation4 + $0x260] sm:$0xf] %v9636
      %9682 = vst [vmem:[#allocation4 + $0x284] sm:$0xf] %v9646
      %v9683 = vld [vmem:[#allocation4] sm:$0xff]
      %v9684 = vld [vmem:[#allocation4 + $0x8] sm:$0xff]
      %v9685 = vld [vmem:[#allocation4 + $0x10] sm:$0xff]
      %v9686 = vld [vmem:[#allocation4 + $0x18] sm:$0xff]
      %v9687 = vld [vmem:[#allocation4 + $0x20] sm:$0xf]
      %v9688 = vld [vmem:[#allocation4 + $0x24] sm:$0xff]
      %v9689 = vld [vmem:[#allocation4 + $0x2c] sm:$0xff]
      %v9690 = vld [vmem:[#allocation4 + $0x34] sm:$0xff]
      %v9691 = vld [vmem:[#allocation4 + $0x3c] sm:$0xff]
      %v9692 = vld [vmem:[#allocation4 + $0x44] sm:$0xf]
      %v9693 = vld [vmem:[#allocation4 + $0x48] sm:$0xff]
      %v9694 = vld [vmem:[#allocation4 + $0x50] sm:$0xff]
      %v9695 = vld [vmem:[#allocation4 + $0x58] sm:$0xff]
      %v9696 = vld [vmem:[#allocation4 + $0x60] sm:$0xff]
      %v9697 = vld [vmem:[#allocation4 + $0x68] sm:$0xf]
      %v9698 = vld [vmem:[#allocation4 + $0x6c] sm:$0xff]
      %v9699 = vld [vmem:[#allocation4 + $0x74] sm:$0xff]
      %v9700 = vld [vmem:[#allocation4 + $0x7c] sm:$0xff]
      %v9701 = vld [vmem:[#allocation4 + $0x84] sm:$0xff]
      %v9702 = vld [vmem:[#allocation4 + $0x8c] sm:$0xf]
      %v9703 = vld [vmem:[#allocation4 + $0x90] sm:$0xff]
      %v9704 = vld [vmem:[#allocation4 + $0x98] sm:$0xff]
      %v9705 = vld [vmem:[#allocation4 + $0xa0] sm:$0xff]
      %v9706 = vld [vmem:[#allocation4 + $0xa8] sm:$0xff]
      %v9707 = vld [vmem:[#allocation4 + $0xb0] sm:$0xf]
      %v9708 = vld [vmem:[#allocation4 + $0xb4] sm:$0xff]
      %v9709 = vld [vmem:[#allocation4 + $0xbc] sm:$0xff]
      %v9710 = vld [vmem:[#allocation4 + $0xc4] sm:$0xff]
      %v9711 = vld [vmem:[#allocation4 + $0xcc] sm:$0xff]
      %v9712 = vld [vmem:[#allocation4 + $0xd4] sm:$0xf]
      %v9713 = vld [vmem:[#allocation4 + $0xd8] sm:$0xff]
      %v9714 = vld [vmem:[#allocation4 + $0xe0] sm:$0xff]
      %v9715 = vld [vmem:[#allocation4 + $0xe8] sm:$0xff]
      %v9716 = vld [vmem:[#allocation4 + $0xf0] sm:$0xff]
      %v9717 = vld [vmem:[#allocation4 + $0xf8] sm:$0xf]
      %v9718 = vld [vmem:[#allocation4 + $0xfc] sm:$0xff]
      %v9719 = vld [vmem:[#allocation4 + $0x104] sm:$0xff]
      %v9720 = vld [vmem:[#allocation4 + $0x10c] sm:$0xff]
      %v9721 = vld [vmem:[#allocation4 + $0x114] sm:$0xff]
      %v9722 = vld [vmem:[#allocation4 + $0x11c] sm:$0xf]
      %v9723 = vld [vmem:[#allocation4 + $0x120] sm:$0xff]
      %v9724 = vld [vmem:[#allocation4 + $0x128] sm:$0xff]
      %v9725 = vld [vmem:[#allocation4 + $0x130] sm:$0xff]
      %v9726 = vld [vmem:[#allocation4 + $0x138] sm:$0xff]
      %v9727 = vld [vmem:[#allocation4 + $0x140] sm:$0xf]
      %v9728 = vld [vmem:[#allocation4 + $0x144] sm:$0xff]
      %v9729 = vld [vmem:[#allocation4 + $0x14c] sm:$0xff]
      %v9730 = vld [vmem:[#allocation4 + $0x154] sm:$0xff]
      %v9731 = vld [vmem:[#allocation4 + $0x15c] sm:$0xff]
      %v9732 = vld [vmem:[#allocation4 + $0x164] sm:$0xf]
      %v9733 = vld [vmem:[#allocation4 + $0x168] sm:$0xff]
      %v9734 = vld [vmem:[#allocation4 + $0x170] sm:$0xff]
      %v9735 = vld [vmem:[#allocation4 + $0x178] sm:$0xff]
      %v9736 = vld [vmem:[#allocation4 + $0x180] sm:$0xff]
      %v9737 = vld [vmem:[#allocation4 + $0x188] sm:$0xf]
      %v9738 = vld [vmem:[#allocation4 + $0x18c] sm:$0xff]
      %v9739 = vld [vmem:[#allocation4 + $0x194] sm:$0xff]
      %v9740 = vld [vmem:[#allocation4 + $0x19c] sm:$0xff]
      %v9741 = vld [vmem:[#allocation4 + $0x1a4] sm:$0xff]
      %v9742 = vld [vmem:[#allocation4 + $0x1ac] sm:$0xf]
      %v9743 = vld [vmem:[#allocation4 + $0x1b0] sm:$0xff]
      %v9744 = vld [vmem:[#allocation4 + $0x1b8] sm:$0xff]
      %v9745 = vld [vmem:[#allocation4 + $0x1c0] sm:$0xff]
      %v9746 = vld [vmem:[#allocation4 + $0x1c8] sm:$0xff]
      %v9747 = vld [vmem:[#allocation4 + $0x1d0] sm:$0xf]
      %v9748 = vld [vmem:[#allocation4 + $0x1d4] sm:$0xff]
      %v9749 = vld [vmem:[#allocation4 + $0x1dc] sm:$0xff]
      %v9750 = vld [vmem:[#allocation4 + $0x1e4] sm:$0xff]
      %v9751 = vld [vmem:[#allocation4 + $0x1ec] sm:$0xff]
      %v9752 = vld [vmem:[#allocation4 + $0x1f4] sm:$0xf]
      %v9753 = vld [vmem:[#allocation4 + $0x1f8] sm:$0xff]
      %v9754 = vld [vmem:[#allocation4 + $0x200] sm:$0xff]
      %v9755 = vld [vmem:[#allocation4 + $0x208] sm:$0xff]
      %v9756 = vld [vmem:[#allocation4 + $0x210] sm:$0xff]
      %v9757 = vld [vmem:[#allocation4 + $0x218] sm:$0xf]
      %v9758 = vld [vmem:[#allocation4 + $0x21c] sm:$0xff]
      %v9759 = vld [vmem:[#allocation4 + $0x224] sm:$0xff]
      %v9760 = vld [vmem:[#allocation4 + $0x22c] sm:$0xff]
      %v9761 = vld [vmem:[#allocation4 + $0x234] sm:$0xff]
      %v9762 = vld [vmem:[#allocation4 + $0x23c] sm:$0xf]
      %v9763 = vld [vmem:[#allocation4 + $0x240] sm:$0xff]
      %v9764 = vld [vmem:[#allocation4 + $0x248] sm:$0xff]
      %v9765 = vld [vmem:[#allocation4 + $0x250] sm:$0xff]
      %v9766 = vld [vmem:[#allocation4 + $0x258] sm:$0xff]
      %v9767 = vld [vmem:[#allocation4 + $0x260] sm:$0xf]
      %v9768 = vld [vmem:[#allocation4 + $0x264] sm:$0xff]
      %v9769 = vld [vmem:[#allocation4 + $0x26c] sm:$0xff]
      %v9770 = vld [vmem:[#allocation4 + $0x274] sm:$0xff]
      %v9771 = vld [vmem:[#allocation4 + $0x27c] sm:$0xff]
      %v9772 = vld [vmem:[#allocation4 + $0x284] sm:$0xf]
      %v9773 = vld [vmem:[%s3] sm:$0xf]
      %v9774 = vld [vmem:[%s3 + $0x4] sm:$0xf]
      %v9775 = vld [vmem:[%s3 + $0x8] sm:$0xf]
      %v9776 = vld [vmem:[%s3 + $0xc] sm:$0xf]
      %v9777 = vld [vmem:[%s3 + $0x10] sm:$0xf]
      %v9778 = vld [vmem:[%s3 + $0x14] sm:$0xf]
      %v9779 = vld [vmem:[%s3 + $0x18] sm:$0xf]
      %v9780 = vld [vmem:[%s3 + $0x1c] sm:$0xf]
      %v9781 = vld [vmem:[%s3 + $0x20] sm:$0xf]
      %v9782 = vld [vmem:[%s3 + $0x24] sm:$0xf]
      %v9783 = vld [vmem:[%s3 + $0x28] sm:$0xf]
      %v9784 = vld [vmem:[%s3 + $0x2c] sm:$0xf]
      %v9785 = vld [vmem:[%s3 + $0x30] sm:$0xf]
      %v9786 = vld [vmem:[%s3 + $0x34] sm:$0xf]
      %v9787 = vld [vmem:[%s3 + $0x38] sm:$0xf]
      %v9788 = vld [vmem:[%s3 + $0x3c] sm:$0xf]
      %v9789 = vld [vmem:[%s3 + $0x40] sm:$0xf]
      %v9790 = vld [vmem:[%s3 + $0x44] sm:$0xf]
      %v9791 = vld [vmem:[%s3 + $0x48] sm:$0xf]
      %v9792 = vld [vmem:[%s3 + $0x4c] sm:$0xf]
      %v9793 = vld [vmem:[%s3 + $0x50] sm:$0xf]
      %v9794 = vld [vmem:[%s3 + $0x54] sm:$0xf]
      %v9795 = vld [vmem:[%s3 + $0x58] sm:$0xf]
      %v9796 = vld [vmem:[%s3 + $0x5c] sm:$0xf]
      %v9797 = vld [vmem:[%s3 + $0x60] sm:$0xf]
      %v9798 = vld [vmem:[%s3 + $0x64] sm:$0xf]
      %v9799 = vld [vmem:[%s3 + $0x68] sm:$0xf]
      %v9800 = vld [vmem:[%s3 + $0x6c] sm:$0xf]
      %v9801 = vld [vmem:[%s3 + $0x70] sm:$0xf]
      %v9802 = vld [vmem:[%s3 + $0x74] sm:$0xf]
      %v9803 = vld [vmem:[%s3 + $0x78] sm:$0xf]
      %v9804 = vld [vmem:[%s3 + $0x7c] sm:$0xf]
      %v9805 = vld [vmem:[%s3 + $0x80] sm:$0xf]
      %v9806 = vld [vmem:[%s3 + $0x84] sm:$0xf]
      %v9807 = vld [vmem:[%s3 + $0x88] sm:$0xf]
      %v9808 = vld [vmem:[%s3 + $0x8c] sm:$0xf]
      %v9809 = vld [vmem:[%s3 + $0x90] sm:$0xf]
      %v9810 = vld [vmem:[%s3 + $0x94] sm:$0xf]
      %v9811 = vld [vmem:[%s3 + $0x98] sm:$0xf]
      %v9812 = vld [vmem:[%s3 + $0x9c] sm:$0xf]
      %v9813 = vld [vmem:[%s3 + $0xa0] sm:$0xf]
      %v9814 = vld [vmem:[%s3 + $0xa4] sm:$0xf]
      %v9815 = vld [vmem:[%s3 + $0xa8] sm:$0xf]
      %v9816 = vld [vmem:[%s3 + $0xac] sm:$0xf]
      %v9817 = vld [vmem:[%s3 + $0xb0] sm:$0xf]
      %v9818 = vld [vmem:[%s3 + $0xb4] sm:$0xf]
      %v9819 = vld [vmem:[%s3 + $0xb8] sm:$0xf]
      %v9820 = vld [vmem:[%s3 + $0xbc] sm:$0xf]
      %v9821 = vld [vmem:[%s3 + $0xc0] sm:$0xf]
      %v9822 = vld [vmem:[%s3 + $0xc4] sm:$0xf]
      %v9823 = vld [vmem:[%s3 + $0xc8] sm:$0xf]
      %v9824 = vld [vmem:[%s3 + $0xcc] sm:$0xf]
      %v9825 = vld [vmem:[%s3 + $0xd0] sm:$0xf]
      %v9826 = vld [vmem:[%s3 + $0xd4] sm:$0xf]
      %v9827 = vld [vmem:[%s3 + $0xd8] sm:$0xf]
      %v9828 = vld [vmem:[%s3 + $0xdc] sm:$0xf]
      %v9829 = vld [vmem:[%s3 + $0xe0] sm:$0xf]
      %v9830 = vld [vmem:[%s3 + $0xe4] sm:$0xf]
      %v9831 = vld [vmem:[%s3 + $0xe8] sm:$0xf]
      %v9832 = vld [vmem:[%s3 + $0xec] sm:$0xf]
      %v9833 = vld [vmem:[%s3 + $0xf0] sm:$0xf]
      %v9834 = vld [vmem:[%s3 + $0xf4] sm:$0xf]
      %v9835 = vld [vmem:[%s3 + $0xf8] sm:$0xf]
      %v9836 = vld [vmem:[%s3 + $0xfc] sm:$0xf]
      %v9837 = vld [vmem:[%s3 + $0x100] sm:$0xf]
      %v9838 = vld [vmem:[%s3 + $0x104] sm:$0xf]
      %v9839 = vld [vmem:[%s3 + $0x108] sm:$0xf]
      %v9840 = vld [vmem:[%s3 + $0x10c] sm:$0xf]
      %v9841 = vld [vmem:[%s3 + $0x110] sm:$0xf]
      %v9842 = vld [vmem:[%s3 + $0x114] sm:$0xf]
      %v9843 = vld [vmem:[%s3 + $0x118] sm:$0xf]
      %v9844 = vld [vmem:[%s3 + $0x11c] sm:$0xf]
      %v9845 = vld [vmem:[%s3 + $0x120] sm:$0xf]
      %v9846 = vld [vmem:[%s3 + $0x124] sm:$0xf]
      %v9847 = vld [vmem:[%s3 + $0x128] sm:$0xf]
      %v9848 = vld [vmem:[%s3 + $0x12c] sm:$0xf]
      %v9849 = vld [vmem:[%s3 + $0x130] sm:$0xf]
      %v9850 = vld [vmem:[%s3 + $0x134] sm:$0xf]
      %v9851 = vld [vmem:[%s3 + $0x138] sm:$0xf]
      %v9852 = vld [vmem:[%s3 + $0x13c] sm:$0xf]
      %v9853 = vld [vmem:[%s3 + $0x140] sm:$0xf]
      %v9854 = vld [vmem:[%s3 + $0x144] sm:$0xf]
      %v9855 = vld [vmem:[%s3 + $0x148] sm:$0xf]
      %v9856 = vld [vmem:[%s3 + $0x14c] sm:$0xf]
      %v9857 = vld [vmem:[%s3 + $0x150] sm:$0xf]
      %v9858 = vld [vmem:[%s3 + $0x154] sm:$0xf]
      %v9859 = vld [vmem:[%s3 + $0x158] sm:$0xf]
      %v9860 = vld [vmem:[%s3 + $0x15c] sm:$0xf]
      %v9861 = vld [vmem:[%s3 + $0x160] sm:$0xf]
      %v9862 = vld [vmem:[%s3 + $0x164] sm:$0xf]
      %v9863 = vld [vmem:[%s3 + $0x168] sm:$0xf]
      %v9864 = vld [vmem:[%s3 + $0x16c] sm:$0xf]
      %v9865 = vld [vmem:[%s3 + $0x170] sm:$0xf]
      %v9866 = vld [vmem:[%s3 + $0x174] sm:$0xf]
      %v9867 = vld [vmem:[%s3 + $0x178] sm:$0xf]
      %v9868 = vld [vmem:[%s3 + $0x17c] sm:$0xf]
      %v9869 = vld [vmem:[%s3 + $0x180] sm:$0xf]
      %v9870 = vld [vmem:[%s3 + $0x184] sm:$0xf]
      %v9871 = vld [vmem:[%s3 + $0x188] sm:$0xf]
      %v9872 = vld [vmem:[%s3 + $0x18c] sm:$0xf]
      %v9873 = vld [vmem:[%s3 + $0x190] sm:$0xf]
      %v9874 = vld [vmem:[%s3 + $0x194] sm:$0xf]
      %v9875 = vld [vmem:[%s3 + $0x198] sm:$0xf]
      %v9876 = vld [vmem:[%s3 + $0x19c] sm:$0xf]
      %v9877 = vld [vmem:[%s3 + $0x1a0] sm:$0xf]
      %v9878 = vld [vmem:[%s3 + $0x1a4] sm:$0xf]
      %v9879 = vld [vmem:[%s3 + $0x1a8] sm:$0xf]
      %v9880 = vld [vmem:[%s3 + $0x1ac] sm:$0xf]
      %v9881 = vld [vmem:[%s3 + $0x1b0] sm:$0xf]
      %v9882 = vld [vmem:[%s3 + $0x1b4] sm:$0xf]
      %v9883 = vld [vmem:[%s3 + $0x1b8] sm:$0xf]
      %v9884 = vld [vmem:[%s3 + $0x1bc] sm:$0xf]
      %v9885 = vld [vmem:[%s3 + $0x1c0] sm:$0xf]
      %v9886 = vld [vmem:[%s3 + $0x1c4] sm:$0xf]
      %v9887 = vld [vmem:[%s3 + $0x1c8] sm:$0xf]
      %v9888 = vld [vmem:[%s3 + $0x1cc] sm:$0xf]
      %v9889 = vld [vmem:[%s3 + $0x1d0] sm:$0xf]
      %v9890 = vld [vmem:[%s3 + $0x1d4] sm:$0xf]
      %v9891 = vld [vmem:[%s3 + $0x1d8] sm:$0xf]
      %v9892 = vld [vmem:[%s3 + $0x1dc] sm:$0xf]
      %v9893 = vld [vmem:[%s3 + $0x1e0] sm:$0xf]
      %v9894 = vld [vmem:[%s3 + $0x1e4] sm:$0xf]
      %v9895 = vld [vmem:[%s3 + $0x1e8] sm:$0xf]
      %v9896 = vld [vmem:[%s3 + $0x1ec] sm:$0xf]
      %v9897 = vld [vmem:[%s3 + $0x1f0] sm:$0xf]
      %v9898 = vld [vmem:[%s3 + $0x1f4] sm:$0xf]
      %v9899 = vld [vmem:[%s3 + $0x1f8] sm:$0xf]
      %v9900 = vld [vmem:[%s3 + $0x1fc] sm:$0xf]
      %v9901 = vld [vmem:[%s3 + $0x200] sm:$0xf]
      %v9902 = vld [vmem:[%s3 + $0x204] sm:$0xf]
      %v9903 = vld [vmem:[%s3 + $0x208] sm:$0xf]
      %v9904 = vld [vmem:[%s3 + $0x20c] sm:$0xf]
      %v9905 = vld [vmem:[%s3 + $0x210] sm:$0xf]
      %v9906 = vld [vmem:[%s3 + $0x214] sm:$0xf]
      %v9907 = vld [vmem:[%s3 + $0x218] sm:$0xf]
      %v9908 = vld [vmem:[%s3 + $0x21c] sm:$0xf]
      %v9909 = vld [vmem:[%s3 + $0x220] sm:$0xf]
      %v9910 = vld [vmem:[%s3 + $0x224] sm:$0xf]
      %v9911 = vld [vmem:[%s3 + $0x228] sm:$0xf]
      %v9912 = vld [vmem:[%s3 + $0x22c] sm:$0xf]
      %v9913 = vld [vmem:[%s3 + $0x230] sm:$0xf]
      %v9914 = vld [vmem:[%s3 + $0x234] sm:$0xf]
      %v9915 = vld [vmem:[%s3 + $0x238] sm:$0xf]
      %v9916 = vld [vmem:[%s3 + $0x23c] sm:$0xf]
      %v9917 = vld [vmem:[%s4] sm:$0x1]
      %v9919 = vperm.slane %v9917, 0
      %v10011 = vunpack.c.l.b16 %v9683
      %v10012 = vunpack.c.h.b16 %v9683
      %v10013 = vunpack.c.l.b16 %v9684
      %v10014 = vunpack.c.h.b16 %v9684
      %v10015 = vunpack.c.l.b16 %v9685
      %v10016 = vunpack.c.h.b16 %v9685
      %v10017 = vunpack.c.l.b16 %v9686
      %v10018 = vunpack.c.h.b16 %v9686
      %v10019 = vunpack.c.l.b16 %v9687
      %v10020 = vunpack.c.l.b16 %v9688
      %v10021 = vunpack.c.h.b16 %v9688
      %v10022 = vunpack.c.l.b16 %v9689
      %v10023 = vunpack.c.h.b16 %v9689
      %v10024 = vunpack.c.l.b16 %v9690
      %v10025 = vunpack.c.h.b16 %v9690
      %v10026 = vunpack.c.l.b16 %v9691
      %v10027 = vunpack.c.h.b16 %v9691
      %v10028 = vunpack.c.l.b16 %v9692
      %v10029 = vunpack.c.l.b16 %v9693
      %v10030 = vunpack.c.h.b16 %v9693
      %v10031 = vunpack.c.l.b16 %v9694
      %v10032 = vunpack.c.h.b16 %v9694
      %v10033 = vunpack.c.l.b16 %v9695
      %v10034 = vunpack.c.h.b16 %v9695
      %v10035 = vunpack.c.l.b16 %v9696
      %v10036 = vunpack.c.h.b16 %v9696
      %v10037 = vunpack.c.l.b16 %v9697
      %v10038 = vunpack.c.l.b16 %v9698
      %v10039 = vunpack.c.h.b16 %v9698
      %v10040 = vunpack.c.l.b16 %v9699
      %v10041 = vunpack.c.h.b16 %v9699
      %v10042 = vunpack.c.l.b16 %v9700
      %v10043 = vunpack.c.h.b16 %v9700
      %v10044 = vunpack.c.l.b16 %v9701
      %v10045 = vunpack.c.h.b16 %v9701
      %v10046 = vunpack.c.l.b16 %v9702
      %v10047 = vunpack.c.l.b16 %v9703
      %v10048 = vunpack.c.h.b16 %v9703
      %v10049 = vunpack.c.l.b16 %v9704
      %v10050 = vunpack.c.h.b16 %v9704
      %v10051 = vunpack.c.l.b16 %v9705
      %v10052 = vunpack.c.h.b16 %v9705
      %v10053 = vunpack.c.l.b16 %v9706
      %v10054 = vunpack.c.h.b16 %v9706
      %v10055 = vunpack.c.l.b16 %v9707
      %v10056 = vunpack.c.l.b16 %v9708
      %v10057 = vunpack.c.h.b16 %v9708
      %v10058 = vunpack.c.l.b16 %v9709
      %v10059 = vunpack.c.h.b16 %v9709
      %v10060 = vunpack.c.l.b16 %v9710
      %v10061 = vunpack.c.h.b16 %v9710
      %v10062 = vunpack.c.l.b16 %v9711
      %v10063 = vunpack.c.h.b16 %v9711
      %v10064 = vunpack.c.l.b16 %v9712
      %v10065 = vunpack.c.l.b16 %v9713
      %v10066 = vunpack.c.h.b16 %v9713
      %v10067 = vunpack.c.l.b16 %v9714
      %v10068 = vunpack.c.h.b16 %v9714
      %v10069 = vunpack.c.l.b16 %v9715
      %v10070 = vunpack.c.h.b16 %v9715
      %v10071 = vunpack.c.l.b16 %v9716
      %v10072 = vunpack.c.h.b16 %v9716
      %v10073 = vunpack.c.l.b16 %v9717
      %v10074 = vunpack.c.l.b16 %v9718
      %v10075 = vunpack.c.h.b16 %v9718
      %v10076 = vunpack.c.l.b16 %v9719
      %v10077 = vunpack.c.h.b16 %v9719
      %v10078 = vunpack.c.l.b16 %v9720
      %v10079 = vunpack.c.h.b16 %v9720
      %v10080 = vunpack.c.l.b16 %v9721
      %v10081 = vunpack.c.h.b16 %v9721
      %v10082 = vunpack.c.l.b16 %v9722
      %v10083 = vunpack.c.l.b16 %v9723
      %v10084 = vunpack.c.h.b16 %v9723
      %v10085 = vunpack.c.l.b16 %v9724
      %v10086 = vunpack.c.h.b16 %v9724
      %v10087 = vunpack.c.l.b16 %v9725
      %v10088 = vunpack.c.h.b16 %v9725
      %v10089 = vunpack.c.l.b16 %v9726
      %v10090 = vunpack.c.h.b16 %v9726
      %v10091 = vunpack.c.l.b16 %v9727
      %v10092 = vunpack.c.l.b16 %v9728
      %v10093 = vunpack.c.h.b16 %v9728
      %v10094 = vunpack.c.l.b16 %v9729
      %v10095 = vunpack.c.h.b16 %v9729
      %v10096 = vunpack.c.l.b16 %v9730
      %v10097 = vunpack.c.h.b16 %v9730
      %v10098 = vunpack.c.l.b16 %v9731
      %v10099 = vunpack.c.h.b16 %v9731
      %v10100 = vunpack.c.l.b16 %v9732
      %v10101 = vunpack.c.l.b16 %v9733
      %v10102 = vunpack.c.h.b16 %v9733
      %v10103 = vunpack.c.l.b16 %v9734
      %v10104 = vunpack.c.h.b16 %v9734
      %v10105 = vunpack.c.l.b16 %v9735
      %v10106 = vunpack.c.h.b16 %v9735
      %v10107 = vunpack.c.l.b16 %v9736
      %v10108 = vunpack.c.h.b16 %v9736
      %v10109 = vunpack.c.l.b16 %v9737
      %v10110 = vunpack.c.l.b16 %v9738
      %v10111 = vunpack.c.h.b16 %v9738
      %v10112 = vunpack.c.l.b16 %v9739
      %v10113 = vunpack.c.h.b16 %v9739
      %v10114 = vunpack.c.l.b16 %v9740
      %v10115 = vunpack.c.h.b16 %v9740
      %v10116 = vunpack.c.l.b16 %v9741
      %v10117 = vunpack.c.h.b16 %v9741
      %v10118 = vunpack.c.l.b16 %v9742
      %v10119 = vunpack.c.l.b16 %v9743
      %v10120 = vunpack.c.h.b16 %v9743
      %v10121 = vunpack.c.l.b16 %v9744
      %v10122 = vunpack.c.h.b16 %v9744
      %v10123 = vunpack.c.l.b16 %v9745
      %v10124 = vunpack.c.h.b16 %v9745
      %v10125 = vunpack.c.l.b16 %v9746
      %v10126 = vunpack.c.h.b16 %v9746
      %v10127 = vunpack.c.l.b16 %v9747
      %v10128 = vunpack.c.l.b16 %v9748
      %v10129 = vunpack.c.h.b16 %v9748
      %v10130 = vunpack.c.l.b16 %v9749
      %v10131 = vunpack.c.h.b16 %v9749
      %v10132 = vunpack.c.l.b16 %v9750
      %v10133 = vunpack.c.h.b16 %v9750
      %v10134 = vunpack.c.l.b16 %v9751
      %v10135 = vunpack.c.h.b16 %v9751
      %v10136 = vunpack.c.l.b16 %v9752
      %v10137 = vunpack.c.l.b16 %v9753
      %v10138 = vunpack.c.h.b16 %v9753
      %v10139 = vunpack.c.l.b16 %v9754
      %v10140 = vunpack.c.h.b16 %v9754
      %v10141 = vunpack.c.l.b16 %v9755
      %v10142 = vunpack.c.h.b16 %v9755
      %v10143 = vunpack.c.l.b16 %v9756
      %v10144 = vunpack.c.h.b16 %v9756
      %v10145 = vunpack.c.l.b16 %v9757
      %v10146 = vunpack.c.l.b16 %v9758
      %v10147 = vunpack.c.h.b16 %v9758
      %v10148 = vunpack.c.l.b16 %v9759
      %v10149 = vunpack.c.h.b16 %v9759
      %v10150 = vunpack.c.l.b16 %v9760
      %v10151 = vunpack.c.h.b16 %v9760
      %v10152 = vunpack.c.l.b16 %v9761
      %v10153 = vunpack.c.h.b16 %v9761
      %v10154 = vunpack.c.l.b16 %v9762
      %v10155 = vunpack.c.l.b16 %v9763
      %v10156 = vunpack.c.h.b16 %v9763
      %v10157 = vunpack.c.l.b16 %v9764
      %v10158 = vunpack.c.h.b16 %v9764
      %v10159 = vunpack.c.l.b16 %v9765
      %v10160 = vunpack.c.h.b16 %v9765
      %v10161 = vunpack.c.l.b16 %v9766
      %v10162 = vunpack.c.h.b16 %v9766
      %v10163 = vunpack.c.l.b16 %v9767
      %v10164 = vunpack.c.l.b16 %v9768
      %v10165 = vunpack.c.h.b16 %v9768
      %v10166 = vunpack.c.l.b16 %v9769
      %v10167 = vunpack.c.h.b16 %v9769
      %v10168 = vunpack.c.l.b16 %v9770
      %v10169 = vunpack.c.h.b16 %v9770
      %v10170 = vunpack.c.l.b16 %v9771
      %v10171 = vunpack.c.h.b16 %v9771
      %v10172 = vunpack.c.l.b16 %v9772
      %v10173 = vpack.c.b16 %v10020, %v10011
      %v10174 = vpack.c.b16 %v10021, %v10012
      %v10175 = vpack.c.b16 %v10022, %v10013
      %v10176 = vpack.c.b16 %v10023, %v10014
      %v10177 = vpack.c.b16 %v10024, %v10015
      %v10178 = vpack.c.b16 %v10025, %v10016
      %v10179 = vpack.c.b16 %v10026, %v10017
      %v10180 = vpack.c.b16 %v10027, %v10018
      %v10181 = vpack.c.b16 %v10028, %v10019
      %v10182 = vpack.c.b16 %v10038, %v10029
      %v10183 = vpack.c.b16 %v10039, %v10030
      %v10184 = vpack.c.b16 %v10040, %v10031
      %v10185 = vpack.c.b16 %v10041, %v10032
      %v10186 = vpack.c.b16 %v10042, %v10033
      %v10187 = vpack.c.b16 %v10043, %v10034
      %v10188 = vpack.c.b16 %v10044, %v10035
      %v10189 = vpack.c.b16 %v10045, %v10036
      %v10190 = vpack.c.b16 %v10046, %v10037
      %v10191 = vpack.c.b16 %v10056, %v10047
      %v10192 = vpack.c.b16 %v10057, %v10048
      %v10193 = vpack.c.b16 %v10058, %v10049
      %v10194 = vpack.c.b16 %v10059, %v10050
      %v10195 = vpack.c.b16 %v10060, %v10051
      %v10196 = vpack.c.b16 %v10061, %v10052
      %v10197 = vpack.c.b16 %v10062, %v10053
      %v10198 = vpack.c.b16 %v10063, %v10054
      %v10199 = vpack.c.b16 %v10064, %v10055
      %v10200 = vpack.c.b16 %v10074, %v10065
      %v10201 = vpack.c.b16 %v10075, %v10066
      %v10202 = vpack.c.b16 %v10076, %v10067
      %v10203 = vpack.c.b16 %v10077, %v10068
      %v10204 = vpack.c.b16 %v10078, %v10069
      %v10205 = vpack.c.b16 %v10079, %v10070
      %v10206 = vpack.c.b16 %v10080, %v10071
      %v10207 = vpack.c.b16 %v10081, %v10072
      %v10208 = vpack.c.b16 %v10082, %v10073
      %v10209 = vpack.c.b16 %v10092, %v10083
      %v10210 = vpack.c.b16 %v10093, %v10084
      %v10211 = vpack.c.b16 %v10094, %v10085
      %v10212 = vpack.c.b16 %v10095, %v10086
      %v10213 = vpack.c.b16 %v10096, %v10087
      %v10214 = vpack.c.b16 %v10097, %v10088
      %v10215 = vpack.c.b16 %v10098, %v10089
      %v10216 = vpack.c.b16 %v10099, %v10090
      %v10217 = vpack.c.b16 %v10100, %v10091
      %v10218 = vpack.c.b16 %v10110, %v10101
      %v10219 = vpack.c.b16 %v10111, %v10102
      %v10220 = vpack.c.b16 %v10112, %v10103
      %v10221 = vpack.c.b16 %v10113, %v10104
      %v10222 = vpack.c.b16 %v10114, %v10105
      %v10223 = vpack.c.b16 %v10115, %v10106
      %v10224 = vpack.c.b16 %v10116, %v10107
      %v10225 = vpack.c.b16 %v10117, %v10108
      %v10226 = vpack.c.b16 %v10118, %v10109
      %v10227 = vpack.c.b16 %v10128, %v10119
      %v10228 = vpack.c.b16 %v10129, %v10120
      %v10229 = vpack.c.b16 %v10130, %v10121
      %v10230 = vpack.c.b16 %v10131, %v10122
      %v10231 = vpack.c.b16 %v10132, %v10123
      %v10232 = vpack.c.b16 %v10133, %v10124
      %v10233 = vpack.c.b16 %v10134, %v10125
      %v10234 = vpack.c.b16 %v10135, %v10126
      %v10235 = vpack.c.b16 %v10136, %v10127
      %v10236 = vpack.c.b16 %v10146, %v10137
      %v10237 = vpack.c.b16 %v10147, %v10138
      %v10238 = vpack.c.b16 %v10148, %v10139
      %v10239 = vpack.c.b16 %v10149, %v10140
      %v10240 = vpack.c.b16 %v10150, %v10141
      %v10241 = vpack.c.b16 %v10151, %v10142
      %v10242 = vpack.c.b16 %v10152, %v10143
      %v10243 = vpack.c.b16 %v10153, %v10144
      %v10244 = vpack.c.b16 %v10154, %v10145
      %v10245 = vpack.c.b16 %v10164, %v10155
      %v10246 = vpack.c.b16 %v10165, %v10156
      %v10247 = vpack.c.b16 %v10166, %v10157
      %v10248 = vpack.c.b16 %v10167, %v10158
      %v10249 = vpack.c.b16 %v10168, %v10159
      %v10250 = vpack.c.b16 %v10169, %v10160
      %v10251 = vpack.c.b16 %v10170, %v10161
      %v10252 = vpack.c.b16 %v10171, %v10162
      %v10253 = vpack.c.b16 %v10172, %v10163
      %v10479 = vunpack.c.l.b16 %v9773
      %v10480 = vunpack.c.l.b16 %v9774
      %v10481 = vunpack.c.l.b16 %v9775
      %v10482 = vunpack.c.l.b16 %v9776
      %v10483 = vunpack.c.l.b16 %v9777
      %v10484 = vunpack.c.l.b16 %v9778
      %v10485 = vunpack.c.l.b16 %v9779
      %v10486 = vunpack.c.l.b16 %v9780
      %v10487 = vunpack.c.l.b16 %v9781
      %v10488 = vunpack.c.l.b16 %v9782
      %v10489 = vunpack.c.l.b16 %v9783
      %v10490 = vunpack.c.l.b16 %v9784
      %v10491 = vunpack.c.l.b16 %v9785
      %v10492 = vunpack.c.l.b16 %v9786
      %v10493 = vunpack.c.l.b16 %v9787
      %v10494 = vunpack.c.l.b16 %v9788
      %v10495 = vunpack.c.l.b16 %v9789
      %v10496 = vunpack.c.l.b16 %v9790
      %v10497 = vunpack.c.l.b16 %v9791
      %v10498 = vunpack.c.l.b16 %v9792
      %v10499 = vunpack.c.l.b16 %v9793
      %v10500 = vunpack.c.l.b16 %v9794
      %v10501 = vunpack.c.l.b16 %v9795
      %v10502 = vunpack.c.l.b16 %v9796
      %v10503 = vunpack.c.l.b16 %v9797
      %v10504 = vunpack.c.l.b16 %v9798
      %v10505 = vunpack.c.l.b16 %v9799
      %v10506 = vunpack.c.l.b16 %v9800
      %v10507 = vunpack.c.l.b16 %v9801
      %v10508 = vunpack.c.l.b16 %v9802
      %v10509 = vunpack.c.l.b16 %v9803
      %v10510 = vunpack.c.l.b16 %v9804
      %v10511 = vunpack.c.l.b16 %v9805
      %v10512 = vunpack.c.l.b16 %v9806
      %v10513 = vunpack.c.l.b16 %v9807
      %v10514 = vunpack.c.l.b16 %v9808
      %v10515 = vunpack.c.l.b16 %v9809
      %v10516 = vunpack.c.l.b16 %v9810
      %v10517 = vunpack.c.l.b16 %v9811
      %v10518 = vunpack.c.l.b16 %v9812
      %v10519 = vunpack.c.l.b16 %v9813
      %v10520 = vunpack.c.l.b16 %v9814
      %v10521 = vunpack.c.l.b16 %v9815
      %v10522 = vunpack.c.l.b16 %v9816
      %v10523 = vunpack.c.l.b16 %v9817
      %v10524 = vunpack.c.l.b16 %v9818
      %v10525 = vunpack.c.l.b16 %v9819
      %v10526 = vunpack.c.l.b16 %v9820
      %v10527 = vunpack.c.l.b16 %v9821
      %v10528 = vunpack.c.l.b16 %v9822
      %v10529 = vunpack.c.l.b16 %v9823
      %v10530 = vunpack.c.l.b16 %v9824
      %v10531 = vunpack.c.l.b16 %v9825
      %v10532 = vunpack.c.l.b16 %v9826
      %v10533 = vunpack.c.l.b16 %v9827
      %v10534 = vunpack.c.l.b16 %v9828
      %v10535 = vunpack.c.l.b16 %v9829
      %v10536 = vunpack.c.l.b16 %v9830
      %v10537 = vunpack.c.l.b16 %v9831
      %v10538 = vunpack.c.l.b16 %v9832
      %v10539 = vunpack.c.l.b16 %v9833
      %v10540 = vunpack.c.l.b16 %v9834
      %v10541 = vunpack.c.l.b16 %v9835
      %v10542 = vunpack.c.l.b16 %v9836
      %v10543 = vunpack.c.l.b16 %v9837
      %v10544 = vunpack.c.l.b16 %v9838
      %v10545 = vunpack.c.l.b16 %v9839
      %v10546 = vunpack.c.l.b16 %v9840
      %v10547 = vunpack.c.l.b16 %v9841
      %v10548 = vunpack.c.l.b16 %v9842
      %v10549 = vunpack.c.l.b16 %v9843
      %v10550 = vunpack.c.l.b16 %v9844
      %v10551 = vunpack.c.l.b16 %v9845
      %v10552 = vunpack.c.l.b16 %v9846
      %v10553 = vunpack.c.l.b16 %v9847
      %v10554 = vunpack.c.l.b16 %v9848
      %v10555 = vunpack.c.l.b16 %v9849
      %v10556 = vunpack.c.l.b16 %v9850
      %v10557 = vunpack.c.l.b16 %v9851
      %v10558 = vunpack.c.l.b16 %v9852
      %v10559 = vunpack.c.l.b16 %v9853
      %v10560 = vunpack.c.l.b16 %v9854
      %v10561 = vunpack.c.l.b16 %v9855
      %v10562 = vunpack.c.l.b16 %v9856
      %v10563 = vunpack.c.l.b16 %v9857
      %v10564 = vunpack.c.l.b16 %v9858
      %v10565 = vunpack.c.l.b16 %v9859
      %v10566 = vunpack.c.l.b16 %v9860
      %v10567 = vunpack.c.l.b16 %v9861
      %v10568 = vunpack.c.l.b16 %v9862
      %v10569 = vunpack.c.l.b16 %v9863
      %v10570 = vunpack.c.l.b16 %v9864
      %v10571 = vunpack.c.l.b16 %v9865
      %v10572 = vunpack.c.l.b16 %v9866
      %v10573 = vunpack.c.l.b16 %v9867
      %v10574 = vunpack.c.l.b16 %v9868
      %v10575 = vunpack.c.l.b16 %v9869
      %v10576 = vunpack.c.l.b16 %v9870
      %v10577 = vunpack.c.l.b16 %v9871
      %v10578 = vunpack.c.l.b16 %v9872
      %v10579 = vunpack.c.l.b16 %v9873
      %v10580 = vunpack.c.l.b16 %v9874
      %v10581 = vunpack.c.l.b16 %v9875
      %v10582 = vunpack.c.l.b16 %v9876
      %v10583 = vunpack.c.l.b16 %v9877
      %v10584 = vunpack.c.l.b16 %v9878
      %v10585 = vunpack.c.l.b16 %v9879
      %v10586 = vunpack.c.l.b16 %v9880
      %v10587 = vunpack.c.l.b16 %v9881
      %v10588 = vunpack.c.l.b16 %v9882
      %v10589 = vunpack.c.l.b16 %v9883
      %v10590 = vunpack.c.l.b16 %v9884
      %v10591 = vunpack.c.l.b16 %v9885
      %v10592 = vunpack.c.l.b16 %v9886
      %v10593 = vunpack.c.l.b16 %v9887
      %v10594 = vunpack.c.l.b16 %v9888
      %v10595 = vunpack.c.l.b16 %v9889
      %v10596 = vunpack.c.l.b16 %v9890
      %v10597 = vunpack.c.l.b16 %v9891
      %v10598 = vunpack.c.l.b16 %v9892
      %v10599 = vunpack.c.l.b16 %v9893
      %v10600 = vunpack.c.l.b16 %v9894
      %v10601 = vunpack.c.l.b16 %v9895
      %v10602 = vunpack.c.l.b16 %v9896
      %v10603 = vunpack.c.l.b16 %v9897
      %v10604 = vunpack.c.l.b16 %v9898
      %v10605 = vunpack.c.l.b16 %v9899
      %v10606 = vunpack.c.l.b16 %v9900
      %v10607 = vunpack.c.l.b16 %v9901
      %v10608 = vunpack.c.l.b16 %v9902
      %v10609 = vunpack.c.l.b16 %v9903
      %v10610 = vunpack.c.l.b16 %v9904
      %v10611 = vunpack.c.l.b16 %v9905
      %v10612 = vunpack.c.l.b16 %v9906
      %v10613 = vunpack.c.l.b16 %v9907
      %v10614 = vunpack.c.l.b16 %v9908
      %v10615 = vunpack.c.l.b16 %v9909
      %v10616 = vunpack.c.l.b16 %v9910
      %v10617 = vunpack.c.l.b16 %v9911
      %v10618 = vunpack.c.l.b16 %v9912
      %v10619 = vunpack.c.l.b16 %v9913
      %v10620 = vunpack.c.l.b16 %v9914
      %v10621 = vunpack.c.l.b16 %v9915
      %v10622 = vunpack.c.l.b16 %v9916
      %v10623 = vpack.c.b16 %v10480, %v10479
      %v10624 = vpack.c.b16 %v10482, %v10481
      %v10625 = vpack.c.b16 %v10484, %v10483
      %v10626 = vpack.c.b16 %v10486, %v10485
      %v10627 = vpack.c.b16 %v10488, %v10487
      %v10628 = vpack.c.b16 %v10490, %v10489
      %v10629 = vpack.c.b16 %v10492, %v10491
      %v10630 = vpack.c.b16 %v10494, %v10493
      %v10631 = vpack.c.b16 %v10496, %v10495
      %v10632 = vpack.c.b16 %v10498, %v10497
      %v10633 = vpack.c.b16 %v10500, %v10499
      %v10634 = vpack.c.b16 %v10502, %v10501
      %v10635 = vpack.c.b16 %v10504, %v10503
      %v10636 = vpack.c.b16 %v10506, %v10505
      %v10637 = vpack.c.b16 %v10508, %v10507
      %v10638 = vpack.c.b16 %v10510, %v10509
      %v10639 = vpack.c.b16 %v10512, %v10511
      %v10640 = vpack.c.b16 %v10514, %v10513
      %v10641 = vpack.c.b16 %v10516, %v10515
      %v10642 = vpack.c.b16 %v10518, %v10517
      %v10643 = vpack.c.b16 %v10520, %v10519
      %v10644 = vpack.c.b16 %v10522, %v10521
      %v10645 = vpack.c.b16 %v10524, %v10523
      %v10646 = vpack.c.b16 %v10526, %v10525
      %v10647 = vpack.c.b16 %v10528, %v10527
      %v10648 = vpack.c.b16 %v10530, %v10529
      %v10649 = vpack.c.b16 %v10532, %v10531
      %v10650 = vpack.c.b16 %v10534, %v10533
      %v10651 = vpack.c.b16 %v10536, %v10535
      %v10652 = vpack.c.b16 %v10538, %v10537
      %v10653 = vpack.c.b16 %v10540, %v10539
      %v10654 = vpack.c.b16 %v10542, %v10541
      %v10655 = vpack.c.b16 %v10544, %v10543
      %v10656 = vpack.c.b16 %v10546, %v10545
      %v10657 = vpack.c.b16 %v10548, %v10547
      %v10658 = vpack.c.b16 %v10550, %v10549
      %v10659 = vpack.c.b16 %v10552, %v10551
      %v10660 = vpack.c.b16 %v10554, %v10553
      %v10661 = vpack.c.b16 %v10556, %v10555
      %v10662 = vpack.c.b16 %v10558, %v10557
      %v10663 = vpack.c.b16 %v10560, %v10559
      %v10664 = vpack.c.b16 %v10562, %v10561
      %v10665 = vpack.c.b16 %v10564, %v10563
      %v10666 = vpack.c.b16 %v10566, %v10565
      %v10667 = vpack.c.b16 %v10568, %v10567
      %v10668 = vpack.c.b16 %v10570, %v10569
      %v10669 = vpack.c.b16 %v10572, %v10571
      %v10670 = vpack.c.b16 %v10574, %v10573
      %v10671 = vpack.c.b16 %v10576, %v10575
      %v10672 = vpack.c.b16 %v10578, %v10577
      %v10673 = vpack.c.b16 %v10580, %v10579
      %v10674 = vpack.c.b16 %v10582, %v10581
      %v10675 = vpack.c.b16 %v10584, %v10583
      %v10676 = vpack.c.b16 %v10586, %v10585
      %v10677 = vpack.c.b16 %v10588, %v10587
      %v10678 = vpack.c.b16 %v10590, %v10589
      %v10679 = vpack.c.b16 %v10592, %v10591
      %v10680 = vpack.c.b16 %v10594, %v10593
      %v10681 = vpack.c.b16 %v10596, %v10595
      %v10682 = vpack.c.b16 %v10598, %v10597
      %v10683 = vpack.c.b16 %v10600, %v10599
      %v10684 = vpack.c.b16 %v10602, %v10601
      %v10685 = vpack.c.b16 %v10604, %v10603
      %v10686 = vpack.c.b16 %v10606, %v10605
      %v10687 = vpack.c.b16 %v10608, %v10607
      %v10688 = vpack.c.b16 %v10610, %v10609
      %v10689 = vpack.c.b16 %v10612, %v10611
      %v10690 = vpack.c.b16 %v10614, %v10613
      %v10691 = vpack.c.b16 %v10616, %v10615
      %v10692 = vpack.c.b16 %v10618, %v10617
      %v10693 = vpack.c.b16 %v10620, %v10619
      %v10694 = vpack.c.b16 %v10622, %v10621
      %10767 = vmatpush.bf16.msra.mxu0 %v10630
      %10768 = vmatpush.bf16.msra.mxu0 %v10629
      %10769 = vmatpush.bf16.msra.mxu0 %v10628
      %10770 = vmatpush.bf16.msra.mxu0 %v10627
      %10771 = vmatpush.bf16.msra.mxu0 %v10626
      %10772 = vmatpush.bf16.msra.mxu0 %v10625
      %10773 = vmatpush.bf16.msra.mxu0 %v10624
      %10774 = vmatpush.bf16.msra.mxu0 %v10623
      %10775 = vmatmul.bf16.gmra.mxu0 %v10173
      %v10776 = vpop.f32.mrf.mxu0
      %v10777 = vadd.f32 %v9919, %v10776
      %v10778 = vpop.f32.mrf.mxu0
      %v10779 = vadd.f32 %v9919, %v10778
      %10780 = vmatmul.bf16.gmra.mxu0 %v10182
      %v10781 = vpop.f32.mrf.mxu0
      %v10782 = vadd.f32 %v9919, %v10781
      %v10783 = vpop.f32.mrf.mxu0
      %v10784 = vadd.f32 %v9919, %v10783
      %10785 = vmatmul.bf16.gmra.mxu0 %v10191
      %v10786 = vpop.f32.mrf.mxu0
      %v10787 = vadd.f32 %v9919, %v10786
      %v10788 = vpop.f32.mrf.mxu0
      %v10789 = vadd.f32 %v9919, %v10788
      %10790 = vmatmul.bf16.gmra.mxu0 %v10200
      %v10791 = vpop.f32.mrf.mxu0
      %v10792 = vadd.f32 %v9919, %v10791
      %v10793 = vpop.f32.mrf.mxu0
      %v10794 = vadd.f32 %v9919, %v10793
      %10795 = vmatmul.bf16.gmra.mxu0 %v10209
      %v10796 = vpop.f32.mrf.mxu0
      %v10797 = vadd.f32 %v9919, %v10796
      %v10798 = vpop.f32.mrf.mxu0
      %v10799 = vadd.f32 %v9919, %v10798
      %10800 = vmatmul.bf16.gmra.mxu0 %v10218
      %v10801 = vpop.f32.mrf.mxu0
      %v10802 = vadd.f32 %v9919, %v10801
      %v10803 = vpop.f32.mrf.mxu0
      %v10804 = vadd.f32 %v9919, %v10803
      %10805 = vmatmul.bf16.gmra.mxu0 %v10227
      %v10806 = vpop.f32.mrf.mxu0
      %v10807 = vadd.f32 %v9919, %v10806
      %v10808 = vpop.f32.mrf.mxu0
      %v10809 = vadd.f32 %v9919, %v10808
      %10810 = vmatmul.bf16.gmra.mxu0 %v10236
      %v10811 = vpop.f32.mrf.mxu0
      %v10812 = vadd.f32 %v9919, %v10811
      %v10813 = vpop.f32.mrf.mxu0
      %v10814 = vadd.f32 %v9919, %v10813
      %10815 = vmatmul.bf16.gmra.mxu0 %v10245
      %v10816 = vpop.f32.mrf.mxu0
      %v10817 = vadd.f32 %v9919, %v10816
      %v10818 = vpop.f32.mrf.mxu0
      %v10819 = vadd.f32 %v9919, %v10818
      %10820 = vdwg.mxu0
      %10821 = vmatpush.bf16.msra.mxu0 %v10638
      %10822 = vmatpush.bf16.msra.mxu0 %v10637
      %10823 = vmatpush.bf16.msra.mxu0 %v10636
      %10824 = vmatpush.bf16.msra.mxu0 %v10635
      %10825 = vmatpush.bf16.msra.mxu0 %v10634
      %10826 = vmatpush.bf16.msra.mxu0 %v10633
      %10827 = vmatpush.bf16.msra.mxu0 %v10632
      %10828 = vmatpush.bf16.msra.mxu0 %v10631
      %10829 = vmatmul.bf16.gmra.mxu0 %v10174
      %v10830 = vpop.f32.mrf.mxu0
      %v10831 = vadd.f32 %v10777, %v10830
      %v10832 = vpop.f32.mrf.mxu0
      %v10833 = vadd.f32 %v10779, %v10832
      %10834 = vmatmul.bf16.gmra.mxu0 %v10183
      %v10835 = vpop.f32.mrf.mxu0
      %v10836 = vadd.f32 %v10782, %v10835
      %v10837 = vpop.f32.mrf.mxu0
      %v10838 = vadd.f32 %v10784, %v10837
      %10839 = vmatmul.bf16.gmra.mxu0 %v10192
      %v10840 = vpop.f32.mrf.mxu0
      %v10841 = vadd.f32 %v10787, %v10840
      %v10842 = vpop.f32.mrf.mxu0
      %v10843 = vadd.f32 %v10789, %v10842
      %10844 = vmatmul.bf16.gmra.mxu0 %v10201
      %v10845 = vpop.f32.mrf.mxu0
      %v10846 = vadd.f32 %v10792, %v10845
      %v10847 = vpop.f32.mrf.mxu0
      %v10848 = vadd.f32 %v10794, %v10847
      %10849 = vmatmul.bf16.gmra.mxu0 %v10210
      %v10850 = vpop.f32.mrf.mxu0
      %v10851 = vadd.f32 %v10797, %v10850
      %v10852 = vpop.f32.mrf.mxu0
      %v10853 = vadd.f32 %v10799, %v10852
      %10854 = vmatmul.bf16.gmra.mxu0 %v10219
      %v10855 = vpop.f32.mrf.mxu0
      %v10856 = vadd.f32 %v10802, %v10855
      %v10857 = vpop.f32.mrf.mxu0
      %v10858 = vadd.f32 %v10804, %v10857
      %10859 = vmatmul.bf16.gmra.mxu0 %v10228
      %v10860 = vpop.f32.mrf.mxu0
      %v10861 = vadd.f32 %v10807, %v10860
      %v10862 = vpop.f32.mrf.mxu0
      %v10863 = vadd.f32 %v10809, %v10862
      %10864 = vmatmul.bf16.gmra.mxu0 %v10237
      %v10865 = vpop.f32.mrf.mxu0
      %v10866 = vadd.f32 %v10812, %v10865
      %v10867 = vpop.f32.mrf.mxu0
      %v10868 = vadd.f32 %v10814, %v10867
      %10869 = vmatmul.bf16.gmra.mxu0 %v10246
      %v10870 = vpop.f32.mrf.mxu0
      %v10871 = vadd.f32 %v10817, %v10870
      %v10872 = vpop.f32.mrf.mxu0
      %v10873 = vadd.f32 %v10819, %v10872
      %10874 = vdwg.mxu0
      %10875 = vmatpush.bf16.msra.mxu0 %v10646
      %10876 = vmatpush.bf16.msra.mxu0 %v10645
      %10877 = vmatpush.bf16.msra.mxu0 %v10644
      %10878 = vmatpush.bf16.msra.mxu0 %v10643
      %10879 = vmatpush.bf16.msra.mxu0 %v10642
      %10880 = vmatpush.bf16.msra.mxu0 %v10641
      %10881 = vmatpush.bf16.msra.mxu0 %v10640
      %10882 = vmatpush.bf16.msra.mxu0 %v10639
      %10883 = vmatmul.bf16.gmra.mxu0 %v10175
      %v10884 = vpop.f32.mrf.mxu0
      %v10885 = vadd.f32 %v10831, %v10884
      %v10886 = vpop.f32.mrf.mxu0
      %v10887 = vadd.f32 %v10833, %v10886
      %10888 = vmatmul.bf16.gmra.mxu0 %v10184
      %v10889 = vpop.f32.mrf.mxu0
      %v10890 = vadd.f32 %v10836, %v10889
      %v10891 = vpop.f32.mrf.mxu0
      %v10892 = vadd.f32 %v10838, %v10891
      %10893 = vmatmul.bf16.gmra.mxu0 %v10193
      %v10894 = vpop.f32.mrf.mxu0
      %v10895 = vadd.f32 %v10841, %v10894
      %v10896 = vpop.f32.mrf.mxu0
      %v10897 = vadd.f32 %v10843, %v10896
      %10898 = vmatmul.bf16.gmra.mxu0 %v10202
      %v10899 = vpop.f32.mrf.mxu0
      %v10900 = vadd.f32 %v10846, %v10899
      %v10901 = vpop.f32.mrf.mxu0
      %v10902 = vadd.f32 %v10848, %v10901
      %10903 = vmatmul.bf16.gmra.mxu0 %v10211
      %v10904 = vpop.f32.mrf.mxu0
      %v10905 = vadd.f32 %v10851, %v10904
      %v10906 = vpop.f32.mrf.mxu0
      %v10907 = vadd.f32 %v10853, %v10906
      %10908 = vmatmul.bf16.gmra.mxu0 %v10220
      %v10909 = vpop.f32.mrf.mxu0
      %v10910 = vadd.f32 %v10856, %v10909
      %v10911 = vpop.f32.mrf.mxu0
      %v10912 = vadd.f32 %v10858, %v10911
      %10913 = vmatmul.bf16.gmra.mxu0 %v10229
      %v10914 = vpop.f32.mrf.mxu0
      %v10915 = vadd.f32 %v10861, %v10914
      %v10916 = vpop.f32.mrf.mxu0
      %v10917 = vadd.f32 %v10863, %v10916
      %10918 = vmatmul.bf16.gmra.mxu0 %v10238
      %v10919 = vpop.f32.mrf.mxu0
      %v10920 = vadd.f32 %v10866, %v10919
      %v10921 = vpop.f32.mrf.mxu0
      %v10922 = vadd.f32 %v10868, %v10921
      %10923 = vmatmul.bf16.gmra.mxu0 %v10247
      %v10924 = vpop.f32.mrf.mxu0
      %v10925 = vadd.f32 %v10871, %v10924
      %v10926 = vpop.f32.mrf.mxu0
      %v10927 = vadd.f32 %v10873, %v10926
      %10928 = vdwg.mxu0
      %10929 = vmatpush.bf16.msra.mxu0 %v10654
      %10930 = vmatpush.bf16.msra.mxu0 %v10653
      %10931 = vmatpush.bf16.msra.mxu0 %v10652
      %10932 = vmatpush.bf16.msra.mxu0 %v10651
      %10933 = vmatpush.bf16.msra.mxu0 %v10650
      %10934 = vmatpush.bf16.msra.mxu0 %v10649
      %10935 = vmatpush.bf16.msra.mxu0 %v10648
      %10936 = vmatpush.bf16.msra.mxu0 %v10647
      %10937 = vmatmul.bf16.gmra.mxu0 %v10176
      %v10938 = vpop.f32.mrf.mxu0
      %v10939 = vadd.f32 %v10885, %v10938
      %v10940 = vpop.f32.mrf.mxu0
      %v10941 = vadd.f32 %v10887, %v10940
      %10942 = vmatmul.bf16.gmra.mxu0 %v10185
      %v10943 = vpop.f32.mrf.mxu0
      %v10944 = vadd.f32 %v10890, %v10943
      %v10945 = vpop.f32.mrf.mxu0
      %v10946 = vadd.f32 %v10892, %v10945
      %10947 = vmatmul.bf16.gmra.mxu0 %v10194
      %v10948 = vpop.f32.mrf.mxu0
      %v10949 = vadd.f32 %v10895, %v10948
      %v10950 = vpop.f32.mrf.mxu0
      %v10951 = vadd.f32 %v10897, %v10950
      %10952 = vmatmul.bf16.gmra.mxu0 %v10203
      %v10953 = vpop.f32.mrf.mxu0
      %v10954 = vadd.f32 %v10900, %v10953
      %v10955 = vpop.f32.mrf.mxu0
      %v10956 = vadd.f32 %v10902, %v10955
      %10957 = vmatmul.bf16.gmra.mxu0 %v10212
      %v10958 = vpop.f32.mrf.mxu0
      %v10959 = vadd.f32 %v10905, %v10958
      %v10960 = vpop.f32.mrf.mxu0
      %v10961 = vadd.f32 %v10907, %v10960
      %10962 = vmatmul.bf16.gmra.mxu0 %v10221
      %v10963 = vpop.f32.mrf.mxu0
      %v10964 = vadd.f32 %v10910, %v10963
      %v10965 = vpop.f32.mrf.mxu0
      %v10966 = vadd.f32 %v10912, %v10965
      %10967 = vmatmul.bf16.gmra.mxu0 %v10230
      %v10968 = vpop.f32.mrf.mxu0
      %v10969 = vadd.f32 %v10915, %v10968
      %v10970 = vpop.f32.mrf.mxu0
      %v10971 = vadd.f32 %v10917, %v10970
      %10972 = vmatmul.bf16.gmra.mxu0 %v10239
      %v10973 = vpop.f32.mrf.mxu0
      %v10974 = vadd.f32 %v10920, %v10973
      %v10975 = vpop.f32.mrf.mxu0
      %v10976 = vadd.f32 %v10922, %v10975
      %10977 = vmatmul.bf16.gmra.mxu0 %v10248
      %v10978 = vpop.f32.mrf.mxu0
      %v10979 = vadd.f32 %v10925, %v10978
      %v10980 = vpop.f32.mrf.mxu0
      %v10981 = vadd.f32 %v10927, %v10980
      %10982 = vdwg.mxu0
      %10983 = vmatpush.bf16.msra.mxu0 %v10662
      %10984 = vmatpush.bf16.msra.mxu0 %v10661
      %10985 = vmatpush.bf16.msra.mxu0 %v10660
      %10986 = vmatpush.bf16.msra.mxu0 %v10659
      %10987 = vmatpush.bf16.msra.mxu0 %v10658
      %10988 = vmatpush.bf16.msra.mxu0 %v10657
      %10989 = vmatpush.bf16.msra.mxu0 %v10656
      %10990 = vmatpush.bf16.msra.mxu0 %v10655
      %10991 = vmatmul.bf16.gmra.mxu0 %v10177
      %v10992 = vpop.f32.mrf.mxu0
      %v10993 = vadd.f32 %v10939, %v10992
      %v10994 = vpop.f32.mrf.mxu0
      %v10995 = vadd.f32 %v10941, %v10994
      %10996 = vmatmul.bf16.gmra.mxu0 %v10186
      %v10997 = vpop.f32.mrf.mxu0
      %v10998 = vadd.f32 %v10944, %v10997
      %v10999 = vpop.f32.mrf.mxu0
      %v11000 = vadd.f32 %v10946, %v10999
      %11001 = vmatmul.bf16.gmra.mxu0 %v10195
      %v11002 = vpop.f32.mrf.mxu0
      %v11003 = vadd.f32 %v10949, %v11002
      %v11004 = vpop.f32.mrf.mxu0
      %v11005 = vadd.f32 %v10951, %v11004
      %11006 = vmatmul.bf16.gmra.mxu0 %v10204
      %v11007 = vpop.f32.mrf.mxu0
      %v11008 = vadd.f32 %v10954, %v11007
      %v11009 = vpop.f32.mrf.mxu0
      %v11010 = vadd.f32 %v10956, %v11009
      %11011 = vmatmul.bf16.gmra.mxu0 %v10213
      %v11012 = vpop.f32.mrf.mxu0
      %v11013 = vadd.f32 %v10959, %v11012
      %v11014 = vpop.f32.mrf.mxu0
      %v11015 = vadd.f32 %v10961, %v11014
      %11016 = vmatmul.bf16.gmra.mxu0 %v10222
      %v11017 = vpop.f32.mrf.mxu0
      %v11018 = vadd.f32 %v10964, %v11017
      %v11019 = vpop.f32.mrf.mxu0
      %v11020 = vadd.f32 %v10966, %v11019
      %11021 = vmatmul.bf16.gmra.mxu0 %v10231
      %v11022 = vpop.f32.mrf.mxu0
      %v11023 = vadd.f32 %v10969, %v11022
      %v11024 = vpop.f32.mrf.mxu0
      %v11025 = vadd.f32 %v10971, %v11024
      %11026 = vmatmul.bf16.gmra.mxu0 %v10240
      %v11027 = vpop.f32.mrf.mxu0
      %v11028 = vadd.f32 %v10974, %v11027
      %v11029 = vpop.f32.mrf.mxu0
      %v11030 = vadd.f32 %v10976, %v11029
      %11031 = vmatmul.bf16.gmra.mxu0 %v10249
      %v11032 = vpop.f32.mrf.mxu0
      %v11033 = vadd.f32 %v10979, %v11032
      %v11034 = vpop.f32.mrf.mxu0
      %v11035 = vadd.f32 %v10981, %v11034
      %11036 = vdwg.mxu0
      %11037 = vmatpush.bf16.msra.mxu0 %v10670
      %11038 = vmatpush.bf16.msra.mxu0 %v10669
      %11039 = vmatpush.bf16.msra.mxu0 %v10668
      %11040 = vmatpush.bf16.msra.mxu0 %v10667
      %11041 = vmatpush.bf16.msra.mxu0 %v10666
      %11042 = vmatpush.bf16.msra.mxu0 %v10665
      %11043 = vmatpush.bf16.msra.mxu0 %v10664
      %11044 = vmatpush.bf16.msra.mxu0 %v10663
      %11045 = vmatmul.bf16.gmra.mxu0 %v10178
      %v11046 = vpop.f32.mrf.mxu0
      %v11047 = vadd.f32 %v10993, %v11046
      %v11048 = vpop.f32.mrf.mxu0
      %v11049 = vadd.f32 %v10995, %v11048
      %11050 = vmatmul.bf16.gmra.mxu0 %v10187
      %v11051 = vpop.f32.mrf.mxu0
      %v11052 = vadd.f32 %v10998, %v11051
      %v11053 = vpop.f32.mrf.mxu0
      %v11054 = vadd.f32 %v11000, %v11053
      %11055 = vmatmul.bf16.gmra.mxu0 %v10196
      %v11056 = vpop.f32.mrf.mxu0
      %v11057 = vadd.f32 %v11003, %v11056
      %v11058 = vpop.f32.mrf.mxu0
      %v11059 = vadd.f32 %v11005, %v11058
      %11060 = vmatmul.bf16.gmra.mxu0 %v10205
      %v11061 = vpop.f32.mrf.mxu0
      %v11062 = vadd.f32 %v11008, %v11061
      %v11063 = vpop.f32.mrf.mxu0
      %v11064 = vadd.f32 %v11010, %v11063
      %11065 = vmatmul.bf16.gmra.mxu0 %v10214
      %v11066 = vpop.f32.mrf.mxu0
      %v11067 = vadd.f32 %v11013, %v11066
      %v11068 = vpop.f32.mrf.mxu0
      %v11069 = vadd.f32 %v11015, %v11068
      %11070 = vmatmul.bf16.gmra.mxu0 %v10223
      %v11071 = vpop.f32.mrf.mxu0
      %v11072 = vadd.f32 %v11018, %v11071
      %v11073 = vpop.f32.mrf.mxu0
      %v11074 = vadd.f32 %v11020, %v11073
      %11075 = vmatmul.bf16.gmra.mxu0 %v10232
      %v11076 = vpop.f32.mrf.mxu0
      %v11077 = vadd.f32 %v11023, %v11076
      %v11078 = vpop.f32.mrf.mxu0
      %v11079 = vadd.f32 %v11025, %v11078
      %11080 = vmatmul.bf16.gmra.mxu0 %v10241
      %v11081 = vpop.f32.mrf.mxu0
      %v11082 = vadd.f32 %v11028, %v11081
      %v11083 = vpop.f32.mrf.mxu0
      %v11084 = vadd.f32 %v11030, %v11083
      %11085 = vmatmul.bf16.gmra.mxu0 %v10250
      %v11086 = vpop.f32.mrf.mxu0
      %v11087 = vadd.f32 %v11033, %v11086
      %v11088 = vpop.f32.mrf.mxu0
      %v11089 = vadd.f32 %v11035, %v11088
      %11090 = vdwg.mxu0
      %11091 = vmatpush.bf16.msra.mxu0 %v10678
      %11092 = vmatpush.bf16.msra.mxu0 %v10677
      %11093 = vmatpush.bf16.msra.mxu0 %v10676
      %11094 = vmatpush.bf16.msra.mxu0 %v10675
      %11095 = vmatpush.bf16.msra.mxu0 %v10674
      %11096 = vmatpush.bf16.msra.mxu0 %v10673
      %11097 = vmatpush.bf16.msra.mxu0 %v10672
      %11098 = vmatpush.bf16.msra.mxu0 %v10671
      %11099 = vmatmul.bf16.gmra.mxu0 %v10179
      %v11100 = vpop.f32.mrf.mxu0
      %v11101 = vadd.f32 %v11047, %v11100
      %v11102 = vpop.f32.mrf.mxu0
      %v11103 = vadd.f32 %v11049, %v11102
      %11104 = vmatmul.bf16.gmra.mxu0 %v10188
      %v11105 = vpop.f32.mrf.mxu0
      %v11106 = vadd.f32 %v11052, %v11105
      %v11107 = vpop.f32.mrf.mxu0
      %v11108 = vadd.f32 %v11054, %v11107
      %11109 = vmatmul.bf16.gmra.mxu0 %v10197
      %v11110 = vpop.f32.mrf.mxu0
      %v11111 = vadd.f32 %v11057, %v11110
      %v11112 = vpop.f32.mrf.mxu0
      %v11113 = vadd.f32 %v11059, %v11112
      %11114 = vmatmul.bf16.gmra.mxu0 %v10206
      %v11115 = vpop.f32.mrf.mxu0
      %v11116 = vadd.f32 %v11062, %v11115
      %v11117 = vpop.f32.mrf.mxu0
      %v11118 = vadd.f32 %v11064, %v11117
      %11119 = vmatmul.bf16.gmra.mxu0 %v10215
      %v11120 = vpop.f32.mrf.mxu0
      %v11121 = vadd.f32 %v11067, %v11120
      %v11122 = vpop.f32.mrf.mxu0
      %v11123 = vadd.f32 %v11069, %v11122
      %11124 = vmatmul.bf16.gmra.mxu0 %v10224
      %v11125 = vpop.f32.mrf.mxu0
      %v11126 = vadd.f32 %v11072, %v11125
      %v11127 = vpop.f32.mrf.mxu0
      %v11128 = vadd.f32 %v11074, %v11127
      %11129 = vmatmul.bf16.gmra.mxu0 %v10233
      %v11130 = vpop.f32.mrf.mxu0
      %v11131 = vadd.f32 %v11077, %v11130
      %v11132 = vpop.f32.mrf.mxu0
      %v11133 = vadd.f32 %v11079, %v11132
      %11134 = vmatmul.bf16.gmra.mxu0 %v10242
      %v11135 = vpop.f32.mrf.mxu0
      %v11136 = vadd.f32 %v11082, %v11135
      %v11137 = vpop.f32.mrf.mxu0
      %v11138 = vadd.f32 %v11084, %v11137
      %11139 = vmatmul.bf16.gmra.mxu0 %v10251
      %v11140 = vpop.f32.mrf.mxu0
      %v11141 = vadd.f32 %v11087, %v11140
      %v11142 = vpop.f32.mrf.mxu0
      %v11143 = vadd.f32 %v11089, %v11142
      %11144 = vdwg.mxu0
      %11145 = vmatpush.bf16.msra.mxu0 %v10686
      %11146 = vmatpush.bf16.msra.mxu0 %v10685
      %11147 = vmatpush.bf16.msra.mxu0 %v10684
      %11148 = vmatpush.bf16.msra.mxu0 %v10683
      %11149 = vmatpush.bf16.msra.mxu0 %v10682
      %11150 = vmatpush.bf16.msra.mxu0 %v10681
      %11151 = vmatpush.bf16.msra.mxu0 %v10680
      %11152 = vmatpush.bf16.msra.mxu0 %v10679
      %11153 = vmatmul.bf16.gmra.mxu0 %v10180
      %v11154 = vpop.f32.mrf.mxu0
      %v11155 = vadd.f32 %v11101, %v11154
      %v11156 = vpop.f32.mrf.mxu0
      %v11157 = vadd.f32 %v11103, %v11156
      %11158 = vmatmul.bf16.gmra.mxu0 %v10189
      %v11159 = vpop.f32.mrf.mxu0
      %v11160 = vadd.f32 %v11106, %v11159
      %v11161 = vpop.f32.mrf.mxu0
      %v11162 = vadd.f32 %v11108, %v11161
      %11163 = vmatmul.bf16.gmra.mxu0 %v10198
      %v11164 = vpop.f32.mrf.mxu0
      %v11165 = vadd.f32 %v11111, %v11164
      %v11166 = vpop.f32.mrf.mxu0
      %v11167 = vadd.f32 %v11113, %v11166
      %11168 = vmatmul.bf16.gmra.mxu0 %v10207
      %v11169 = vpop.f32.mrf.mxu0
      %v11170 = vadd.f32 %v11116, %v11169
      %v11171 = vpop.f32.mrf.mxu0
      %v11172 = vadd.f32 %v11118, %v11171
      %11173 = vmatmul.bf16.gmra.mxu0 %v10216
      %v11174 = vpop.f32.mrf.mxu0
      %v11175 = vadd.f32 %v11121, %v11174
      %v11176 = vpop.f32.mrf.mxu0
      %v11177 = vadd.f32 %v11123, %v11176
      %11178 = vmatmul.bf16.gmra.mxu0 %v10225
      %v11179 = vpop.f32.mrf.mxu0
      %v11180 = vadd.f32 %v11126, %v11179
      %v11181 = vpop.f32.mrf.mxu0
      %v11182 = vadd.f32 %v11128, %v11181
      %11183 = vmatmul.bf16.gmra.mxu0 %v10234
      %v11184 = vpop.f32.mrf.mxu0
      %v11185 = vadd.f32 %v11131, %v11184
      %v11186 = vpop.f32.mrf.mxu0
      %v11187 = vadd.f32 %v11133, %v11186
      %11188 = vmatmul.bf16.gmra.mxu0 %v10243
      %v11189 = vpop.f32.mrf.mxu0
      %v11190 = vadd.f32 %v11136, %v11189
      %v11191 = vpop.f32.mrf.mxu0
      %v11192 = vadd.f32 %v11138, %v11191
      %11193 = vmatmul.bf16.gmra.mxu0 %v10252
      %v11194 = vpop.f32.mrf.mxu0
      %v11195 = vadd.f32 %v11141, %v11194
      %v11196 = vpop.f32.mrf.mxu0
      %v11197 = vadd.f32 %v11143, %v11196
      %11198 = vdwg.mxu0
      %11199 = vmatpush.bf16.msra.mxu0 %v10694
      %11200 = vmatpush.bf16.msra.mxu0 %v10693
      %11201 = vmatpush.bf16.msra.mxu0 %v10692
      %11202 = vmatpush.bf16.msra.mxu0 %v10691
      %11203 = vmatpush.bf16.msra.mxu0 %v10690
      %11204 = vmatpush.bf16.msra.mxu0 %v10689
      %11205 = vmatpush.bf16.msra.mxu0 %v10688
      %11206 = vmatpush.bf16.msra.mxu0 %v10687
      %11207 = vmatmul.bf16.gmra.mxu0 %v10181
      %v11208 = vpop.f32.mrf.mxu0
      %v11209 = vadd.f32 %v11155, %v11208
      %v11210 = vpop.f32.mrf.mxu0
      %v11211 = vadd.f32 %v11157, %v11210
      %11212 = vmatmul.bf16.gmra.mxu0 %v10190
      %v11213 = vpop.f32.mrf.mxu0
      %v11214 = vadd.f32 %v11160, %v11213
      %v11215 = vpop.f32.mrf.mxu0
      %v11216 = vadd.f32 %v11162, %v11215
      %11217 = vmatmul.bf16.gmra.mxu0 %v10199
      %v11218 = vpop.f32.mrf.mxu0
      %v11219 = vadd.f32 %v11165, %v11218
      %v11220 = vpop.f32.mrf.mxu0
      %v11221 = vadd.f32 %v11167, %v11220
      %11222 = vmatmul.bf16.gmra.mxu0 %v10208
      %v11223 = vpop.f32.mrf.mxu0
      %v11224 = vadd.f32 %v11170, %v11223
      %v11225 = vpop.f32.mrf.mxu0
      %v11226 = vadd.f32 %v11172, %v11225
      %11227 = vmatmul.bf16.gmra.mxu0 %v10217
      %v11228 = vpop.f32.mrf.mxu0
      %v11229 = vadd.f32 %v11175, %v11228
      %v11230 = vpop.f32.mrf.mxu0
      %v11231 = vadd.f32 %v11177, %v11230
      %11232 = vmatmul.bf16.gmra.mxu0 %v10226
      %v11233 = vpop.f32.mrf.mxu0
      %v11234 = vadd.f32 %v11180, %v11233
      %v11235 = vpop.f32.mrf.mxu0
      %v11236 = vadd.f32 %v11182, %v11235
      %11237 = vmatmul.bf16.gmra.mxu0 %v10235
      %v11238 = vpop.f32.mrf.mxu0
      %v11239 = vadd.f32 %v11185, %v11238
      %v11240 = vpop.f32.mrf.mxu0
      %v11241 = vadd.f32 %v11187, %v11240
      %11242 = vmatmul.bf16.gmra.mxu0 %v10244
      %v11243 = vpop.f32.mrf.mxu0
      %v11244 = vadd.f32 %v11190, %v11243
      %v11245 = vpop.f32.mrf.mxu0
      %v11246 = vadd.f32 %v11192, %v11245
      %11247 = vmatmul.bf16.gmra.mxu0 %v10253
      %v11248 = vpop.f32.mrf.mxu0
      %v11249 = vadd.f32 %v11195, %v11248
      %v11250 = vpop.f32.mrf.mxu0
      %v11251 = vadd.f32 %v11197, %v11250
      %11252 = vdwg.mxu0
      %v11253 = vmul.f32 %v11209, 0.01
      %v11254 = vmul.f32 %v11211, 0.01
      %v11255 = vmul.f32 %v11214, 0.01
      %v11256 = vmul.f32 %v11216, 0.01
      %v11257 = vmul.f32 %v11219, 0.01
      %v11258 = vmul.f32 %v11221, 0.01
      %v11259 = vmul.f32 %v11224, 0.01
      %v11260 = vmul.f32 %v11226, 0.01
      %v11261 = vmul.f32 %v11229, 0.01
      %v11262 = vmul.f32 %v11231, 0.01
      %v11263 = vmul.f32 %v11234, 0.01
      %v11264 = vmul.f32 %v11236, 0.01
      %v11265 = vmul.f32 %v11239, 0.01
      %v11266 = vmul.f32 %v11241, 0.01
      %v11267 = vmul.f32 %v11244, 0.01
      %v11268 = vmul.f32 %v11246, 0.01
      %v11269 = vmul.f32 %v11249, 0.01
      %v11270 = vmul.f32 %v11251, 0.01
      %v11271 = vmax.f32 %v11209, %v11253
      %v11272 = vmax.f32 %v11211, %v11254
      %v11273 = vmax.f32 %v11214, %v11255
      %v11274 = vmax.f32 %v11216, %v11256
      %v11275 = vmax.f32 %v11219, %v11257
      %v11276 = vmax.f32 %v11221, %v11258
      %v11277 = vmax.f32 %v11224, %v11259
      %v11278 = vmax.f32 %v11226, %v11260
      %v11279 = vmax.f32 %v11229, %v11261
      %v11280 = vmax.f32 %v11231, %v11262
      %v11281 = vmax.f32 %v11234, %v11263
      %v11282 = vmax.f32 %v11236, %v11264
      %v11283 = vmax.f32 %v11239, %v11265
      %v11284 = vmax.f32 %v11241, %v11266
      %v11285 = vmax.f32 %v11244, %v11267
      %v11286 = vmax.f32 %v11246, %v11268
      %v11287 = vmax.f32 %v11249, %v11269
      %v11288 = vmax.f32 %v11251, %v11270
      %v11289 = vpack.c.bf16 %v11271, %v11271
      %v11290 = vpack.c.bf16 %v11272, %v11272
      %v11291 = vpack.c.bf16 %v11273, %v11273
      %v11292 = vpack.c.bf16 %v11274, %v11274
      %v11293 = vpack.c.bf16 %v11275, %v11275
      %v11294 = vpack.c.bf16 %v11276, %v11276
      %v11295 = vpack.c.bf16 %v11277, %v11277
      %v11296 = vpack.c.bf16 %v11278, %v11278
      %v11297 = vpack.c.bf16 %v11279, %v11279
      %v11298 = vpack.c.bf16 %v11280, %v11280
      %v11299 = vpack.c.bf16 %v11281, %v11281
      %v11300 = vpack.c.bf16 %v11282, %v11282
      %v11301 = vpack.c.bf16 %v11283, %v11283
      %v11302 = vpack.c.bf16 %v11284, %v11284
      %v11303 = vpack.c.bf16 %v11285, %v11285
      %v11304 = vpack.c.bf16 %v11286, %v11286
      %v11305 = vpack.c.bf16 %v11287, %v11287
      %v11306 = vpack.c.bf16 %v11288, %v11288
      %11307 = vst [vmem:[%s224 + $0x48] sm:$0xf] %v11289
      %11308 = vst [vmem:[%s224 + $0x4c] sm:$0xf] %v11290
      %11309 = vst [vmem:[%s224 + $0x50] sm:$0xf] %v11291
      %11310 = vst [vmem:[%s224 + $0x54] sm:$0xf] %v11292
      %11311 = vst [vmem:[%s224 + $0x58] sm:$0xf] %v11293
      %11312 = vst [vmem:[%s224 + $0x5c] sm:$0xf] %v11294
      %11313 = vst [vmem:[%s224 + $0x60] sm:$0xf] %v11295
      %11314 = vst [vmem:[%s224 + $0x64] sm:$0xf] %v11296
      %11315 = vst [vmem:[%s224 + $0x68] sm:$0xf] %v11297
      %11316 = vst [vmem:[%s224 + $0x6c] sm:$0xf] %v11298
      %11317 = vst [vmem:[%s224 + $0x70] sm:$0xf] %v11299
      %11318 = vst [vmem:[%s224 + $0x74] sm:$0xf] %v11300
      %11319 = vst [vmem:[%s224 + $0x78] sm:$0xf] %v11301
      %11320 = vst [vmem:[%s224 + $0x7c] sm:$0xf] %v11302
      %11321 = vst [vmem:[%s224 + $0x80] sm:$0xf] %v11303
      %11322 = vst [vmem:[%s224 + $0x84] sm:$0xf] %v11304
      %11323 = vst [vmem:[%s224 + $0x88] sm:$0xf] %v11305
      %11324 = vst [vmem:[%s224 + $0x8c] sm:$0xf] %v11306
      %p11325 = scmp.lt.s32.totalorder %s16, 1
      %s11326 = scalar_select %p11325, %s16, 1
      %s11327 = smul.addr %s11326, 36
      %s11328 = smul.addr %s11327, 4
      %s11329 = scalar_lea.vmem %s5, %s11328
      // Predicated region
      $region41: #{stacked_conv_layers.1} parent=39 // pred_check
        %p11330 = pneg %p144
      $region42: #{stacked_conv_layers.1} parent=39 // pred_check_branch
        %11332 = sbr.rel (%p11330) target = $region44
      $region43: #{stacked_conv_layers.1} parent=39 // pred_region
        _
      $region44: #{stacked_conv_layers.1} parent=39 // pred_fallthru
        _
    $region40: #{stacked_conv_layers.1} parent=5 // pred_fallthru
      _
    %p11333 = scmp.le.s32.totalorder 2, %s11
    // Predicated region
    $region45: #{stacked_conv_layers.1} parent=5 // pred_check
      %p11334 = pneg %p11333
    $region46: #{stacked_conv_layers.1} parent=5 // pred_check_branch
      %11336 = sbr.rel (%p11334) target = $region48
    $region47: #{stacked_conv_layers.1} parent=5 // pred_region
      %s11337 = ssub.s32 %s11, 2
      // Predicated region
      $region49: #{stacked_conv_layers.1} parent=47 // pred_check
        %p11338 = pneg %p150
      $region50: #{stacked_conv_layers.1} parent=47 // pred_check_branch
        %11340 = sbr.rel (%p11338) target = $region52
      $region51: #{stacked_conv_layers.1} parent=47 // pred_region
        %p11341 = scmp.lt.s32.totalorder %s17, 1
        %s11342 = scalar_select %p11341, %s17, 1
        %s11343 = smul.addr %s11342, 36
        %s11344 = smul.addr %s11343, 4
        %s11345 = scalar_lea.vmem %s5, %s11344
      $region52: #{stacked_conv_layers.1} parent=47 // pred_fallthru
        _
    $region48: #{stacked_conv_layers.1} parent=5 // pred_fallthru
      _
  $region6: #{stacked_conv_layers.1} parent=0 // loop_footer
    %s15 = sadd.s32 1, %s11
  $region7: #{stacked_conv_layers.1} parent=0 // loop_footer_branch
    %10 = sbr.rel target = $region3
  $region8: #{stacked_conv_layers.1} parent=0 // loop_exit
    _

</llo_original>
